<compile_context>
chip_gen: v7x
topology: tpu7x:2x2x1
jax: 0.10.0
libtpu: 0.0.40
codegen_flags: <defaults>
</compile_context>

<pallas_src>
import math
from functools import partial

import jax
import jax.numpy as jnp
from jax.experimental import pallas as pl
from jax.experimental.pallas import tpu as pltpu

LANE = 128
SUBLANE = 8


def _ceil_to(x, m):
    return (x + m - 1) // m * m


def _pick_c_tile(c_padded):
    # Lane-dense channel tiles; 256-wide blocks when divisible (v6e/v7x MXU).
    return 256 if (c_padded % 256 == 0) else 128


# ------------------------------ Pallas kernel ------------------------------- #

def _conv_kernel(*refs, kh, kw, out_h, out_w,
                 apply_relu, has_residual, has_affine):
    """Tap-folded conv-as-matmul.

    refs (in order):
      x_ref     (N, Hp, Wp, tk)  f32   -- padded NHWC activation, Cin tile k
      w_ref     (kh, kw, tk, tn) bf16  -- HWIO weights, Cin tile k / Cout tile j
      [res_ref  (M, tn) f32]           -- fused residual add (FPN skip)
      [scale/shift (1, tn) f32]        -- fused eval-BN affine (after ReLU)
      o_ref     (M, tn) f32            -- M = N*out_h*out_w

    grid = (Cout tiles [parallel], Cin tiles [arbitrary reduction]).
    o_ref is f32 and resident across the reduction axis, so partial sums
    accumulate straight into it; epilogues run in the k == last finalize.
    """
    i = 0
    x_ref = refs[i]; i += 1
    w_ref = refs[i]; i += 1
    res_ref = None
    scale_ref = shift_ref = None
    if has_residual:
        res_ref = refs[i]; i += 1
    if has_affine:
        scale_ref = refs[i]; i += 1
        shift_ref = refs[i]; i += 1
    o_ref = refs[i]

    k = pl.program_id(1)
    n_rows, _ = o_ref.shape
    tk = x_ref.shape[-1]

    acc = jnp.zeros(o_ref.shape, jnp.float32)
    for di in range(kh):
        for dj in range(kw):
            # Static window slice of the VMEM-resident input block; out_w is a
            # multiple of 8 so the collapse to (rows, tk) is layout-trivial.
            win = x_ref[:, di:di + out_h, dj:dj + out_w, :]
            a = win.reshape(n_rows, tk).astype(jnp.bfloat16)
            acc = acc + jnp.dot(a, w_ref[di, dj],
                                preferred_element_type=jnp.float32)

    @pl.when(k == 0)
    def _init():
        o_ref[...] = acc

    @pl.when(k > 0)
    def _accumulate():
        o_ref[...] += acc

    @pl.when(k == pl.num_programs(1) - 1)
    def _finalize():
        r = o_ref[...]
        if has_residual:
            r = r + res_ref[...]
        if apply_relu:
            r = jnp.maximum(r, 0.0)
        if has_affine:
            r = r * scale_ref[...] + shift_ref[...]
        o_ref[...] = r


# ------------------------------ conv wrapper -------------------------------- #

def conv2d_fpn(x, w_oihw, *, stride=1, padding=0, relu=False,
               residual=None, bn_scale=None, bn_shift=None):
    """Conv2d (no bias) with PyTorch OIHW weights on NHWC activations.

    Returns (N, Ho, Wo, Cout_padded) float32.  Channel padding (to a multiple
    of 128) is kept on intermediates and sliced off by the caller at the end.
    Stride-2 convs (kernel 3, padding 1) are computed at stride 1 and
    subsampled; the fused ReLU/BN epilogues commute with the subsampling.
    """
    assert stride in (1, 2)
    N, H, W, c_in_act = x.shape
    Cout, Cin, kh, kw = w_oihw.shape
    cin_p = _ceil_to(Cin, LANE)
    cout_p = _ceil_to(Cout, LANE)
    assert c_in_act in (Cin, cin_p)

    # Output width padded to a multiple of 8 with extra zero columns (sliced
    # off below) so every (rows, channels) slab is (8,128)-aligned.
    Wc = _ceil_to(W, SUBLANE)
    xp = jnp.pad(x.astype(jnp.float32),
                 ((0, 0),
                  (padding, padding),
                  (padding, padding + (Wc - W)),
                  (0, cin_p - c_in_act)))
    Hp, Wp = H + 2 * padding, Wc + 2 * padding

    # OIHW -> HWIO, zero-pad both channel dims, bf16 for the MXU.
    w = jnp.transpose(w_oihw, (2, 3, 1, 0))
    w = jnp.pad(w, ((0, 0), (0, 0), (0, cin_p - Cin), (0, cout_p - Cout)))
    w = w.astype(jnp.bfloat16)

    M = N * H * Wc
    tk = _pick_c_tile(cin_p)
    tn = _pick_c_tile(cout_p)
    grid = (cout_p // tn, cin_p // tk)          # (Cout tiles, Cin reduction)

    in_specs = [
        pl.BlockSpec((N, Hp, Wp, tk), lambda j, k: (0, 0, 0, k)),
        pl.BlockSpec((kh, kw, tk, tn), lambda j, k: (0, 0, k, j)),
    ]
    inputs = [xp, w]

    has_residual = residual is not None
    if has_residual:
        assert residual.shape == (N, H, W, cout_p)
        r = jnp.pad(residual.astype(jnp.float32),
                    ((0, 0), (0, 0), (0, Wc - W), (0, 0))).reshape(M, cout_p)
        in_specs.append(pl.BlockSpec((M, tn), lambda j, k: (0, j)))
        inputs.append(r)

    has_affine = bn_scale is not None
    if has_affine:
        s = jnp.pad(bn_scale.astype(jnp.float32),
                    (0, cout_p - Cout)).reshape(1, cout_p)
        t = jnp.pad(bn_shift.astype(jnp.float32),
                    (0, cout_p - Cout)).reshape(1, cout_p)
        in_specs += [pl.BlockSpec((1, tn), lambda j, k: (0, j)),
                     pl.BlockSpec((1, tn), lambda j, k: (0, j))]
        inputs += [s, t]

    kernel = partial(_conv_kernel, kh=kh, kw=kw, out_h=H, out_w=Wc,
                     apply_relu=relu, has_residual=has_residual,
                     has_affine=has_affine)

    out = pl.pallas_call(
        kernel,
        out_shape=jax.ShapeDtypeStruct((M, cout_p), jnp.float32),
        grid_spec=pltpu.PrefetchScalarGridSpec(
            num_scalar_prefetch=0,
            grid=grid,
            in_specs=in_specs,
            out_specs=pl.BlockSpec((M, tn), lambda j, k: (0, j)),
        ),
        compiler_params=pltpu.CompilerParams(
            dimension_semantics=("parallel", "arbitrary")),
    )(*inputs)

    out = out.reshape(N, H, Wc, cout_p)[:, :, :W, :]
    if stride == 2:
        out = out[:, ::2, ::2, :]
    return out


# ------------------------------ forward pass -------------------------------- #

def densenet_fpn_forward(x_nchw, params):
    # TODO(synk): the densenet/EfficientNet-B2 `features` backbone is an external
    # submodule and is not replicated; `x` is treated as the backbone's feature
    # map (1408 channels in the original, scaled down here).
    x = jnp.transpose(x_nchw, (0, 2, 3, 1)).astype(jnp.float32)   # -> NHWC
    c2 = c3 = c4 = x            # c1..c4 all alias the same feature map

    cout = params["lat1_w"].shape[0]

    # p5 branch.  _upsample(p5, c3) is the identity here (same spatial size).
    p5 = conv2d_fpn(c4, params["lat1_w"])
    p5_up = p5
    p5c = conv2d_fpn(p5, params["corr1_w"], padding=1)

    # p4 branch: residual add (p5_upsampled + p4) fused into the lateral 1x1.
    p4 = conv2d_fpn(c3, params["lat2_w"], residual=p5_up)
    p4_mid = p4                 # _upsample(p4, c2) is the identity (same size)
    p4c = conv2d_fpn(p4, params["corr2_w"], padding=1)

    # p3 branch: residual add fused into the lateral 1x1.
    p3 = conv2d_fpn(c2, params["lat3_w"], residual=p4_mid)
    p3c = conv2d_fpn(p3, params["corr3_w"], padding=1)

    # p6 / p7: stride-2 convs with fused ReLU; eval-BN affine fused into the
    # conv7 epilogue AFTER the ReLU (module does relu -> batch_norm).
    p6 = conv2d_fpn(c4, params["conv6_w"], stride=2, padding=1, relu=True)
    eps = 1e-5
    scale = params["bn_gamma"] / jnp.sqrt(params["bn_var"] + eps)
    shift = params["bn_beta"] - params["bn_mean"] * scale
    p7 = conv2d_fpn(p6, params["conv7_w"], stride=2, padding=1, relu=True,
                    bn_scale=scale, bn_shift=shift)
    # TODO(synk): Dropout(0.5) is identity in eval mode; train-mode random
    # masking is not implemented.

    # Nearest upsampling (pure-JAX glue) + slice channel padding, NHWC -> NCHW.
    def finish(t, factor=1):
        t = t[..., :cout]
        if factor > 1:
            t = jnp.repeat(jnp.repeat(t, factor, axis=1), factor, axis=2)
        return jnp.transpose(t, (0, 3, 1, 2))

    return (finish(p3c, 4), finish(p4c, 2), finish(p5c), finish(p6), finish(p7))


# --------------------------- pure-JAX reference ------------------------------ #

def _ref_forward(x_nchw, params):
    x = jnp.transpose(x_nchw, (0, 2, 3, 1))

    def conv(h, w_oihw, stride=1, padding=0):
        w = jnp.transpose(w_oihw, (2, 3, 1, 0))
        return jax.lax.conv_general_dilated(
            h, w, (stride, stride), [(padding, padding)] * 2,
            dimension_numbers=("NHWC", "HWIO", "NHWC"),
            precision=jax.lax.Precision.HIGHEST)

    c2 = c3 = c4 = x
    p5 = conv(c4, params["lat1_w"]); p5_up = p5
    p5c = conv(p5, params["corr1_w"], padding=1)
    p4 = conv(c3, params["lat2_w"]) + p5_up; p4_mid = p4
    p4c = conv(p4, params["corr2_w"], padding=1)
    p3 = conv(c2, params["lat3_w"]) + p4_mid
    p3c = conv(p3, params["corr3_w"], padding=1)
    p6 = jnp.maximum(conv(c4, params["conv6_w"], stride=2, padding=1), 0.0)
    p7 = jnp.maximum(conv(p6, params["conv7_w"], stride=2, padding=1), 0.0)
    scale = params["bn_gamma"] / jnp.sqrt(params["bn_var"] + 1e-5)
    shift = params["bn_beta"] - params["bn_mean"] * scale
    p7 = p7 * scale + shift
    up = lambda t, f: jnp.repeat(jnp.repeat(t, f, axis=1), f, axis=2)
    to = lambda t: jnp.transpose(t, (0, 3, 1, 2))
    return (to(up(p3c, 4)), to(up(p4c, 2)), to(p5c), to(p6), to(p7))


# --------------------------------- driver ------------------------------------ #

if __name__ == "__main__":
    key = jax.random.PRNGKey(0)
    # Small stand-in shapes: Cin=128 for the 1408-channel backbone output,
    # Cout=128 for the 720-channel FPN width, 8x8 feature map, batch 2.
    N, Cin, H, W = 2, 128, 8, 8
    Cout = 128

    ks = jax.random.split(key, 9)

    def winit(k, shape, fan_in):
        return jax.random.normal(k, shape, jnp.float32) * (1.0 / math.sqrt(fan_in))

    params = {
        "lat1_w":  winit(ks[0], (Cout, Cin, 1, 1), Cin),
        "lat2_w":  winit(ks[1], (Cout, Cin, 1, 1), Cin),
        "lat3_w":  winit(ks[2], (Cout, Cin, 1, 1), Cin),
        "corr1_w": winit(ks[3], (Cout, Cout, 3, 3), 9 * Cout),
        "corr2_w": winit(ks[4], (Cout, Cout, 3, 3), 9 * Cout),
        "corr3_w": winit(ks[5], (Cout, Cin, 3, 3), 9 * Cin),
        "conv6_w": winit(ks[6], (Cout, Cin, 3, 3), 9 * Cin),
        "conv7_w": winit(ks[7], (Cout, Cout, 3, 3), 9 * Cout),
        "bn_gamma": jnp.ones((Cout,), jnp.float32),
        "bn_beta":  jnp.zeros((Cout,), jnp.float32),
        "bn_mean":  jnp.zeros((Cout,), jnp.float32),
        "bn_var":   jnp.ones((Cout,), jnp.float32),
    }
    # corr layers in the module are 720->720; keep Cin==Cout in the scaled-down
    # demo so shapes stay consistent.
    params["corr3_w"] = winit(ks[5], (Cout, Cout, 3, 3), 9 * Cout)

    x = jax.random.normal(ks[8], (N, Cin, H, W), jnp.float32)

    outs = jax.block_until_ready(jax.jit(densenet_fpn_forward)(x, params))

    expected = [(N, Cout, 4 * H, 4 * W), (N, Cout, 2 * H, 2 * W),
                (N, Cout, H, W), (N, Cout, H // 2, W // 2),
                (N, Cout, H // 4, W // 4)]
    for o, s in zip(outs, expected):
        assert o.shape == s, (o.shape, s)

    # Numerical check against a pure-JAX reference (bf16 MXU operands -> loose
    # absolute tolerance).
    refs = jax.block_until_ready(jax.jit(_ref_forward)(x, params))
    for o, r in zip(outs, refs):
        err = float(jnp.max(jnp.abs(o - r)))
        assert err < 0.15, f"max abs err {err}"

    print("KERNEL_OK")
</pallas_src>

<mosaic_0001>
module attributes {stable_mosaic.version = 11 : i64} {
  func.func @_conv_kernel(%arg0: i32, %arg1: i32, %arg2: memref<2x8x8x128xf32, #tpu.memory_space<vmem>>, %arg3: memref<1x1x128x128xbf16, #tpu.memory_space<vmem>>, %arg4: memref<128x128xf32, #tpu.memory_space<vmem>>) attributes {dimension_semantics = [#tpu.dimension_semantics<parallel>, #tpu.dimension_semantics<arbitrary>], iteration_bounds = array<i64: 1, 1>, scalar_prefetch = 0 : i64, scratch_operands = 0 : i64, tpu.core_type = #tpu.core_type<tc>, window_params = [{transform_indices = @transform_0, window_bounds = array<i64: 2, 8, 8, 128>}, {transform_indices = @transform_1, window_bounds = array<i64: 1, 1, 128, 128>}, {transform_indices = @transform_2, window_bounds = array<i64: 128, 128>}]} {
    %cst = arith.constant 0.000000e+00 : f32
    %0 = vector.broadcast %cst : f32 to vector<128x128xf32>
    %c0 = arith.constant 0 : index
    %c0_0 = arith.constant 0 : index
    %c0_1 = arith.constant 0 : index
    %c0_2 = arith.constant 0 : index
    %1 = vector.load %arg2[%c0, %c0_0, %c0_1, %c0_2] : memref<2x8x8x128xf32, #tpu.memory_space<vmem>>, vector<2x8x8x128xf32>
    %2 = vector.shape_cast %1 : vector<2x8x8x128xf32> to vector<128x128xf32>
    %3 = arith.truncf %2 : vector<128x128xf32> to vector<128x128xbf16>
    %c0_3 = arith.constant 0 : index
    %c0_4 = arith.constant 0 : index
    %c0_5 = arith.constant 0 : index
    %c0_6 = arith.constant 0 : index
    %4 = vector.load %arg3[%c0_3, %c0_4, %c0_5, %c0_6] : memref<1x1x128x128xbf16, #tpu.memory_space<vmem>>, vector<1x1x128x128xbf16>
    %5 = vector.shape_cast %4 : vector<1x1x128x128xbf16> to vector<128x128xbf16>
    %cst_7 = arith.constant dense<0.000000e+00> : vector<128x128xf32>
    %6 = tpu.matmul %3, %5, %cst_7 {dimension_numbers = #tpu.dot_dimension_numbers<[1], [0], [0], [1], [0, 0, 1, 1], [], []>} : vector<128x128xbf16>, vector<128x128xbf16>, vector<128x128xf32> -> vector<128x128xf32>
    %7 = arith.addf %0, %6 : vector<128x128xf32>
    %c0_i32 = arith.constant 0 : i32
    %8 = arith.cmpi eq, %arg1, %c0_i32 : i32
    %9 = arith.extui %8 : i1 to i32
    %c0_i32_8 = arith.constant 0 : i32
    %10 = arith.cmpi ne, %9, %c0_i32_8 : i32
    scf.if %10 {
      %c0_13 = arith.constant 0 : index
      %c0_14 = arith.constant 0 : index
      %17 = vector.load %arg4[%c0_13, %c0_14] : memref<128x128xf32, #tpu.memory_space<vmem>>, vector<128x128xf32>
      tpu.vector_store %arg4[%c0_13, %c0_14], %7 {strides = array<i32>} : memref<128x128xf32, #tpu.memory_space<vmem>>, vector<128x128xf32>,
    } else {
    }
    %c0_i32_9 = arith.constant 0 : i32
    %11 = arith.cmpi sgt, %arg1, %c0_i32_9 : i32
    %12 = arith.extui %11 : i1 to i32
    %c0_i32_10 = arith.constant 0 : i32
    %13 = arith.cmpi ne, %12, %c0_i32_10 : i32
    scf.if %13 {
      %c0_13 = arith.constant 0 : index
      %c0_14 = arith.constant 0 : index
      %17 = vector.load %arg4[%c0_13, %c0_14] : memref<128x128xf32, #tpu.memory_space<vmem>>, vector<128x128xf32>
      %18 = arith.addf %17, %7 : vector<128x128xf32>
      %c0_15 = arith.constant 0 : index
      %c0_16 = arith.constant 0 : index
      %19 = vector.load %arg4[%c0_15, %c0_16] : memref<128x128xf32, #tpu.memory_space<vmem>>, vector<128x128xf32>
      tpu.vector_store %arg4[%c0_15, %c0_16], %18 {strides = array<i32>} : memref<128x128xf32, #tpu.memory_space<vmem>>, vector<128x128xf32>,
    } else {
    }
    %c0_i32_11 = arith.constant 0 : i32
    %14 = arith.cmpi eq, %arg1, %c0_i32_11 : i32
    %15 = arith.extui %14 : i1 to i32
    %c0_i32_12 = arith.constant 0 : i32
    %16 = arith.cmpi ne, %15, %c0_i32_12 : i32
    scf.if %16 {
      %c0_13 = arith.constant 0 : index
      %c0_14 = arith.constant 0 : index
      %17 = vector.load %arg4[%c0_13, %c0_14] : memref<128x128xf32, #tpu.memory_space<vmem>>, vector<128x128xf32>
      %c0_15 = arith.constant 0 : index
      %c0_16 = arith.constant 0 : index
      %18 = vector.load %arg4[%c0_15, %c0_16] : memref<128x128xf32, #tpu.memory_space<vmem>>, vector<128x128xf32>
      tpu.vector_store %arg4[%c0_15, %c0_16], %17 {strides = array<i32>} : memref<128x128xf32, #tpu.memory_space<vmem>>, vector<128x128xf32>,
    } else {
    }
    return
  }
  func.func @transform_0(%arg0: i32, %arg1: i32) -> (i32, i32, i32, i32) {
    %c0_i32 = arith.constant 0 : i32
    %c0_i32_0 = arith.constant 0 : i32
    %c0_i32_1 = arith.constant 0 : i32
    %c0_i32_2 = arith.constant 0 : i32
    return %c0_i32, %c0_i32_0, %c0_i32_1, %arg1 : i32, i32, i32, i32
  }
  func.func @transform_1(%arg0: i32, %arg1: i32) -> (i32, i32, i32, i32) {
    %c0_i32 = arith.constant 0 : i32
    %c0_i32_0 = arith.constant 0 : i32
    %c0_i32_1 = arith.constant 0 : i32
    return %c0_i32, %c0_i32_0, %arg1, %arg0 : i32, i32, i32, i32
  }
  func.func @transform_2(%arg0: i32, %arg1: i32) -> (i32, i32) {
    %c0_i32 = arith.constant 0 : i32
    %c0_i32_0 = arith.constant 0 : i32
    return %c0_i32, %arg0 : i32, i32
  }
}

module attributes {stable_mosaic.version = 11 : i64} {
  func.func @_conv_kernel(%arg0: i32, %arg1: i32, %arg2: memref<2x8x8x128xf32, #tpu.memory_space<vmem>>, %arg3: memref<1x1x128x128xbf16, #tpu.memory_space<vmem>>, %arg4: memref<128x128xf32, #tpu.memory_space<vmem>>, %arg5: memref<128x128xf32, #tpu.memory_space<vmem>>) attributes {dimension_semantics = [#tpu.dimension_semantics<parallel>, #tpu.dimension_semantics<arbitrary>], iteration_bounds = array<i64: 1, 1>, scalar_prefetch = 0 : i64, scratch_operands = 0 : i64, tpu.core_type = #tpu.core_type<tc>, window_params = [{transform_indices = @transform_0, window_bounds = array<i64: 2, 8, 8, 128>}, {transform_indices = @transform_1, window_bounds = array<i64: 1, 1, 128, 128>}, {transform_indices = @transform_2, window_bounds = array<i64: 128, 128>}, {transform_indices = @transform_3, window_bounds = array<i64: 128, 128>}]} {
    %cst = arith.constant 0.000000e+00 : f32
    %0 = vector.broadcast %cst : f32 to vector<128x128xf32>
    %c0 = arith.constant 0 : index
    %c0_0 = arith.constant 0 : index
    %c0_1 = arith.constant 0 : index
    %c0_2 = arith.constant 0 : index
    %1 = vector.load %arg2[%c0, %c0_0, %c0_1, %c0_2] : memref<2x8x8x128xf32, #tpu.memory_space<vmem>>, vector<2x8x8x128xf32>
    %2 = vector.shape_cast %1 : vector<2x8x8x128xf32> to vector<128x128xf32>
    %3 = arith.truncf %2 : vector<128x128xf32> to vector<128x128xbf16>
    %c0_3 = arith.constant 0 : index
    %c0_4 = arith.constant 0 : index
    %c0_5 = arith.constant 0 : index
    %c0_6 = arith.constant 0 : index
    %4 = vector.load %arg3[%c0_3, %c0_4, %c0_5, %c0_6] : memref<1x1x128x128xbf16, #tpu.memory_space<vmem>>, vector<1x1x128x128xbf16>
    %5 = vector.shape_cast %4 : vector<1x1x128x128xbf16> to vector<128x128xbf16>
    %cst_7 = arith.constant dense<0.000000e+00> : vector<128x128xf32>
    %6 = tpu.matmul %3, %5, %cst_7 {dimension_numbers = #tpu.dot_dimension_numbers<[1], [0], [0], [1], [0, 0, 1, 1], [], []>} : vector<128x128xbf16>, vector<128x128xbf16>, vector<128x128xf32> -> vector<128x128xf32>
    %7 = arith.addf %0, %6 : vector<128x128xf32>
    %c0_i32 = arith.constant 0 : i32
    %8 = arith.cmpi eq, %arg1, %c0_i32 : i32
    %9 = arith.extui %8 : i1 to i32
    %c0_i32_8 = arith.constant 0 : i32
    %10 = arith.cmpi ne, %9, %c0_i32_8 : i32
    scf.if %10 {
      %c0_13 = arith.constant 0 : index
      %c0_14 = arith.constant 0 : index
      %17 = vector.load %arg5[%c0_13, %c0_14] : memref<128x128xf32, #tpu.memory_space<vmem>>, vector<128x128xf32>
      tpu.vector_store %arg5[%c0_13, %c0_14], %7 {strides = array<i32>} : memref<128x128xf32, #tpu.memory_space<vmem>>, vector<128x128xf32>,
    } else {
    }
    %c0_i32_9 = arith.constant 0 : i32
    %11 = arith.cmpi sgt, %arg1, %c0_i32_9 : i32
    %12 = arith.extui %11 : i1 to i32
    %c0_i32_10 = arith.constant 0 : i32
    %13 = arith.cmpi ne, %12, %c0_i32_10 : i32
    scf.if %13 {
      %c0_13 = arith.constant 0 : index
      %c0_14 = arith.constant 0 : index
      %17 = vector.load %arg5[%c0_13, %c0_14] : memref<128x128xf32, #tpu.memory_space<vmem>>, vector<128x128xf32>
      %18 = arith.addf %17, %7 : vector<128x128xf32>
      %c0_15 = arith.constant 0 : index
      %c0_16 = arith.constant 0 : index
      %19 = vector.load %arg5[%c0_15, %c0_16] : memref<128x128xf32, #tpu.memory_space<vmem>>, vector<128x128xf32>
      tpu.vector_store %arg5[%c0_15, %c0_16], %18 {strides = array<i32>} : memref<128x128xf32, #tpu.memory_space<vmem>>, vector<128x128xf32>,
    } else {
    }
    %c0_i32_11 = arith.constant 0 : i32
    %14 = arith.cmpi eq, %arg1, %c0_i32_11 : i32
    %15 = arith.extui %14 : i1 to i32
    %c0_i32_12 = arith.constant 0 : i32
    %16 = arith.cmpi ne, %15, %c0_i32_12 : i32
    scf.if %16 {
      %c0_13 = arith.constant 0 : index
      %c0_14 = arith.constant 0 : index
      %17 = vector.load %arg5[%c0_13, %c0_14] : memref<128x128xf32, #tpu.memory_space<vmem>>, vector<128x128xf32>
      %c0_15 = arith.constant 0 : index
      %c0_16 = arith.constant 0 : index
      %18 = vector.load %arg4[%c0_15, %c0_16] : memref<128x128xf32, #tpu.memory_space<vmem>>, vector<128x128xf32>
      %19 = arith.addf %17, %18 : vector<128x128xf32>
      %c0_17 = arith.constant 0 : index
      %c0_18 = arith.constant 0 : index
      %20 = vector.load %arg5[%c0_17, %c0_18] : memref<128x128xf32, #tpu.memory_space<vmem>>, vector<128x128xf32>
      tpu.vector_store %arg5[%c0_17, %c0_18], %19 {strides = array<i32>} : memref<128x128xf32, #tpu.memory_space<vmem>>, vector<128x128xf32>,
    } else {
    }
    return
  }
  func.func @transform_0(%arg0: i32, %arg1: i32) -> (i32, i32, i32, i32) {
    %c0_i32 = arith.constant 0 : i32
    %c0_i32_0 = arith.constant 0 : i32
    %c0_i32_1 = arith.constant 0 : i32
    %c0_i32_2 = arith.constant 0 : i32
    return %c0_i32, %c0_i32_0, %c0_i32_1, %arg1 : i32, i32, i32, i32
  }
  func.func @transform_1(%arg0: i32, %arg1: i32) -> (i32, i32, i32, i32) {
    %c0_i32 = arith.constant 0 : i32
    %c0_i32_0 = arith.constant 0 : i32
    %c0_i32_1 = arith.constant 0 : i32
    return %c0_i32, %c0_i32_0, %arg1, %arg0 : i32, i32, i32, i32
  }
  func.func @transform_2(%arg0: i32, %arg1: i32) -> (i32, i32) {
    %c0_i32 = arith.constant 0 : i32
    %c0_i32_0 = arith.constant 0 : i32
    return %c0_i32, %arg0 : i32, i32
  }
  func.func @transform_3(%arg0: i32, %arg1: i32) -> (i32, i32) {
    %c0_i32 = arith.constant 0 : i32
    %c0_i32_0 = arith.constant 0 : i32
    return %c0_i32, %arg0 : i32, i32
  }
}

module attributes {stable_mosaic.version = 11 : i64} {
  func.func @_conv_kernel(%arg0: i32, %arg1: i32, %arg2: memref<2x10x10x128xf32, #tpu.memory_space<vmem>>, %arg3: memref<3x3x128x128xbf16, #tpu.memory_space<vmem>>, %arg4: memref<128x128xf32, #tpu.memory_space<vmem>>) attributes {dimension_semantics = [#tpu.dimension_semantics<parallel>, #tpu.dimension_semantics<arbitrary>], iteration_bounds = array<i64: 1, 1>, scalar_prefetch = 0 : i64, scratch_operands = 0 : i64, tpu.core_type = #tpu.core_type<tc>, window_params = [{transform_indices = @transform_0, window_bounds = array<i64: 2, 10, 10, 128>}, {transform_indices = @transform_1, window_bounds = array<i64: 3, 3, 128, 128>}, {transform_indices = @transform_2, window_bounds = array<i64: 128, 128>}]} {
    %cst = arith.constant 0.000000e+00 : f32
    %0 = vector.broadcast %cst : f32 to vector<128x128xf32>
    %c0 = arith.constant 0 : index
    %c0_0 = arith.constant 0 : index
    %c0_1 = arith.constant 0 : index
    %c0_2 = arith.constant 0 : index
    %1 = vector.load %arg2[%c0, %c0_0, %c0_1, %c0_2] : memref<2x10x10x128xf32, #tpu.memory_space<vmem>>, vector<2x8x8x128xf32>
    %2 = vector.shape_cast %1 : vector<2x8x8x128xf32> to vector<128x128xf32>
    %3 = arith.truncf %2 : vector<128x128xf32> to vector<128x128xbf16>
    %c0_3 = arith.constant 0 : index
    %c0_4 = arith.constant 0 : index
    %c0_5 = arith.constant 0 : index
    %c0_6 = arith.constant 0 : index
    %4 = vector.load %arg3[%c0_3, %c0_4, %c0_5, %c0_6] : memref<3x3x128x128xbf16, #tpu.memory_space<vmem>>, vector<1x1x128x128xbf16>
    %5 = vector.shape_cast %4 : vector<1x1x128x128xbf16> to vector<128x128xbf16>
    %cst_7 = arith.constant dense<0.000000e+00> : vector<128x128xf32>
    %6 = tpu.matmul %3, %5, %cst_7 {dimension_numbers = #tpu.dot_dimension_numbers<[1], [0], [0], [1], [0, 0, 1, 1], [], []>} : vector<128x128xbf16>, vector<128x128xbf16>, vector<128x128xf32> -> vector<128x128xf32>
    %7 = arith.addf %0, %6 : vector<128x128xf32>
    %c0_8 = arith.constant 0 : index
    %c0_9 = arith.constant 0 : index
    %c1 = arith.constant 1 : index
    %c0_10 = arith.constant 0 : index
    %8 = vector.load %arg2[%c0_8, %c0_9, %c1, %c0_10] : memref<2x10x10x128xf32, #tpu.memory_space<vmem>>, vector<2x8x8x128xf32>
    %9 = vector.shape_cast %8 : vector<2x8x8x128xf32> to vector<128x128xf32>
    %10 = arith.truncf %9 : vector<128x128xf32> to vector<128x128xbf16>
    %c0_11 = arith.constant 0 : index
    %c1_12 = arith.constant 1 : index
    %c0_13 = arith.constant 0 : index
    %c0_14 = arith.constant 0 : index
    %11 = vector.load %arg3[%c0_11, %c1_12, %c0_13, %c0_14] : memref<3x3x128x128xbf16, #tpu.memory_space<vmem>>, vector<1x1x128x128xbf16>
    %12 = vector.shape_cast %11 : vector<1x1x128x128xbf16> to vector<128x128xbf16>
    %cst_15 = arith.constant dense<0.000000e+00> : vector<128x128xf32>
    %13 = tpu.matmul %10, %12, %cst_15 {dimension_numbers = #tpu.dot_dimension_numbers<[1], [0], [0], [1], [0, 0, 1, 1], [], []>} : vector<128x128xbf16>, vector<128x128xbf16>, vector<128x128xf32> -> vector<128x128xf32>
    %14 = arith.addf %7, %13 : vector<128x128xf32>
    %c0_16 = arith.constant 0 : index
    %c0_17 = arith.constant 0 : index
    %c2 = arith.constant 2 : index
    %c0_18 = arith.constant 0 : index
    %15 = vector.load %arg2[%c0_16, %c0_17, %c2, %c0_18] : memref<2x10x10x128xf32, #tpu.memory_space<vmem>>, vector<2x8x8x128xf32>
    %16 = vector.shape_cast %15 : vector<2x8x8x128xf32> to vector<128x128xf32>
    %17 = arith.truncf %16 : vector<128x128xf32> to vector<128x128xbf16>
    %c0_19 = arith.constant 0 : index
    %c2_20 = arith.constant 2 : index
    %c0_21 = arith.constant 0 : index
    %c0_22 = arith.constant 0 : index
    %18 = vector.load %arg3[%c0_19, %c2_20, %c0_21, %c0_22] : memref<3x3x128x128xbf16, #tpu.memory_space<vmem>>, vector<1x1x128x128xbf16>
    %19 = vector.shape_cast %18 : vector<1x1x128x128xbf16> to vector<128x128xbf16>
    %cst_23 = arith.constant dense<0.000000e+00> : vector<128x128xf32>
    %20 = tpu.matmul %17, %19, %cst_23 {dimension_numbers = #tpu.dot_dimension_numbers<[1], [0], [0], [1], [0, 0, 1, 1], [], []>} : vector<128x128xbf16>, vector<128x128xbf16>, vector<128x128xf32> -> vector<128x128xf32>
    %21 = arith.addf %14, %20 : vector<128x128xf32>
    %c0_24 = arith.constant 0 : index
    %c1_25 = arith.constant 1 : index
    %c0_26 = arith.constant 0 : index
    %c0_27 = arith.constant 0 : index
    %22 = vector.load %arg2[%c0_24, %c1_25, %c0_26, %c0_27] : memref<2x10x10x128xf32, #tpu.memory_space<vmem>>, vector<2x8x8x128xf32>
    %23 = vector.shape_cast %22 : vector<2x8x8x128xf32> to vector<128x128xf32>
    %24 = arith.truncf %23 : vector<128x128xf32> to vector<128x128xbf16>
    %c1_28 = arith.constant 1 : index
    %c0_29 = arith.constant 0 : index
    %c0_30 = arith.constant 0 : index
    %c0_31 = arith.constant 0 : index
    %25 = vector.load %arg3[%c1_28, %c0_29, %c0_30, %c0_31] : memref<3x3x128x128xbf16, #tpu.memory_space<vmem>>, vector<1x1x128x128xbf16>
    %26 = vector.shape_cast %25 : vector<1x1x128x128xbf16> to vector<128x128xbf16>
    %cst_32 = arith.constant dense<0.000000e+00> : vector<128x128xf32>
    %27 = tpu.matmul %24, %26, %cst_32 {dimension_numbers = #tpu.dot_dimension_numbers<[1], [0], [0], [1], [0, 0, 1, 1], [], []>} : vector<128x128xbf16>, vector<128x128xbf16>, vector<128x128xf32> -> vector<128x128xf32>
    %28 = arith.addf %21, %27 : vector<128x128xf32>
    %c0_33 = arith.constant 0 : index
    %c1_34 = arith.constant 1 : index
    %c1_35 = arith.constant 1 : index
    %c0_36 = arith.constant 0 : index
    %29 = vector.load %arg2[%c0_33, %c1_34, %c1_35, %c0_36] : memref<2x10x10x128xf32, #tpu.memory_space<vmem>>, vector<2x8x8x128xf32>
    %30 = vector.shape_cast %29 : vector<2x8x8x128xf32> to vector<128x128xf32>
    %31 = arith.truncf %30 : vector<128x128xf32> to vector<128x128xbf16>
    %c1_37 = arith.constant 1 : index
    %c1_38 = arith.constant 1 : index
    %c0_39 = arith.constant 0 : index
    %c0_40 = arith.constant 0 : index
    %32 = vector.load %arg3[%c1_37, %c1_38, %c0_39, %c0_40] : memref<3x3x128x128xbf16, #tpu.memory_space<vmem>>, vector<1x1x128x128xbf16>
    %33 = vector.shape_cast %32 : vector<1x1x128x128xbf16> to vector<128x128xbf16>
    %cst_41 = arith.constant dense<0.000000e+00> : vector<128x128xf32>
    %34 = tpu.matmul %31, %33, %cst_41 {dimension_numbers = #tpu.dot_dimension_numbers<[1], [0], [0], [1], [0, 0, 1, 1], [], []>} : vector<128x128xbf16>, vector<128x128xbf16>, vector<128x128xf32> -> vector<128x128xf32>
    %35 = arith.addf %28, %34 : vector<128x128xf32>
    %c0_42 = arith.constant 0 : index
    %c1_43 = arith.constant 1 : index
    %c2_44 = arith.constant 2 : index
    %c0_45 = arith.constant 0 : index
    %36 = vector.load %arg2[%c0_42, %c1_43, %c2_44, %c0_45] : memref<2x10x10x128xf32, #tpu.memory_space<vmem>>, vector<2x8x8x128xf32>
    %37 = vector.shape_cast %36 : vector<2x8x8x128xf32> to vector<128x128xf32>
    %38 = arith.truncf %37 : vector<128x128xf32> to vector<128x128xbf16>
    %c1_46 = arith.constant 1 : index
    %c2_47 = arith.constant 2 : index
    %c0_48 = arith.constant 0 : index
    %c0_49 = arith.constant 0 : index
    %39 = vector.load %arg3[%c1_46, %c2_47, %c0_48, %c0_49] : memref<3x3x128x128xbf16, #tpu.memory_space<vmem>>, vector<1x1x128x128xbf16>
    %40 = vector.shape_cast %39 : vector<1x1x128x128xbf16> to vector<128x128xbf16>
    %cst_50 = arith.constant dense<0.000000e+00> : vector<128x128xf32>
    %41 = tpu.matmul %38, %40, %cst_50 {dimension_numbers = #tpu.dot_dimension_numbers<[1], [0], [0], [1], [0, 0, 1, 1], [], []>} : vector<128x128xbf16>, vector<128x128xbf16>, vector<128x128xf32> -> vector<128x128xf32>
    %42 = arith.addf %35, %41 : vector<128x128xf32>
    %c0_51 = arith.constant 0 : index
    %c2_52 = arith.constant 2 : index
    %c0_53 = arith.constant 0 : index
    %c0_54 = arith.constant 0 : index
    %43 = vector.load %arg2[%c0_51, %c2_52, %c0_53, %c0_54] : memref<2x10x10x128xf32, #tpu.memory_space<vmem>>, vector<2x8x8x128xf32>
    %44 = vector.shape_cast %43 : vector<2x8x8x128xf32> to vector<128x128xf32>
    %45 = arith.truncf %44 : vector<128x128xf32> to vector<128x128xbf16>
    %c2_55 = arith.constant 2 : index
    %c0_56 = arith.constant 0 : index
    %c0_57 = arith.constant 0 : index
    %c0_58 = arith.constant 0 : index
    %46 = vector.load %arg3[%c2_55, %c0_56, %c0_57, %c0_58] : memref<3x3x128x128xbf16, #tpu.memory_space<vmem>>, vector<1x1x128x128xbf16>
    %47 = vector.shape_cast %46 : vector<1x1x128x128xbf16> to vector<128x128xbf16>
    %cst_59 = arith.constant dense<0.000000e+00> : vector<128x128xf32>
    %48 = tpu.matmul %45, %47, %cst_59 {dimension_numbers = #tpu.dot_dimension_numbers<[1], [0], [0], [1], [0, 0, 1, 1], [], []>} : vector<128x128xbf16>, vector<128x128xbf16>, vector<128x128xf32> -> vector<128x128xf32>
    %49 = arith.addf %42, %48 : vector<128x128xf32>
    %c0_60 = arith.constant 0 : index
    %c2_61 = arith.constant 2 : index
    %c1_62 = arith.constant 1 : index
    %c0_63 = arith.constant 0 : index
    %50 = vector.load %arg2[%c0_60, %c2_61, %c1_62, %c0_63] : memref<2x10x10x128xf32, #tpu.memory_space<vmem>>, vector<2x8x8x128xf32>
    %51 = vector.shape_cast %50 : vector<2x8x8x128xf32> to vector<128x128xf32>
    %52 = arith.truncf %51 : vector<128x128xf32> to vector<128x128xbf16>
    %c2_64 = arith.constant 2 : index
    %c1_65 = arith.constant 1 : index
    %c0_66 = arith.constant 0 : index
    %c0_67 = arith.constant 0 : index
    %53 = vector.load %arg3[%c2_64, %c1_65, %c0_66, %c0_67] : memref<3x3x128x128xbf16, #tpu.memory_space<vmem>>, vector<1x1x128x128xbf16>
    %54 = vector.shape_cast %53 : vector<1x1x128x128xbf16> to vector<128x128xbf16>
    %cst_68 = arith.constant dense<0.000000e+00> : vector<128x128xf32>
    %55 = tpu.matmul %52, %54, %cst_68 {dimension_numbers = #tpu.dot_dimension_numbers<[1], [0], [0], [1], [0, 0, 1, 1], [], []>} : vector<128x128xbf16>, vector<128x128xbf16>, vector<128x128xf32> -> vector<128x128xf32>
    %56 = arith.addf %49, %55 : vector<128x128xf32>
    %c0_69 = arith.constant 0 : index
    %c2_70 = arith.constant 2 : index
    %c2_71 = arith.constant 2 : index
    %c0_72 = arith.constant 0 : index
    %57 = vector.load %arg2[%c0_69, %c2_70, %c2_71, %c0_72] : memref<2x10x10x128xf32, #tpu.memory_space<vmem>>, vector<2x8x8x128xf32>
    %58 = vector.shape_cast %57 : vector<2x8x8x128xf32> to vector<128x128xf32>
    %59 = arith.truncf %58 : vector<128x128xf32> to vector<128x128xbf16>
    %c2_73 = arith.constant 2 : index
    %c2_74 = arith.constant 2 : index
    %c0_75 = arith.constant 0 : index
    %c0_76 = arith.constant 0 : index
    %60 = vector.load %arg3[%c2_73, %c2_74, %c0_75, %c0_76] : memref<3x3x128x128xbf16, #tpu.memory_space<vmem>>, vector<1x1x128x128xbf16>
    %61 = vector.shape_cast %60 : vector<1x1x128x128xbf16> to vector<128x128xbf16>
    %cst_77 = arith.constant dense<0.000000e+00> : vector<128x128xf32>
    %62 = tpu.matmul %59, %61, %cst_77 {dimension_numbers = #tpu.dot_dimension_numbers<[1], [0], [0], [1], [0, 0, 1, 1], [], []>} : vector<128x128xbf16>, vector<128x128xbf16>, vector<128x128xf32> -> vector<128x128xf32>
    %63 = arith.addf %56, %62 : vector<128x128xf32>
    %c0_i32 = arith.constant 0 : i32
    %64 = arith.cmpi eq, %arg1, %c0_i32 : i32
    %65 = arith.extui %64 : i1 to i32
    %c0_i32_78 = arith.constant 0 : i32
    %66 = arith.cmpi ne, %65, %c0_i32_78 : i32
    scf.if %66 {
      %c0_83 = arith.constant 0 : index
      %c0_84 = arith.constant 0 : index
      %73 = vector.load %arg4[%c0_83, %c0_84] : memref<128x128xf32, #tpu.memory_space<vmem>>, vector<128x128xf32>
      tpu.vector_store %arg4[%c0_83, %c0_84], %63 {strides = array<i32>} : memref<128x128xf32, #tpu.memory_space<vmem>>, vector<128x128xf32>,
    } else {
    }
    %c0_i32_79 = arith.constant 0 : i32
    %67 = arith.cmpi sgt, %arg1, %c0_i32_79 : i32
    %68 = arith.extui %67 : i1 to i32
    %c0_i32_80 = arith.constant 0 : i32
    %69 = arith.cmpi ne, %68, %c0_i32_80 : i32
    scf.if %69 {
      %c0_83 = arith.constant 0 : index
      %c0_84 = arith.constant 0 : index
      %73 = vector.load %arg4[%c0_83, %c0_84] : memref<128x128xf32, #tpu.memory_space<vmem>>, vector<128x128xf32>
      %74 = arith.addf %73, %63 : vector<128x128xf32>
      %c0_85 = arith.constant 0 : index
      %c0_86 = arith.constant 0 : index
      %75 = vector.load %arg4[%c0_85, %c0_86] : memref<128x128xf32, #tpu.memory_space<vmem>>, vector<128x128xf32>
      tpu.vector_store %arg4[%c0_85, %c0_86], %74 {strides = array<i32>} : memref<128x128xf32, #tpu.memory_space<vmem>>, vector<128x128xf32>,
    } else {
    }
    %c0_i32_81 = arith.constant 0 : i32
    %70 = arith.cmpi eq, %arg1, %c0_i32_81 : i32
    %71 = arith.extui %70 : i1 to i32
    %c0_i32_82 = arith.constant 0 : i32
    %72 = arith.cmpi ne, %71, %c0_i32_82 : i32
    scf.if %72 {
      %c0_83 = arith.constant 0 : index
      %c0_84 = arith.constant 0 : index
      %73 = vector.load %arg4[%c0_83, %c0_84] : memref<128x128xf32, #tpu.memory_space<vmem>>, vector<128x128xf32>
      %cst_85 = arith.constant 0.000000e+00 : f32
      %74 = vector.broadcast %cst_85 : f32 to vector<128x128xf32>
      %75 = arith.maximumf %73, %74 : vector<128x128xf32>
      %c0_86 = arith.constant 0 : index
      %c0_87 = arith.constant 0 : index
      %76 = vector.load %arg4[%c0_86, %c0_87] : memref<128x128xf32, #tpu.memory_space<vmem>>, vector<128x128xf32>
      tpu.vector_store %arg4[%c0_86, %c0_87], %75 {strides = array<i32>} : memref<128x128xf32, #tpu.memory_space<vmem>>, vector<128x128xf32>,
    } else {
    }
    return
  }
  func.func @transform_0(%arg0: i32, %arg1: i32) -> (i32, i32, i32, i32) {
    %c0_i32 = arith.constant 0 : i32
    %c0_i32_0 = arith.constant 0 : i32
    %c0_i32_1 = arith.constant 0 : i32
    %c0_i32_2 = arith.constant 0 : i32
    return %c0_i32, %c0_i32_0, %c0_i32_1, %arg1 : i32, i32, i32, i32
  }
  func.func @transform_1(%arg0: i32, %arg1: i32) -> (i32, i32, i32, i32) {
    %c0_i32 = arith.constant 0 : i32
    %c0_i32_0 = arith.constant 0 : i32
    %c0_i32_1 = arith.constant 0 : i32
    return %c0_i32, %c0_i32_0, %arg1, %arg0 : i32, i32, i32, i32
  }
  func.func @transform_2(%arg0: i32, %arg1: i32) -> (i32, i32) {
    %c0_i32 = arith.constant 0 : i32
    %c0_i32_0 = arith.constant 0 : i32
    return %c0_i32, %arg0 : i32, i32
  }
}

module attributes {stable_mosaic.version = 11 : i64} {
  func.func @_conv_kernel(%arg0: i32, %arg1: i32, %arg2: memref<2x6x10x128xf32, #tpu.memory_space<vmem>>, %arg3: memref<3x3x128x128xbf16, #tpu.memory_space<vmem>>, %arg4: memref<1x128xf32, #tpu.memory_space<vmem>>, %arg5: memref<1x128xf32, #tpu.memory_space<vmem>>, %arg6: memref<64x128xf32, #tpu.memory_space<vmem>>) attributes {dimension_semantics = [#tpu.dimension_semantics<parallel>, #tpu.dimension_semantics<arbitrary>], iteration_bounds = array<i64: 1, 1>, scalar_prefetch = 0 : i64, scratch_operands = 0 : i64, tpu.core_type = #tpu.core_type<tc>, window_params = [{transform_indices = @transform_0, window_bounds = array<i64: 2, 6, 10, 128>}, {transform_indices = @transform_1, window_bounds = array<i64: 3, 3, 128, 128>}, {transform_indices = @transform_2, window_bounds = array<i64: 1, 128>}, {transform_indices = @transform_3, window_bounds = array<i64: 1, 128>}, {transform_indices = @transform_4, window_bounds = array<i64: 64, 128>}]} {
    %cst = arith.constant 0.000000e+00 : f32
    %0 = vector.broadcast %cst : f32 to vector<64x128xf32>
    %c0 = arith.constant 0 : index
    %c0_0 = arith.constant 0 : index
    %c0_1 = arith.constant 0 : index
    %c0_2 = arith.constant 0 : index
    %1 = vector.load %arg2[%c0, %c0_0, %c0_1, %c0_2] : memref<2x6x10x128xf32, #tpu.memory_space<vmem>>, vector<2x4x8x128xf32>
    %2 = vector.shape_cast %1 : vector<2x4x8x128xf32> to vector<64x128xf32>
    %3 = arith.truncf %2 : vector<64x128xf32> to vector<64x128xbf16>
    %c0_3 = arith.constant 0 : index
    %c0_4 = arith.constant 0 : index
    %c0_5 = arith.constant 0 : index
    %c0_6 = arith.constant 0 : index
    %4 = vector.load %arg3[%c0_3, %c0_4, %c0_5, %c0_6] : memref<3x3x128x128xbf16, #tpu.memory_space<vmem>>, vector<1x1x128x128xbf16>
    %5 = vector.shape_cast %4 : vector<1x1x128x128xbf16> to vector<128x128xbf16>
    %cst_7 = arith.constant dense<0.000000e+00> : vector<64x128xf32>
    %6 = tpu.matmul %3, %5, %cst_7 {dimension_numbers = #tpu.dot_dimension_numbers<[1], [0], [0], [1], [0, 0, 1, 1], [], []>} : vector<64x128xbf16>, vector<128x128xbf16>, vector<64x128xf32> -> vector<64x128xf32>
    %7 = arith.addf %0, %6 : vector<64x128xf32>
    %c0_8 = arith.constant 0 : index
    %c0_9 = arith.constant 0 : index
    %c1 = arith.constant 1 : index
    %c0_10 = arith.constant 0 : index
    %8 = vector.load %arg2[%c0_8, %c0_9, %c1, %c0_10] : memref<2x6x10x128xf32, #tpu.memory_space<vmem>>, vector<2x4x8x128xf32>
    %9 = vector.shape_cast %8 : vector<2x4x8x128xf32> to vector<64x128xf32>
    %10 = arith.truncf %9 : vector<64x128xf32> to vector<64x128xbf16>
    %c0_11 = arith.constant 0 : index
    %c1_12 = arith.constant 1 : index
    %c0_13 = arith.constant 0 : index
    %c0_14 = arith.constant 0 : index
    %11 = vector.load %arg3[%c0_11, %c1_12, %c0_13, %c0_14] : memref<3x3x128x128xbf16, #tpu.memory_space<vmem>>, vector<1x1x128x128xbf16>
    %12 = vector.shape_cast %11 : vector<1x1x128x128xbf16> to vector<128x128xbf16>
    %cst_15 = arith.constant dense<0.000000e+00> : vector<64x128xf32>
    %13 = tpu.matmul %10, %12, %cst_15 {dimension_numbers = #tpu.dot_dimension_numbers<[1], [0], [0], [1], [0, 0, 1, 1], [], []>} : vector<64x128xbf16>, vector<128x128xbf16>, vector<64x128xf32> -> vector<64x128xf32>
    %14 = arith.addf %7, %13 : vector<64x128xf32>
    %c0_16 = arith.constant 0 : index
    %c0_17 = arith.constant 0 : index
    %c2 = arith.constant 2 : index
    %c0_18 = arith.constant 0 : index
    %15 = vector.load %arg2[%c0_16, %c0_17, %c2, %c0_18] : memref<2x6x10x128xf32, #tpu.memory_space<vmem>>, vector<2x4x8x128xf32>
    %16 = vector.shape_cast %15 : vector<2x4x8x128xf32> to vector<64x128xf32>
    %17 = arith.truncf %16 : vector<64x128xf32> to vector<64x128xbf16>
    %c0_19 = arith.constant 0 : index
    %c2_20 = arith.constant 2 : index
    %c0_21 = arith.constant 0 : index
    %c0_22 = arith.constant 0 : index
    %18 = vector.load %arg3[%c0_19, %c2_20, %c0_21, %c0_22] : memref<3x3x128x128xbf16, #tpu.memory_space<vmem>>, vector<1x1x128x128xbf16>
    %19 = vector.shape_cast %18 : vector<1x1x128x128xbf16> to vector<128x128xbf16>
    %cst_23 = arith.constant dense<0.000000e+00> : vector<64x128xf32>
    %20 = tpu.matmul %17, %19, %cst_23 {dimension_numbers = #tpu.dot_dimension_numbers<[1], [0], [0], [1], [0, 0, 1, 1], [], []>} : vector<64x128xbf16>, vector<128x128xbf16>, vector<64x128xf32> -> vector<64x128xf32>
    %21 = arith.addf %14, %20 : vector<64x128xf32>
    %c0_24 = arith.constant 0 : index
    %c1_25 = arith.constant 1 : index
    %c0_26 = arith.constant 0 : index
    %c0_27 = arith.constant 0 : index
    %22 = vector.load %arg2[%c0_24, %c1_25, %c0_26, %c0_27] : memref<2x6x10x128xf32, #tpu.memory_space<vmem>>, vector<2x4x8x128xf32>
    %23 = vector.shape_cast %22 : vector<2x4x8x128xf32> to vector<64x128xf32>
    %24 = arith.truncf %23 : vector<64x128xf32> to vector<64x128xbf16>
    %c1_28 = arith.constant 1 : index
    %c0_29 = arith.constant 0 : index
    %c0_30 = arith.constant 0 : index
    %c0_31 = arith.constant 0 : index
    %25 = vector.load %arg3[%c1_28, %c0_29, %c0_30, %c0_31] : memref<3x3x128x128xbf16, #tpu.memory_space<vmem>>, vector<1x1x128x128xbf16>
    %26 = vector.shape_cast %25 : vector<1x1x128x128xbf16> to vector<128x128xbf16>
    %cst_32 = arith.constant dense<0.000000e+00> : vector<64x128xf32>
    %27 = tpu.matmul %24, %26, %cst_32 {dimension_numbers = #tpu.dot_dimension_numbers<[1], [0], [0], [1], [0, 0, 1, 1], [], []>} : vector<64x128xbf16>, vector<128x128xbf16>, vector<64x128xf32> -> vector<64x128xf32>
    %28 = arith.addf %21, %27 : vector<64x128xf32>
    %c0_33 = arith.constant 0 : index
    %c1_34 = arith.constant 1 : index
    %c1_35 = arith.constant 1 : index
    %c0_36 = arith.constant 0 : index
    %29 = vector.load %arg2[%c0_33, %c1_34, %c1_35, %c0_36] : memref<2x6x10x128xf32, #tpu.memory_space<vmem>>, vector<2x4x8x128xf32>
    %30 = vector.shape_cast %29 : vector<2x4x8x128xf32> to vector<64x128xf32>
    %31 = arith.truncf %30 : vector<64x128xf32> to vector<64x128xbf16>
    %c1_37 = arith.constant 1 : index
    %c1_38 = arith.constant 1 : index
    %c0_39 = arith.constant 0 : index
    %c0_40 = arith.constant 0 : index
    %32 = vector.load %arg3[%c1_37, %c1_38, %c0_39, %c0_40] : memref<3x3x128x128xbf16, #tpu.memory_space<vmem>>, vector<1x1x128x128xbf16>
    %33 = vector.shape_cast %32 : vector<1x1x128x128xbf16> to vector<128x128xbf16>
    %cst_41 = arith.constant dense<0.000000e+00> : vector<64x128xf32>
    %34 = tpu.matmul %31, %33, %cst_41 {dimension_numbers = #tpu.dot_dimension_numbers<[1], [0], [0], [1], [0, 0, 1, 1], [], []>} : vector<64x128xbf16>, vector<128x128xbf16>, vector<64x128xf32> -> vector<64x128xf32>
    %35 = arith.addf %28, %34 : vector<64x128xf32>
    %c0_42 = arith.constant 0 : index
    %c1_43 = arith.constant 1 : index
    %c2_44 = arith.constant 2 : index
    %c0_45 = arith.constant 0 : index
    %36 = vector.load %arg2[%c0_42, %c1_43, %c2_44, %c0_45] : memref<2x6x10x128xf32, #tpu.memory_space<vmem>>, vector<2x4x8x128xf32>
    %37 = vector.shape_cast %36 : vector<2x4x8x128xf32> to vector<64x128xf32>
    %38 = arith.truncf %37 : vector<64x128xf32> to vector<64x128xbf16>
    %c1_46 = arith.constant 1 : index
    %c2_47 = arith.constant 2 : index
    %c0_48 = arith.constant 0 : index
    %c0_49 = arith.constant 0 : index
    %39 = vector.load %arg3[%c1_46, %c2_47, %c0_48, %c0_49] : memref<3x3x128x128xbf16, #tpu.memory_space<vmem>>, vector<1x1x128x128xbf16>
    %40 = vector.shape_cast %39 : vector<1x1x128x128xbf16> to vector<128x128xbf16>
    %cst_50 = arith.constant dense<0.000000e+00> : vector<64x128xf32>
    %41 = tpu.matmul %38, %40, %cst_50 {dimension_numbers = #tpu.dot_dimension_numbers<[1], [0], [0], [1], [0, 0, 1, 1], [], []>} : vector<64x128xbf16>, vector<128x128xbf16>, vector<64x128xf32> -> vector<64x128xf32>
    %42 = arith.addf %35, %41 : vector<64x128xf32>
    %c0_51 = arith.constant 0 : index
    %c2_52 = arith.constant 2 : index
    %c0_53 = arith.constant 0 : index
    %c0_54 = arith.constant 0 : index
    %43 = vector.load %arg2[%c0_51, %c2_52, %c0_53, %c0_54] : memref<2x6x10x128xf32, #tpu.memory_space<vmem>>, vector<2x4x8x128xf32>
    %44 = vector.shape_cast %43 : vector<2x4x8x128xf32> to vector<64x128xf32>
    %45 = arith.truncf %44 : vector<64x128xf32> to vector<64x128xbf16>
    %c2_55 = arith.constant 2 : index
    %c0_56 = arith.constant 0 : index
    %c0_57 = arith.constant 0 : index
    %c0_58 = arith.constant 0 : index
    %46 = vector.load %arg3[%c2_55, %c0_56, %c0_57, %c0_58] : memref<3x3x128x128xbf16, #tpu.memory_space<vmem>>, vector<1x1x128x128xbf16>
    %47 = vector.shape_cast %46 : vector<1x1x128x128xbf16> to vector<128x128xbf16>
    %cst_59 = arith.constant dense<0.000000e+00> : vector<64x128xf32>
    %48 = tpu.matmul %45, %47, %cst_59 {dimension_numbers = #tpu.dot_dimension_numbers<[1], [0], [0], [1], [0, 0, 1, 1], [], []>} : vector<64x128xbf16>, vector<128x128xbf16>, vector<64x128xf32> -> vector<64x128xf32>
    %49 = arith.addf %42, %48 : vector<64x128xf32>
    %c0_60 = arith.constant 0 : index
    %c2_61 = arith.constant 2 : index
    %c1_62 = arith.constant 1 : index
    %c0_63 = arith.constant 0 : index
    %50 = vector.load %arg2[%c0_60, %c2_61, %c1_62, %c0_63] : memref<2x6x10x128xf32, #tpu.memory_space<vmem>>, vector<2x4x8x128xf32>
    %51 = vector.shape_cast %50 : vector<2x4x8x128xf32> to vector<64x128xf32>
    %52 = arith.truncf %51 : vector<64x128xf32> to vector<64x128xbf16>
    %c2_64 = arith.constant 2 : index
    %c1_65 = arith.constant 1 : index
    %c0_66 = arith.constant 0 : index
    %c0_67 = arith.constant 0 : index
    %53 = vector.load %arg3[%c2_64, %c1_65, %c0_66, %c0_67] : memref<3x3x128x128xbf16, #tpu.memory_space<vmem>>, vector<1x1x128x128xbf16>
    %54 = vector.shape_cast %53 : vector<1x1x128x128xbf16> to vector<128x128xbf16>
    %cst_68 = arith.constant dense<0.000000e+00> : vector<64x128xf32>
    %55 = tpu.matmul %52, %54, %cst_68 {dimension_numbers = #tpu.dot_dimension_numbers<[1], [0], [0], [1], [0, 0, 1, 1], [], []>} : vector<64x128xbf16>, vector<128x128xbf16>, vector<64x128xf32> -> vector<64x128xf32>
    %56 = arith.addf %49, %55 : vector<64x128xf32>
    %c0_69 = arith.constant 0 : index
    %c2_70 = arith.constant 2 : index
    %c2_71 = arith.constant 2 : index
    %c0_72 = arith.constant 0 : index
    %57 = vector.load %arg2[%c0_69, %c2_70, %c2_71, %c0_72] : memref<2x6x10x128xf32, #tpu.memory_space<vmem>>, vector<2x4x8x128xf32>
    %58 = vector.shape_cast %57 : vector<2x4x8x128xf32> to vector<64x128xf32>
    %59 = arith.truncf %58 : vector<64x128xf32> to vector<64x128xbf16>
    %c2_73 = arith.constant 2 : index
    %c2_74 = arith.constant 2 : index
    %c0_75 = arith.constant 0 : index
    %c0_76 = arith.constant 0 : index
    %60 = vector.load %arg3[%c2_73, %c2_74, %c0_75, %c0_76] : memref<3x3x128x128xbf16, #tpu.memory_space<vmem>>, vector<1x1x128x128xbf16>
    %61 = vector.shape_cast %60 : vector<1x1x128x128xbf16> to vector<128x128xbf16>
    %cst_77 = arith.constant dense<0.000000e+00> : vector<64x128xf32>
    %62 = tpu.matmul %59, %61, %cst_77 {dimension_numbers = #tpu.dot_dimension_numbers<[1], [0], [0], [1], [0, 0, 1, 1], [], []>} : vector<64x128xbf16>, vector<128x128xbf16>, vector<64x128xf32> -> vector<64x128xf32>
    %63 = arith.addf %56, %62 : vector<64x128xf32>
    %c0_i32 = arith.constant 0 : i32
    %64 = arith.cmpi eq, %arg1, %c0_i32 : i32
    %65 = arith.extui %64 : i1 to i32
    %c0_i32_78 = arith.constant 0 : i32
    %66 = arith.cmpi ne, %65, %c0_i32_78 : i32
    scf.if %66 {
      %c0_83 = arith.constant 0 : index
      %c0_84 = arith.constant 0 : index
      %73 = vector.load %arg6[%c0_83, %c0_84] : memref<64x128xf32, #tpu.memory_space<vmem>>, vector<64x128xf32>
      tpu.vector_store %arg6[%c0_83, %c0_84], %63 {strides = array<i32>} : memref<64x128xf32, #tpu.memory_space<vmem>>, vector<64x128xf32>,
    } else {
    }
    %c0_i32_79 = arith.constant 0 : i32
    %67 = arith.cmpi sgt, %arg1, %c0_i32_79 : i32
    %68 = arith.extui %67 : i1 to i32
    %c0_i32_80 = arith.constant 0 : i32
    %69 = arith.cmpi ne, %68, %c0_i32_80 : i32
    scf.if %69 {
      %c0_83 = arith.constant 0 : index
      %c0_84 = arith.constant 0 : index
      %73 = vector.load %arg6[%c0_83, %c0_84] : memref<64x128xf32, #tpu.memory_space<vmem>>, vector<64x128xf32>
      %74 = arith.addf %73, %63 : vector<64x128xf32>
      %c0_85 = arith.constant 0 : index
      %c0_86 = arith.constant 0 : index
      %75 = vector.load %arg6[%c0_85, %c0_86] : memref<64x128xf32, #tpu.memory_space<vmem>>, vector<64x128xf32>
      tpu.vector_store %arg6[%c0_85, %c0_86], %74 {strides = array<i32>} : memref<64x128xf32, #tpu.memory_space<vmem>>, vector<64x128xf32>,
    } else {
    }
    %c0_i32_81 = arith.constant 0 : i32
    %70 = arith.cmpi eq, %arg1, %c0_i32_81 : i32
    %71 = arith.extui %70 : i1 to i32
    %c0_i32_82 = arith.constant 0 : i32
    %72 = arith.cmpi ne, %71, %c0_i32_82 : i32
    scf.if %72 {
      %c0_83 = arith.constant 0 : index
      %c0_84 = arith.constant 0 : index
      %73 = vector.load %arg6[%c0_83, %c0_84] : memref<64x128xf32, #tpu.memory_space<vmem>>, vector<64x128xf32>
      %cst_85 = arith.constant 0.000000e+00 : f32
      %74 = vector.broadcast %cst_85 : f32 to vector<64x128xf32>
      %75 = arith.maximumf %73, %74 : vector<64x128xf32>
      %c0_86 = arith.constant 0 : index
      %c0_87 = arith.constant 0 : index
      %76 = vector.load %arg4[%c0_86, %c0_87] : memref<1x128xf32, #tpu.memory_space<vmem>>, vector<1x128xf32>
      %77 = vector.broadcast %76 : vector<1x128xf32> to vector<64x128xf32>
      %78 = arith.mulf %75, %77 : vector<64x128xf32>
      %c0_88 = arith.constant 0 : index
      %c0_89 = arith.constant 0 : index
      %79 = vector.load %arg5[%c0_88, %c0_89] : memref<1x128xf32, #tpu.memory_space<vmem>>, vector<1x128xf32>
      %80 = vector.broadcast %79 : vector<1x128xf32> to vector<64x128xf32>
      %81 = arith.addf %78, %80 : vector<64x128xf32>
      %c0_90 = arith.constant 0 : index
      %c0_91 = arith.constant 0 : index
      %82 = vector.load %arg6[%c0_90, %c0_91] : memref<64x128xf32, #tpu.memory_space<vmem>>, vector<64x128xf32>
      tpu.vector_store %arg6[%c0_90, %c0_91], %81 {strides = array<i32>} : memref<64x128xf32, #tpu.memory_space<vmem>>, vector<64x128xf32>,
    } else {
    }
    return
  }
  func.func @transform_0(%arg0: i32, %arg1: i32) -> (i32, i32, i32, i32) {
    %c0_i32 = arith.constant 0 : i32
    %c0_i32_0 = arith.constant 0 : i32
    %c0_i32_1 = arith.constant 0 : i32
    %c0_i32_2 = arith.constant 0 : i32
    return %c0_i32, %c0_i32_0, %c0_i32_1, %arg1 : i32, i32, i32, i32
  }
  func.func @transform_1(%arg0: i32, %arg1: i32) -> (i32, i32, i32, i32) {
    %c0_i32 = arith.constant 0 : i32
    %c0_i32_0 = arith.constant 0 : i32
    %c0_i32_1 = arith.constant 0 : i32
    return %c0_i32, %c0_i32_0, %arg1, %arg0 : i32, i32, i32, i32
  }
  func.func @transform_2(%arg0: i32, %arg1: i32) -> (i32, i32) {
    %c0_i32 = arith.constant 0 : i32
    %c0_i32_0 = arith.constant 0 : i32
    return %c0_i32, %arg0 : i32, i32
  }
  func.func @transform_3(%arg0: i32, %arg1: i32) -> (i32, i32) {
    %c0_i32 = arith.constant 0 : i32
    %c0_i32_0 = arith.constant 0 : i32
    return %c0_i32, %arg0 : i32, i32
  }
  func.func @transform_4(%arg0: i32, %arg1: i32) -> (i32, i32) {
    %c0_i32 = arith.constant 0 : i32
    %c0_i32_0 = arith.constant 0 : i32
    return %c0_i32, %arg0 : i32, i32
  }
}

module attributes {stable_mosaic.version = 11 : i64} {
  func.func @_conv_kernel(%arg0: i32, %arg1: i32, %arg2: memref<2x10x10x128xf32, #tpu.memory_space<vmem>>, %arg3: memref<3x3x128x128xbf16, #tpu.memory_space<vmem>>, %arg4: memref<128x128xf32, #tpu.memory_space<vmem>>) attributes {dimension_semantics = [#tpu.dimension_semantics<parallel>, #tpu.dimension_semantics<arbitrary>], iteration_bounds = array<i64: 1, 1>, scalar_prefetch = 0 : i64, scratch_operands = 0 : i64, tpu.core_type = #tpu.core_type<tc>, window_params = [{transform_indices = @transform_0, window_bounds = array<i64: 2, 10, 10, 128>}, {transform_indices = @transform_1, window_bounds = array<i64: 3, 3, 128, 128>}, {transform_indices = @transform_2, window_bounds = array<i64: 128, 128>}]} {
    %cst = arith.constant 0.000000e+00 : f32
    %0 = vector.broadcast %cst : f32 to vector<128x128xf32>
    %c0 = arith.constant 0 : index
    %c0_0 = arith.constant 0 : index
    %c0_1 = arith.constant 0 : index
    %c0_2 = arith.constant 0 : index
    %1 = vector.load %arg2[%c0, %c0_0, %c0_1, %c0_2] : memref<2x10x10x128xf32, #tpu.memory_space<vmem>>, vector<2x8x8x128xf32>
    %2 = vector.shape_cast %1 : vector<2x8x8x128xf32> to vector<128x128xf32>
    %3 = arith.truncf %2 : vector<128x128xf32> to vector<128x128xbf16>
    %c0_3 = arith.constant 0 : index
    %c0_4 = arith.constant 0 : index
    %c0_5 = arith.constant 0 : index
    %c0_6 = arith.constant 0 : index
    %4 = vector.load %arg3[%c0_3, %c0_4, %c0_5, %c0_6] : memref<3x3x128x128xbf16, #tpu.memory_space<vmem>>, vector<1x1x128x128xbf16>
    %5 = vector.shape_cast %4 : vector<1x1x128x128xbf16> to vector<128x128xbf16>
    %cst_7 = arith.constant dense<0.000000e+00> : vector<128x128xf32>
    %6 = tpu.matmul %3, %5, %cst_7 {dimension_numbers = #tpu.dot_dimension_numbers<[1], [0], [0], [1], [0, 0, 1, 1], [], []>} : vector<128x128xbf16>, vector<128x128xbf16>, vector<128x128xf32> -> vector<128x128xf32>
    %7 = arith.addf %0, %6 : vector<128x128xf32>
    %c0_8 = arith.constant 0 : index
    %c0_9 = arith.constant 0 : index
    %c1 = arith.constant 1 : index
    %c0_10 = arith.constant 0 : index
    %8 = vector.load %arg2[%c0_8, %c0_9, %c1, %c0_10] : memref<2x10x10x128xf32, #tpu.memory_space<vmem>>, vector<2x8x8x128xf32>
    %9 = vector.shape_cast %8 : vector<2x8x8x128xf32> to vector<128x128xf32>
    %10 = arith.truncf %9 : vector<128x128xf32> to vector<128x128xbf16>
    %c0_11 = arith.constant 0 : index
    %c1_12 = arith.constant 1 : index
    %c0_13 = arith.constant 0 : index
    %c0_14 = arith.constant 0 : index
    %11 = vector.load %arg3[%c0_11, %c1_12, %c0_13, %c0_14] : memref<3x3x128x128xbf16, #tpu.memory_space<vmem>>, vector<1x1x128x128xbf16>
    %12 = vector.shape_cast %11 : vector<1x1x128x128xbf16> to vector<128x128xbf16>
    %cst_15 = arith.constant dense<0.000000e+00> : vector<128x128xf32>
    %13 = tpu.matmul %10, %12, %cst_15 {dimension_numbers = #tpu.dot_dimension_numbers<[1], [0], [0], [1], [0, 0, 1, 1], [], []>} : vector<128x128xbf16>, vector<128x128xbf16>, vector<128x128xf32> -> vector<128x128xf32>
    %14 = arith.addf %7, %13 : vector<128x128xf32>
    %c0_16 = arith.constant 0 : index
    %c0_17 = arith.constant 0 : index
    %c2 = arith.constant 2 : index
    %c0_18 = arith.constant 0 : index
    %15 = vector.load %arg2[%c0_16, %c0_17, %c2, %c0_18] : memref<2x10x10x128xf32, #tpu.memory_space<vmem>>, vector<2x8x8x128xf32>
    %16 = vector.shape_cast %15 : vector<2x8x8x128xf32> to vector<128x128xf32>
    %17 = arith.truncf %16 : vector<128x128xf32> to vector<128x128xbf16>
    %c0_19 = arith.constant 0 : index
    %c2_20 = arith.constant 2 : index
    %c0_21 = arith.constant 0 : index
    %c0_22 = arith.constant 0 : index
    %18 = vector.load %arg3[%c0_19, %c2_20, %c0_21, %c0_22] : memref<3x3x128x128xbf16, #tpu.memory_space<vmem>>, vector<1x1x128x128xbf16>
    %19 = vector.shape_cast %18 : vector<1x1x128x128xbf16> to vector<128x128xbf16>
    %cst_23 = arith.constant dense<0.000000e+00> : vector<128x128xf32>
    %20 = tpu.matmul %17, %19, %cst_23 {dimension_numbers = #tpu.dot_dimension_numbers<[1], [0], [0], [1], [0, 0, 1, 1], [], []>} : vector<128x128xbf16>, vector<128x128xbf16>, vector<128x128xf32> -> vector<128x128xf32>
    %21 = arith.addf %14, %20 : vector<128x128xf32>
    %c0_24 = arith.constant 0 : index
    %c1_25 = arith.constant 1 : index
    %c0_26 = arith.constant 0 : index
    %c0_27 = arith.constant 0 : index
    %22 = vector.load %arg2[%c0_24, %c1_25, %c0_26, %c0_27] : memref<2x10x10x128xf32, #tpu.memory_space<vmem>>, vector<2x8x8x128xf32>
    %23 = vector.shape_cast %22 : vector<2x8x8x128xf32> to vector<128x128xf32>
    %24 = arith.truncf %23 : vector<128x128xf32> to vector<128x128xbf16>
    %c1_28 = arith.constant 1 : index
    %c0_29 = arith.constant 0 : index
    %c0_30 = arith.constant 0 : index
    %c0_31 = arith.constant 0 : index
    %25 = vector.load %arg3[%c1_28, %c0_29, %c0_30, %c0_31] : memref<3x3x128x128xbf16, #tpu.memory_space<vmem>>, vector<1x1x128x128xbf16>
    %26 = vector.shape_cast %25 : vector<1x1x128x128xbf16> to vector<128x128xbf16>
    %cst_32 = arith.constant dense<0.000000e+00> : vector<128x128xf32>
    %27 = tpu.matmul %24, %26, %cst_32 {dimension_numbers = #tpu.dot_dimension_numbers<[1], [0], [0], [1], [0, 0, 1, 1], [], []>} : vector<128x128xbf16>, vector<128x128xbf16>, vector<128x128xf32> -> vector<128x128xf32>
    %28 = arith.addf %21, %27 : vector<128x128xf32>
    %c0_33 = arith.constant 0 : index
    %c1_34 = arith.constant 1 : index
    %c1_35 = arith.constant 1 : index
    %c0_36 = arith.constant 0 : index
    %29 = vector.load %arg2[%c0_33, %c1_34, %c1_35, %c0_36] : memref<2x10x10x128xf32, #tpu.memory_space<vmem>>, vector<2x8x8x128xf32>
    %30 = vector.shape_cast %29 : vector<2x8x8x128xf32> to vector<128x128xf32>
    %31 = arith.truncf %30 : vector<128x128xf32> to vector<128x128xbf16>
    %c1_37 = arith.constant 1 : index
    %c1_38 = arith.constant 1 : index
    %c0_39 = arith.constant 0 : index
    %c0_40 = arith.constant 0 : index
    %32 = vector.load %arg3[%c1_37, %c1_38, %c0_39, %c0_40] : memref<3x3x128x128xbf16, #tpu.memory_space<vmem>>, vector<1x1x128x128xbf16>
    %33 = vector.shape_cast %32 : vector<1x1x128x128xbf16> to vector<128x128xbf16>
    %cst_41 = arith.constant dense<0.000000e+00> : vector<128x128xf32>
    %34 = tpu.matmul %31, %33, %cst_41 {dimension_numbers = #tpu.dot_dimension_numbers<[1], [0], [0], [1], [0, 0, 1, 1], [], []>} : vector<128x128xbf16>, vector<128x128xbf16>, vector<128x128xf32> -> vector<128x128xf32>
    %35 = arith.addf %28, %34 : vector<128x128xf32>
    %c0_42 = arith.constant 0 : index
    %c1_43 = arith.constant 1 : index
    %c2_44 = arith.constant 2 : index
    %c0_45 = arith.constant 0 : index
    %36 = vector.load %arg2[%c0_42, %c1_43, %c2_44, %c0_45] : memref<2x10x10x128xf32, #tpu.memory_space<vmem>>, vector<2x8x8x128xf32>
    %37 = vector.shape_cast %36 : vector<2x8x8x128xf32> to vector<128x128xf32>
    %38 = arith.truncf %37 : vector<128x128xf32> to vector<128x128xbf16>
    %c1_46 = arith.constant 1 : index
    %c2_47 = arith.constant 2 : index
    %c0_48 = arith.constant 0 : index
    %c0_49 = arith.constant 0 : index
    %39 = vector.load %arg3[%c1_46, %c2_47, %c0_48, %c0_49] : memref<3x3x128x128xbf16, #tpu.memory_space<vmem>>, vector<1x1x128x128xbf16>
    %40 = vector.shape_cast %39 : vector<1x1x128x128xbf16> to vector<128x128xbf16>
    %cst_50 = arith.constant dense<0.000000e+00> : vector<128x128xf32>
    %41 = tpu.matmul %38, %40, %cst_50 {dimension_numbers = #tpu.dot_dimension_numbers<[1], [0], [0], [1], [0, 0, 1, 1], [], []>} : vector<128x128xbf16>, vector<128x128xbf16>, vector<128x128xf32> -> vector<128x128xf32>
    %42 = arith.addf %35, %41 : vector<128x128xf32>
    %c0_51 = arith.constant 0 : index
    %c2_52 = arith.constant 2 : index
    %c0_53 = arith.constant 0 : index
    %c0_54 = arith.constant 0 : index
    %43 = vector.load %arg2[%c0_51, %c2_52, %c0_53, %c0_54] : memref<2x10x10x128xf32, #tpu.memory_space<vmem>>, vector<2x8x8x128xf32>
    %44 = vector.shape_cast %43 : vector<2x8x8x128xf32> to vector<128x128xf32>
    %45 = arith.truncf %44 : vector<128x128xf32> to vector<128x128xbf16>
    %c2_55 = arith.constant 2 : index
    %c0_56 = arith.constant 0 : index
    %c0_57 = arith.constant 0 : index
    %c0_58 = arith.constant 0 : index
    %46 = vector.load %arg3[%c2_55, %c0_56, %c0_57, %c0_58] : memref<3x3x128x128xbf16, #tpu.memory_space<vmem>>, vector<1x1x128x128xbf16>
    %47 = vector.shape_cast %46 : vector<1x1x128x128xbf16> to vector<128x128xbf16>
    %cst_59 = arith.constant dense<0.000000e+00> : vector<128x128xf32>
    %48 = tpu.matmul %45, %47, %cst_59 {dimension_numbers = #tpu.dot_dimension_numbers<[1], [0], [0], [1], [0, 0, 1, 1], [], []>} : vector<128x128xbf16>, vector<128x128xbf16>, vector<128x128xf32> -> vector<128x128xf32>
    %49 = arith.addf %42, %48 : vector<128x128xf32>
    %c0_60 = arith.constant 0 : index
    %c2_61 = arith.constant 2 : index
    %c1_62 = arith.constant 1 : index
    %c0_63 = arith.constant 0 : index
    %50 = vector.load %arg2[%c0_60, %c2_61, %c1_62, %c0_63] : memref<2x10x10x128xf32, #tpu.memory_space<vmem>>, vector<2x8x8x128xf32>
    %51 = vector.shape_cast %50 : vector<2x8x8x128xf32> to vector<128x128xf32>
    %52 = arith.truncf %51 : vector<128x128xf32> to vector<128x128xbf16>
    %c2_64 = arith.constant 2 : index
    %c1_65 = arith.constant 1 : index
    %c0_66 = arith.constant 0 : index
    %c0_67 = arith.constant 0 : index
    %53 = vector.load %arg3[%c2_64, %c1_65, %c0_66, %c0_67] : memref<3x3x128x128xbf16, #tpu.memory_space<vmem>>, vector<1x1x128x128xbf16>
    %54 = vector.shape_cast %53 : vector<1x1x128x128xbf16> to vector<128x128xbf16>
    %cst_68 = arith.constant dense<0.000000e+00> : vector<128x128xf32>
    %55 = tpu.matmul %52, %54, %cst_68 {dimension_numbers = #tpu.dot_dimension_numbers<[1], [0], [0], [1], [0, 0, 1, 1], [], []>} : vector<128x128xbf16>, vector<128x128xbf16>, vector<128x128xf32> -> vector<128x128xf32>
    %56 = arith.addf %49, %55 : vector<128x128xf32>
    %c0_69 = arith.constant 0 : index
    %c2_70 = arith.constant 2 : index
    %c2_71 = arith.constant 2 : index
    %c0_72 = arith.constant 0 : index
    %57 = vector.load %arg2[%c0_69, %c2_70, %c2_71, %c0_72] : memref<2x10x10x128xf32, #tpu.memory_space<vmem>>, vector<2x8x8x128xf32>
    %58 = vector.shape_cast %57 : vector<2x8x8x128xf32> to vector<128x128xf32>
    %59 = arith.truncf %58 : vector<128x128xf32> to vector<128x128xbf16>
    %c2_73 = arith.constant 2 : index
    %c2_74 = arith.constant 2 : index
    %c0_75 = arith.constant 0 : index
    %c0_76 = arith.constant 0 : index
    %60 = vector.load %arg3[%c2_73, %c2_74, %c0_75, %c0_76] : memref<3x3x128x128xbf16, #tpu.memory_space<vmem>>, vector<1x1x128x128xbf16>
    %61 = vector.shape_cast %60 : vector<1x1x128x128xbf16> to vector<128x128xbf16>
    %cst_77 = arith.constant dense<0.000000e+00> : vector<128x128xf32>
    %62 = tpu.matmul %59, %61, %cst_77 {dimension_numbers = #tpu.dot_dimension_numbers<[1], [0], [0], [1], [0, 0, 1, 1], [], []>} : vector<128x128xbf16>, vector<128x128xbf16>, vector<128x128xf32> -> vector<128x128xf32>
    %63 = arith.addf %56, %62 : vector<128x128xf32>
    %c0_i32 = arith.constant 0 : i32
    %64 = arith.cmpi eq, %arg1, %c0_i32 : i32
    %65 = arith.extui %64 : i1 to i32
    %c0_i32_78 = arith.constant 0 : i32
    %66 = arith.cmpi ne, %65, %c0_i32_78 : i32
    scf.if %66 {
      %c0_83 = arith.constant 0 : index
      %c0_84 = arith.constant 0 : index
      %73 = vector.load %arg4[%c0_83, %c0_84] : memref<128x128xf32, #tpu.memory_space<vmem>>, vector<128x128xf32>
      tpu.vector_store %arg4[%c0_83, %c0_84], %63 {strides = array<i32>} : memref<128x128xf32, #tpu.memory_space<vmem>>, vector<128x128xf32>,
    } else {
    }
    %c0_i32_79 = arith.constant 0 : i32
    %67 = arith.cmpi sgt, %arg1, %c0_i32_79 : i32
    %68 = arith.extui %67 : i1 to i32
    %c0_i32_80 = arith.constant 0 : i32
    %69 = arith.cmpi ne, %68, %c0_i32_80 : i32
    scf.if %69 {
      %c0_83 = arith.constant 0 : index
      %c0_84 = arith.constant 0 : index
      %73 = vector.load %arg4[%c0_83, %c0_84] : memref<128x128xf32, #tpu.memory_space<vmem>>, vector<128x128xf32>
      %74 = arith.addf %73, %63 : vector<128x128xf32>
      %c0_85 = arith.constant 0 : index
      %c0_86 = arith.constant 0 : index
      %75 = vector.load %arg4[%c0_85, %c0_86] : memref<128x128xf32, #tpu.memory_space<vmem>>, vector<128x128xf32>
      tpu.vector_store %arg4[%c0_85, %c0_86], %74 {strides = array<i32>} : memref<128x128xf32, #tpu.memory_space<vmem>>, vector<128x128xf32>,
    } else {
    }
    %c0_i32_81 = arith.constant 0 : i32
    %70 = arith.cmpi eq, %arg1, %c0_i32_81 : i32
    %71 = arith.extui %70 : i1 to i32
    %c0_i32_82 = arith.constant 0 : i32
    %72 = arith.cmpi ne, %71, %c0_i32_82 : i32
    scf.if %72 {
      %c0_83 = arith.constant 0 : index
      %c0_84 = arith.constant 0 : index
      %73 = vector.load %arg4[%c0_83, %c0_84] : memref<128x128xf32, #tpu.memory_space<vmem>>, vector<128x128xf32>
      %c0_85 = arith.constant 0 : index
      %c0_86 = arith.constant 0 : index
      %74 = vector.load %arg4[%c0_85, %c0_86] : memref<128x128xf32, #tpu.memory_space<vmem>>, vector<128x128xf32>
      tpu.vector_store %arg4[%c0_85, %c0_86], %73 {strides = array<i32>} : memref<128x128xf32, #tpu.memory_space<vmem>>, vector<128x128xf32>,
    } else {
    }
    return
  }
  func.func @transform_0(%arg0: i32, %arg1: i32) -> (i32, i32, i32, i32) {
    %c0_i32 = arith.constant 0 : i32
    %c0_i32_0 = arith.constant 0 : i32
    %c0_i32_1 = arith.constant 0 : i32
    %c0_i32_2 = arith.constant 0 : i32
    return %c0_i32, %c0_i32_0, %c0_i32_1, %arg1 : i32, i32, i32, i32
  }
  func.func @transform_1(%arg0: i32, %arg1: i32) -> (i32, i32, i32, i32) {
    %c0_i32 = arith.constant 0 : i32
    %c0_i32_0 = arith.constant 0 : i32
    %c0_i32_1 = arith.constant 0 : i32
    return %c0_i32, %c0_i32_0, %arg1, %arg0 : i32, i32, i32, i32
  }
  func.func @transform_2(%arg0: i32, %arg1: i32) -> (i32, i32) {
    %c0_i32 = arith.constant 0 : i32
    %c0_i32_0 = arith.constant 0 : i32
    return %c0_i32, %arg0 : i32, i32
  }
}

module attributes {stable_mosaic.version = 11 : i64} {
  func.func @_conv_kernel(%arg0: i32, %arg1: i32, %arg2: memref<2x10x10x128xf32, #tpu.memory_space<vmem>>, %arg3: memref<3x3x128x128xbf16, #tpu.memory_space<vmem>>, %arg4: memref<128x128xf32, #tpu.memory_space<vmem>>) attributes {dimension_semantics = [#tpu.dimension_semantics<parallel>, #tpu.dimension_semantics<arbitrary>], iteration_bounds = array<i64: 1, 1>, scalar_prefetch = 0 : i64, scratch_operands = 0 : i64, tpu.core_type = #tpu.core_type<tc>, window_params = [{transform_indices = @transform_0, window_bounds = array<i64: 2, 10, 10, 128>}, {transform_indices = @transform_1, window_bounds = array<i64: 3, 3, 128, 128>}, {transform_indices = @transform_2, window_bounds = array<i64: 128, 128>}]} {
    %cst = arith.constant 0.000000e+00 : f32
    %0 = vector.broadcast %cst : f32 to vector<128x128xf32>
    %c0 = arith.constant 0 : index
    %c0_0 = arith.constant 0 : index
    %c0_1 = arith.constant 0 : index
    %c0_2 = arith.constant 0 : index
    %1 = vector.load %arg2[%c0, %c0_0, %c0_1, %c0_2] : memref<2x10x10x128xf32, #tpu.memory_space<vmem>>, vector<2x8x8x128xf32>
    %2 = vector.shape_cast %1 : vector<2x8x8x128xf32> to vector<128x128xf32>
    %3 = arith.truncf %2 : vector<128x128xf32> to vector<128x128xbf16>
    %c0_3 = arith.constant 0 : index
    %c0_4 = arith.constant 0 : index
    %c0_5 = arith.constant 0 : index
    %c0_6 = arith.constant 0 : index
    %4 = vector.load %arg3[%c0_3, %c0_4, %c0_5, %c0_6] : memref<3x3x128x128xbf16, #tpu.memory_space<vmem>>, vector<1x1x128x128xbf16>
    %5 = vector.shape_cast %4 : vector<1x1x128x128xbf16> to vector<128x128xbf16>
    %cst_7 = arith.constant dense<0.000000e+00> : vector<128x128xf32>
    %6 = tpu.matmul %3, %5, %cst_7 {dimension_numbers = #tpu.dot_dimension_numbers<[1], [0], [0], [1], [0, 0, 1, 1], [], []>} : vector<128x128xbf16>, vector<128x128xbf16>, vector<128x128xf32> -> vector<128x128xf32>
    %7 = arith.addf %0, %6 : vector<128x128xf32>
    %c0_8 = arith.constant 0 : index
    %c0_9 = arith.constant 0 : index
    %c1 = arith.constant 1 : index
    %c0_10 = arith.constant 0 : index
    %8 = vector.load %arg2[%c0_8, %c0_9, %c1, %c0_10] : memref<2x10x10x128xf32, #tpu.memory_space<vmem>>, vector<2x8x8x128xf32>
    %9 = vector.shape_cast %8 : vector<2x8x8x128xf32> to vector<128x128xf32>
    %10 = arith.truncf %9 : vector<128x128xf32> to vector<128x128xbf16>
    %c0_11 = arith.constant 0 : index
    %c1_12 = arith.constant 1 : index
    %c0_13 = arith.constant 0 : index
    %c0_14 = arith.constant 0 : index
    %11 = vector.load %arg3[%c0_11, %c1_12, %c0_13, %c0_14] : memref<3x3x128x128xbf16, #tpu.memory_space<vmem>>, vector<1x1x128x128xbf16>
    %12 = vector.shape_cast %11 : vector<1x1x128x128xbf16> to vector<128x128xbf16>
    %cst_15 = arith.constant dense<0.000000e+00> : vector<128x128xf32>
    %13 = tpu.matmul %10, %12, %cst_15 {dimension_numbers = #tpu.dot_dimension_numbers<[1], [0], [0], [1], [0, 0, 1, 1], [], []>} : vector<128x128xbf16>, vector<128x128xbf16>, vector<128x128xf32> -> vector<128x128xf32>
    %14 = arith.addf %7, %13 : vector<128x128xf32>
    %c0_16 = arith.constant 0 : index
    %c0_17 = arith.constant 0 : index
    %c2 = arith.constant 2 : index
    %c0_18 = arith.constant 0 : index
    %15 = vector.load %arg2[%c0_16, %c0_17, %c2, %c0_18] : memref<2x10x10x128xf32, #tpu.memory_space<vmem>>, vector<2x8x8x128xf32>
    %16 = vector.shape_cast %15 : vector<2x8x8x128xf32> to vector<128x128xf32>
    %17 = arith.truncf %16 : vector<128x128xf32> to vector<128x128xbf16>
    %c0_19 = arith.constant 0 : index
    %c2_20 = arith.constant 2 : index
    %c0_21 = arith.constant 0 : index
    %c0_22 = arith.constant 0 : index
    %18 = vector.load %arg3[%c0_19, %c2_20, %c0_21, %c0_22] : memref<3x3x128x128xbf16, #tpu.memory_space<vmem>>, vector<1x1x128x128xbf16>
    %19 = vector.shape_cast %18 : vector<1x1x128x128xbf16> to vector<128x128xbf16>
    %cst_23 = arith.constant dense<0.000000e+00> : vector<128x128xf32>
    %20 = tpu.matmul %17, %19, %cst_23 {dimension_numbers = #tpu.dot_dimension_numbers<[1], [0], [0], [1], [0, 0, 1, 1], [], []>} : vector<128x128xbf16>, vector<128x128xbf16>, vector<128x128xf32> -> vector<128x128xf32>
    %21 = arith.addf %14, %20 : vector<128x128xf32>
    %c0_24 = arith.constant 0 : index
    %c1_25 = arith.constant 1 : index
    %c0_26 = arith.constant 0 : index
    %c0_27 = arith.constant 0 : index
    %22 = vector.load %arg2[%c0_24, %c1_25, %c0_26, %c0_27] : memref<2x10x10x128xf32, #tpu.memory_space<vmem>>, vector<2x8x8x128xf32>
    %23 = vector.shape_cast %22 : vector<2x8x8x128xf32> to vector<128x128xf32>
    %24 = arith.truncf %23 : vector<128x128xf32> to vector<128x128xbf16>
    %c1_28 = arith.constant 1 : index
    %c0_29 = arith.constant 0 : index
    %c0_30 = arith.constant 0 : index
    %c0_31 = arith.constant 0 : index
    %25 = vector.load %arg3[%c1_28, %c0_29, %c0_30, %c0_31] : memref<3x3x128x128xbf16, #tpu.memory_space<vmem>>, vector<1x1x128x128xbf16>
    %26 = vector.shape_cast %25 : vector<1x1x128x128xbf16> to vector<128x128xbf16>
    %cst_32 = arith.constant dense<0.000000e+00> : vector<128x128xf32>
    %27 = tpu.matmul %24, %26, %cst_32 {dimension_numbers = #tpu.dot_dimension_numbers<[1], [0], [0], [1], [0, 0, 1, 1], [], []>} : vector<128x128xbf16>, vector<128x128xbf16>, vector<128x128xf32> -> vector<128x128xf32>
    %28 = arith.addf %21, %27 : vector<128x128xf32>
    %c0_33 = arith.constant 0 : index
    %c1_34 = arith.constant 1 : index
    %c1_35 = arith.constant 1 : index
    %c0_36 = arith.constant 0 : index
    %29 = vector.load %arg2[%c0_33, %c1_34, %c1_35, %c0_36] : memref<2x10x10x128xf32, #tpu.memory_space<vmem>>, vector<2x8x8x128xf32>
    %30 = vector.shape_cast %29 : vector<2x8x8x128xf32> to vector<128x128xf32>
    %31 = arith.truncf %30 : vector<128x128xf32> to vector<128x128xbf16>
    %c1_37 = arith.constant 1 : index
    %c1_38 = arith.constant 1 : index
    %c0_39 = arith.constant 0 : index
    %c0_40 = arith.constant 0 : index
    %32 = vector.load %arg3[%c1_37, %c1_38, %c0_39, %c0_40] : memref<3x3x128x128xbf16, #tpu.memory_space<vmem>>, vector<1x1x128x128xbf16>
    %33 = vector.shape_cast %32 : vector<1x1x128x128xbf16> to vector<128x128xbf16>
    %cst_41 = arith.constant dense<0.000000e+00> : vector<128x128xf32>
    %34 = tpu.matmul %31, %33, %cst_41 {dimension_numbers = #tpu.dot_dimension_numbers<[1], [0], [0], [1], [0, 0, 1, 1], [], []>} : vector<128x128xbf16>, vector<128x128xbf16>, vector<128x128xf32> -> vector<128x128xf32>
    %35 = arith.addf %28, %34 : vector<128x128xf32>
    %c0_42 = arith.constant 0 : index
    %c1_43 = arith.constant 1 : index
    %c2_44 = arith.constant 2 : index
    %c0_45 = arith.constant 0 : index
    %36 = vector.load %arg2[%c0_42, %c1_43, %c2_44, %c0_45] : memref<2x10x10x128xf32, #tpu.memory_space<vmem>>, vector<2x8x8x128xf32>
    %37 = vector.shape_cast %36 : vector<2x8x8x128xf32> to vector<128x128xf32>
    %38 = arith.truncf %37 : vector<128x128xf32> to vector<128x128xbf16>
    %c1_46 = arith.constant 1 : index
    %c2_47 = arith.constant 2 : index
    %c0_48 = arith.constant 0 : index
    %c0_49 = arith.constant 0 : index
    %39 = vector.load %arg3[%c1_46, %c2_47, %c0_48, %c0_49] : memref<3x3x128x128xbf16, #tpu.memory_space<vmem>>, vector<1x1x128x128xbf16>
    %40 = vector.shape_cast %39 : vector<1x1x128x128xbf16> to vector<128x128xbf16>
    %cst_50 = arith.constant dense<0.000000e+00> : vector<128x128xf32>
    %41 = tpu.matmul %38, %40, %cst_50 {dimension_numbers = #tpu.dot_dimension_numbers<[1], [0], [0], [1], [0, 0, 1, 1], [], []>} : vector<128x128xbf16>, vector<128x128xbf16>, vector<128x128xf32> -> vector<128x128xf32>
    %42 = arith.addf %35, %41 : vector<128x128xf32>
    %c0_51 = arith.constant 0 : index
    %c2_52 = arith.constant 2 : index
    %c0_53 = arith.constant 0 : index
    %c0_54 = arith.constant 0 : index
    %43 = vector.load %arg2[%c0_51, %c2_52, %c0_53, %c0_54] : memref<2x10x10x128xf32, #tpu.memory_space<vmem>>, vector<2x8x8x128xf32>
    %44 = vector.shape_cast %43 : vector<2x8x8x128xf32> to vector<128x128xf32>
    %45 = arith.truncf %44 : vector<128x128xf32> to vector<128x128xbf16>
    %c2_55 = arith.constant 2 : index
    %c0_56 = arith.constant 0 : index
    %c0_57 = arith.constant 0 : index
    %c0_58 = arith.constant 0 : index
    %46 = vector.load %arg3[%c2_55, %c0_56, %c0_57, %c0_58] : memref<3x3x128x128xbf16, #tpu.memory_space<vmem>>, vector<1x1x128x128xbf16>
    %47 = vector.shape_cast %46 : vector<1x1x128x128xbf16> to vector<128x128xbf16>
    %cst_59 = arith.constant dense<0.000000e+00> : vector<128x128xf32>
    %48 = tpu.matmul %45, %47, %cst_59 {dimension_numbers = #tpu.dot_dimension_numbers<[1], [0], [0], [1], [0, 0, 1, 1], [], []>} : vector<128x128xbf16>, vector<128x128xbf16>, vector<128x128xf32> -> vector<128x128xf32>
    %49 = arith.addf %42, %48 : vector<128x128xf32>
    %c0_60 = arith.constant 0 : index
    %c2_61 = arith.constant 2 : index
    %c1_62 = arith.constant 1 : index
    %c0_63 = arith.constant 0 : index
    %50 = vector.load %arg2[%c0_60, %c2_61, %c1_62, %c0_63] : memref<2x10x10x128xf32, #tpu.memory_space<vmem>>, vector<2x8x8x128xf32>
    %51 = vector.shape_cast %50 : vector<2x8x8x128xf32> to vector<128x128xf32>
    %52 = arith.truncf %51 : vector<128x128xf32> to vector<128x128xbf16>
    %c2_64 = arith.constant 2 : index
    %c1_65 = arith.constant 1 : index
    %c0_66 = arith.constant 0 : index
    %c0_67 = arith.constant 0 : index
    %53 = vector.load %arg3[%c2_64, %c1_65, %c0_66, %c0_67] : memref<3x3x128x128xbf16, #tpu.memory_space<vmem>>, vector<1x1x128x128xbf16>
    %54 = vector.shape_cast %53 : vector<1x1x128x128xbf16> to vector<128x128xbf16>
    %cst_68 = arith.constant dense<0.000000e+00> : vector<128x128xf32>
    %55 = tpu.matmul %52, %54, %cst_68 {dimension_numbers = #tpu.dot_dimension_numbers<[1], [0], [0], [1], [0, 0, 1, 1], [], []>} : vector<128x128xbf16>, vector<128x128xbf16>, vector<128x128xf32> -> vector<128x128xf32>
    %56 = arith.addf %49, %55 : vector<128x128xf32>
    %c0_69 = arith.constant 0 : index
    %c2_70 = arith.constant 2 : index
    %c2_71 = arith.constant 2 : index
    %c0_72 = arith.constant 0 : index
    %57 = vector.load %arg2[%c0_69, %c2_70, %c2_71, %c0_72] : memref<2x10x10x128xf32, #tpu.memory_space<vmem>>, vector<2x8x8x128xf32>
    %58 = vector.shape_cast %57 : vector<2x8x8x128xf32> to vector<128x128xf32>
    %59 = arith.truncf %58 : vector<128x128xf32> to vector<128x128xbf16>
    %c2_73 = arith.constant 2 : index
    %c2_74 = arith.constant 2 : index
    %c0_75 = arith.constant 0 : index
    %c0_76 = arith.constant 0 : index
    %60 = vector.load %arg3[%c2_73, %c2_74, %c0_75, %c0_76] : memref<3x3x128x128xbf16, #tpu.memory_space<vmem>>, vector<1x1x128x128xbf16>
    %61 = vector.shape_cast %60 : vector<1x1x128x128xbf16> to vector<128x128xbf16>
    %cst_77 = arith.constant dense<0.000000e+00> : vector<128x128xf32>
    %62 = tpu.matmul %59, %61, %cst_77 {dimension_numbers = #tpu.dot_dimension_numbers<[1], [0], [0], [1], [0, 0, 1, 1], [], []>} : vector<128x128xbf16>, vector<128x128xbf16>, vector<128x128xf32> -> vector<128x128xf32>
    %63 = arith.addf %56, %62 : vector<128x128xf32>
    %c0_i32 = arith.constant 0 : i32
    %64 = arith.cmpi eq, %arg1, %c0_i32 : i32
    %65 = arith.extui %64 : i1 to i32
    %c0_i32_78 = arith.constant 0 : i32
    %66 = arith.cmpi ne, %65, %c0_i32_78 : i32
    scf.if %66 {
      %c0_83 = arith.constant 0 : index
      %c0_84 = arith.constant 0 : index
      %73 = vector.load %arg4[%c0_83, %c0_84] : memref<128x128xf32, #tpu.memory_space<vmem>>, vector<128x128xf32>
      tpu.vector_store %arg4[%c0_83, %c0_84], %63 {strides = array<i32>} : memref<128x128xf32, #tpu.memory_space<vmem>>, vector<128x128xf32>,
    } else {
    }
    %c0_i32_79 = arith.constant 0 : i32
    %67 = arith.cmpi sgt, %arg1, %c0_i32_79 : i32
    %68 = arith.extui %67 : i1 to i32
    %c0_i32_80 = arith.constant 0 : i32
    %69 = arith.cmpi ne, %68, %c0_i32_80 : i32
    scf.if %69 {
      %c0_83 = arith.constant 0 : index
      %c0_84 = arith.constant 0 : index
      %73 = vector.load %arg4[%c0_83, %c0_84] : memref<128x128xf32, #tpu.memory_space<vmem>>, vector<128x128xf32>
      %74 = arith.addf %73, %63 : vector<128x128xf32>
      %c0_85 = arith.constant 0 : index
      %c0_86 = arith.constant 0 : index
      %75 = vector.load %arg4[%c0_85, %c0_86] : memref<128x128xf32, #tpu.memory_space<vmem>>, vector<128x128xf32>
      tpu.vector_store %arg4[%c0_85, %c0_86], %74 {strides = array<i32>} : memref<128x128xf32, #tpu.memory_space<vmem>>, vector<128x128xf32>,
    } else {
    }
    %c0_i32_81 = arith.constant 0 : i32
    %70 = arith.cmpi eq, %arg1, %c0_i32_81 : i32
    %71 = arith.extui %70 : i1 to i32
    %c0_i32_82 = arith.constant 0 : i32
    %72 = arith.cmpi ne, %71, %c0_i32_82 : i32
    scf.if %72 {
      %c0_83 = arith.constant 0 : index
      %c0_84 = arith.constant 0 : index
      %73 = vector.load %arg4[%c0_83, %c0_84] : memref<128x128xf32, #tpu.memory_space<vmem>>, vector<128x128xf32>
      %c0_85 = arith.constant 0 : index
      %c0_86 = arith.constant 0 : index
      %74 = vector.load %arg4[%c0_85, %c0_86] : memref<128x128xf32, #tpu.memory_space<vmem>>, vector<128x128xf32>
      tpu.vector_store %arg4[%c0_85, %c0_86], %73 {strides = array<i32>} : memref<128x128xf32, #tpu.memory_space<vmem>>, vector<128x128xf32>,
    } else {
    }
    return
  }
  func.func @transform_0(%arg0: i32, %arg1: i32) -> (i32, i32, i32, i32) {
    %c0_i32 = arith.constant 0 : i32
    %c0_i32_0 = arith.constant 0 : i32
    %c0_i32_1 = arith.constant 0 : i32
    %c0_i32_2 = arith.constant 0 : i32
    return %c0_i32, %c0_i32_0, %c0_i32_1, %arg1 : i32, i32, i32, i32
  }
  func.func @transform_1(%arg0: i32, %arg1: i32) -> (i32, i32, i32, i32) {
    %c0_i32 = arith.constant 0 : i32
    %c0_i32_0 = arith.constant 0 : i32
    %c0_i32_1 = arith.constant 0 : i32
    return %c0_i32, %c0_i32_0, %arg1, %arg0 : i32, i32, i32, i32
  }
  func.func @transform_2(%arg0: i32, %arg1: i32) -> (i32, i32) {
    %c0_i32 = arith.constant 0 : i32
    %c0_i32_0 = arith.constant 0 : i32
    return %c0_i32, %arg0 : i32, i32
  }
}

</mosaic_0001>

<llo_original>
// kernel: densenet_fpn_forward.10
$region0: #{densenet_fpn_forward.10}
  #allocation0 [shape = 'u32[]', space=smem, size = 0x4, offset = 0x4, fixed_abs, tag = 'smem constant byte address 0x4 - core index']
  #allocation1 [shape = 'u32[144,128]{1,0:T(1,128)}', space=vmem, size = 0x12000, scoped, tag = 'internal scratch']
  %s0 = inlined_call_operand.vmem [shape: f32[2,8,8,128], index: 0, kind: input, shape index: {}]
  %s1 = inlined_call_operand.vmem [shape: bf16[1,1,128,128], index: 1, kind: input, shape index: {}]
  %s2 = inlined_call_operand.vmem [shape: f32[128,128], index: 2, kind: input, shape index: {}]
  %s3 = inlined_call_operand.vmem [shape: f32[128,128], index: 3, kind: output, shape index: {}]
  %s4 = sld [smem:[#allocation0]]
  $region34: #{densenet_fpn_forward.10} parent=0
    _
  %s6 = ssub.s32 1, %s4
  %s7 = scalar_select 0, %s6, %s4
  // Predicated region
  $region2: #{densenet_fpn_forward.10} parent=0 // pred_check
    _
  $region3: #{densenet_fpn_forward.10} parent=0 // pred_check_branch
    %9 = sbr.rel (0) target = $region5
  $region4: #{densenet_fpn_forward.10} parent=0 // pred_region
    _
  $region5: #{densenet_fpn_forward.10} parent=0 // pred_fallthru
    _
  // Predicated region
  $region6: #{densenet_fpn_forward.10} parent=0 // pred_check
    _
  $region7: #{densenet_fpn_forward.10} parent=0 // pred_check_branch
    %11 = sbr.rel (0) target = $region9
  $region8: #{densenet_fpn_forward.10} parent=0 // pred_region
    _
  $region9: #{densenet_fpn_forward.10} parent=0 // pred_fallthru
    _
  // Predicated region
  $region10: #{densenet_fpn_forward.10} parent=0 // pred_check
    _
  $region11: #{densenet_fpn_forward.10} parent=0 // pred_check_branch
    %13 = sbr.rel (0) target = $region13
  $region12: #{densenet_fpn_forward.10} parent=0 // pred_region
    _
  $region13: #{densenet_fpn_forward.10} parent=0 // pred_fallthru
    _
  %v15 = vld [vmem:[%s0] sm:$0xff]
  %v16 = vld [vmem:[%s0 + $0x8] sm:$0xff]
  %v17 = vld [vmem:[%s0 + $0x10] sm:$0xff]
  %v18 = vld [vmem:[%s0 + $0x18] sm:$0xff]
  %v19 = vld [vmem:[%s0 + $0x20] sm:$0xff]
  %v20 = vld [vmem:[%s0 + $0x28] sm:$0xff]
  %v21 = vld [vmem:[%s0 + $0x30] sm:$0xff]
  %v22 = vld [vmem:[%s0 + $0x38] sm:$0xff]
  %v23 = vld [vmem:[%s0 + $0x40] sm:$0xff]
  %v24 = vld [vmem:[%s0 + $0x48] sm:$0xff]
  %v25 = vld [vmem:[%s0 + $0x50] sm:$0xff]
  %v26 = vld [vmem:[%s0 + $0x58] sm:$0xff]
  %v27 = vld [vmem:[%s0 + $0x60] sm:$0xff]
  %v28 = vld [vmem:[%s0 + $0x68] sm:$0xff]
  %v29 = vld [vmem:[%s0 + $0x70] sm:$0xff]
  %v30 = vld [vmem:[%s0 + $0x78] sm:$0xff]
  %v31 = vpack.c.bf16 %v16, %v15
  %v32 = vpack.c.bf16 %v18, %v17
  %v33 = vpack.c.bf16 %v20, %v19
  %v34 = vpack.c.bf16 %v22, %v21
  %v35 = vpack.c.bf16 %v24, %v23
  %v36 = vpack.c.bf16 %v26, %v25
  %v37 = vpack.c.bf16 %v28, %v27
  %v38 = vpack.c.bf16 %v30, %v29
  %v39 = vld [vmem:[%s1] sm:$0xf]
  %v40 = vld [vmem:[%s1 + $0x4] sm:$0xf]
  %v41 = vld [vmem:[%s1 + $0x8] sm:$0xf]
  %v42 = vld [vmem:[%s1 + $0xc] sm:$0xf]
  %v43 = vld [vmem:[%s1 + $0x10] sm:$0xf]
  %v44 = vld [vmem:[%s1 + $0x14] sm:$0xf]
  %v45 = vld [vmem:[%s1 + $0x18] sm:$0xf]
  %v46 = vld [vmem:[%s1 + $0x1c] sm:$0xf]
  %v47 = vld [vmem:[%s1 + $0x20] sm:$0xf]
  %v48 = vld [vmem:[%s1 + $0x24] sm:$0xf]
  %v49 = vld [vmem:[%s1 + $0x28] sm:$0xf]
  %v50 = vld [vmem:[%s1 + $0x2c] sm:$0xf]
  %v51 = vld [vmem:[%s1 + $0x30] sm:$0xf]
  %v52 = vld [vmem:[%s1 + $0x34] sm:$0xf]
  %v53 = vld [vmem:[%s1 + $0x38] sm:$0xf]
  %v54 = vld [vmem:[%s1 + $0x3c] sm:$0xf]
  %v71 = vunpack.c.l.b16 %v39
  %v72 = vunpack.c.l.b16 %v40
  %v73 = vunpack.c.l.b16 %v41
  %v74 = vunpack.c.l.b16 %v42
  %v75 = vunpack.c.l.b16 %v43
  %v76 = vunpack.c.l.b16 %v44
  %v77 = vunpack.c.l.b16 %v45
  %v78 = vunpack.c.l.b16 %v46
  %v79 = vunpack.c.l.b16 %v47
  %v80 = vunpack.c.l.b16 %v48
  %v81 = vunpack.c.l.b16 %v49
  %v82 = vunpack.c.l.b16 %v50
  %v83 = vunpack.c.l.b16 %v51
  %v84 = vunpack.c.l.b16 %v52
  %v85 = vunpack.c.l.b16 %v53
  %v86 = vunpack.c.l.b16 %v54
  %v87 = vpack.c.b16 %v72, %v71
  %v88 = vpack.c.b16 %v74, %v73
  %v89 = vpack.c.b16 %v76, %v75
  %v90 = vpack.c.b16 %v78, %v77
  %v91 = vpack.c.b16 %v80, %v79
  %v92 = vpack.c.b16 %v82, %v81
  %v93 = vpack.c.b16 %v84, %v83
  %v94 = vpack.c.b16 %v86, %v85
  %103 = vmatprep.subr.bf16.mxu0 0
  %104 = vmatpush1.bf16.msra.mxu0 %v87
  %105 = vmatprep.subr.bf16.mxu0 0
  %106 = vmatpush1.bf16.msra.mxu0 %v88
  %107 = vmatprep.subr.bf16.mxu0 0
  %108 = vmatpush1.bf16.msra.mxu0 %v89
  %109 = vmatprep.subr.bf16.mxu0 0
  %110 = vmatpush1.bf16.msra.mxu0 %v90
  %111 = vmatprep.subr.bf16.mxu0 0
  %112 = vmatpush1.bf16.msra.mxu0 %v91
  %113 = vmatprep.subr.bf16.mxu0 0
  %114 = vmatpush1.bf16.msra.mxu0 %v92
  %115 = vmatprep.subr.bf16.mxu0 0
  %116 = vmatpush1.bf16.msra.mxu0 %v93
  %117 = vmatprep.subr.bf16.mxu0 0
  %118 = vmatpush1.bf16.msra.mxu0 %v94
  %119 = vmatprep.subr.bf16.mxu0 0
  %120 = vmatpush1.bf16.msra.mxu0 0
  %121 = vmatprep.subr.bf16.mxu0 0
  %122 = vmatpush1.bf16.msra.mxu0 0
  %123 = vmatprep.subr.bf16.mxu0 0
  %124 = vmatpush1.bf16.msra.mxu0 0
  %125 = vmatprep.subr.bf16.mxu0 0
  %126 = vmatpush1.bf16.msra.mxu0 0
  %127 = vmatprep.subr.bf16.mxu0 0
  %128 = vmatpush1.bf16.msra.mxu0 0
  %129 = vmatprep.subr.bf16.mxu0 0
  %130 = vmatpush1.bf16.msra.mxu0 0
  %131 = vmatprep.subr.bf16.mxu0 0
  %132 = vmatpush1.bf16.msra.mxu0 0
  %133 = vmatprep.subr.bf16.mxu0 0
  %134 = vmatpush1.bf16.msra.mxu0 0
  %135 = vmatprep.mubr.bf16.mxu0 0
  %136 = vmatmul.mubr.bf16.gmra.mrb[0].mxu0 %v31
  %v137 = vpop.f32.mrb[0].mxu0
  %v138 = vadd.f32 0.0, %v137
  %v139 = vpop.f32.mrb[0].mxu0
  %v140 = vpop.f32.mrb[0].mxu0
  %v141 = vadd.f32 0.0, %v140
  %v142 = vpop.f32.mrb[0].mxu0
  %143 = vmatprep.mubr.bf16.mxu0 0
  %144 = vmatmul.mubr.bf16.gmra.mrb[0].mxu0 %v32
  %v145 = vpop.f32.mrb[0].mxu0
  %v146 = vadd.f32 0.0, %v145
  %v147 = vpop.f32.mrb[0].mxu0
  %v148 = vpop.f32.mrb[0].mxu0
  %v149 = vadd.f32 0.0, %v148
  %v150 = vpop.f32.mrb[0].mxu0
  %151 = vmatprep.mubr.bf16.mxu0 0
  %152 = vmatmul.mubr.bf16.gmra.mrb[0].mxu0 %v33
  %v153 = vpop.f32.mrb[0].mxu0
  %v154 = vadd.f32 0.0, %v153
  %v155 = vpop.f32.mrb[0].mxu0
  %v156 = vpop.f32.mrb[0].mxu0
  %v157 = vadd.f32 0.0, %v156
  %v158 = vpop.f32.mrb[0].mxu0
  %159 = vmatprep.mubr.bf16.mxu0 0
  %160 = vmatmul.mubr.bf16.gmra.mrb[0].mxu0 %v34
  %v161 = vpop.f32.mrb[0].mxu0
  %v162 = vadd.f32 0.0, %v161
  %v163 = vpop.f32.mrb[0].mxu0
  %v164 = vpop.f32.mrb[0].mxu0
  %v165 = vadd.f32 0.0, %v164
  %v166 = vpop.f32.mrb[0].mxu0
  %167 = vmatprep.mubr.bf16.mxu0 0
  %168 = vmatmul.mubr.bf16.gmra.mrb[0].mxu0 %v35
  %v169 = vpop.f32.mrb[0].mxu0
  %v170 = vadd.f32 0.0, %v169
  %v171 = vpop.f32.mrb[0].mxu0
  %v172 = vpop.f32.mrb[0].mxu0
  %v173 = vadd.f32 0.0, %v172
  %v174 = vpop.f32.mrb[0].mxu0
  %175 = vmatprep.mubr.bf16.mxu0 0
  %176 = vmatmul.mubr.bf16.gmra.mrb[0].mxu0 %v36
  %v177 = vpop.f32.mrb[0].mxu0
  %v178 = vadd.f32 0.0, %v177
  %v179 = vpop.f32.mrb[0].mxu0
  %v180 = vpop.f32.mrb[0].mxu0
  %v181 = vadd.f32 0.0, %v180
  %v182 = vpop.f32.mrb[0].mxu0
  %183 = vmatprep.mubr.bf16.mxu0 0
  %184 = vmatmul.mubr.bf16.gmra.mrb[0].mxu0 %v37
  %v185 = vpop.f32.mrb[0].mxu0
  %v186 = vadd.f32 0.0, %v185
  %v187 = vpop.f32.mrb[0].mxu0
  %v188 = vpop.f32.mrb[0].mxu0
  %v189 = vadd.f32 0.0, %v188
  %v190 = vpop.f32.mrb[0].mxu0
  %191 = vmatprep.mubr.bf16.mxu0 0
  %192 = vmatmul.mubr.bf16.gmra.mrb[0].mxu0 %v38
  %v193 = vpop.f32.mrb[0].mxu0
  %v194 = vadd.f32 0.0, %v193
  %v195 = vpop.f32.mrb[0].mxu0
  %v196 = vpop.f32.mrb[0].mxu0
  %v197 = vadd.f32 0.0, %v196
  %v198 = vpop.f32.mrb[0].mxu0
  %199 = vdwg.mxu0
  %p200 = scmp.eq.s32.totalorder 0, 0
  // Predicated region
  $region14: #{densenet_fpn_forward.10} parent=0 // pred_check
    %p201 = pneg %p200
  $region15: #{densenet_fpn_forward.10} parent=0 // pred_check_branch
    %203 = sbr.rel (%p201) target = $region17
  $region16: #{densenet_fpn_forward.10} parent=0 // pred_region
    %204 = vst [vmem:[%s3] sm:$0xff] %v138
    %205 = vst [vmem:[%s3 + $0x8] sm:$0xff] %v141
    %206 = vst [vmem:[%s3 + $0x10] sm:$0xff] %v146
    %207 = vst [vmem:[%s3 + $0x18] sm:$0xff] %v149
    %208 = vst [vmem:[%s3 + $0x20] sm:$0xff] %v154
    %209 = vst [vmem:[%s3 + $0x28] sm:$0xff] %v157
    %210 = vst [vmem:[%s3 + $0x30] sm:$0xff] %v162
    %211 = vst [vmem:[%s3 + $0x38] sm:$0xff] %v165
    %212 = vst [vmem:[%s3 + $0x40] sm:$0xff] %v170
    %213 = vst [vmem:[%s3 + $0x48] sm:$0xff] %v173
    %214 = vst [vmem:[%s3 + $0x50] sm:$0xff] %v178
    %215 = vst [vmem:[%s3 + $0x58] sm:$0xff] %v181
    %216 = vst [vmem:[%s3 + $0x60] sm:$0xff] %v186
    %217 = vst [vmem:[%s3 + $0x68] sm:$0xff] %v189
    %218 = vst [vmem:[%s3 + $0x70] sm:$0xff] %v194
    %219 = vst [vmem:[%s3 + $0x78] sm:$0xff] %v197
  $region17: #{densenet_fpn_forward.10} parent=0 // pred_fallthru
    _
  %p220 = scmp.gt.s32.totalorder 0, 0
  // Predicated region
  $region18: #{densenet_fpn_forward.10} parent=0 // pred_check
    %p221 = pneg %p220
  $region19: #{densenet_fpn_forward.10} parent=0 // pred_check_branch
    %223 = sbr.rel (%p221) target = $region21
  $region20: #{densenet_fpn_forward.10} parent=0 // pred_region
    %v224 = vld [vmem:[%s3] sm:$0xff]
    %v225 = vld [vmem:[%s3 + $0x8] sm:$0xff]
    %v226 = vld [vmem:[%s3 + $0x10] sm:$0xff]
    %v227 = vld [vmem:[%s3 + $0x18] sm:$0xff]
    %v228 = vld [vmem:[%s3 + $0x20] sm:$0xff]
    %v229 = vld [vmem:[%s3 + $0x28] sm:$0xff]
    %v230 = vld [vmem:[%s3 + $0x30] sm:$0xff]
    %v231 = vld [vmem:[%s3 + $0x38] sm:$0xff]
    %v232 = vld [vmem:[%s3 + $0x40] sm:$0xff]
    %v233 = vld [vmem:[%s3 + $0x48] sm:$0xff]
    %v234 = vld [vmem:[%s3 + $0x50] sm:$0xff]
    %v235 = vld [vmem:[%s3 + $0x58] sm:$0xff]
    %v236 = vld [vmem:[%s3 + $0x60] sm:$0xff]
    %v237 = vld [vmem:[%s3 + $0x68] sm:$0xff]
    %v238 = vld [vmem:[%s3 + $0x70] sm:$0xff]
    %v239 = vld [vmem:[%s3 + $0x78] sm:$0xff]
    %v240 = vadd.f32 %v224, %v138
    %v241 = vadd.f32 %v225, %v141
    %v242 = vadd.f32 %v226, %v146
    %v243 = vadd.f32 %v227, %v149
    %v244 = vadd.f32 %v228, %v154
    %v245 = vadd.f32 %v229, %v157
    %v246 = vadd.f32 %v230, %v162
    %v247 = vadd.f32 %v231, %v165
    %v248 = vadd.f32 %v232, %v170
    %v249 = vadd.f32 %v233, %v173
    %v250 = vadd.f32 %v234, %v178
    %v251 = vadd.f32 %v235, %v181
    %v252 = vadd.f32 %v236, %v186
    %v253 = vadd.f32 %v237, %v189
    %v254 = vadd.f32 %v238, %v194
    %v255 = vadd.f32 %v239, %v197
    %256 = vst [vmem:[%s3] sm:$0xff] %v240
    %257 = vst [vmem:[%s3 + $0x8] sm:$0xff] %v241
    %258 = vst [vmem:[%s3 + $0x10] sm:$0xff] %v242
    %259 = vst [vmem:[%s3 + $0x18] sm:$0xff] %v243
    %260 = vst [vmem:[%s3 + $0x20] sm:$0xff] %v244
    %261 = vst [vmem:[%s3 + $0x28] sm:$0xff] %v245
    %262 = vst [vmem:[%s3 + $0x30] sm:$0xff] %v246
    %263 = vst [vmem:[%s3 + $0x38] sm:$0xff] %v247
    %264 = vst [vmem:[%s3 + $0x40] sm:$0xff] %v248
    %265 = vst [vmem:[%s3 + $0x48] sm:$0xff] %v249
    %266 = vst [vmem:[%s3 + $0x50] sm:$0xff] %v250
    %267 = vst [vmem:[%s3 + $0x58] sm:$0xff] %v251
    %268 = vst [vmem:[%s3 + $0x60] sm:$0xff] %v252
    %269 = vst [vmem:[%s3 + $0x68] sm:$0xff] %v253
    %270 = vst [vmem:[%s3 + $0x70] sm:$0xff] %v254
    %271 = vst [vmem:[%s3 + $0x78] sm:$0xff] %v255
  $region21: #{densenet_fpn_forward.10} parent=0 // pred_fallthru
    _
  // Predicated region
  $region22: #{densenet_fpn_forward.10} parent=0 // pred_check
    %p272 = pneg %p200
  $region23: #{densenet_fpn_forward.10} parent=0 // pred_check_branch
    %274 = sbr.rel (%p272) target = $region25
  $region24: #{densenet_fpn_forward.10} parent=0 // pred_region
    %v275 = vld [vmem:[%s3] sm:$0xff]
    %v276 = vld [vmem:[%s3 + $0x8] sm:$0xff]
    %v277 = vld [vmem:[%s3 + $0x10] sm:$0xff]
    %v278 = vld [vmem:[%s3 + $0x18] sm:$0xff]
    %v279 = vld [vmem:[%s3 + $0x20] sm:$0xff]
    %v280 = vld [vmem:[%s3 + $0x28] sm:$0xff]
    %v281 = vld [vmem:[%s3 + $0x30] sm:$0xff]
    %v282 = vld [vmem:[%s3 + $0x38] sm:$0xff]
    %v283 = vld [vmem:[%s3 + $0x40] sm:$0xff]
    %v284 = vld [vmem:[%s3 + $0x48] sm:$0xff]
    %v285 = vld [vmem:[%s3 + $0x50] sm:$0xff]
    %v286 = vld [vmem:[%s3 + $0x58] sm:$0xff]
    %v287 = vld [vmem:[%s3 + $0x60] sm:$0xff]
    %v288 = vld [vmem:[%s3 + $0x68] sm:$0xff]
    %v289 = vld [vmem:[%s3 + $0x70] sm:$0xff]
    %v290 = vld [vmem:[%s3 + $0x78] sm:$0xff]
    %v291 = vld [vmem:[%s2] sm:$0xff]
    %v292 = vld [vmem:[%s2 + $0x8] sm:$0xff]
    %v293 = vld [vmem:[%s2 + $0x10] sm:$0xff]
    %v294 = vld [vmem:[%s2 + $0x18] sm:$0xff]
    %v295 = vld [vmem:[%s2 + $0x20] sm:$0xff]
    %v296 = vld [vmem:[%s2 + $0x28] sm:$0xff]
    %v297 = vld [vmem:[%s2 + $0x30] sm:$0xff]
    %v298 = vld [vmem:[%s2 + $0x38] sm:$0xff]
    %v299 = vld [vmem:[%s2 + $0x40] sm:$0xff]
    %v300 = vld [vmem:[%s2 + $0x48] sm:$0xff]
    %v301 = vld [vmem:[%s2 + $0x50] sm:$0xff]
    %v302 = vld [vmem:[%s2 + $0x58] sm:$0xff]
    %v303 = vld [vmem:[%s2 + $0x60] sm:$0xff]
    %v304 = vld [vmem:[%s2 + $0x68] sm:$0xff]
    %v305 = vld [vmem:[%s2 + $0x70] sm:$0xff]
    %v306 = vld [vmem:[%s2 + $0x78] sm:$0xff]
    %v307 = vadd.f32 %v275, %v291
    %v308 = vadd.f32 %v276, %v292
    %v309 = vadd.f32 %v277, %v293
    %v310 = vadd.f32 %v278, %v294
    %v311 = vadd.f32 %v279, %v295
    %v312 = vadd.f32 %v280, %v296
    %v313 = vadd.f32 %v281, %v297
    %v314 = vadd.f32 %v282, %v298
    %v315 = vadd.f32 %v283, %v299
    %v316 = vadd.f32 %v284, %v300
    %v317 = vadd.f32 %v285, %v301
    %v318 = vadd.f32 %v286, %v302
    %v319 = vadd.f32 %v287, %v303
    %v320 = vadd.f32 %v288, %v304
    %v321 = vadd.f32 %v289, %v305
    %v322 = vadd.f32 %v290, %v306
    %323 = vst [vmem:[%s3] sm:$0xff] %v307
    %324 = vst [vmem:[%s3 + $0x8] sm:$0xff] %v308
    %325 = vst [vmem:[%s3 + $0x10] sm:$0xff] %v309
    %326 = vst [vmem:[%s3 + $0x18] sm:$0xff] %v310
    %327 = vst [vmem:[%s3 + $0x20] sm:$0xff] %v311
    %328 = vst [vmem:[%s3 + $0x28] sm:$0xff] %v312
    %329 = vst [vmem:[%s3 + $0x30] sm:$0xff] %v313
    %330 = vst [vmem:[%s3 + $0x38] sm:$0xff] %v314
    %331 = vst [vmem:[%s3 + $0x40] sm:$0xff] %v315
    %332 = vst [vmem:[%s3 + $0x48] sm:$0xff] %v316
    %333 = vst [vmem:[%s3 + $0x50] sm:$0xff] %v317
    %334 = vst [vmem:[%s3 + $0x58] sm:$0xff] %v318
    %335 = vst [vmem:[%s3 + $0x60] sm:$0xff] %v319
    %336 = vst [vmem:[%s3 + $0x68] sm:$0xff] %v320
    %337 = vst [vmem:[%s3 + $0x70] sm:$0xff] %v321
    %338 = vst [vmem:[%s3 + $0x78] sm:$0xff] %v322
  $region25: #{densenet_fpn_forward.10} parent=0 // pred_fallthru
    _
  // Predicated region
  $region26: #{densenet_fpn_forward.10} parent=0 // pred_check
    _
  $region27: #{densenet_fpn_forward.10} parent=0 // pred_check_branch
    %340 = sbr.rel (0) target = $region29
  $region28: #{densenet_fpn_forward.10} parent=0 // pred_region
    _
  $region29: #{densenet_fpn_forward.10} parent=0 // pred_fallthru
    _
  // Predicated region
  $region30: #{densenet_fpn_forward.10} parent=0 // pred_check
    _
  $region31: #{densenet_fpn_forward.10} parent=0 // pred_check_branch
    %342 = sbr.rel (0) target = $region33
  $region32: #{densenet_fpn_forward.10} parent=0 // pred_region
    _
  $region33: #{densenet_fpn_forward.10} parent=0 // pred_fallthru
    _

// kernel: densenet_fpn_forward.8
$region0: #{densenet_fpn_forward.8}
  #allocation0 [shape = 'u32[]', space=smem, size = 0x4, offset = 0x4, fixed_abs, tag = 'smem constant byte address 0x4 - core index']
  #allocation1 [shape = 'u32[144,128]{1,0:T(1,128)}', space=vmem, size = 0x12000, scoped, tag = 'internal scratch']
  %s0 = inlined_call_operand.vmem [shape: f32[2,8,8,128], index: 0, kind: input, shape index: {}]
  %s1 = inlined_call_operand.vmem [shape: bf16[1,1,128,128], index: 1, kind: input, shape index: {}]
  %s2 = inlined_call_operand.vmem [shape: f32[128,128], index: 2, kind: output, shape index: {}]
  %s3 = sld [smem:[#allocation0]]
  $region30: #{densenet_fpn_forward.8} parent=0
    _
  %s5 = ssub.s32 1, %s3
  %s6 = scalar_select 0, %s5, %s3
  // Predicated region
  $region2: #{densenet_fpn_forward.8} parent=0 // pred_check
    _
  $region3: #{densenet_fpn_forward.8} parent=0 // pred_check_branch
    %8 = sbr.rel (0) target = $region5
  $region4: #{densenet_fpn_forward.8} parent=0 // pred_region
    _
  $region5: #{densenet_fpn_forward.8} parent=0 // pred_fallthru
    _
  // Predicated region
  $region6: #{densenet_fpn_forward.8} parent=0 // pred_check
    _
  $region7: #{densenet_fpn_forward.8} parent=0 // pred_check_branch
    %10 = sbr.rel (0) target = $region9
  $region8: #{densenet_fpn_forward.8} parent=0 // pred_region
    _
  $region9: #{densenet_fpn_forward.8} parent=0 // pred_fallthru
    _
  %v12 = vld [vmem:[%s0] sm:$0xff]
  %v13 = vld [vmem:[%s0 + $0x8] sm:$0xff]
  %v14 = vld [vmem:[%s0 + $0x10] sm:$0xff]
  %v15 = vld [vmem:[%s0 + $0x18] sm:$0xff]
  %v16 = vld [vmem:[%s0 + $0x20] sm:$0xff]
  %v17 = vld [vmem:[%s0 + $0x28] sm:$0xff]
  %v18 = vld [vmem:[%s0 + $0x30] sm:$0xff]
  %v19 = vld [vmem:[%s0 + $0x38] sm:$0xff]
  %v20 = vld [vmem:[%s0 + $0x40] sm:$0xff]
  %v21 = vld [vmem:[%s0 + $0x48] sm:$0xff]
  %v22 = vld [vmem:[%s0 + $0x50] sm:$0xff]
  %v23 = vld [vmem:[%s0 + $0x58] sm:$0xff]
  %v24 = vld [vmem:[%s0 + $0x60] sm:$0xff]
  %v25 = vld [vmem:[%s0 + $0x68] sm:$0xff]
  %v26 = vld [vmem:[%s0 + $0x70] sm:$0xff]
  %v27 = vld [vmem:[%s0 + $0x78] sm:$0xff]
  %v28 = vpack.c.bf16 %v13, %v12
  %v29 = vpack.c.bf16 %v15, %v14
  %v30 = vpack.c.bf16 %v17, %v16
  %v31 = vpack.c.bf16 %v19, %v18
  %v32 = vpack.c.bf16 %v21, %v20
  %v33 = vpack.c.bf16 %v23, %v22
  %v34 = vpack.c.bf16 %v25, %v24
  %v35 = vpack.c.bf16 %v27, %v26
  %v36 = vld [vmem:[%s1] sm:$0xf]
  %v37 = vld [vmem:[%s1 + $0x4] sm:$0xf]
  %v38 = vld [vmem:[%s1 + $0x8] sm:$0xf]
  %v39 = vld [vmem:[%s1 + $0xc] sm:$0xf]
  %v40 = vld [vmem:[%s1 + $0x10] sm:$0xf]
  %v41 = vld [vmem:[%s1 + $0x14] sm:$0xf]
  %v42 = vld [vmem:[%s1 + $0x18] sm:$0xf]
  %v43 = vld [vmem:[%s1 + $0x1c] sm:$0xf]
  %v44 = vld [vmem:[%s1 + $0x20] sm:$0xf]
  %v45 = vld [vmem:[%s1 + $0x24] sm:$0xf]
  %v46 = vld [vmem:[%s1 + $0x28] sm:$0xf]
  %v47 = vld [vmem:[%s1 + $0x2c] sm:$0xf]
  %v48 = vld [vmem:[%s1 + $0x30] sm:$0xf]
  %v49 = vld [vmem:[%s1 + $0x34] sm:$0xf]
  %v50 = vld [vmem:[%s1 + $0x38] sm:$0xf]
  %v51 = vld [vmem:[%s1 + $0x3c] sm:$0xf]
  %v68 = vunpack.c.l.b16 %v36
  %v69 = vunpack.c.l.b16 %v37
  %v70 = vunpack.c.l.b16 %v38
  %v71 = vunpack.c.l.b16 %v39
  %v72 = vunpack.c.l.b16 %v40
  %v73 = vunpack.c.l.b16 %v41
  %v74 = vunpack.c.l.b16 %v42
  %v75 = vunpack.c.l.b16 %v43
  %v76 = vunpack.c.l.b16 %v44
  %v77 = vunpack.c.l.b16 %v45
  %v78 = vunpack.c.l.b16 %v46
  %v79 = vunpack.c.l.b16 %v47
  %v80 = vunpack.c.l.b16 %v48
  %v81 = vunpack.c.l.b16 %v49
  %v82 = vunpack.c.l.b16 %v50
  %v83 = vunpack.c.l.b16 %v51
  %v84 = vpack.c.b16 %v69, %v68
  %v85 = vpack.c.b16 %v71, %v70
  %v86 = vpack.c.b16 %v73, %v72
  %v87 = vpack.c.b16 %v75, %v74
  %v88 = vpack.c.b16 %v77, %v76
  %v89 = vpack.c.b16 %v79, %v78
  %v90 = vpack.c.b16 %v81, %v80
  %v91 = vpack.c.b16 %v83, %v82
  %100 = vmatprep.subr.bf16.mxu0 0
  %101 = vmatpush1.bf16.msra.mxu0 %v84
  %102 = vmatprep.subr.bf16.mxu0 0
  %103 = vmatpush1.bf16.msra.mxu0 %v85
  %104 = vmatprep.subr.bf16.mxu0 0
  %105 = vmatpush1.bf16.msra.mxu0 %v86
  %106 = vmatprep.subr.bf16.mxu0 0
  %107 = vmatpush1.bf16.msra.mxu0 %v87
  %108 = vmatprep.subr.bf16.mxu0 0
  %109 = vmatpush1.bf16.msra.mxu0 %v88
  %110 = vmatprep.subr.bf16.mxu0 0
  %111 = vmatpush1.bf16.msra.mxu0 %v89
  %112 = vmatprep.subr.bf16.mxu0 0
  %113 = vmatpush1.bf16.msra.mxu0 %v90
  %114 = vmatprep.subr.bf16.mxu0 0
  %115 = vmatpush1.bf16.msra.mxu0 %v91
  %116 = vmatprep.subr.bf16.mxu0 0
  %117 = vmatpush1.bf16.msra.mxu0 0
  %118 = vmatprep.subr.bf16.mxu0 0
  %119 = vmatpush1.bf16.msra.mxu0 0
  %120 = vmatprep.subr.bf16.mxu0 0
  %121 = vmatpush1.bf16.msra.mxu0 0
  %122 = vmatprep.subr.bf16.mxu0 0
  %123 = vmatpush1.bf16.msra.mxu0 0
  %124 = vmatprep.subr.bf16.mxu0 0
  %125 = vmatpush1.bf16.msra.mxu0 0
  %126 = vmatprep.subr.bf16.mxu0 0
  %127 = vmatpush1.bf16.msra.mxu0 0
  %128 = vmatprep.subr.bf16.mxu0 0
  %129 = vmatpush1.bf16.msra.mxu0 0
  %130 = vmatprep.subr.bf16.mxu0 0
  %131 = vmatpush1.bf16.msra.mxu0 0
  %132 = vmatprep.mubr.bf16.mxu0 0
  %133 = vmatmul.mubr.bf16.gmra.mrb[0].mxu0 %v28
  %v134 = vpop.f32.mrb[0].mxu0
  %v135 = vadd.f32 0.0, %v134
  %v136 = vpop.f32.mrb[0].mxu0
  %v137 = vpop.f32.mrb[0].mxu0
  %v138 = vadd.f32 0.0, %v137
  %v139 = vpop.f32.mrb[0].mxu0
  %140 = vmatprep.mubr.bf16.mxu0 0
  %141 = vmatmul.mubr.bf16.gmra.mrb[0].mxu0 %v29
  %v142 = vpop.f32.mrb[0].mxu0
  %v143 = vadd.f32 0.0, %v142
  %v144 = vpop.f32.mrb[0].mxu0
  %v145 = vpop.f32.mrb[0].mxu0
  %v146 = vadd.f32 0.0, %v145
  %v147 = vpop.f32.mrb[0].mxu0
  %148 = vmatprep.mubr.bf16.mxu0 0
  %149 = vmatmul.mubr.bf16.gmra.mrb[0].mxu0 %v30
  %v150 = vpop.f32.mrb[0].mxu0
  %v151 = vadd.f32 0.0, %v150
  %v152 = vpop.f32.mrb[0].mxu0
  %v153 = vpop.f32.mrb[0].mxu0
  %v154 = vadd.f32 0.0, %v153
  %v155 = vpop.f32.mrb[0].mxu0
  %156 = vmatprep.mubr.bf16.mxu0 0
  %157 = vmatmul.mubr.bf16.gmra.mrb[0].mxu0 %v31
  %v158 = vpop.f32.mrb[0].mxu0
  %v159 = vadd.f32 0.0, %v158
  %v160 = vpop.f32.mrb[0].mxu0
  %v161 = vpop.f32.mrb[0].mxu0
  %v162 = vadd.f32 0.0, %v161
  %v163 = vpop.f32.mrb[0].mxu0
  %164 = vmatprep.mubr.bf16.mxu0 0
  %165 = vmatmul.mubr.bf16.gmra.mrb[0].mxu0 %v32
  %v166 = vpop.f32.mrb[0].mxu0
  %v167 = vadd.f32 0.0, %v166
  %v168 = vpop.f32.mrb[0].mxu0
  %v169 = vpop.f32.mrb[0].mxu0
  %v170 = vadd.f32 0.0, %v169
  %v171 = vpop.f32.mrb[0].mxu0
  %172 = vmatprep.mubr.bf16.mxu0 0
  %173 = vmatmul.mubr.bf16.gmra.mrb[0].mxu0 %v33
  %v174 = vpop.f32.mrb[0].mxu0
  %v175 = vadd.f32 0.0, %v174
  %v176 = vpop.f32.mrb[0].mxu0
  %v177 = vpop.f32.mrb[0].mxu0
  %v178 = vadd.f32 0.0, %v177
  %v179 = vpop.f32.mrb[0].mxu0
  %180 = vmatprep.mubr.bf16.mxu0 0
  %181 = vmatmul.mubr.bf16.gmra.mrb[0].mxu0 %v34
  %v182 = vpop.f32.mrb[0].mxu0
  %v183 = vadd.f32 0.0, %v182
  %v184 = vpop.f32.mrb[0].mxu0
  %v185 = vpop.f32.mrb[0].mxu0
  %v186 = vadd.f32 0.0, %v185
  %v187 = vpop.f32.mrb[0].mxu0
  %188 = vmatprep.mubr.bf16.mxu0 0
  %189 = vmatmul.mubr.bf16.gmra.mrb[0].mxu0 %v35
  %v190 = vpop.f32.mrb[0].mxu0
  %v191 = vadd.f32 0.0, %v190
  %v192 = vpop.f32.mrb[0].mxu0
  %v193 = vpop.f32.mrb[0].mxu0
  %v194 = vadd.f32 0.0, %v193
  %v195 = vpop.f32.mrb[0].mxu0
  %196 = vdwg.mxu0
  %p197 = scmp.eq.s32.totalorder 0, 0
  // Predicated region
  $region10: #{densenet_fpn_forward.8} parent=0 // pred_check
    %p198 = pneg %p197
  $region11: #{densenet_fpn_forward.8} parent=0 // pred_check_branch
    %200 = sbr.rel (%p198) target = $region13
  $region12: #{densenet_fpn_forward.8} parent=0 // pred_region
    %201 = vst [vmem:[%s2] sm:$0xff] %v135
    %202 = vst [vmem:[%s2 + $0x8] sm:$0xff] %v138
    %203 = vst [vmem:[%s2 + $0x10] sm:$0xff] %v143
    %204 = vst [vmem:[%s2 + $0x18] sm:$0xff] %v146
    %205 = vst [vmem:[%s2 + $0x20] sm:$0xff] %v151
    %206 = vst [vmem:[%s2 + $0x28] sm:$0xff] %v154
    %207 = vst [vmem:[%s2 + $0x30] sm:$0xff] %v159
    %208 = vst [vmem:[%s2 + $0x38] sm:$0xff] %v162
    %209 = vst [vmem:[%s2 + $0x40] sm:$0xff] %v167
    %210 = vst [vmem:[%s2 + $0x48] sm:$0xff] %v170
    %211 = vst [vmem:[%s2 + $0x50] sm:$0xff] %v175
    %212 = vst [vmem:[%s2 + $0x58] sm:$0xff] %v178
    %213 = vst [vmem:[%s2 + $0x60] sm:$0xff] %v183
    %214 = vst [vmem:[%s2 + $0x68] sm:$0xff] %v186
    %215 = vst [vmem:[%s2 + $0x70] sm:$0xff] %v191
    %216 = vst [vmem:[%s2 + $0x78] sm:$0xff] %v194
  $region13: #{densenet_fpn_forward.8} parent=0 // pred_fallthru
    _
  %p217 = scmp.gt.s32.totalorder 0, 0
  // Predicated region
  $region14: #{densenet_fpn_forward.8} parent=0 // pred_check
    %p218 = pneg %p217
  $region15: #{densenet_fpn_forward.8} parent=0 // pred_check_branch
    %220 = sbr.rel (%p218) target = $region17
  $region16: #{densenet_fpn_forward.8} parent=0 // pred_region
    %v221 = vld [vmem:[%s2] sm:$0xff]
    %v222 = vld [vmem:[%s2 + $0x8] sm:$0xff]
    %v223 = vld [vmem:[%s2 + $0x10] sm:$0xff]
    %v224 = vld [vmem:[%s2 + $0x18] sm:$0xff]
    %v225 = vld [vmem:[%s2 + $0x20] sm:$0xff]
    %v226 = vld [vmem:[%s2 + $0x28] sm:$0xff]
    %v227 = vld [vmem:[%s2 + $0x30] sm:$0xff]
    %v228 = vld [vmem:[%s2 + $0x38] sm:$0xff]
    %v229 = vld [vmem:[%s2 + $0x40] sm:$0xff]
    %v230 = vld [vmem:[%s2 + $0x48] sm:$0xff]
    %v231 = vld [vmem:[%s2 + $0x50] sm:$0xff]
    %v232 = vld [vmem:[%s2 + $0x58] sm:$0xff]
    %v233 = vld [vmem:[%s2 + $0x60] sm:$0xff]
    %v234 = vld [vmem:[%s2 + $0x68] sm:$0xff]
    %v235 = vld [vmem:[%s2 + $0x70] sm:$0xff]
    %v236 = vld [vmem:[%s2 + $0x78] sm:$0xff]
    %v237 = vadd.f32 %v221, %v135
    %v238 = vadd.f32 %v222, %v138
    %v239 = vadd.f32 %v223, %v143
    %v240 = vadd.f32 %v224, %v146
    %v241 = vadd.f32 %v225, %v151
    %v242 = vadd.f32 %v226, %v154
    %v243 = vadd.f32 %v227, %v159
    %v244 = vadd.f32 %v228, %v162
    %v245 = vadd.f32 %v229, %v167
    %v246 = vadd.f32 %v230, %v170
    %v247 = vadd.f32 %v231, %v175
    %v248 = vadd.f32 %v232, %v178
    %v249 = vadd.f32 %v233, %v183
    %v250 = vadd.f32 %v234, %v186
    %v251 = vadd.f32 %v235, %v191
    %v252 = vadd.f32 %v236, %v194
    %253 = vst [vmem:[%s2] sm:$0xff] %v237
    %254 = vst [vmem:[%s2 + $0x8] sm:$0xff] %v238
    %255 = vst [vmem:[%s2 + $0x10] sm:$0xff] %v239
    %256 = vst [vmem:[%s2 + $0x18] sm:$0xff] %v240
    %257 = vst [vmem:[%s2 + $0x20] sm:$0xff] %v241
    %258 = vst [vmem:[%s2 + $0x28] sm:$0xff] %v242
    %259 = vst [vmem:[%s2 + $0x30] sm:$0xff] %v243
    %260 = vst [vmem:[%s2 + $0x38] sm:$0xff] %v244
    %261 = vst [vmem:[%s2 + $0x40] sm:$0xff] %v245
    %262 = vst [vmem:[%s2 + $0x48] sm:$0xff] %v246
    %263 = vst [vmem:[%s2 + $0x50] sm:$0xff] %v247
    %264 = vst [vmem:[%s2 + $0x58] sm:$0xff] %v248
    %265 = vst [vmem:[%s2 + $0x60] sm:$0xff] %v249
    %266 = vst [vmem:[%s2 + $0x68] sm:$0xff] %v250
    %267 = vst [vmem:[%s2 + $0x70] sm:$0xff] %v251
    %268 = vst [vmem:[%s2 + $0x78] sm:$0xff] %v252
  $region17: #{densenet_fpn_forward.8} parent=0 // pred_fallthru
    _
  // Predicated region
  $region18: #{densenet_fpn_forward.8} parent=0 // pred_check
    %p269 = pneg %p197
  $region19: #{densenet_fpn_forward.8} parent=0 // pred_check_branch
    %271 = sbr.rel (%p269) target = $region21
  $region20: #{densenet_fpn_forward.8} parent=0 // pred_region
    %v272 = vld [vmem:[%s2] sm:$0xff]
    %v273 = vld [vmem:[%s2 + $0x8] sm:$0xff]
    %v274 = vld [vmem:[%s2 + $0x10] sm:$0xff]
    %v275 = vld [vmem:[%s2 + $0x18] sm:$0xff]
    %v276 = vld [vmem:[%s2 + $0x20] sm:$0xff]
    %v277 = vld [vmem:[%s2 + $0x28] sm:$0xff]
    %v278 = vld [vmem:[%s2 + $0x30] sm:$0xff]
    %v279 = vld [vmem:[%s2 + $0x38] sm:$0xff]
    %v280 = vld [vmem:[%s2 + $0x40] sm:$0xff]
    %v281 = vld [vmem:[%s2 + $0x48] sm:$0xff]
    %v282 = vld [vmem:[%s2 + $0x50] sm:$0xff]
    %v283 = vld [vmem:[%s2 + $0x58] sm:$0xff]
    %v284 = vld [vmem:[%s2 + $0x60] sm:$0xff]
    %v285 = vld [vmem:[%s2 + $0x68] sm:$0xff]
    %v286 = vld [vmem:[%s2 + $0x70] sm:$0xff]
    %v287 = vld [vmem:[%s2 + $0x78] sm:$0xff]
    %288 = vst [vmem:[%s2] sm:$0xff] %v272
    %289 = vst [vmem:[%s2 + $0x8] sm:$0xff] %v273
    %290 = vst [vmem:[%s2 + $0x10] sm:$0xff] %v274
    %291 = vst [vmem:[%s2 + $0x18] sm:$0xff] %v275
    %292 = vst [vmem:[%s2 + $0x20] sm:$0xff] %v276
    %293 = vst [vmem:[%s2 + $0x28] sm:$0xff] %v277
    %294 = vst [vmem:[%s2 + $0x30] sm:$0xff] %v278
    %295 = vst [vmem:[%s2 + $0x38] sm:$0xff] %v279
    %296 = vst [vmem:[%s2 + $0x40] sm:$0xff] %v280
    %297 = vst [vmem:[%s2 + $0x48] sm:$0xff] %v281
    %298 = vst [vmem:[%s2 + $0x50] sm:$0xff] %v282
    %299 = vst [vmem:[%s2 + $0x58] sm:$0xff] %v283
    %300 = vst [vmem:[%s2 + $0x60] sm:$0xff] %v284
    %301 = vst [vmem:[%s2 + $0x68] sm:$0xff] %v285
    %302 = vst [vmem:[%s2 + $0x70] sm:$0xff] %v286
    %303 = vst [vmem:[%s2 + $0x78] sm:$0xff] %v287
  $region21: #{densenet_fpn_forward.8} parent=0 // pred_fallthru
    _
  // Predicated region
  $region22: #{densenet_fpn_forward.8} parent=0 // pred_check
    _
  $region23: #{densenet_fpn_forward.8} parent=0 // pred_check_branch
    %305 = sbr.rel (0) target = $region25
  $region24: #{densenet_fpn_forward.8} parent=0 // pred_region
    _
  $region25: #{densenet_fpn_forward.8} parent=0 // pred_fallthru
    _
  // Predicated region
  $region26: #{densenet_fpn_forward.8} parent=0 // pred_check
    _
  $region27: #{densenet_fpn_forward.8} parent=0 // pred_check_branch
    %307 = sbr.rel (0) target = $region29
  $region28: #{densenet_fpn_forward.8} parent=0 // pred_region
    _
  $region29: #{densenet_fpn_forward.8} parent=0 // pred_fallthru
    _

// kernel: densenet_fpn_forward.14
$region0: #{densenet_fpn_forward.14}
  #allocation0 [shape = 'u32[]', space=smem, size = 0x4, offset = 0x4, fixed_abs, tag = 'smem constant byte address 0x4 - core index']
  #allocation1 [shape = 'u32[144,128]{1,0:T(1,128)}', space=vmem, size = 0x12000, scoped, tag = 'internal scratch']
  %s0 = inlined_call_operand.vmem [shape: f32[2,10,10,128], index: 0, kind: input, shape index: {}]
  %s1 = inlined_call_operand.vmem [shape: bf16[3,3,128,128], index: 1, kind: input, shape index: {}]
  %s2 = inlined_call_operand.vmem [shape: f32[128,128], index: 2, kind: output, shape index: {}]
  %s3 = sld [smem:[#allocation0]]
  $region30: #{densenet_fpn_forward.14} parent=0
    _
  %s5 = ssub.s32 1, %s3
  %s6 = scalar_select 0, %s5, %s3
  // Predicated region
  $region2: #{densenet_fpn_forward.14} parent=0 // pred_check
    _
  $region3: #{densenet_fpn_forward.14} parent=0 // pred_check_branch
    %8 = sbr.rel (0) target = $region5
  $region4: #{densenet_fpn_forward.14} parent=0 // pred_region
    _
  $region5: #{densenet_fpn_forward.14} parent=0 // pred_fallthru
    _
  // Predicated region
  $region6: #{densenet_fpn_forward.14} parent=0 // pred_check
    _
  $region7: #{densenet_fpn_forward.14} parent=0 // pred_check_branch
    %10 = sbr.rel (0) target = $region9
  $region8: #{densenet_fpn_forward.14} parent=0 // pred_region
    _
  $region9: #{densenet_fpn_forward.14} parent=0 // pred_fallthru
    _
  %v12 = vld [vmem:[%s0] sm:$0xff]
  %v13 = vld [vmem:[%s0 + $0x10] sm:$0xff]
  %v14 = vld [vmem:[%s0 + $0x20] sm:$0xff]
  %v15 = vld [vmem:[%s0 + $0x30] sm:$0xff]
  %v16 = vld [vmem:[%s0 + $0x40] sm:$0xff]
  %v17 = vld [vmem:[%s0 + $0x50] sm:$0xff]
  %v18 = vld [vmem:[%s0 + $0x60] sm:$0xff]
  %v19 = vld [vmem:[%s0 + $0x70] sm:$0xff]
  %v20 = vld [vmem:[%s0 + $0xa0] sm:$0xff]
  %v21 = vld [vmem:[%s0 + $0xb0] sm:$0xff]
  %v22 = vld [vmem:[%s0 + $0xc0] sm:$0xff]
  %v23 = vld [vmem:[%s0 + $0xd0] sm:$0xff]
  %v24 = vld [vmem:[%s0 + $0xe0] sm:$0xff]
  %v25 = vld [vmem:[%s0 + $0xf0] sm:$0xff]
  %v26 = vld [vmem:[%s0 + $0x100] sm:$0xff]
  %v27 = vld [vmem:[%s0 + $0x110] sm:$0xff]
  %v28 = vpack.c.bf16 %v13, %v12
  %v29 = vpack.c.bf16 %v15, %v14
  %v30 = vpack.c.bf16 %v17, %v16
  %v31 = vpack.c.bf16 %v19, %v18
  %v32 = vpack.c.bf16 %v21, %v20
  %v33 = vpack.c.bf16 %v23, %v22
  %v34 = vpack.c.bf16 %v25, %v24
  %v35 = vpack.c.bf16 %v27, %v26
  %v36 = vld [vmem:[%s1] sm:$0xf]
  %v37 = vld [vmem:[%s1 + $0x4] sm:$0xf]
  %v38 = vld [vmem:[%s1 + $0x8] sm:$0xf]
  %v39 = vld [vmem:[%s1 + $0xc] sm:$0xf]
  %v40 = vld [vmem:[%s1 + $0x10] sm:$0xf]
  %v41 = vld [vmem:[%s1 + $0x14] sm:$0xf]
  %v42 = vld [vmem:[%s1 + $0x18] sm:$0xf]
  %v43 = vld [vmem:[%s1 + $0x1c] sm:$0xf]
  %v44 = vld [vmem:[%s1 + $0x20] sm:$0xf]
  %v45 = vld [vmem:[%s1 + $0x24] sm:$0xf]
  %v46 = vld [vmem:[%s1 + $0x28] sm:$0xf]
  %v47 = vld [vmem:[%s1 + $0x2c] sm:$0xf]
  %v48 = vld [vmem:[%s1 + $0x30] sm:$0xf]
  %v49 = vld [vmem:[%s1 + $0x34] sm:$0xf]
  %v50 = vld [vmem:[%s1 + $0x38] sm:$0xf]
  %v51 = vld [vmem:[%s1 + $0x3c] sm:$0xf]
  %v52 = vld [vmem:[%s0 + $0x1] sm:$0xff]
  %v53 = vld [vmem:[%s0 + $0x11] sm:$0xff]
  %v54 = vld [vmem:[%s0 + $0x21] sm:$0xff]
  %v55 = vld [vmem:[%s0 + $0x31] sm:$0xff]
  %v56 = vld [vmem:[%s0 + $0x41] sm:$0xff]
  %v57 = vld [vmem:[%s0 + $0x51] sm:$0xff]
  %v58 = vld [vmem:[%s0 + $0x61] sm:$0xff]
  %v59 = vld [vmem:[%s0 + $0x71] sm:$0xff]
  %v60 = vld [vmem:[%s0 + $0xa1] sm:$0xff]
  %v61 = vld [vmem:[%s0 + $0xb1] sm:$0xff]
  %v62 = vld [vmem:[%s0 + $0xc1] sm:$0xff]
  %v63 = vld [vmem:[%s0 + $0xd1] sm:$0xff]
  %v64 = vld [vmem:[%s0 + $0xe1] sm:$0xff]
  %v65 = vld [vmem:[%s0 + $0xf1] sm:$0xff]
  %v66 = vld [vmem:[%s0 + $0x101] sm:$0xff]
  %v67 = vld [vmem:[%s0 + $0x111] sm:$0xff]
  %v68 = vpack.c.bf16 %v53, %v52
  %v69 = vpack.c.bf16 %v55, %v54
  %v70 = vpack.c.bf16 %v57, %v56
  %v71 = vpack.c.bf16 %v59, %v58
  %v72 = vpack.c.bf16 %v61, %v60
  %v73 = vpack.c.bf16 %v63, %v62
  %v74 = vpack.c.bf16 %v65, %v64
  %v75 = vpack.c.bf16 %v67, %v66
  %s76 = scalar_lea.vmem %s1, 64
  %v77 = vld [vmem:[%s76] sm:$0xf]
  %v78 = vld [vmem:[%s76 + $0x4] sm:$0xf]
  %v79 = vld [vmem:[%s76 + $0x8] sm:$0xf]
  %v80 = vld [vmem:[%s76 + $0xc] sm:$0xf]
  %v81 = vld [vmem:[%s76 + $0x10] sm:$0xf]
  %v82 = vld [vmem:[%s76 + $0x14] sm:$0xf]
  %v83 = vld [vmem:[%s76 + $0x18] sm:$0xf]
  %v84 = vld [vmem:[%s76 + $0x1c] sm:$0xf]
  %v85 = vld [vmem:[%s76 + $0x20] sm:$0xf]
  %v86 = vld [vmem:[%s76 + $0x24] sm:$0xf]
  %v87 = vld [vmem:[%s76 + $0x28] sm:$0xf]
  %v88 = vld [vmem:[%s76 + $0x2c] sm:$0xf]
  %v89 = vld [vmem:[%s76 + $0x30] sm:$0xf]
  %v90 = vld [vmem:[%s76 + $0x34] sm:$0xf]
  %v91 = vld [vmem:[%s76 + $0x38] sm:$0xf]
  %v92 = vld [vmem:[%s76 + $0x3c] sm:$0xf]
  %v109 = vunpack.c.l.b16 %v77
  %v110 = vunpack.c.l.b16 %v78
  %v111 = vunpack.c.l.b16 %v79
  %v112 = vunpack.c.l.b16 %v80
  %v113 = vunpack.c.l.b16 %v81
  %v114 = vunpack.c.l.b16 %v82
  %v115 = vunpack.c.l.b16 %v83
  %v116 = vunpack.c.l.b16 %v84
  %v117 = vunpack.c.l.b16 %v85
  %v118 = vunpack.c.l.b16 %v86
  %v119 = vunpack.c.l.b16 %v87
  %v120 = vunpack.c.l.b16 %v88
  %v121 = vunpack.c.l.b16 %v89
  %v122 = vunpack.c.l.b16 %v90
  %v123 = vunpack.c.l.b16 %v91
  %v124 = vunpack.c.l.b16 %v92
  %v125 = vpack.c.b16 %v110, %v109
  %v126 = vpack.c.b16 %v112, %v111
  %v127 = vpack.c.b16 %v114, %v113
  %v128 = vpack.c.b16 %v116, %v115
  %v129 = vpack.c.b16 %v118, %v117
  %v130 = vpack.c.b16 %v120, %v119
  %v131 = vpack.c.b16 %v122, %v121
  %v132 = vpack.c.b16 %v124, %v123
  %141 = vmatprep.subr.bf16.mxu0 0
  %142 = vmatpush1.bf16.msra.mxu0 %v125
  %143 = vmatprep.subr.bf16.mxu0 0
  %144 = vmatpush1.bf16.msra.mxu0 %v126
  %145 = vmatprep.subr.bf16.mxu0 0
  %146 = vmatpush1.bf16.msra.mxu0 %v127
  %147 = vmatprep.subr.bf16.mxu0 0
  %148 = vmatpush1.bf16.msra.mxu0 %v128
  %149 = vmatprep.subr.bf16.mxu0 0
  %150 = vmatpush1.bf16.msra.mxu0 %v129
  %151 = vmatprep.subr.bf16.mxu0 0
  %152 = vmatpush1.bf16.msra.mxu0 %v130
  %153 = vmatprep.subr.bf16.mxu0 0
  %154 = vmatpush1.bf16.msra.mxu0 %v131
  %155 = vmatprep.subr.bf16.mxu0 0
  %156 = vmatpush1.bf16.msra.mxu0 %v132
  %157 = vmatprep.subr.bf16.mxu0 0
  %158 = vmatpush1.bf16.msra.mxu0 0
  %159 = vmatprep.subr.bf16.mxu0 0
  %160 = vmatpush1.bf16.msra.mxu0 0
  %161 = vmatprep.subr.bf16.mxu0 0
  %162 = vmatpush1.bf16.msra.mxu0 0
  %163 = vmatprep.subr.bf16.mxu0 0
  %164 = vmatpush1.bf16.msra.mxu0 0
  %165 = vmatprep.subr.bf16.mxu0 0
  %166 = vmatpush1.bf16.msra.mxu0 0
  %167 = vmatprep.subr.bf16.mxu0 0
  %168 = vmatpush1.bf16.msra.mxu0 0
  %169 = vmatprep.subr.bf16.mxu0 0
  %170 = vmatpush1.bf16.msra.mxu0 0
  %171 = vmatprep.subr.bf16.mxu0 0
  %172 = vmatpush1.bf16.msra.mxu0 0
  %173 = vmatprep.mubr.bf16.mxu0 0
  %174 = vmatmul.mubr.bf16.gmra.mrb[0].mxu0 %v68
  %v175 = vpop.f32.mrb[0].mxu0
  %v176 = vadd.f32 0.0, %v175
  %v177 = vpop.f32.mrb[0].mxu0
  %v178 = vpop.f32.mrb[0].mxu0
  %v179 = vadd.f32 0.0, %v178
  %v180 = vpop.f32.mrb[0].mxu0
  %181 = vmatprep.mubr.bf16.mxu0 0
  %182 = vmatmul.mubr.bf16.gmra.mrb[0].mxu0 %v69
  %v183 = vpop.f32.mrb[0].mxu0
  %v184 = vadd.f32 0.0, %v183
  %v185 = vpop.f32.mrb[0].mxu0
  %v186 = vpop.f32.mrb[0].mxu0
  %v187 = vadd.f32 0.0, %v186
  %v188 = vpop.f32.mrb[0].mxu0
  %189 = vmatprep.mubr.bf16.mxu0 0
  %190 = vmatmul.mubr.bf16.gmra.mrb[0].mxu0 %v70
  %v191 = vpop.f32.mrb[0].mxu0
  %v192 = vadd.f32 0.0, %v191
  %v193 = vpop.f32.mrb[0].mxu0
  %v194 = vpop.f32.mrb[0].mxu0
  %v195 = vadd.f32 0.0, %v194
  %v196 = vpop.f32.mrb[0].mxu0
  %197 = vmatprep.mubr.bf16.mxu0 0
  %198 = vmatmul.mubr.bf16.gmra.mrb[0].mxu0 %v71
  %v199 = vpop.f32.mrb[0].mxu0
  %v200 = vadd.f32 0.0, %v199
  %v201 = vpop.f32.mrb[0].mxu0
  %v202 = vpop.f32.mrb[0].mxu0
  %v203 = vadd.f32 0.0, %v202
  %v204 = vpop.f32.mrb[0].mxu0
  %205 = vmatprep.mubr.bf16.mxu0 0
  %206 = vmatmul.mubr.bf16.gmra.mrb[0].mxu0 %v72
  %v207 = vpop.f32.mrb[0].mxu0
  %v208 = vadd.f32 0.0, %v207
  %v209 = vpop.f32.mrb[0].mxu0
  %v210 = vpop.f32.mrb[0].mxu0
  %v211 = vadd.f32 0.0, %v210
  %v212 = vpop.f32.mrb[0].mxu0
  %213 = vmatprep.mubr.bf16.mxu0 0
  %214 = vmatmul.mubr.bf16.gmra.mrb[0].mxu0 %v73
  %v215 = vpop.f32.mrb[0].mxu0
  %v216 = vadd.f32 0.0, %v215
  %v217 = vpop.f32.mrb[0].mxu0
  %v218 = vpop.f32.mrb[0].mxu0
  %v219 = vadd.f32 0.0, %v218
  %v220 = vpop.f32.mrb[0].mxu0
  %221 = vmatprep.mubr.bf16.mxu0 0
  %222 = vmatmul.mubr.bf16.gmra.mrb[0].mxu0 %v74
  %v223 = vpop.f32.mrb[0].mxu0
  %v224 = vadd.f32 0.0, %v223
  %v225 = vpop.f32.mrb[0].mxu0
  %v226 = vpop.f32.mrb[0].mxu0
  %v227 = vadd.f32 0.0, %v226
  %v228 = vpop.f32.mrb[0].mxu0
  %229 = vmatprep.mubr.bf16.mxu0 0
  %230 = vmatmul.mubr.bf16.gmra.mrb[0].mxu0 %v75
  %v231 = vpop.f32.mrb[0].mxu0
  %v232 = vadd.f32 0.0, %v231
  %v233 = vpop.f32.mrb[0].mxu0
  %v234 = vpop.f32.mrb[0].mxu0
  %v235 = vadd.f32 0.0, %v234
  %v236 = vpop.f32.mrb[0].mxu0
  %237 = vdwg.mxu0
  %v254 = vunpack.c.l.b16 %v36
  %v255 = vunpack.c.l.b16 %v37
  %v256 = vunpack.c.l.b16 %v38
  %v257 = vunpack.c.l.b16 %v39
  %v258 = vunpack.c.l.b16 %v40
  %v259 = vunpack.c.l.b16 %v41
  %v260 = vunpack.c.l.b16 %v42
  %v261 = vunpack.c.l.b16 %v43
  %v262 = vunpack.c.l.b16 %v44
  %v263 = vunpack.c.l.b16 %v45
  %v264 = vunpack.c.l.b16 %v46
  %v265 = vunpack.c.l.b16 %v47
  %v266 = vunpack.c.l.b16 %v48
  %v267 = vunpack.c.l.b16 %v49
  %v268 = vunpack.c.l.b16 %v50
  %v269 = vunpack.c.l.b16 %v51
  %v270 = vpack.c.b16 %v255, %v254
  %v271 = vpack.c.b16 %v257, %v256
  %v272 = vpack.c.b16 %v259, %v258
  %v273 = vpack.c.b16 %v261, %v260
  %v274 = vpack.c.b16 %v263, %v262
  %v275 = vpack.c.b16 %v265, %v264
  %v276 = vpack.c.b16 %v267, %v266
  %v277 = vpack.c.b16 %v269, %v268
  %286 = vmatprep.subr.bf16.mxu0 0
  %287 = vmatpush1.bf16.msra.mxu0 %v270
  %288 = vmatprep.subr.bf16.mxu0 0
  %289 = vmatpush1.bf16.msra.mxu0 %v271
  %290 = vmatprep.subr.bf16.mxu0 0
  %291 = vmatpush1.bf16.msra.mxu0 %v272
  %292 = vmatprep.subr.bf16.mxu0 0
  %293 = vmatpush1.bf16.msra.mxu0 %v273
  %294 = vmatprep.subr.bf16.mxu0 0
  %295 = vmatpush1.bf16.msra.mxu0 %v274
  %296 = vmatprep.subr.bf16.mxu0 0
  %297 = vmatpush1.bf16.msra.mxu0 %v275
  %298 = vmatprep.subr.bf16.mxu0 0
  %299 = vmatpush1.bf16.msra.mxu0 %v276
  %300 = vmatprep.subr.bf16.mxu0 0
  %301 = vmatpush1.bf16.msra.mxu0 %v277
  %302 = vmatprep.subr.bf16.mxu0 0
  %303 = vmatpush1.bf16.msra.mxu0 0
  %304 = vmatprep.subr.bf16.mxu0 0
  %305 = vmatpush1.bf16.msra.mxu0 0
  %306 = vmatprep.subr.bf16.mxu0 0
  %307 = vmatpush1.bf16.msra.mxu0 0
  %308 = vmatprep.subr.bf16.mxu0 0
  %309 = vmatpush1.bf16.msra.mxu0 0
  %310 = vmatprep.subr.bf16.mxu0 0
  %311 = vmatpush1.bf16.msra.mxu0 0
  %312 = vmatprep.subr.bf16.mxu0 0
  %313 = vmatpush1.bf16.msra.mxu0 0
  %314 = vmatprep.subr.bf16.mxu0 0
  %315 = vmatpush1.bf16.msra.mxu0 0
  %316 = vmatprep.subr.bf16.mxu0 0
  %317 = vmatpush1.bf16.msra.mxu0 0
  %318 = vmatprep.mubr.bf16.mxu0 0
  %319 = vmatmul.mubr.bf16.gmra.mrb[0].mxu0 %v28
  %v320 = vpop.f32.mrb[0].mxu0
  %v321 = vadd.f32 %v176, %v320
  %v322 = vpop.f32.mrb[0].mxu0
  %v323 = vpop.f32.mrb[0].mxu0
  %v324 = vadd.f32 %v179, %v323
  %v325 = vpop.f32.mrb[0].mxu0
  %326 = vmatprep.mubr.bf16.mxu0 0
  %327 = vmatmul.mubr.bf16.gmra.mrb[0].mxu0 %v29
  %v328 = vpop.f32.mrb[0].mxu0
  %v329 = vadd.f32 %v184, %v328
  %v330 = vpop.f32.mrb[0].mxu0
  %v331 = vpop.f32.mrb[0].mxu0
  %v332 = vadd.f32 %v187, %v331
  %v333 = vpop.f32.mrb[0].mxu0
  %334 = vmatprep.mubr.bf16.mxu0 0
  %335 = vmatmul.mubr.bf16.gmra.mrb[0].mxu0 %v30
  %v336 = vpop.f32.mrb[0].mxu0
  %v337 = vadd.f32 %v192, %v336
  %v338 = vpop.f32.mrb[0].mxu0
  %v339 = vpop.f32.mrb[0].mxu0
  %v340 = vadd.f32 %v195, %v339
  %v341 = vpop.f32.mrb[0].mxu0
  %342 = vmatprep.mubr.bf16.mxu0 0
  %343 = vmatmul.mubr.bf16.gmra.mrb[0].mxu0 %v31
  %v344 = vpop.f32.mrb[0].mxu0
  %v345 = vadd.f32 %v200, %v344
  %v346 = vpop.f32.mrb[0].mxu0
  %v347 = vpop.f32.mrb[0].mxu0
  %v348 = vadd.f32 %v203, %v347
  %v349 = vpop.f32.mrb[0].mxu0
  %350 = vmatprep.mubr.bf16.mxu0 0
  %351 = vmatmul.mubr.bf16.gmra.mrb[0].mxu0 %v32
  %v352 = vpop.f32.mrb[0].mxu0
  %v353 = vadd.f32 %v208, %v352
  %v354 = vpop.f32.mrb[0].mxu0
  %v355 = vpop.f32.mrb[0].mxu0
  %v356 = vadd.f32 %v211, %v355
  %v357 = vpop.f32.mrb[0].mxu0
  %358 = vmatprep.mubr.bf16.mxu0 0
  %359 = vmatmul.mubr.bf16.gmra.mrb[0].mxu0 %v33
  %v360 = vpop.f32.mrb[0].mxu0
  %v361 = vadd.f32 %v216, %v360
  %v362 = vpop.f32.mrb[0].mxu0
  %v363 = vpop.f32.mrb[0].mxu0
  %v364 = vadd.f32 %v219, %v363
  %v365 = vpop.f32.mrb[0].mxu0
  %366 = vmatprep.mubr.bf16.mxu0 0
  %367 = vmatmul.mubr.bf16.gmra.mrb[0].mxu0 %v34
  %v368 = vpop.f32.mrb[0].mxu0
  %v369 = vadd.f32 %v224, %v368
  %v370 = vpop.f32.mrb[0].mxu0
  %v371 = vpop.f32.mrb[0].mxu0
  %v372 = vadd.f32 %v227, %v371
  %v373 = vpop.f32.mrb[0].mxu0
  %374 = vmatprep.mubr.bf16.mxu0 0
  %375 = vmatmul.mubr.bf16.gmra.mrb[0].mxu0 %v35
  %v376 = vpop.f32.mrb[0].mxu0
  %v377 = vadd.f32 %v232, %v376
  %v378 = vpop.f32.mrb[0].mxu0
  %v379 = vpop.f32.mrb[0].mxu0
  %v380 = vadd.f32 %v235, %v379
  %v381 = vpop.f32.mrb[0].mxu0
  %382 = vdwg.mxu0
  %v383 = vld [vmem:[%s0 + $0x2] sm:$0xff]
  %v384 = vld [vmem:[%s0 + $0x12] sm:$0xff]
  %v385 = vld [vmem:[%s0 + $0x22] sm:$0xff]
  %v386 = vld [vmem:[%s0 + $0x32] sm:$0xff]
  %v387 = vld [vmem:[%s0 + $0x42] sm:$0xff]
  %v388 = vld [vmem:[%s0 + $0x52] sm:$0xff]
  %v389 = vld [vmem:[%s0 + $0x62] sm:$0xff]
  %v390 = vld [vmem:[%s0 + $0x72] sm:$0xff]
  %v391 = vld [vmem:[%s0 + $0xa2] sm:$0xff]
  %v392 = vld [vmem:[%s0 + $0xb2] sm:$0xff]
  %v393 = vld [vmem:[%s0 + $0xc2] sm:$0xff]
  %v394 = vld [vmem:[%s0 + $0xd2] sm:$0xff]
  %v395 = vld [vmem:[%s0 + $0xe2] sm:$0xff]
  %v396 = vld [vmem:[%s0 + $0xf2] sm:$0xff]
  %v397 = vld [vmem:[%s0 + $0x102] sm:$0xff]
  %v398 = vld [vmem:[%s0 + $0x112] sm:$0xff]
  %v399 = vpack.c.bf16 %v384, %v383
  %v400 = vpack.c.bf16 %v386, %v385
  %v401 = vpack.c.bf16 %v388, %v387
  %v402 = vpack.c.bf16 %v390, %v389
  %v403 = vpack.c.bf16 %v392, %v391
  %v404 = vpack.c.bf16 %v394, %v393
  %v405 = vpack.c.bf16 %v396, %v395
  %v406 = vpack.c.bf16 %v398, %v397
  %s407 = scalar_lea.vmem %s1, 128
  %v408 = vld [vmem:[%s407] sm:$0xf]
  %v409 = vld [vmem:[%s407 + $0x4] sm:$0xf]
  %v410 = vld [vmem:[%s407 + $0x8] sm:$0xf]
  %v411 = vld [vmem:[%s407 + $0xc] sm:$0xf]
  %v412 = vld [vmem:[%s407 + $0x10] sm:$0xf]
  %v413 = vld [vmem:[%s407 + $0x14] sm:$0xf]
  %v414 = vld [vmem:[%s407 + $0x18] sm:$0xf]
  %v415 = vld [vmem:[%s407 + $0x1c] sm:$0xf]
  %v416 = vld [vmem:[%s407 + $0x20] sm:$0xf]
  %v417 = vld [vmem:[%s407 + $0x24] sm:$0xf]
  %v418 = vld [vmem:[%s407 + $0x28] sm:$0xf]
  %v419 = vld [vmem:[%s407 + $0x2c] sm:$0xf]
  %v420 = vld [vmem:[%s407 + $0x30] sm:$0xf]
  %v421 = vld [vmem:[%s407 + $0x34] sm:$0xf]
  %v422 = vld [vmem:[%s407 + $0x38] sm:$0xf]
  %v423 = vld [vmem:[%s407 + $0x3c] sm:$0xf]
  %v440 = vunpack.c.l.b16 %v408
  %v441 = vunpack.c.l.b16 %v409
  %v442 = vunpack.c.l.b16 %v410
  %v443 = vunpack.c.l.b16 %v411
  %v444 = vunpack.c.l.b16 %v412
  %v445 = vunpack.c.l.b16 %v413
  %v446 = vunpack.c.l.b16 %v414
  %v447 = vunpack.c.l.b16 %v415
  %v448 = vunpack.c.l.b16 %v416
  %v449 = vunpack.c.l.b16 %v417
  %v450 = vunpack.c.l.b16 %v418
  %v451 = vunpack.c.l.b16 %v419
  %v452 = vunpack.c.l.b16 %v420
  %v453 = vunpack.c.l.b16 %v421
  %v454 = vunpack.c.l.b16 %v422
  %v455 = vunpack.c.l.b16 %v423
  %v456 = vpack.c.b16 %v441, %v440
  %v457 = vpack.c.b16 %v443, %v442
  %v458 = vpack.c.b16 %v445, %v444
  %v459 = vpack.c.b16 %v447, %v446
  %v460 = vpack.c.b16 %v449, %v448
  %v461 = vpack.c.b16 %v451, %v450
  %v462 = vpack.c.b16 %v453, %v452
  %v463 = vpack.c.b16 %v455, %v454
  %472 = vmatprep.subr.bf16.mxu0 0
  %473 = vmatpush1.bf16.msra.mxu0 %v456
  %474 = vmatprep.subr.bf16.mxu0 0
  %475 = vmatpush1.bf16.msra.mxu0 %v457
  %476 = vmatprep.subr.bf16.mxu0 0
  %477 = vmatpush1.bf16.msra.mxu0 %v458
  %478 = vmatprep.subr.bf16.mxu0 0
  %479 = vmatpush1.bf16.msra.mxu0 %v459
  %480 = vmatprep.subr.bf16.mxu0 0
  %481 = vmatpush1.bf16.msra.mxu0 %v460
  %482 = vmatprep.subr.bf16.mxu0 0
  %483 = vmatpush1.bf16.msra.mxu0 %v461
  %484 = vmatprep.subr.bf16.mxu0 0
  %485 = vmatpush1.bf16.msra.mxu0 %v462
  %486 = vmatprep.subr.bf16.mxu0 0
  %487 = vmatpush1.bf16.msra.mxu0 %v463
  %488 = vmatprep.subr.bf16.mxu0 0
  %489 = vmatpush1.bf16.msra.mxu0 0
  %490 = vmatprep.subr.bf16.mxu0 0
  %491 = vmatpush1.bf16.msra.mxu0 0
  %492 = vmatprep.subr.bf16.mxu0 0
  %493 = vmatpush1.bf16.msra.mxu0 0
  %494 = vmatprep.subr.bf16.mxu0 0
  %495 = vmatpush1.bf16.msra.mxu0 0
  %496 = vmatprep.subr.bf16.mxu0 0
  %497 = vmatpush1.bf16.msra.mxu0 0
  %498 = vmatprep.subr.bf16.mxu0 0
  %499 = vmatpush1.bf16.msra.mxu0 0
  %500 = vmatprep.subr.bf16.mxu0 0
  %501 = vmatpush1.bf16.msra.mxu0 0
  %502 = vmatprep.subr.bf16.mxu0 0
  %503 = vmatpush1.bf16.msra.mxu0 0
  %504 = vmatprep.mubr.bf16.mxu0 0
  %505 = vmatmul.mubr.bf16.gmra.mrb[0].mxu0 %v399
  %v506 = vpop.f32.mrb[0].mxu0
  %v507 = vadd.f32 0.0, %v506
  %v508 = vpop.f32.mrb[0].mxu0
  %v509 = vpop.f32.mrb[0].mxu0
  %v510 = vadd.f32 0.0, %v509
  %v511 = vpop.f32.mrb[0].mxu0
  %512 = vmatprep.mubr.bf16.mxu0 0
  %513 = vmatmul.mubr.bf16.gmra.mrb[0].mxu0 %v400
  %v514 = vpop.f32.mrb[0].mxu0
  %v515 = vadd.f32 0.0, %v514
  %v516 = vpop.f32.mrb[0].mxu0
  %v517 = vpop.f32.mrb[0].mxu0
  %v518 = vadd.f32 0.0, %v517
  %v519 = vpop.f32.mrb[0].mxu0
  %520 = vmatprep.mubr.bf16.mxu0 0
  %521 = vmatmul.mubr.bf16.gmra.mrb[0].mxu0 %v401
  %v522 = vpop.f32.mrb[0].mxu0
  %v523 = vadd.f32 0.0, %v522
  %v524 = vpop.f32.mrb[0].mxu0
  %v525 = vpop.f32.mrb[0].mxu0
  %v526 = vadd.f32 0.0, %v525
  %v527 = vpop.f32.mrb[0].mxu0
  %528 = vmatprep.mubr.bf16.mxu0 0
  %529 = vmatmul.mubr.bf16.gmra.mrb[0].mxu0 %v402
  %v530 = vpop.f32.mrb[0].mxu0
  %v531 = vadd.f32 0.0, %v530
  %v532 = vpop.f32.mrb[0].mxu0
  %v533 = vpop.f32.mrb[0].mxu0
  %v534 = vadd.f32 0.0, %v533
  %v535 = vpop.f32.mrb[0].mxu0
  %536 = vmatprep.mubr.bf16.mxu0 0
  %537 = vmatmul.mubr.bf16.gmra.mrb[0].mxu0 %v403
  %v538 = vpop.f32.mrb[0].mxu0
  %v539 = vadd.f32 0.0, %v538
  %v540 = vpop.f32.mrb[0].mxu0
  %v541 = vpop.f32.mrb[0].mxu0
  %v542 = vadd.f32 0.0, %v541
  %v543 = vpop.f32.mrb[0].mxu0
  %544 = vmatprep.mubr.bf16.mxu0 0
  %545 = vmatmul.mubr.bf16.gmra.mrb[0].mxu0 %v404
  %v546 = vpop.f32.mrb[0].mxu0
  %v547 = vadd.f32 0.0, %v546
  %v548 = vpop.f32.mrb[0].mxu0
  %v549 = vpop.f32.mrb[0].mxu0
  %v550 = vadd.f32 0.0, %v549
  %v551 = vpop.f32.mrb[0].mxu0
  %552 = vmatprep.mubr.bf16.mxu0 0
  %553 = vmatmul.mubr.bf16.gmra.mrb[0].mxu0 %v405
  %v554 = vpop.f32.mrb[0].mxu0
  %v555 = vadd.f32 0.0, %v554
  %v556 = vpop.f32.mrb[0].mxu0
  %v557 = vpop.f32.mrb[0].mxu0
  %v558 = vadd.f32 0.0, %v557
  %v559 = vpop.f32.mrb[0].mxu0
  %560 = vmatprep.mubr.bf16.mxu0 0
  %561 = vmatmul.mubr.bf16.gmra.mrb[0].mxu0 %v406
  %v562 = vpop.f32.mrb[0].mxu0
  %v563 = vadd.f32 0.0, %v562
  %v564 = vpop.f32.mrb[0].mxu0
  %v565 = vpop.f32.mrb[0].mxu0
  %v566 = vadd.f32 0.0, %v565
  %v567 = vpop.f32.mrb[0].mxu0
  %568 = vdwg.mxu0
  %v569 = vadd.f32 %v321, %v507
  %v570 = vadd.f32 %v324, %v510
  %v571 = vadd.f32 %v329, %v515
  %v572 = vadd.f32 %v332, %v518
  %v573 = vadd.f32 %v337, %v523
  %v574 = vadd.f32 %v340, %v526
  %v575 = vadd.f32 %v345, %v531
  %v576 = vadd.f32 %v348, %v534
  %v577 = vadd.f32 %v353, %v539
  %v578 = vadd.f32 %v356, %v542
  %v579 = vadd.f32 %v361, %v547
  %v580 = vadd.f32 %v364, %v550
  %v581 = vadd.f32 %v369, %v555
  %v582 = vadd.f32 %v372, %v558
  %v583 = vadd.f32 %v377, %v563
  %v584 = vadd.f32 %v380, %v566
  %s585 = scalar_lea.vmem %s0, 16
  %v586 = vld [vmem:[%s585] sm:$0xff]
  %v587 = vld [vmem:[%s585 + $0x10] sm:$0xff]
  %v588 = vld [vmem:[%s585 + $0x20] sm:$0xff]
  %v589 = vld [vmem:[%s585 + $0x30] sm:$0xff]
  %v590 = vld [vmem:[%s585 + $0x40] sm:$0xff]
  %v591 = vld [vmem:[%s585 + $0x50] sm:$0xff]
  %v592 = vld [vmem:[%s585 + $0x60] sm:$0xff]
  %v593 = vld [vmem:[%s585 + $0x70] sm:$0xff]
  %v594 = vld [vmem:[%s585 + $0xa0] sm:$0xff]
  %v595 = vld [vmem:[%s585 + $0xb0] sm:$0xff]
  %v596 = vld [vmem:[%s585 + $0xc0] sm:$0xff]
  %v597 = vld [vmem:[%s585 + $0xd0] sm:$0xff]
  %v598 = vld [vmem:[%s585 + $0xe0] sm:$0xff]
  %v599 = vld [vmem:[%s585 + $0xf0] sm:$0xff]
  %v600 = vld [vmem:[%s585 + $0x100] sm:$0xff]
  %v601 = vld [vmem:[%s585 + $0x110] sm:$0xff]
  %v602 = vpack.c.bf16 %v587, %v586
  %v603 = vpack.c.bf16 %v589, %v588
  %v604 = vpack.c.bf16 %v591, %v590
  %v605 = vpack.c.bf16 %v593, %v592
  %v606 = vpack.c.bf16 %v595, %v594
  %v607 = vpack.c.bf16 %v597, %v596
  %v608 = vpack.c.bf16 %v599, %v598
  %v609 = vpack.c.bf16 %v601, %v600
  %s610 = scalar_lea.vmem %s1, 192
  %v611 = vld [vmem:[%s610] sm:$0xf]
  %v612 = vld [vmem:[%s610 + $0x4] sm:$0xf]
  %v613 = vld [vmem:[%s610 + $0x8] sm:$0xf]
  %v614 = vld [vmem:[%s610 + $0xc] sm:$0xf]
  %v615 = vld [vmem:[%s610 + $0x10] sm:$0xf]
  %v616 = vld [vmem:[%s610 + $0x14] sm:$0xf]
  %v617 = vld [vmem:[%s610 + $0x18] sm:$0xf]
  %v618 = vld [vmem:[%s610 + $0x1c] sm:$0xf]
  %v619 = vld [vmem:[%s610 + $0x20] sm:$0xf]
  %v620 = vld [vmem:[%s610 + $0x24] sm:$0xf]
  %v621 = vld [vmem:[%s610 + $0x28] sm:$0xf]
  %v622 = vld [vmem:[%s610 + $0x2c] sm:$0xf]
  %v623 = vld [vmem:[%s610 + $0x30] sm:$0xf]
  %v624 = vld [vmem:[%s610 + $0x34] sm:$0xf]
  %v625 = vld [vmem:[%s610 + $0x38] sm:$0xf]
  %v626 = vld [vmem:[%s610 + $0x3c] sm:$0xf]
  %v643 = vunpack.c.l.b16 %v611
  %v644 = vunpack.c.l.b16 %v612
  %v645 = vunpack.c.l.b16 %v613
  %v646 = vunpack.c.l.b16 %v614
  %v647 = vunpack.c.l.b16 %v615
  %v648 = vunpack.c.l.b16 %v616
  %v649 = vunpack.c.l.b16 %v617
  %v650 = vunpack.c.l.b16 %v618
  %v651 = vunpack.c.l.b16 %v619
  %v652 = vunpack.c.l.b16 %v620
  %v653 = vunpack.c.l.b16 %v621
  %v654 = vunpack.c.l.b16 %v622
  %v655 = vunpack.c.l.b16 %v623
  %v656 = vunpack.c.l.b16 %v624
  %v657 = vunpack.c.l.b16 %v625
  %v658 = vunpack.c.l.b16 %v626
  %v659 = vpack.c.b16 %v644, %v643
  %v660 = vpack.c.b16 %v646, %v645
  %v661 = vpack.c.b16 %v648, %v647
  %v662 = vpack.c.b16 %v650, %v649
  %v663 = vpack.c.b16 %v652, %v651
  %v664 = vpack.c.b16 %v654, %v653
  %v665 = vpack.c.b16 %v656, %v655
  %v666 = vpack.c.b16 %v658, %v657
  %675 = vmatprep.subr.bf16.mxu0 0
  %676 = vmatpush1.bf16.msra.mxu0 %v659
  %677 = vmatprep.subr.bf16.mxu0 0
  %678 = vmatpush1.bf16.msra.mxu0 %v660
  %679 = vmatprep.subr.bf16.mxu0 0
  %680 = vmatpush1.bf16.msra.mxu0 %v661
  %681 = vmatprep.subr.bf16.mxu0 0
  %682 = vmatpush1.bf16.msra.mxu0 %v662
  %683 = vmatprep.subr.bf16.mxu0 0
  %684 = vmatpush1.bf16.msra.mxu0 %v663
  %685 = vmatprep.subr.bf16.mxu0 0
  %686 = vmatpush1.bf16.msra.mxu0 %v664
  %687 = vmatprep.subr.bf16.mxu0 0
  %688 = vmatpush1.bf16.msra.mxu0 %v665
  %689 = vmatprep.subr.bf16.mxu0 0
  %690 = vmatpush1.bf16.msra.mxu0 %v666
  %691 = vmatprep.subr.bf16.mxu0 0
  %692 = vmatpush1.bf16.msra.mxu0 0
  %693 = vmatprep.subr.bf16.mxu0 0
  %694 = vmatpush1.bf16.msra.mxu0 0
  %695 = vmatprep.subr.bf16.mxu0 0
  %696 = vmatpush1.bf16.msra.mxu0 0
  %697 = vmatprep.subr.bf16.mxu0 0
  %698 = vmatpush1.bf16.msra.mxu0 0
  %699 = vmatprep.subr.bf16.mxu0 0
  %700 = vmatpush1.bf16.msra.mxu0 0
  %701 = vmatprep.subr.bf16.mxu0 0
  %702 = vmatpush1.bf16.msra.mxu0 0
  %703 = vmatprep.subr.bf16.mxu0 0
  %704 = vmatpush1.bf16.msra.mxu0 0
  %705 = vmatprep.subr.bf16.mxu0 0
  %706 = vmatpush1.bf16.msra.mxu0 0
  %707 = vmatprep.mubr.bf16.mxu0 0
  %708 = vmatmul.mubr.bf16.gmra.mrb[0].mxu0 %v602
  %v709 = vpop.f32.mrb[0].mxu0
  %v710 = vadd.f32 0.0, %v709
  %v711 = vpop.f32.mrb[0].mxu0
  %v712 = vpop.f32.mrb[0].mxu0
  %v713 = vadd.f32 0.0, %v712
  %v714 = vpop.f32.mrb[0].mxu0
  %715 = vmatprep.mubr.bf16.mxu0 0
  %716 = vmatmul.mubr.bf16.gmra.mrb[0].mxu0 %v603
  %v717 = vpop.f32.mrb[0].mxu0
  %v718 = vadd.f32 0.0, %v717
  %v719 = vpop.f32.mrb[0].mxu0
  %v720 = vpop.f32.mrb[0].mxu0
  %v721 = vadd.f32 0.0, %v720
  %v722 = vpop.f32.mrb[0].mxu0
  %723 = vmatprep.mubr.bf16.mxu0 0
  %724 = vmatmul.mubr.bf16.gmra.mrb[0].mxu0 %v604
  %v725 = vpop.f32.mrb[0].mxu0
  %v726 = vadd.f32 0.0, %v725
  %v727 = vpop.f32.mrb[0].mxu0
  %v728 = vpop.f32.mrb[0].mxu0
  %v729 = vadd.f32 0.0, %v728
  %v730 = vpop.f32.mrb[0].mxu0
  %731 = vmatprep.mubr.bf16.mxu0 0
  %732 = vmatmul.mubr.bf16.gmra.mrb[0].mxu0 %v605
  %v733 = vpop.f32.mrb[0].mxu0
  %v734 = vadd.f32 0.0, %v733
  %v735 = vpop.f32.mrb[0].mxu0
  %v736 = vpop.f32.mrb[0].mxu0
  %v737 = vadd.f32 0.0, %v736
  %v738 = vpop.f32.mrb[0].mxu0
  %739 = vmatprep.mubr.bf16.mxu0 0
  %740 = vmatmul.mubr.bf16.gmra.mrb[0].mxu0 %v606
  %v741 = vpop.f32.mrb[0].mxu0
  %v742 = vadd.f32 0.0, %v741
  %v743 = vpop.f32.mrb[0].mxu0
  %v744 = vpop.f32.mrb[0].mxu0
  %v745 = vadd.f32 0.0, %v744
  %v746 = vpop.f32.mrb[0].mxu0
  %747 = vmatprep.mubr.bf16.mxu0 0
  %748 = vmatmul.mubr.bf16.gmra.mrb[0].mxu0 %v607
  %v749 = vpop.f32.mrb[0].mxu0
  %v750 = vadd.f32 0.0, %v749
  %v751 = vpop.f32.mrb[0].mxu0
  %v752 = vpop.f32.mrb[0].mxu0
  %v753 = vadd.f32 0.0, %v752
  %v754 = vpop.f32.mrb[0].mxu0
  %755 = vmatprep.mubr.bf16.mxu0 0
  %756 = vmatmul.mubr.bf16.gmra.mrb[0].mxu0 %v608
  %v757 = vpop.f32.mrb[0].mxu0
  %v758 = vadd.f32 0.0, %v757
  %v759 = vpop.f32.mrb[0].mxu0
  %v760 = vpop.f32.mrb[0].mxu0
  %v761 = vadd.f32 0.0, %v760
  %v762 = vpop.f32.mrb[0].mxu0
  %763 = vmatprep.mubr.bf16.mxu0 0
  %764 = vmatmul.mubr.bf16.gmra.mrb[0].mxu0 %v609
  %v765 = vpop.f32.mrb[0].mxu0
  %v766 = vadd.f32 0.0, %v765
  %v767 = vpop.f32.mrb[0].mxu0
  %v768 = vpop.f32.mrb[0].mxu0
  %v769 = vadd.f32 0.0, %v768
  %v770 = vpop.f32.mrb[0].mxu0
  %771 = vdwg.mxu0
  %v772 = vadd.f32 %v569, %v710
  %v773 = vadd.f32 %v570, %v713
  %v774 = vadd.f32 %v571, %v718
  %v775 = vadd.f32 %v572, %v721
  %v776 = vadd.f32 %v573, %v726
  %v777 = vadd.f32 %v574, %v729
  %v778 = vadd.f32 %v575, %v734
  %v779 = vadd.f32 %v576, %v737
  %v780 = vadd.f32 %v577, %v742
  %v781 = vadd.f32 %v578, %v745
  %v782 = vadd.f32 %v579, %v750
  %v783 = vadd.f32 %v580, %v753
  %v784 = vadd.f32 %v581, %v758
  %v785 = vadd.f32 %v582, %v761
  %v786 = vadd.f32 %v583, %v766
  %v787 = vadd.f32 %v584, %v769
  %v788 = vld [vmem:[%s585 + $0x1] sm:$0xff]
  %v789 = vld [vmem:[%s585 + $0x11] sm:$0xff]
  %v790 = vld [vmem:[%s585 + $0x21] sm:$0xff]
  %v791 = vld [vmem:[%s585 + $0x31] sm:$0xff]
  %v792 = vld [vmem:[%s585 + $0x41] sm:$0xff]
  %v793 = vld [vmem:[%s585 + $0x51] sm:$0xff]
  %v794 = vld [vmem:[%s585 + $0x61] sm:$0xff]
  %v795 = vld [vmem:[%s585 + $0x71] sm:$0xff]
  %v796 = vld [vmem:[%s585 + $0xa1] sm:$0xff]
  %v797 = vld [vmem:[%s585 + $0xb1] sm:$0xff]
  %v798 = vld [vmem:[%s585 + $0xc1] sm:$0xff]
  %v799 = vld [vmem:[%s585 + $0xd1] sm:$0xff]
  %v800 = vld [vmem:[%s585 + $0xe1] sm:$0xff]
  %v801 = vld [vmem:[%s585 + $0xf1] sm:$0xff]
  %v802 = vld [vmem:[%s585 + $0x101] sm:$0xff]
  %v803 = vld [vmem:[%s585 + $0x111] sm:$0xff]
  %v804 = vpack.c.bf16 %v789, %v788
  %v805 = vpack.c.bf16 %v791, %v790
  %v806 = vpack.c.bf16 %v793, %v792
  %v807 = vpack.c.bf16 %v795, %v794
  %v808 = vpack.c.bf16 %v797, %v796
  %v809 = vpack.c.bf16 %v799, %v798
  %v810 = vpack.c.bf16 %v801, %v800
  %v811 = vpack.c.bf16 %v803, %v802
  %s812 = scalar_lea.vmem %s1, 256
  %v813 = vld [vmem:[%s812] sm:$0xf]
  %v814 = vld [vmem:[%s812 + $0x4] sm:$0xf]
  %v815 = vld [vmem:[%s812 + $0x8] sm:$0xf]
  %v816 = vld [vmem:[%s812 + $0xc] sm:$0xf]
  %v817 = vld [vmem:[%s812 + $0x10] sm:$0xf]
  %v818 = vld [vmem:[%s812 + $0x14] sm:$0xf]
  %v819 = vld [vmem:[%s812 + $0x18] sm:$0xf]
  %v820 = vld [vmem:[%s812 + $0x1c] sm:$0xf]
  %v821 = vld [vmem:[%s812 + $0x20] sm:$0xf]
  %v822 = vld [vmem:[%s812 + $0x24] sm:$0xf]
  %v823 = vld [vmem:[%s812 + $0x28] sm:$0xf]
  %v824 = vld [vmem:[%s812 + $0x2c] sm:$0xf]
  %v825 = vld [vmem:[%s812 + $0x30] sm:$0xf]
  %v826 = vld [vmem:[%s812 + $0x34] sm:$0xf]
  %v827 = vld [vmem:[%s812 + $0x38] sm:$0xf]
  %v828 = vld [vmem:[%s812 + $0x3c] sm:$0xf]
  %v845 = vunpack.c.l.b16 %v813
  %v846 = vunpack.c.l.b16 %v814
  %v847 = vunpack.c.l.b16 %v815
  %v848 = vunpack.c.l.b16 %v816
  %v849 = vunpack.c.l.b16 %v817
  %v850 = vunpack.c.l.b16 %v818
  %v851 = vunpack.c.l.b16 %v819
  %v852 = vunpack.c.l.b16 %v820
  %v853 = vunpack.c.l.b16 %v821
  %v854 = vunpack.c.l.b16 %v822
  %v855 = vunpack.c.l.b16 %v823
  %v856 = vunpack.c.l.b16 %v824
  %v857 = vunpack.c.l.b16 %v825
  %v858 = vunpack.c.l.b16 %v826
  %v859 = vunpack.c.l.b16 %v827
  %v860 = vunpack.c.l.b16 %v828
  %v861 = vpack.c.b16 %v846, %v845
  %v862 = vpack.c.b16 %v848, %v847
  %v863 = vpack.c.b16 %v850, %v849
  %v864 = vpack.c.b16 %v852, %v851
  %v865 = vpack.c.b16 %v854, %v853
  %v866 = vpack.c.b16 %v856, %v855
  %v867 = vpack.c.b16 %v858, %v857
  %v868 = vpack.c.b16 %v860, %v859
  %877 = vmatprep.subr.bf16.mxu0 0
  %878 = vmatpush1.bf16.msra.mxu0 %v861
  %879 = vmatprep.subr.bf16.mxu0 0
  %880 = vmatpush1.bf16.msra.mxu0 %v862
  %881 = vmatprep.subr.bf16.mxu0 0
  %882 = vmatpush1.bf16.msra.mxu0 %v863
  %883 = vmatprep.subr.bf16.mxu0 0
  %884 = vmatpush1.bf16.msra.mxu0 %v864
  %885 = vmatprep.subr.bf16.mxu0 0
  %886 = vmatpush1.bf16.msra.mxu0 %v865
  %887 = vmatprep.subr.bf16.mxu0 0
  %888 = vmatpush1.bf16.msra.mxu0 %v866
  %889 = vmatprep.subr.bf16.mxu0 0
  %890 = vmatpush1.bf16.msra.mxu0 %v867
  %891 = vmatprep.subr.bf16.mxu0 0
  %892 = vmatpush1.bf16.msra.mxu0 %v868
  %893 = vmatprep.subr.bf16.mxu0 0
  %894 = vmatpush1.bf16.msra.mxu0 0
  %895 = vmatprep.subr.bf16.mxu0 0
  %896 = vmatpush1.bf16.msra.mxu0 0
  %897 = vmatprep.subr.bf16.mxu0 0
  %898 = vmatpush1.bf16.msra.mxu0 0
  %899 = vmatprep.subr.bf16.mxu0 0
  %900 = vmatpush1.bf16.msra.mxu0 0
  %901 = vmatprep.subr.bf16.mxu0 0
  %902 = vmatpush1.bf16.msra.mxu0 0
  %903 = vmatprep.subr.bf16.mxu0 0
  %904 = vmatpush1.bf16.msra.mxu0 0
  %905 = vmatprep.subr.bf16.mxu0 0
  %906 = vmatpush1.bf16.msra.mxu0 0
  %907 = vmatprep.subr.bf16.mxu0 0
  %908 = vmatpush1.bf16.msra.mxu0 0
  %909 = vmatprep.mubr.bf16.mxu0 0
  %910 = vmatmul.mubr.bf16.gmra.mrb[0].mxu0 %v804
  %v911 = vpop.f32.mrb[0].mxu0
  %v912 = vadd.f32 0.0, %v911
  %v913 = vpop.f32.mrb[0].mxu0
  %v914 = vpop.f32.mrb[0].mxu0
  %v915 = vadd.f32 0.0, %v914
  %v916 = vpop.f32.mrb[0].mxu0
  %917 = vmatprep.mubr.bf16.mxu0 0
  %918 = vmatmul.mubr.bf16.gmra.mrb[0].mxu0 %v805
  %v919 = vpop.f32.mrb[0].mxu0
  %v920 = vadd.f32 0.0, %v919
  %v921 = vpop.f32.mrb[0].mxu0
  %v922 = vpop.f32.mrb[0].mxu0
  %v923 = vadd.f32 0.0, %v922
  %v924 = vpop.f32.mrb[0].mxu0
  %925 = vmatprep.mubr.bf16.mxu0 0
  %926 = vmatmul.mubr.bf16.gmra.mrb[0].mxu0 %v806
  %v927 = vpop.f32.mrb[0].mxu0
  %v928 = vadd.f32 0.0, %v927
  %v929 = vpop.f32.mrb[0].mxu0
  %v930 = vpop.f32.mrb[0].mxu0
  %v931 = vadd.f32 0.0, %v930
  %v932 = vpop.f32.mrb[0].mxu0
  %933 = vmatprep.mubr.bf16.mxu0 0
  %934 = vmatmul.mubr.bf16.gmra.mrb[0].mxu0 %v807
  %v935 = vpop.f32.mrb[0].mxu0
  %v936 = vadd.f32 0.0, %v935
  %v937 = vpop.f32.mrb[0].mxu0
  %v938 = vpop.f32.mrb[0].mxu0
  %v939 = vadd.f32 0.0, %v938
  %v940 = vpop.f32.mrb[0].mxu0
  %941 = vmatprep.mubr.bf16.mxu0 0
  %942 = vmatmul.mubr.bf16.gmra.mrb[0].mxu0 %v808
  %v943 = vpop.f32.mrb[0].mxu0
  %v944 = vadd.f32 0.0, %v943
  %v945 = vpop.f32.mrb[0].mxu0
  %v946 = vpop.f32.mrb[0].mxu0
  %v947 = vadd.f32 0.0, %v946
  %v948 = vpop.f32.mrb[0].mxu0
  %949 = vmatprep.mubr.bf16.mxu0 0
  %950 = vmatmul.mubr.bf16.gmra.mrb[0].mxu0 %v809
  %v951 = vpop.f32.mrb[0].mxu0
  %v952 = vadd.f32 0.0, %v951
  %v953 = vpop.f32.mrb[0].mxu0
  %v954 = vpop.f32.mrb[0].mxu0
  %v955 = vadd.f32 0.0, %v954
  %v956 = vpop.f32.mrb[0].mxu0
  %957 = vmatprep.mubr.bf16.mxu0 0
  %958 = vmatmul.mubr.bf16.gmra.mrb[0].mxu0 %v810
  %v959 = vpop.f32.mrb[0].mxu0
  %v960 = vadd.f32 0.0, %v959
  %v961 = vpop.f32.mrb[0].mxu0
  %v962 = vpop.f32.mrb[0].mxu0
  %v963 = vadd.f32 0.0, %v962
  %v964 = vpop.f32.mrb[0].mxu0
  %965 = vmatprep.mubr.bf16.mxu0 0
  %966 = vmatmul.mubr.bf16.gmra.mrb[0].mxu0 %v811
  %v967 = vpop.f32.mrb[0].mxu0
  %v968 = vadd.f32 0.0, %v967
  %v969 = vpop.f32.mrb[0].mxu0
  %v970 = vpop.f32.mrb[0].mxu0
  %v971 = vadd.f32 0.0, %v970
  %v972 = vpop.f32.mrb[0].mxu0
  %973 = vdwg.mxu0
  %v974 = vadd.f32 %v772, %v912
  %v975 = vadd.f32 %v773, %v915
  %v976 = vadd.f32 %v774, %v920
  %v977 = vadd.f32 %v775, %v923
  %v978 = vadd.f32 %v776, %v928
  %v979 = vadd.f32 %v777, %v931
  %v980 = vadd.f32 %v778, %v936
  %v981 = vadd.f32 %v779, %v939
  %v982 = vadd.f32 %v780, %v944
  %v983 = vadd.f32 %v781, %v947
  %v984 = vadd.f32 %v782, %v952
  %v985 = vadd.f32 %v783, %v955
  %v986 = vadd.f32 %v784, %v960
  %v987 = vadd.f32 %v785, %v963
  %v988 = vadd.f32 %v786, %v968
  %v989 = vadd.f32 %v787, %v971
  %v990 = vld [vmem:[%s585 + $0x2] sm:$0xff]
  %v991 = vld [vmem:[%s585 + $0x12] sm:$0xff]
  %v992 = vld [vmem:[%s585 + $0x22] sm:$0xff]
  %v993 = vld [vmem:[%s585 + $0x32] sm:$0xff]
  %v994 = vld [vmem:[%s585 + $0x42] sm:$0xff]
  %v995 = vld [vmem:[%s585 + $0x52] sm:$0xff]
  %v996 = vld [vmem:[%s585 + $0x62] sm:$0xff]
  %v997 = vld [vmem:[%s585 + $0x72] sm:$0xff]
  %v998 = vld [vmem:[%s585 + $0xa2] sm:$0xff]
  %v999 = vld [vmem:[%s585 + $0xb2] sm:$0xff]
  %v1000 = vld [vmem:[%s585 + $0xc2] sm:$0xff]
  %v1001 = vld [vmem:[%s585 + $0xd2] sm:$0xff]
  %v1002 = vld [vmem:[%s585 + $0xe2] sm:$0xff]
  %v1003 = vld [vmem:[%s585 + $0xf2] sm:$0xff]
  %v1004 = vld [vmem:[%s585 + $0x102] sm:$0xff]
  %v1005 = vld [vmem:[%s585 + $0x112] sm:$0xff]
  %v1006 = vpack.c.bf16 %v991, %v990
  %v1007 = vpack.c.bf16 %v993, %v992
  %v1008 = vpack.c.bf16 %v995, %v994
  %v1009 = vpack.c.bf16 %v997, %v996
  %v1010 = vpack.c.bf16 %v999, %v998
  %v1011 = vpack.c.bf16 %v1001, %v1000
  %v1012 = vpack.c.bf16 %v1003, %v1002
  %v1013 = vpack.c.bf16 %v1005, %v1004
  %s1014 = scalar_lea.vmem %s1, 320
  %v1015 = vld [vmem:[%s1014] sm:$0xf]
  %v1016 = vld [vmem:[%s1014 + $0x4] sm:$0xf]
  %v1017 = vld [vmem:[%s1014 + $0x8] sm:$0xf]
  %v1018 = vld [vmem:[%s1014 + $0xc] sm:$0xf]
  %v1019 = vld [vmem:[%s1014 + $0x10] sm:$0xf]
  %v1020 = vld [vmem:[%s1014 + $0x14] sm:$0xf]
  %v1021 = vld [vmem:[%s1014 + $0x18] sm:$0xf]
  %v1022 = vld [vmem:[%s1014 + $0x1c] sm:$0xf]
  %v1023 = vld [vmem:[%s1014 + $0x20] sm:$0xf]
  %v1024 = vld [vmem:[%s1014 + $0x24] sm:$0xf]
  %v1025 = vld [vmem:[%s1014 + $0x28] sm:$0xf]
  %v1026 = vld [vmem:[%s1014 + $0x2c] sm:$0xf]
  %v1027 = vld [vmem:[%s1014 + $0x30] sm:$0xf]
  %v1028 = vld [vmem:[%s1014 + $0x34] sm:$0xf]
  %v1029 = vld [vmem:[%s1014 + $0x38] sm:$0xf]
  %v1030 = vld [vmem:[%s1014 + $0x3c] sm:$0xf]
  %v1047 = vunpack.c.l.b16 %v1015
  %v1048 = vunpack.c.l.b16 %v1016
  %v1049 = vunpack.c.l.b16 %v1017
  %v1050 = vunpack.c.l.b16 %v1018
  %v1051 = vunpack.c.l.b16 %v1019
  %v1052 = vunpack.c.l.b16 %v1020
  %v1053 = vunpack.c.l.b16 %v1021
  %v1054 = vunpack.c.l.b16 %v1022
  %v1055 = vunpack.c.l.b16 %v1023
  %v1056 = vunpack.c.l.b16 %v1024
  %v1057 = vunpack.c.l.b16 %v1025
  %v1058 = vunpack.c.l.b16 %v1026
  %v1059 = vunpack.c.l.b16 %v1027
  %v1060 = vunpack.c.l.b16 %v1028
  %v1061 = vunpack.c.l.b16 %v1029
  %v1062 = vunpack.c.l.b16 %v1030
  %v1063 = vpack.c.b16 %v1048, %v1047
  %v1064 = vpack.c.b16 %v1050, %v1049
  %v1065 = vpack.c.b16 %v1052, %v1051
  %v1066 = vpack.c.b16 %v1054, %v1053
  %v1067 = vpack.c.b16 %v1056, %v1055
  %v1068 = vpack.c.b16 %v1058, %v1057
  %v1069 = vpack.c.b16 %v1060, %v1059
  %v1070 = vpack.c.b16 %v1062, %v1061
  %1079 = vmatprep.subr.bf16.mxu0 0
  %1080 = vmatpush1.bf16.msra.mxu0 %v1063
  %1081 = vmatprep.subr.bf16.mxu0 0
  %1082 = vmatpush1.bf16.msra.mxu0 %v1064
  %1083 = vmatprep.subr.bf16.mxu0 0
  %1084 = vmatpush1.bf16.msra.mxu0 %v1065
  %1085 = vmatprep.subr.bf16.mxu0 0
  %1086 = vmatpush1.bf16.msra.mxu0 %v1066
  %1087 = vmatprep.subr.bf16.mxu0 0
  %1088 = vmatpush1.bf16.msra.mxu0 %v1067
  %1089 = vmatprep.subr.bf16.mxu0 0
  %1090 = vmatpush1.bf16.msra.mxu0 %v1068
  %1091 = vmatprep.subr.bf16.mxu0 0
  %1092 = vmatpush1.bf16.msra.mxu0 %v1069
  %1093 = vmatprep.subr.bf16.mxu0 0
  %1094 = vmatpush1.bf16.msra.mxu0 %v1070
  %1095 = vmatprep.subr.bf16.mxu0 0
  %1096 = vmatpush1.bf16.msra.mxu0 0
  %1097 = vmatprep.subr.bf16.mxu0 0
  %1098 = vmatpush1.bf16.msra.mxu0 0
  %1099 = vmatprep.subr.bf16.mxu0 0
  %1100 = vmatpush1.bf16.msra.mxu0 0
  %1101 = vmatprep.subr.bf16.mxu0 0
  %1102 = vmatpush1.bf16.msra.mxu0 0
  %1103 = vmatprep.subr.bf16.mxu0 0
  %1104 = vmatpush1.bf16.msra.mxu0 0
  %1105 = vmatprep.subr.bf16.mxu0 0
  %1106 = vmatpush1.bf16.msra.mxu0 0
  %1107 = vmatprep.subr.bf16.mxu0 0
  %1108 = vmatpush1.bf16.msra.mxu0 0
  %1109 = vmatprep.subr.bf16.mxu0 0
  %1110 = vmatpush1.bf16.msra.mxu0 0
  %1111 = vmatprep.mubr.bf16.mxu0 0
  %1112 = vmatmul.mubr.bf16.gmra.mrb[0].mxu0 %v1006
  %v1113 = vpop.f32.mrb[0].mxu0
  %v1114 = vadd.f32 0.0, %v1113
  %v1115 = vpop.f32.mrb[0].mxu0
  %v1116 = vpop.f32.mrb[0].mxu0
  %v1117 = vadd.f32 0.0, %v1116
  %v1118 = vpop.f32.mrb[0].mxu0
  %1119 = vmatprep.mubr.bf16.mxu0 0
  %1120 = vmatmul.mubr.bf16.gmra.mrb[0].mxu0 %v1007
  %v1121 = vpop.f32.mrb[0].mxu0
  %v1122 = vadd.f32 0.0, %v1121
  %v1123 = vpop.f32.mrb[0].mxu0
  %v1124 = vpop.f32.mrb[0].mxu0
  %v1125 = vadd.f32 0.0, %v1124
  %v1126 = vpop.f32.mrb[0].mxu0
  %1127 = vmatprep.mubr.bf16.mxu0 0
  %1128 = vmatmul.mubr.bf16.gmra.mrb[0].mxu0 %v1008
  %v1129 = vpop.f32.mrb[0].mxu0
  %v1130 = vadd.f32 0.0, %v1129
  %v1131 = vpop.f32.mrb[0].mxu0
  %v1132 = vpop.f32.mrb[0].mxu0
  %v1133 = vadd.f32 0.0, %v1132
  %v1134 = vpop.f32.mrb[0].mxu0
  %1135 = vmatprep.mubr.bf16.mxu0 0
  %1136 = vmatmul.mubr.bf16.gmra.mrb[0].mxu0 %v1009
  %v1137 = vpop.f32.mrb[0].mxu0
  %v1138 = vadd.f32 0.0, %v1137
  %v1139 = vpop.f32.mrb[0].mxu0
  %v1140 = vpop.f32.mrb[0].mxu0
  %v1141 = vadd.f32 0.0, %v1140
  %v1142 = vpop.f32.mrb[0].mxu0
  %1143 = vmatprep.mubr.bf16.mxu0 0
  %1144 = vmatmul.mubr.bf16.gmra.mrb[0].mxu0 %v1010
  %v1145 = vpop.f32.mrb[0].mxu0
  %v1146 = vadd.f32 0.0, %v1145
  %v1147 = vpop.f32.mrb[0].mxu0
  %v1148 = vpop.f32.mrb[0].mxu0
  %v1149 = vadd.f32 0.0, %v1148
  %v1150 = vpop.f32.mrb[0].mxu0
  %1151 = vmatprep.mubr.bf16.mxu0 0
  %1152 = vmatmul.mubr.bf16.gmra.mrb[0].mxu0 %v1011
  %v1153 = vpop.f32.mrb[0].mxu0
  %v1154 = vadd.f32 0.0, %v1153
  %v1155 = vpop.f32.mrb[0].mxu0
  %v1156 = vpop.f32.mrb[0].mxu0
  %v1157 = vadd.f32 0.0, %v1156
  %v1158 = vpop.f32.mrb[0].mxu0
  %1159 = vmatprep.mubr.bf16.mxu0 0
  %1160 = vmatmul.mubr.bf16.gmra.mrb[0].mxu0 %v1012
  %v1161 = vpop.f32.mrb[0].mxu0
  %v1162 = vadd.f32 0.0, %v1161
  %v1163 = vpop.f32.mrb[0].mxu0
  %v1164 = vpop.f32.mrb[0].mxu0
  %v1165 = vadd.f32 0.0, %v1164
  %v1166 = vpop.f32.mrb[0].mxu0
  %1167 = vmatprep.mubr.bf16.mxu0 0
  %1168 = vmatmul.mubr.bf16.gmra.mrb[0].mxu0 %v1013
  %v1169 = vpop.f32.mrb[0].mxu0
  %v1170 = vadd.f32 0.0, %v1169
  %v1171 = vpop.f32.mrb[0].mxu0
  %v1172 = vpop.f32.mrb[0].mxu0
  %v1173 = vadd.f32 0.0, %v1172
  %v1174 = vpop.f32.mrb[0].mxu0
  %1175 = vdwg.mxu0
  %v1176 = vadd.f32 %v974, %v1114
  %v1177 = vadd.f32 %v975, %v1117
  %v1178 = vadd.f32 %v976, %v1122
  %v1179 = vadd.f32 %v977, %v1125
  %v1180 = vadd.f32 %v978, %v1130
  %v1181 = vadd.f32 %v979, %v1133
  %v1182 = vadd.f32 %v980, %v1138
  %v1183 = vadd.f32 %v981, %v1141
  %v1184 = vadd.f32 %v982, %v1146
  %v1185 = vadd.f32 %v983, %v1149
  %v1186 = vadd.f32 %v984, %v1154
  %v1187 = vadd.f32 %v985, %v1157
  %v1188 = vadd.f32 %v986, %v1162
  %v1189 = vadd.f32 %v987, %v1165
  %v1190 = vadd.f32 %v988, %v1170
  %v1191 = vadd.f32 %v989, %v1173
  %s1192 = scalar_lea.vmem %s0, 32
  %v1193 = vld [vmem:[%s1192] sm:$0xff]
  %v1194 = vld [vmem:[%s1192 + $0x10] sm:$0xff]
  %v1195 = vld [vmem:[%s1192 + $0x20] sm:$0xff]
  %v1196 = vld [vmem:[%s1192 + $0x30] sm:$0xff]
  %v1197 = vld [vmem:[%s1192 + $0x40] sm:$0xff]
  %v1198 = vld [vmem:[%s1192 + $0x50] sm:$0xff]
  %v1199 = vld [vmem:[%s1192 + $0x60] sm:$0xff]
  %v1200 = vld [vmem:[%s1192 + $0x70] sm:$0xff]
  %v1201 = vld [vmem:[%s1192 + $0xa0] sm:$0xff]
  %v1202 = vld [vmem:[%s1192 + $0xb0] sm:$0xff]
  %v1203 = vld [vmem:[%s1192 + $0xc0] sm:$0xff]
  %v1204 = vld [vmem:[%s1192 + $0xd0] sm:$0xff]
  %v1205 = vld [vmem:[%s1192 + $0xe0] sm:$0xff]
  %v1206 = vld [vmem:[%s1192 + $0xf0] sm:$0xff]
  %v1207 = vld [vmem:[%s1192 + $0x100] sm:$0xff]
  %v1208 = vld [vmem:[%s1192 + $0x110] sm:$0xff]
  %v1209 = vpack.c.bf16 %v1194, %v1193
  %v1210 = vpack.c.bf16 %v1196, %v1195
  %v1211 = vpack.c.bf16 %v1198, %v1197
  %v1212 = vpack.c.bf16 %v1200, %v1199
  %v1213 = vpack.c.bf16 %v1202, %v1201
  %v1214 = vpack.c.bf16 %v1204, %v1203
  %v1215 = vpack.c.bf16 %v1206, %v1205
  %v1216 = vpack.c.bf16 %v1208, %v1207
  %s1217 = scalar_lea.vmem %s1, 384
  %v1218 = vld [vmem:[%s1217] sm:$0xf]
  %v1219 = vld [vmem:[%s1217 + $0x4] sm:$0xf]
  %v1220 = vld [vmem:[%s1217 + $0x8] sm:$0xf]
  %v1221 = vld [vmem:[%s1217 + $0xc] sm:$0xf]
  %v1222 = vld [vmem:[%s1217 + $0x10] sm:$0xf]
  %v1223 = vld [vmem:[%s1217 + $0x14] sm:$0xf]
  %v1224 = vld [vmem:[%s1217 + $0x18] sm:$0xf]
  %v1225 = vld [vmem:[%s1217 + $0x1c] sm:$0xf]
  %v1226 = vld [vmem:[%s1217 + $0x20] sm:$0xf]
  %v1227 = vld [vmem:[%s1217 + $0x24] sm:$0xf]
  %v1228 = vld [vmem:[%s1217 + $0x28] sm:$0xf]
  %v1229 = vld [vmem:[%s1217 + $0x2c] sm:$0xf]
  %v1230 = vld [vmem:[%s1217 + $0x30] sm:$0xf]
  %v1231 = vld [vmem:[%s1217 + $0x34] sm:$0xf]
  %v1232 = vld [vmem:[%s1217 + $0x38] sm:$0xf]
  %v1233 = vld [vmem:[%s1217 + $0x3c] sm:$0xf]
  %v1250 = vunpack.c.l.b16 %v1218
  %v1251 = vunpack.c.l.b16 %v1219
  %v1252 = vunpack.c.l.b16 %v1220
  %v1253 = vunpack.c.l.b16 %v1221
  %v1254 = vunpack.c.l.b16 %v1222
  %v1255 = vunpack.c.l.b16 %v1223
  %v1256 = vunpack.c.l.b16 %v1224
  %v1257 = vunpack.c.l.b16 %v1225
  %v1258 = vunpack.c.l.b16 %v1226
  %v1259 = vunpack.c.l.b16 %v1227
  %v1260 = vunpack.c.l.b16 %v1228
  %v1261 = vunpack.c.l.b16 %v1229
  %v1262 = vunpack.c.l.b16 %v1230
  %v1263 = vunpack.c.l.b16 %v1231
  %v1264 = vunpack.c.l.b16 %v1232
  %v1265 = vunpack.c.l.b16 %v1233
  %v1266 = vpack.c.b16 %v1251, %v1250
  %v1267 = vpack.c.b16 %v1253, %v1252
  %v1268 = vpack.c.b16 %v1255, %v1254
  %v1269 = vpack.c.b16 %v1257, %v1256
  %v1270 = vpack.c.b16 %v1259, %v1258
  %v1271 = vpack.c.b16 %v1261, %v1260
  %v1272 = vpack.c.b16 %v1263, %v1262
  %v1273 = vpack.c.b16 %v1265, %v1264
  %1282 = vmatprep.subr.bf16.mxu0 0
  %1283 = vmatpush1.bf16.msra.mxu0 %v1266
  %1284 = vmatprep.subr.bf16.mxu0 0
  %1285 = vmatpush1.bf16.msra.mxu0 %v1267
  %1286 = vmatprep.subr.bf16.mxu0 0
  %1287 = vmatpush1.bf16.msra.mxu0 %v1268
  %1288 = vmatprep.subr.bf16.mxu0 0
  %1289 = vmatpush1.bf16.msra.mxu0 %v1269
  %1290 = vmatprep.subr.bf16.mxu0 0
  %1291 = vmatpush1.bf16.msra.mxu0 %v1270
  %1292 = vmatprep.subr.bf16.mxu0 0
  %1293 = vmatpush1.bf16.msra.mxu0 %v1271
  %1294 = vmatprep.subr.bf16.mxu0 0
  %1295 = vmatpush1.bf16.msra.mxu0 %v1272
  %1296 = vmatprep.subr.bf16.mxu0 0
  %1297 = vmatpush1.bf16.msra.mxu0 %v1273
  %1298 = vmatprep.subr.bf16.mxu0 0
  %1299 = vmatpush1.bf16.msra.mxu0 0
  %1300 = vmatprep.subr.bf16.mxu0 0
  %1301 = vmatpush1.bf16.msra.mxu0 0
  %1302 = vmatprep.subr.bf16.mxu0 0
  %1303 = vmatpush1.bf16.msra.mxu0 0
  %1304 = vmatprep.subr.bf16.mxu0 0
  %1305 = vmatpush1.bf16.msra.mxu0 0
  %1306 = vmatprep.subr.bf16.mxu0 0
  %1307 = vmatpush1.bf16.msra.mxu0 0
  %1308 = vmatprep.subr.bf16.mxu0 0
  %1309 = vmatpush1.bf16.msra.mxu0 0
  %1310 = vmatprep.subr.bf16.mxu0 0
  %1311 = vmatpush1.bf16.msra.mxu0 0
  %1312 = vmatprep.subr.bf16.mxu0 0
  %1313 = vmatpush1.bf16.msra.mxu0 0
  %1314 = vmatprep.mubr.bf16.mxu0 0
  %1315 = vmatmul.mubr.bf16.gmra.mrb[0].mxu0 %v1209
  %v1316 = vpop.f32.mrb[0].mxu0
  %v1317 = vadd.f32 0.0, %v1316
  %v1318 = vpop.f32.mrb[0].mxu0
  %v1319 = vpop.f32.mrb[0].mxu0
  %v1320 = vadd.f32 0.0, %v1319
  %v1321 = vpop.f32.mrb[0].mxu0
  %1322 = vmatprep.mubr.bf16.mxu0 0
  %1323 = vmatmul.mubr.bf16.gmra.mrb[0].mxu0 %v1210
  %v1324 = vpop.f32.mrb[0].mxu0
  %v1325 = vadd.f32 0.0, %v1324
  %v1326 = vpop.f32.mrb[0].mxu0
  %v1327 = vpop.f32.mrb[0].mxu0
  %v1328 = vadd.f32 0.0, %v1327
  %v1329 = vpop.f32.mrb[0].mxu0
  %1330 = vmatprep.mubr.bf16.mxu0 0
  %1331 = vmatmul.mubr.bf16.gmra.mrb[0].mxu0 %v1211
  %v1332 = vpop.f32.mrb[0].mxu0
  %v1333 = vadd.f32 0.0, %v1332
  %v1334 = vpop.f32.mrb[0].mxu0
  %v1335 = vpop.f32.mrb[0].mxu0
  %v1336 = vadd.f32 0.0, %v1335
  %v1337 = vpop.f32.mrb[0].mxu0
  %1338 = vmatprep.mubr.bf16.mxu0 0
  %1339 = vmatmul.mubr.bf16.gmra.mrb[0].mxu0 %v1212
  %v1340 = vpop.f32.mrb[0].mxu0
  %v1341 = vadd.f32 0.0, %v1340
  %v1342 = vpop.f32.mrb[0].mxu0
  %v1343 = vpop.f32.mrb[0].mxu0
  %v1344 = vadd.f32 0.0, %v1343
  %v1345 = vpop.f32.mrb[0].mxu0
  %1346 = vmatprep.mubr.bf16.mxu0 0
  %1347 = vmatmul.mubr.bf16.gmra.mrb[0].mxu0 %v1213
  %v1348 = vpop.f32.mrb[0].mxu0
  %v1349 = vadd.f32 0.0, %v1348
  %v1350 = vpop.f32.mrb[0].mxu0
  %v1351 = vpop.f32.mrb[0].mxu0
  %v1352 = vadd.f32 0.0, %v1351
  %v1353 = vpop.f32.mrb[0].mxu0
  %1354 = vmatprep.mubr.bf16.mxu0 0
  %1355 = vmatmul.mubr.bf16.gmra.mrb[0].mxu0 %v1214
  %v1356 = vpop.f32.mrb[0].mxu0
  %v1357 = vadd.f32 0.0, %v1356
  %v1358 = vpop.f32.mrb[0].mxu0
  %v1359 = vpop.f32.mrb[0].mxu0
  %v1360 = vadd.f32 0.0, %v1359
  %v1361 = vpop.f32.mrb[0].mxu0
  %1362 = vmatprep.mubr.bf16.mxu0 0
  %1363 = vmatmul.mubr.bf16.gmra.mrb[0].mxu0 %v1215
  %v1364 = vpop.f32.mrb[0].mxu0
  %v1365 = vadd.f32 0.0, %v1364
  %v1366 = vpop.f32.mrb[0].mxu0
  %v1367 = vpop.f32.mrb[0].mxu0
  %v1368 = vadd.f32 0.0, %v1367
  %v1369 = vpop.f32.mrb[0].mxu0
  %1370 = vmatprep.mubr.bf16.mxu0 0
  %1371 = vmatmul.mubr.bf16.gmra.mrb[0].mxu0 %v1216
  %v1372 = vpop.f32.mrb[0].mxu0
  %v1373 = vadd.f32 0.0, %v1372
  %v1374 = vpop.f32.mrb[0].mxu0
  %v1375 = vpop.f32.mrb[0].mxu0
  %v1376 = vadd.f32 0.0, %v1375
  %v1377 = vpop.f32.mrb[0].mxu0
  %1378 = vdwg.mxu0
  %v1379 = vadd.f32 %v1176, %v1317
  %v1380 = vadd.f32 %v1177, %v1320
  %v1381 = vadd.f32 %v1178, %v1325
  %v1382 = vadd.f32 %v1179, %v1328
  %v1383 = vadd.f32 %v1180, %v1333
  %v1384 = vadd.f32 %v1181, %v1336
  %v1385 = vadd.f32 %v1182, %v1341
  %v1386 = vadd.f32 %v1183, %v1344
  %v1387 = vadd.f32 %v1184, %v1349
  %v1388 = vadd.f32 %v1185, %v1352
  %v1389 = vadd.f32 %v1186, %v1357
  %v1390 = vadd.f32 %v1187, %v1360
  %v1391 = vadd.f32 %v1188, %v1365
  %v1392 = vadd.f32 %v1189, %v1368
  %v1393 = vadd.f32 %v1190, %v1373
  %v1394 = vadd.f32 %v1191, %v1376
  %v1395 = vld [vmem:[%s1192 + $0x1] sm:$0xff]
  %v1396 = vld [vmem:[%s1192 + $0x11] sm:$0xff]
  %v1397 = vld [vmem:[%s1192 + $0x21] sm:$0xff]
  %v1398 = vld [vmem:[%s1192 + $0x31] sm:$0xff]
  %v1399 = vld [vmem:[%s1192 + $0x41] sm:$0xff]
  %v1400 = vld [vmem:[%s1192 + $0x51] sm:$0xff]
  %v1401 = vld [vmem:[%s1192 + $0x61] sm:$0xff]
  %v1402 = vld [vmem:[%s1192 + $0x71] sm:$0xff]
  %v1403 = vld [vmem:[%s1192 + $0xa1] sm:$0xff]
  %v1404 = vld [vmem:[%s1192 + $0xb1] sm:$0xff]
  %v1405 = vld [vmem:[%s1192 + $0xc1] sm:$0xff]
  %v1406 = vld [vmem:[%s1192 + $0xd1] sm:$0xff]
  %v1407 = vld [vmem:[%s1192 + $0xe1] sm:$0xff]
  %v1408 = vld [vmem:[%s1192 + $0xf1] sm:$0xff]
  %v1409 = vld [vmem:[%s1192 + $0x101] sm:$0xff]
  %v1410 = vld [vmem:[%s1192 + $0x111] sm:$0xff]
  %v1411 = vpack.c.bf16 %v1396, %v1395
  %v1412 = vpack.c.bf16 %v1398, %v1397
  %v1413 = vpack.c.bf16 %v1400, %v1399
  %v1414 = vpack.c.bf16 %v1402, %v1401
  %v1415 = vpack.c.bf16 %v1404, %v1403
  %v1416 = vpack.c.bf16 %v1406, %v1405
  %v1417 = vpack.c.bf16 %v1408, %v1407
  %v1418 = vpack.c.bf16 %v1410, %v1409
  %s1419 = scalar_lea.vmem %s1, 448
  %v1420 = vld [vmem:[%s1419] sm:$0xf]
  %v1421 = vld [vmem:[%s1419 + $0x4] sm:$0xf]
  %v1422 = vld [vmem:[%s1419 + $0x8] sm:$0xf]
  %v1423 = vld [vmem:[%s1419 + $0xc] sm:$0xf]
  %v1424 = vld [vmem:[%s1419 + $0x10] sm:$0xf]
  %v1425 = vld [vmem:[%s1419 + $0x14] sm:$0xf]
  %v1426 = vld [vmem:[%s1419 + $0x18] sm:$0xf]
  %v1427 = vld [vmem:[%s1419 + $0x1c] sm:$0xf]
  %v1428 = vld [vmem:[%s1419 + $0x20] sm:$0xf]
  %v1429 = vld [vmem:[%s1419 + $0x24] sm:$0xf]
  %v1430 = vld [vmem:[%s1419 + $0x28] sm:$0xf]
  %v1431 = vld [vmem:[%s1419 + $0x2c] sm:$0xf]
  %v1432 = vld [vmem:[%s1419 + $0x30] sm:$0xf]
  %v1433 = vld [vmem:[%s1419 + $0x34] sm:$0xf]
  %v1434 = vld [vmem:[%s1419 + $0x38] sm:$0xf]
  %v1435 = vld [vmem:[%s1419 + $0x3c] sm:$0xf]
  %v1452 = vunpack.c.l.b16 %v1420
  %v1453 = vunpack.c.l.b16 %v1421
  %v1454 = vunpack.c.l.b16 %v1422
  %v1455 = vunpack.c.l.b16 %v1423
  %v1456 = vunpack.c.l.b16 %v1424
  %v1457 = vunpack.c.l.b16 %v1425
  %v1458 = vunpack.c.l.b16 %v1426
  %v1459 = vunpack.c.l.b16 %v1427
  %v1460 = vunpack.c.l.b16 %v1428
  %v1461 = vunpack.c.l.b16 %v1429
  %v1462 = vunpack.c.l.b16 %v1430
  %v1463 = vunpack.c.l.b16 %v1431
  %v1464 = vunpack.c.l.b16 %v1432
  %v1465 = vunpack.c.l.b16 %v1433
  %v1466 = vunpack.c.l.b16 %v1434
  %v1467 = vunpack.c.l.b16 %v1435
  %v1468 = vpack.c.b16 %v1453, %v1452
  %v1469 = vpack.c.b16 %v1455, %v1454
  %v1470 = vpack.c.b16 %v1457, %v1456
  %v1471 = vpack.c.b16 %v1459, %v1458
  %v1472 = vpack.c.b16 %v1461, %v1460
  %v1473 = vpack.c.b16 %v1463, %v1462
  %v1474 = vpack.c.b16 %v1465, %v1464
  %v1475 = vpack.c.b16 %v1467, %v1466
  %1484 = vmatprep.subr.bf16.mxu0 0
  %1485 = vmatpush1.bf16.msra.mxu0 %v1468
  %1486 = vmatprep.subr.bf16.mxu0 0
  %1487 = vmatpush1.bf16.msra.mxu0 %v1469
  %1488 = vmatprep.subr.bf16.mxu0 0
  %1489 = vmatpush1.bf16.msra.mxu0 %v1470
  %1490 = vmatprep.subr.bf16.mxu0 0
  %1491 = vmatpush1.bf16.msra.mxu0 %v1471
  %1492 = vmatprep.subr.bf16.mxu0 0
  %1493 = vmatpush1.bf16.msra.mxu0 %v1472
  %1494 = vmatprep.subr.bf16.mxu0 0
  %1495 = vmatpush1.bf16.msra.mxu0 %v1473
  %1496 = vmatprep.subr.bf16.mxu0 0
  %1497 = vmatpush1.bf16.msra.mxu0 %v1474
  %1498 = vmatprep.subr.bf16.mxu0 0
  %1499 = vmatpush1.bf16.msra.mxu0 %v1475
  %1500 = vmatprep.subr.bf16.mxu0 0
  %1501 = vmatpush1.bf16.msra.mxu0 0
  %1502 = vmatprep.subr.bf16.mxu0 0
  %1503 = vmatpush1.bf16.msra.mxu0 0
  %1504 = vmatprep.subr.bf16.mxu0 0
  %1505 = vmatpush1.bf16.msra.mxu0 0
  %1506 = vmatprep.subr.bf16.mxu0 0
  %1507 = vmatpush1.bf16.msra.mxu0 0
  %1508 = vmatprep.subr.bf16.mxu0 0
  %1509 = vmatpush1.bf16.msra.mxu0 0
  %1510 = vmatprep.subr.bf16.mxu0 0
  %1511 = vmatpush1.bf16.msra.mxu0 0
  %1512 = vmatprep.subr.bf16.mxu0 0
  %1513 = vmatpush1.bf16.msra.mxu0 0
  %1514 = vmatprep.subr.bf16.mxu0 0
  %1515 = vmatpush1.bf16.msra.mxu0 0
  %1516 = vmatprep.mubr.bf16.mxu0 0
  %1517 = vmatmul.mubr.bf16.gmra.mrb[0].mxu0 %v1411
  %v1518 = vpop.f32.mrb[0].mxu0
  %v1519 = vadd.f32 0.0, %v1518
  %v1520 = vpop.f32.mrb[0].mxu0
  %v1521 = vpop.f32.mrb[0].mxu0
  %v1522 = vadd.f32 0.0, %v1521
  %v1523 = vpop.f32.mrb[0].mxu0
  %1524 = vmatprep.mubr.bf16.mxu0 0
  %1525 = vmatmul.mubr.bf16.gmra.mrb[0].mxu0 %v1412
  %v1526 = vpop.f32.mrb[0].mxu0
  %v1527 = vadd.f32 0.0, %v1526
  %v1528 = vpop.f32.mrb[0].mxu0
  %v1529 = vpop.f32.mrb[0].mxu0
  %v1530 = vadd.f32 0.0, %v1529
  %v1531 = vpop.f32.mrb[0].mxu0
  %1532 = vmatprep.mubr.bf16.mxu0 0
  %1533 = vmatmul.mubr.bf16.gmra.mrb[0].mxu0 %v1413
  %v1534 = vpop.f32.mrb[0].mxu0
  %v1535 = vadd.f32 0.0, %v1534
  %v1536 = vpop.f32.mrb[0].mxu0
  %v1537 = vpop.f32.mrb[0].mxu0
  %v1538 = vadd.f32 0.0, %v1537
  %v1539 = vpop.f32.mrb[0].mxu0
  %1540 = vmatprep.mubr.bf16.mxu0 0
  %1541 = vmatmul.mubr.bf16.gmra.mrb[0].mxu0 %v1414
  %v1542 = vpop.f32.mrb[0].mxu0
  %v1543 = vadd.f32 0.0, %v1542
  %v1544 = vpop.f32.mrb[0].mxu0
  %v1545 = vpop.f32.mrb[0].mxu0
  %v1546 = vadd.f32 0.0, %v1545
  %v1547 = vpop.f32.mrb[0].mxu0
  %1548 = vmatprep.mubr.bf16.mxu0 0
  %1549 = vmatmul.mubr.bf16.gmra.mrb[0].mxu0 %v1415
  %v1550 = vpop.f32.mrb[0].mxu0
  %v1551 = vadd.f32 0.0, %v1550
  %v1552 = vpop.f32.mrb[0].mxu0
  %v1553 = vpop.f32.mrb[0].mxu0
  %v1554 = vadd.f32 0.0, %v1553
  %v1555 = vpop.f32.mrb[0].mxu0
  %1556 = vmatprep.mubr.bf16.mxu0 0
  %1557 = vmatmul.mubr.bf16.gmra.mrb[0].mxu0 %v1416
  %v1558 = vpop.f32.mrb[0].mxu0
  %v1559 = vadd.f32 0.0, %v1558
  %v1560 = vpop.f32.mrb[0].mxu0
  %v1561 = vpop.f32.mrb[0].mxu0
  %v1562 = vadd.f32 0.0, %v1561
  %v1563 = vpop.f32.mrb[0].mxu0
  %1564 = vmatprep.mubr.bf16.mxu0 0
  %1565 = vmatmul.mubr.bf16.gmra.mrb[0].mxu0 %v1417
  %v1566 = vpop.f32.mrb[0].mxu0
  %v1567 = vadd.f32 0.0, %v1566
  %v1568 = vpop.f32.mrb[0].mxu0
  %v1569 = vpop.f32.mrb[0].mxu0
  %v1570 = vadd.f32 0.0, %v1569
  %v1571 = vpop.f32.mrb[0].mxu0
  %1572 = vmatprep.mubr.bf16.mxu0 0
  %1573 = vmatmul.mubr.bf16.gmra.mrb[0].mxu0 %v1418
  %v1574 = vpop.f32.mrb[0].mxu0
  %v1575 = vadd.f32 0.0, %v1574
  %v1576 = vpop.f32.mrb[0].mxu0
  %v1577 = vpop.f32.mrb[0].mxu0
  %v1578 = vadd.f32 0.0, %v1577
  %v1579 = vpop.f32.mrb[0].mxu0
  %1580 = vdwg.mxu0
  %v1581 = vadd.f32 %v1379, %v1519
  %v1582 = vadd.f32 %v1380, %v1522
  %v1583 = vadd.f32 %v1381, %v1527
  %v1584 = vadd.f32 %v1382, %v1530
  %v1585 = vadd.f32 %v1383, %v1535
  %v1586 = vadd.f32 %v1384, %v1538
  %v1587 = vadd.f32 %v1385, %v1543
  %v1588 = vadd.f32 %v1386, %v1546
  %v1589 = vadd.f32 %v1387, %v1551
  %v1590 = vadd.f32 %v1388, %v1554
  %v1591 = vadd.f32 %v1389, %v1559
  %v1592 = vadd.f32 %v1390, %v1562
  %v1593 = vadd.f32 %v1391, %v1567
  %v1594 = vadd.f32 %v1392, %v1570
  %v1595 = vadd.f32 %v1393, %v1575
  %v1596 = vadd.f32 %v1394, %v1578
  %v1597 = vld [vmem:[%s1192 + $0x2] sm:$0xff]
  %v1598 = vld [vmem:[%s1192 + $0x12] sm:$0xff]
  %v1599 = vld [vmem:[%s1192 + $0x22] sm:$0xff]
  %v1600 = vld [vmem:[%s1192 + $0x32] sm:$0xff]
  %v1601 = vld [vmem:[%s1192 + $0x42] sm:$0xff]
  %v1602 = vld [vmem:[%s1192 + $0x52] sm:$0xff]
  %v1603 = vld [vmem:[%s1192 + $0x62] sm:$0xff]
  %v1604 = vld [vmem:[%s1192 + $0x72] sm:$0xff]
  %v1605 = vld [vmem:[%s1192 + $0xa2] sm:$0xff]
  %v1606 = vld [vmem:[%s1192 + $0xb2] sm:$0xff]
  %v1607 = vld [vmem:[%s1192 + $0xc2] sm:$0xff]
  %v1608 = vld [vmem:[%s1192 + $0xd2] sm:$0xff]
  %v1609 = vld [vmem:[%s1192 + $0xe2] sm:$0xff]
  %v1610 = vld [vmem:[%s1192 + $0xf2] sm:$0xff]
  %v1611 = vld [vmem:[%s1192 + $0x102] sm:$0xff]
  %v1612 = vld [vmem:[%s1192 + $0x112] sm:$0xff]
  %v1613 = vpack.c.bf16 %v1598, %v1597
  %v1614 = vpack.c.bf16 %v1600, %v1599
  %v1615 = vpack.c.bf16 %v1602, %v1601
  %v1616 = vpack.c.bf16 %v1604, %v1603
  %v1617 = vpack.c.bf16 %v1606, %v1605
  %v1618 = vpack.c.bf16 %v1608, %v1607
  %v1619 = vpack.c.bf16 %v1610, %v1609
  %v1620 = vpack.c.bf16 %v1612, %v1611
  %s1621 = scalar_lea.vmem %s1, 512
  %v1622 = vld [vmem:[%s1621] sm:$0xf]
  %v1623 = vld [vmem:[%s1621 + $0x4] sm:$0xf]
  %v1624 = vld [vmem:[%s1621 + $0x8] sm:$0xf]
  %v1625 = vld [vmem:[%s1621 + $0xc] sm:$0xf]
  %v1626 = vld [vmem:[%s1621 + $0x10] sm:$0xf]
  %v1627 = vld [vmem:[%s1621 + $0x14] sm:$0xf]
  %v1628 = vld [vmem:[%s1621 + $0x18] sm:$0xf]
  %v1629 = vld [vmem:[%s1621 + $0x1c] sm:$0xf]
  %v1630 = vld [vmem:[%s1621 + $0x20] sm:$0xf]
  %v1631 = vld [vmem:[%s1621 + $0x24] sm:$0xf]
  %v1632 = vld [vmem:[%s1621 + $0x28] sm:$0xf]
  %v1633 = vld [vmem:[%s1621 + $0x2c] sm:$0xf]
  %v1634 = vld [vmem:[%s1621 + $0x30] sm:$0xf]
  %v1635 = vld [vmem:[%s1621 + $0x34] sm:$0xf]
  %v1636 = vld [vmem:[%s1621 + $0x38] sm:$0xf]
  %v1637 = vld [vmem:[%s1621 + $0x3c] sm:$0xf]
  %v1654 = vunpack.c.l.b16 %v1622
  %v1655 = vunpack.c.l.b16 %v1623
  %v1656 = vunpack.c.l.b16 %v1624
  %v1657 = vunpack.c.l.b16 %v1625
  %v1658 = vunpack.c.l.b16 %v1626
  %v1659 = vunpack.c.l.b16 %v1627
  %v1660 = vunpack.c.l.b16 %v1628
  %v1661 = vunpack.c.l.b16 %v1629
  %v1662 = vunpack.c.l.b16 %v1630
  %v1663 = vunpack.c.l.b16 %v1631
  %v1664 = vunpack.c.l.b16 %v1632
  %v1665 = vunpack.c.l.b16 %v1633
  %v1666 = vunpack.c.l.b16 %v1634
  %v1667 = vunpack.c.l.b16 %v1635
  %v1668 = vunpack.c.l.b16 %v1636
  %v1669 = vunpack.c.l.b16 %v1637
  %v1670 = vpack.c.b16 %v1655, %v1654
  %v1671 = vpack.c.b16 %v1657, %v1656
  %v1672 = vpack.c.b16 %v1659, %v1658
  %v1673 = vpack.c.b16 %v1661, %v1660
  %v1674 = vpack.c.b16 %v1663, %v1662
  %v1675 = vpack.c.b16 %v1665, %v1664
  %v1676 = vpack.c.b16 %v1667, %v1666
  %v1677 = vpack.c.b16 %v1669, %v1668
  %1686 = vmatprep.subr.bf16.mxu0 0
  %1687 = vmatpush1.bf16.msra.mxu0 %v1670
  %1688 = vmatprep.subr.bf16.mxu0 0
  %1689 = vmatpush1.bf16.msra.mxu0 %v1671
  %1690 = vmatprep.subr.bf16.mxu0 0
  %1691 = vmatpush1.bf16.msra.mxu0 %v1672
  %1692 = vmatprep.subr.bf16.mxu0 0
  %1693 = vmatpush1.bf16.msra.mxu0 %v1673
  %1694 = vmatprep.subr.bf16.mxu0 0
  %1695 = vmatpush1.bf16.msra.mxu0 %v1674
  %1696 = vmatprep.subr.bf16.mxu0 0
  %1697 = vmatpush1.bf16.msra.mxu0 %v1675
  %1698 = vmatprep.subr.bf16.mxu0 0
  %1699 = vmatpush1.bf16.msra.mxu0 %v1676
  %1700 = vmatprep.subr.bf16.mxu0 0
  %1701 = vmatpush1.bf16.msra.mxu0 %v1677
  %1702 = vmatprep.subr.bf16.mxu0 0
  %1703 = vmatpush1.bf16.msra.mxu0 0
  %1704 = vmatprep.subr.bf16.mxu0 0
  %1705 = vmatpush1.bf16.msra.mxu0 0
  %1706 = vmatprep.subr.bf16.mxu0 0
  %1707 = vmatpush1.bf16.msra.mxu0 0
  %1708 = vmatprep.subr.bf16.mxu0 0
  %1709 = vmatpush1.bf16.msra.mxu0 0
  %1710 = vmatprep.subr.bf16.mxu0 0
  %1711 = vmatpush1.bf16.msra.mxu0 0
  %1712 = vmatprep.subr.bf16.mxu0 0
  %1713 = vmatpush1.bf16.msra.mxu0 0
  %1714 = vmatprep.subr.bf16.mxu0 0
  %1715 = vmatpush1.bf16.msra.mxu0 0
  %1716 = vmatprep.subr.bf16.mxu0 0
  %1717 = vmatpush1.bf16.msra.mxu0 0
  %1718 = vmatprep.mubr.bf16.mxu0 0
  %1719 = vmatmul.mubr.bf16.gmra.mrb[0].mxu0 %v1613
  %v1720 = vpop.f32.mrb[0].mxu0
  %v1721 = vadd.f32 0.0, %v1720
  %v1722 = vpop.f32.mrb[0].mxu0
  %v1723 = vpop.f32.mrb[0].mxu0
  %v1724 = vadd.f32 0.0, %v1723
  %v1725 = vpop.f32.mrb[0].mxu0
  %1726 = vmatprep.mubr.bf16.mxu0 0
  %1727 = vmatmul.mubr.bf16.gmra.mrb[0].mxu0 %v1614
  %v1728 = vpop.f32.mrb[0].mxu0
  %v1729 = vadd.f32 0.0, %v1728
  %v1730 = vpop.f32.mrb[0].mxu0
  %v1731 = vpop.f32.mrb[0].mxu0
  %v1732 = vadd.f32 0.0, %v1731
  %v1733 = vpop.f32.mrb[0].mxu0
  %1734 = vmatprep.mubr.bf16.mxu0 0
  %1735 = vmatmul.mubr.bf16.gmra.mrb[0].mxu0 %v1615
  %v1736 = vpop.f32.mrb[0].mxu0
  %v1737 = vadd.f32 0.0, %v1736
  %v1738 = vpop.f32.mrb[0].mxu0
  %v1739 = vpop.f32.mrb[0].mxu0
  %v1740 = vadd.f32 0.0, %v1739
  %v1741 = vpop.f32.mrb[0].mxu0
  %1742 = vmatprep.mubr.bf16.mxu0 0
  %1743 = vmatmul.mubr.bf16.gmra.mrb[0].mxu0 %v1616
  %v1744 = vpop.f32.mrb[0].mxu0
  %v1745 = vadd.f32 0.0, %v1744
  %v1746 = vpop.f32.mrb[0].mxu0
  %v1747 = vpop.f32.mrb[0].mxu0
  %v1748 = vadd.f32 0.0, %v1747
  %v1749 = vpop.f32.mrb[0].mxu0
  %1750 = vmatprep.mubr.bf16.mxu0 0
  %1751 = vmatmul.mubr.bf16.gmra.mrb[0].mxu0 %v1617
  %v1752 = vpop.f32.mrb[0].mxu0
  %v1753 = vadd.f32 0.0, %v1752
  %v1754 = vpop.f32.mrb[0].mxu0
  %v1755 = vpop.f32.mrb[0].mxu0
  %v1756 = vadd.f32 0.0, %v1755
  %v1757 = vpop.f32.mrb[0].mxu0
  %1758 = vmatprep.mubr.bf16.mxu0 0
  %1759 = vmatmul.mubr.bf16.gmra.mrb[0].mxu0 %v1618
  %v1760 = vpop.f32.mrb[0].mxu0
  %v1761 = vadd.f32 0.0, %v1760
  %v1762 = vpop.f32.mrb[0].mxu0
  %v1763 = vpop.f32.mrb[0].mxu0
  %v1764 = vadd.f32 0.0, %v1763
  %v1765 = vpop.f32.mrb[0].mxu0
  %1766 = vmatprep.mubr.bf16.mxu0 0
  %1767 = vmatmul.mubr.bf16.gmra.mrb[0].mxu0 %v1619
  %v1768 = vpop.f32.mrb[0].mxu0
  %v1769 = vadd.f32 0.0, %v1768
  %v1770 = vpop.f32.mrb[0].mxu0
  %v1771 = vpop.f32.mrb[0].mxu0
  %v1772 = vadd.f32 0.0, %v1771
  %v1773 = vpop.f32.mrb[0].mxu0
  %1774 = vmatprep.mubr.bf16.mxu0 0
  %1775 = vmatmul.mubr.bf16.gmra.mrb[0].mxu0 %v1620
  %v1776 = vpop.f32.mrb[0].mxu0
  %v1777 = vadd.f32 0.0, %v1776
  %v1778 = vpop.f32.mrb[0].mxu0
  %v1779 = vpop.f32.mrb[0].mxu0
  %v1780 = vadd.f32 0.0, %v1779
  %v1781 = vpop.f32.mrb[0].mxu0
  %1782 = vdwg.mxu0
  %v1783 = vadd.f32 %v1581, %v1721
  %v1784 = vadd.f32 %v1582, %v1724
  %v1785 = vadd.f32 %v1583, %v1729
  %v1786 = vadd.f32 %v1584, %v1732
  %v1787 = vadd.f32 %v1585, %v1737
  %v1788 = vadd.f32 %v1586, %v1740
  %v1789 = vadd.f32 %v1587, %v1745
  %v1790 = vadd.f32 %v1588, %v1748
  %v1791 = vadd.f32 %v1589, %v1753
  %v1792 = vadd.f32 %v1590, %v1756
  %v1793 = vadd.f32 %v1591, %v1761
  %v1794 = vadd.f32 %v1592, %v1764
  %v1795 = vadd.f32 %v1593, %v1769
  %v1796 = vadd.f32 %v1594, %v1772
  %v1797 = vadd.f32 %v1595, %v1777
  %v1798 = vadd.f32 %v1596, %v1780
  %p1799 = scmp.eq.s32.totalorder 0, 0
  // Predicated region
  $region10: #{densenet_fpn_forward.14} parent=0 // pred_check
    %p1800 = pneg %p1799
  $region11: #{densenet_fpn_forward.14} parent=0 // pred_check_branch
    %1802 = sbr.rel (%p1800) target = $region13
  $region12: #{densenet_fpn_forward.14} parent=0 // pred_region
    %1803 = vst [vmem:[%s2] sm:$0xff] %v1783
    %1804 = vst [vmem:[%s2 + $0x8] sm:$0xff] %v1784
    %1805 = vst [vmem:[%s2 + $0x10] sm:$0xff] %v1785
    %1806 = vst [vmem:[%s2 + $0x18] sm:$0xff] %v1786
    %1807 = vst [vmem:[%s2 + $0x20] sm:$0xff] %v1787
    %1808 = vst [vmem:[%s2 + $0x28] sm:$0xff] %v1788
    %1809 = vst [vmem:[%s2 + $0x30] sm:$0xff] %v1789
    %1810 = vst [vmem:[%s2 + $0x38] sm:$0xff] %v1790
    %1811 = vst [vmem:[%s2 + $0x40] sm:$0xff] %v1791
    %1812 = vst [vmem:[%s2 + $0x48] sm:$0xff] %v1792
    %1813 = vst [vmem:[%s2 + $0x50] sm:$0xff] %v1793
    %1814 = vst [vmem:[%s2 + $0x58] sm:$0xff] %v1794
    %1815 = vst [vmem:[%s2 + $0x60] sm:$0xff] %v1795
    %1816 = vst [vmem:[%s2 + $0x68] sm:$0xff] %v1796
    %1817 = vst [vmem:[%s2 + $0x70] sm:$0xff] %v1797
    %1818 = vst [vmem:[%s2 + $0x78] sm:$0xff] %v1798
  $region13: #{densenet_fpn_forward.14} parent=0 // pred_fallthru
    _
  %p1819 = scmp.gt.s32.totalorder 0, 0
  // Predicated region
  $region14: #{densenet_fpn_forward.14} parent=0 // pred_check
    %p1820 = pneg %p1819
  $region15: #{densenet_fpn_forward.14} parent=0 // pred_check_branch
    %1822 = sbr.rel (%p1820) target = $region17
  $region16: #{densenet_fpn_forward.14} parent=0 // pred_region
    %v1823 = vld [vmem:[%s2] sm:$0xff]
    %v1824 = vld [vmem:[%s2 + $0x8] sm:$0xff]
    %v1825 = vld [vmem:[%s2 + $0x10] sm:$0xff]
    %v1826 = vld [vmem:[%s2 + $0x18] sm:$0xff]
    %v1827 = vld [vmem:[%s2 + $0x20] sm:$0xff]
    %v1828 = vld [vmem:[%s2 + $0x28] sm:$0xff]
    %v1829 = vld [vmem:[%s2 + $0x30] sm:$0xff]
    %v1830 = vld [vmem:[%s2 + $0x38] sm:$0xff]
    %v1831 = vld [vmem:[%s2 + $0x40] sm:$0xff]
    %v1832 = vld [vmem:[%s2 + $0x48] sm:$0xff]
    %v1833 = vld [vmem:[%s2 + $0x50] sm:$0xff]
    %v1834 = vld [vmem:[%s2 + $0x58] sm:$0xff]
    %v1835 = vld [vmem:[%s2 + $0x60] sm:$0xff]
    %v1836 = vld [vmem:[%s2 + $0x68] sm:$0xff]
    %v1837 = vld [vmem:[%s2 + $0x70] sm:$0xff]
    %v1838 = vld [vmem:[%s2 + $0x78] sm:$0xff]
    %v1839 = vadd.f32 %v1823, %v1783
    %v1840 = vadd.f32 %v1824, %v1784
    %v1841 = vadd.f32 %v1825, %v1785
    %v1842 = vadd.f32 %v1826, %v1786
    %v1843 = vadd.f32 %v1827, %v1787
    %v1844 = vadd.f32 %v1828, %v1788
    %v1845 = vadd.f32 %v1829, %v1789
    %v1846 = vadd.f32 %v1830, %v1790
    %v1847 = vadd.f32 %v1831, %v1791
    %v1848 = vadd.f32 %v1832, %v1792
    %v1849 = vadd.f32 %v1833, %v1793
    %v1850 = vadd.f32 %v1834, %v1794
    %v1851 = vadd.f32 %v1835, %v1795
    %v1852 = vadd.f32 %v1836, %v1796
    %v1853 = vadd.f32 %v1837, %v1797
    %v1854 = vadd.f32 %v1838, %v1798
    %1855 = vst [vmem:[%s2] sm:$0xff] %v1839
    %1856 = vst [vmem:[%s2 + $0x8] sm:$0xff] %v1840
    %1857 = vst [vmem:[%s2 + $0x10] sm:$0xff] %v1841
    %1858 = vst [vmem:[%s2 + $0x18] sm:$0xff] %v1842
    %1859 = vst [vmem:[%s2 + $0x20] sm:$0xff] %v1843
    %1860 = vst [vmem:[%s2 + $0x28] sm:$0xff] %v1844
    %1861 = vst [vmem:[%s2 + $0x30] sm:$0xff] %v1845
    %1862 = vst [vmem:[%s2 + $0x38] sm:$0xff] %v1846
    %1863 = vst [vmem:[%s2 + $0x40] sm:$0xff] %v1847
    %1864 = vst [vmem:[%s2 + $0x48] sm:$0xff] %v1848
    %1865 = vst [vmem:[%s2 + $0x50] sm:$0xff] %v1849
    %1866 = vst [vmem:[%s2 + $0x58] sm:$0xff] %v1850
    %1867 = vst [vmem:[%s2 + $0x60] sm:$0xff] %v1851
    %1868 = vst [vmem:[%s2 + $0x68] sm:$0xff] %v1852
    %1869 = vst [vmem:[%s2 + $0x70] sm:$0xff] %v1853
    %1870 = vst [vmem:[%s2 + $0x78] sm:$0xff] %v1854
  $region17: #{densenet_fpn_forward.14} parent=0 // pred_fallthru
    _
  // Predicated region
  $region18: #{densenet_fpn_forward.14} parent=0 // pred_check
    %p1871 = pneg %p1799
  $region19: #{densenet_fpn_forward.14} parent=0 // pred_check_branch
    %1873 = sbr.rel (%p1871) target = $region21
  $region20: #{densenet_fpn_forward.14} parent=0 // pred_region
    %v1874 = vld [vmem:[%s2] sm:$0xff]
    %v1875 = vld [vmem:[%s2 + $0x8] sm:$0xff]
    %v1876 = vld [vmem:[%s2 + $0x10] sm:$0xff]
    %v1877 = vld [vmem:[%s2 + $0x18] sm:$0xff]
    %v1878 = vld [vmem:[%s2 + $0x20] sm:$0xff]
    %v1879 = vld [vmem:[%s2 + $0x28] sm:$0xff]
    %v1880 = vld [vmem:[%s2 + $0x30] sm:$0xff]
    %v1881 = vld [vmem:[%s2 + $0x38] sm:$0xff]
    %v1882 = vld [vmem:[%s2 + $0x40] sm:$0xff]
    %v1883 = vld [vmem:[%s2 + $0x48] sm:$0xff]
    %v1884 = vld [vmem:[%s2 + $0x50] sm:$0xff]
    %v1885 = vld [vmem:[%s2 + $0x58] sm:$0xff]
    %v1886 = vld [vmem:[%s2 + $0x60] sm:$0xff]
    %v1887 = vld [vmem:[%s2 + $0x68] sm:$0xff]
    %v1888 = vld [vmem:[%s2 + $0x70] sm:$0xff]
    %v1889 = vld [vmem:[%s2 + $0x78] sm:$0xff]
    %v1890 = vmax.f32 %v1874, 0.0
    %v1891 = vmax.f32 %v1875, 0.0
    %v1892 = vmax.f32 %v1876, 0.0
    %v1893 = vmax.f32 %v1877, 0.0
    %v1894 = vmax.f32 %v1878, 0.0
    %v1895 = vmax.f32 %v1879, 0.0
    %v1896 = vmax.f32 %v1880, 0.0
    %v1897 = vmax.f32 %v1881, 0.0
    %v1898 = vmax.f32 %v1882, 0.0
    %v1899 = vmax.f32 %v1883, 0.0
    %v1900 = vmax.f32 %v1884, 0.0
    %v1901 = vmax.f32 %v1885, 0.0
    %v1902 = vmax.f32 %v1886, 0.0
    %v1903 = vmax.f32 %v1887, 0.0
    %v1904 = vmax.f32 %v1888, 0.0
    %v1905 = vmax.f32 %v1889, 0.0
    %1906 = vst [vmem:[%s2] sm:$0xff] %v1890
    %1907 = vst [vmem:[%s2 + $0x8] sm:$0xff] %v1891
    %1908 = vst [vmem:[%s2 + $0x10] sm:$0xff] %v1892
    %1909 = vst [vmem:[%s2 + $0x18] sm:$0xff] %v1893
    %1910 = vst [vmem:[%s2 + $0x20] sm:$0xff] %v1894
    %1911 = vst [vmem:[%s2 + $0x28] sm:$0xff] %v1895
    %1912 = vst [vmem:[%s2 + $0x30] sm:$0xff] %v1896
    %1913 = vst [vmem:[%s2 + $0x38] sm:$0xff] %v1897
    %1914 = vst [vmem:[%s2 + $0x40] sm:$0xff] %v1898
    %1915 = vst [vmem:[%s2 + $0x48] sm:$0xff] %v1899
    %1916 = vst [vmem:[%s2 + $0x50] sm:$0xff] %v1900
    %1917 = vst [vmem:[%s2 + $0x58] sm:$0xff] %v1901
    %1918 = vst [vmem:[%s2 + $0x60] sm:$0xff] %v1902
    %1919 = vst [vmem:[%s2 + $0x68] sm:$0xff] %v1903
    %1920 = vst [vmem:[%s2 + $0x70] sm:$0xff] %v1904
    %1921 = vst [vmem:[%s2 + $0x78] sm:$0xff] %v1905
  $region21: #{densenet_fpn_forward.14} parent=0 // pred_fallthru
    _
  // Predicated region
  $region22: #{densenet_fpn_forward.14} parent=0 // pred_check
    _
  $region23: #{densenet_fpn_forward.14} parent=0 // pred_check_branch
    %1923 = sbr.rel (0) target = $region25
  $region24: #{densenet_fpn_forward.14} parent=0 // pred_region
    _
  $region25: #{densenet_fpn_forward.14} parent=0 // pred_fallthru
    _
  // Predicated region
  $region26: #{densenet_fpn_forward.14} parent=0 // pred_check
    _
  $region27: #{densenet_fpn_forward.14} parent=0 // pred_check_branch
    %1925 = sbr.rel (0) target = $region29
  $region28: #{densenet_fpn_forward.14} parent=0 // pred_region
    _
  $region29: #{densenet_fpn_forward.14} parent=0 // pred_fallthru
    _

// kernel: densenet_fpn_forward.15
$region0: #{densenet_fpn_forward.15}
  #allocation0 [shape = 'u32[]', space=smem, size = 0x4, offset = 0x4, fixed_abs, tag = 'smem constant byte address 0x4 - core index']
  #allocation1 [shape = 'u32[144,128]{1,0:T(1,128)}', space=vmem, size = 0x12000, scoped, tag = 'internal scratch']
  %s0 = inlined_call_operand.vmem [shape: f32[2,6,10,128], index: 0, kind: input, shape index: {}]
  %s1 = inlined_call_operand.vmem [shape: bf16[3,3,128,128], index: 1, kind: input, shape index: {}]
  %s2 = inlined_call_operand.vmem [shape: f32[1,128], index: 2, kind: input, shape index: {}]
  %s3 = inlined_call_operand.vmem [shape: f32[1,128], index: 3, kind: input, shape index: {}]
  %s4 = inlined_call_operand.vmem [shape: f32[64,128], index: 4, kind: output, shape index: {}]
  %s5 = sld [smem:[#allocation0]]
  $region38: #{densenet_fpn_forward.15} parent=0
    _
  %s7 = ssub.s32 1, %s5
  %s8 = scalar_select 0, %s7, %s5
  // Predicated region
  $region2: #{densenet_fpn_forward.15} parent=0 // pred_check
    _
  $region3: #{densenet_fpn_forward.15} parent=0 // pred_check_branch
    %10 = sbr.rel (0) target = $region5
  $region4: #{densenet_fpn_forward.15} parent=0 // pred_region
    _
  $region5: #{densenet_fpn_forward.15} parent=0 // pred_fallthru
    _
  // Predicated region
  $region6: #{densenet_fpn_forward.15} parent=0 // pred_check
    _
  $region7: #{densenet_fpn_forward.15} parent=0 // pred_check_branch
    %12 = sbr.rel (0) target = $region9
  $region8: #{densenet_fpn_forward.15} parent=0 // pred_region
    _
  $region9: #{densenet_fpn_forward.15} parent=0 // pred_fallthru
    _
  // Predicated region
  $region10: #{densenet_fpn_forward.15} parent=0 // pred_check
    _
  $region11: #{densenet_fpn_forward.15} parent=0 // pred_check_branch
    %14 = sbr.rel (0) target = $region13
  $region12: #{densenet_fpn_forward.15} parent=0 // pred_region
    _
  $region13: #{densenet_fpn_forward.15} parent=0 // pred_fallthru
    _
  // Predicated region
  $region14: #{densenet_fpn_forward.15} parent=0 // pred_check
    _
  $region15: #{densenet_fpn_forward.15} parent=0 // pred_check_branch
    %16 = sbr.rel (0) target = $region17
  $region16: #{densenet_fpn_forward.15} parent=0 // pred_region
    _
  $region17: #{densenet_fpn_forward.15} parent=0 // pred_fallthru
    _
  %v18 = vld [vmem:[%s0] sm:$0xff]
  %v19 = vld [vmem:[%s0 + $0x10] sm:$0xff]
  %v20 = vld [vmem:[%s0 + $0x20] sm:$0xff]
  %v21 = vld [vmem:[%s0 + $0x30] sm:$0xff]
  %v22 = vld [vmem:[%s0 + $0x60] sm:$0xff]
  %v23 = vld [vmem:[%s0 + $0x70] sm:$0xff]
  %v24 = vld [vmem:[%s0 + $0x80] sm:$0xff]
  %v25 = vld [vmem:[%s0 + $0x90] sm:$0xff]
  %v26 = vpack.c.bf16 %v19, %v18
  %v27 = vpack.c.bf16 %v21, %v20
  %v28 = vpack.c.bf16 %v23, %v22
  %v29 = vpack.c.bf16 %v25, %v24
  %v30 = vld [vmem:[%s1] sm:$0xf]
  %v31 = vld [vmem:[%s1 + $0x4] sm:$0xf]
  %v32 = vld [vmem:[%s1 + $0x8] sm:$0xf]
  %v33 = vld [vmem:[%s1 + $0xc] sm:$0xf]
  %v34 = vld [vmem:[%s1 + $0x10] sm:$0xf]
  %v35 = vld [vmem:[%s1 + $0x14] sm:$0xf]
  %v36 = vld [vmem:[%s1 + $0x18] sm:$0xf]
  %v37 = vld [vmem:[%s1 + $0x1c] sm:$0xf]
  %v38 = vld [vmem:[%s1 + $0x20] sm:$0xf]
  %v39 = vld [vmem:[%s1 + $0x24] sm:$0xf]
  %v40 = vld [vmem:[%s1 + $0x28] sm:$0xf]
  %v41 = vld [vmem:[%s1 + $0x2c] sm:$0xf]
  %v42 = vld [vmem:[%s1 + $0x30] sm:$0xf]
  %v43 = vld [vmem:[%s1 + $0x34] sm:$0xf]
  %v44 = vld [vmem:[%s1 + $0x38] sm:$0xf]
  %v45 = vld [vmem:[%s1 + $0x3c] sm:$0xf]
  %v46 = vld [vmem:[%s0 + $0x1] sm:$0xff]
  %v47 = vld [vmem:[%s0 + $0x11] sm:$0xff]
  %v48 = vld [vmem:[%s0 + $0x21] sm:$0xff]
  %v49 = vld [vmem:[%s0 + $0x31] sm:$0xff]
  %v50 = vld [vmem:[%s0 + $0x61] sm:$0xff]
  %v51 = vld [vmem:[%s0 + $0x71] sm:$0xff]
  %v52 = vld [vmem:[%s0 + $0x81] sm:$0xff]
  %v53 = vld [vmem:[%s0 + $0x91] sm:$0xff]
  %v54 = vpack.c.bf16 %v47, %v46
  %v55 = vpack.c.bf16 %v49, %v48
  %v56 = vpack.c.bf16 %v51, %v50
  %v57 = vpack.c.bf16 %v53, %v52
  %s58 = scalar_lea.vmem %s1, 64
  %v59 = vld [vmem:[%s58] sm:$0xf]
  %v60 = vld [vmem:[%s58 + $0x4] sm:$0xf]
  %v61 = vld [vmem:[%s58 + $0x8] sm:$0xf]
  %v62 = vld [vmem:[%s58 + $0xc] sm:$0xf]
  %v63 = vld [vmem:[%s58 + $0x10] sm:$0xf]
  %v64 = vld [vmem:[%s58 + $0x14] sm:$0xf]
  %v65 = vld [vmem:[%s58 + $0x18] sm:$0xf]
  %v66 = vld [vmem:[%s58 + $0x1c] sm:$0xf]
  %v67 = vld [vmem:[%s58 + $0x20] sm:$0xf]
  %v68 = vld [vmem:[%s58 + $0x24] sm:$0xf]
  %v69 = vld [vmem:[%s58 + $0x28] sm:$0xf]
  %v70 = vld [vmem:[%s58 + $0x2c] sm:$0xf]
  %v71 = vld [vmem:[%s58 + $0x30] sm:$0xf]
  %v72 = vld [vmem:[%s58 + $0x34] sm:$0xf]
  %v73 = vld [vmem:[%s58 + $0x38] sm:$0xf]
  %v74 = vld [vmem:[%s58 + $0x3c] sm:$0xf]
  %v91 = vunpack.c.l.b16 %v59
  %v92 = vunpack.c.l.b16 %v60
  %v93 = vunpack.c.l.b16 %v61
  %v94 = vunpack.c.l.b16 %v62
  %v95 = vunpack.c.l.b16 %v63
  %v96 = vunpack.c.l.b16 %v64
  %v97 = vunpack.c.l.b16 %v65
  %v98 = vunpack.c.l.b16 %v66
  %v99 = vunpack.c.l.b16 %v67
  %v100 = vunpack.c.l.b16 %v68
  %v101 = vunpack.c.l.b16 %v69
  %v102 = vunpack.c.l.b16 %v70
  %v103 = vunpack.c.l.b16 %v71
  %v104 = vunpack.c.l.b16 %v72
  %v105 = vunpack.c.l.b16 %v73
  %v106 = vunpack.c.l.b16 %v74
  %v107 = vpack.c.b16 %v92, %v91
  %v108 = vpack.c.b16 %v94, %v93
  %v109 = vpack.c.b16 %v96, %v95
  %v110 = vpack.c.b16 %v98, %v97
  %v111 = vpack.c.b16 %v100, %v99
  %v112 = vpack.c.b16 %v102, %v101
  %v113 = vpack.c.b16 %v104, %v103
  %v114 = vpack.c.b16 %v106, %v105
  %123 = vmatprep.subr.bf16.mxu0 0
  %124 = vmatpush1.bf16.msra.mxu0 %v107
  %125 = vmatprep.subr.bf16.mxu0 0
  %126 = vmatpush1.bf16.msra.mxu0 %v108
  %127 = vmatprep.subr.bf16.mxu0 0
  %128 = vmatpush1.bf16.msra.mxu0 %v109
  %129 = vmatprep.subr.bf16.mxu0 0
  %130 = vmatpush1.bf16.msra.mxu0 %v110
  %131 = vmatprep.subr.bf16.mxu0 0
  %132 = vmatpush1.bf16.msra.mxu0 %v111
  %133 = vmatprep.subr.bf16.mxu0 0
  %134 = vmatpush1.bf16.msra.mxu0 %v112
  %135 = vmatprep.subr.bf16.mxu0 0
  %136 = vmatpush1.bf16.msra.mxu0 %v113
  %137 = vmatprep.subr.bf16.mxu0 0
  %138 = vmatpush1.bf16.msra.mxu0 %v114
  %139 = vmatprep.subr.bf16.mxu0 0
  %140 = vmatpush1.bf16.msra.mxu0 0
  %141 = vmatprep.subr.bf16.mxu0 0
  %142 = vmatpush1.bf16.msra.mxu0 0
  %143 = vmatprep.subr.bf16.mxu0 0
  %144 = vmatpush1.bf16.msra.mxu0 0
  %145 = vmatprep.subr.bf16.mxu0 0
  %146 = vmatpush1.bf16.msra.mxu0 0
  %147 = vmatprep.subr.bf16.mxu0 0
  %148 = vmatpush1.bf16.msra.mxu0 0
  %149 = vmatprep.subr.bf16.mxu0 0
  %150 = vmatpush1.bf16.msra.mxu0 0
  %151 = vmatprep.subr.bf16.mxu0 0
  %152 = vmatpush1.bf16.msra.mxu0 0
  %153 = vmatprep.subr.bf16.mxu0 0
  %154 = vmatpush1.bf16.msra.mxu0 0
  %155 = vmatprep.mubr.bf16.mxu0 0
  %156 = vmatmul.mubr.bf16.gmra.mrb[0].mxu0 %v54
  %v157 = vpop.f32.mrb[0].mxu0
  %v158 = vadd.f32 0.0, %v157
  %v159 = vpop.f32.mrb[0].mxu0
  %v160 = vpop.f32.mrb[0].mxu0
  %v161 = vadd.f32 0.0, %v160
  %v162 = vpop.f32.mrb[0].mxu0
  %163 = vmatprep.mubr.bf16.mxu0 0
  %164 = vmatmul.mubr.bf16.gmra.mrb[0].mxu0 %v55
  %v165 = vpop.f32.mrb[0].mxu0
  %v166 = vadd.f32 0.0, %v165
  %v167 = vpop.f32.mrb[0].mxu0
  %v168 = vpop.f32.mrb[0].mxu0
  %v169 = vadd.f32 0.0, %v168
  %v170 = vpop.f32.mrb[0].mxu0
  %171 = vmatprep.mubr.bf16.mxu0 0
  %172 = vmatmul.mubr.bf16.gmra.mrb[0].mxu0 %v56
  %v173 = vpop.f32.mrb[0].mxu0
  %v174 = vadd.f32 0.0, %v173
  %v175 = vpop.f32.mrb[0].mxu0
  %v176 = vpop.f32.mrb[0].mxu0
  %v177 = vadd.f32 0.0, %v176
  %v178 = vpop.f32.mrb[0].mxu0
  %179 = vmatprep.mubr.bf16.mxu0 0
  %180 = vmatmul.mubr.bf16.gmra.mrb[0].mxu0 %v57
  %v181 = vpop.f32.mrb[0].mxu0
  %v182 = vadd.f32 0.0, %v181
  %v183 = vpop.f32.mrb[0].mxu0
  %v184 = vpop.f32.mrb[0].mxu0
  %v185 = vadd.f32 0.0, %v184
  %v186 = vpop.f32.mrb[0].mxu0
  %187 = vdwg.mxu0
  %v204 = vunpack.c.l.b16 %v30
  %v205 = vunpack.c.l.b16 %v31
  %v206 = vunpack.c.l.b16 %v32
  %v207 = vunpack.c.l.b16 %v33
  %v208 = vunpack.c.l.b16 %v34
  %v209 = vunpack.c.l.b16 %v35
  %v210 = vunpack.c.l.b16 %v36
  %v211 = vunpack.c.l.b16 %v37
  %v212 = vunpack.c.l.b16 %v38
  %v213 = vunpack.c.l.b16 %v39
  %v214 = vunpack.c.l.b16 %v40
  %v215 = vunpack.c.l.b16 %v41
  %v216 = vunpack.c.l.b16 %v42
  %v217 = vunpack.c.l.b16 %v43
  %v218 = vunpack.c.l.b16 %v44
  %v219 = vunpack.c.l.b16 %v45
  %v220 = vpack.c.b16 %v205, %v204
  %v221 = vpack.c.b16 %v207, %v206
  %v222 = vpack.c.b16 %v209, %v208
  %v223 = vpack.c.b16 %v211, %v210
  %v224 = vpack.c.b16 %v213, %v212
  %v225 = vpack.c.b16 %v215, %v214
  %v226 = vpack.c.b16 %v217, %v216
  %v227 = vpack.c.b16 %v219, %v218
  %236 = vmatprep.subr.bf16.mxu0 0
  %237 = vmatpush1.bf16.msra.mxu0 %v220
  %238 = vmatprep.subr.bf16.mxu0 0
  %239 = vmatpush1.bf16.msra.mxu0 %v221
  %240 = vmatprep.subr.bf16.mxu0 0
  %241 = vmatpush1.bf16.msra.mxu0 %v222
  %242 = vmatprep.subr.bf16.mxu0 0
  %243 = vmatpush1.bf16.msra.mxu0 %v223
  %244 = vmatprep.subr.bf16.mxu0 0
  %245 = vmatpush1.bf16.msra.mxu0 %v224
  %246 = vmatprep.subr.bf16.mxu0 0
  %247 = vmatpush1.bf16.msra.mxu0 %v225
  %248 = vmatprep.subr.bf16.mxu0 0
  %249 = vmatpush1.bf16.msra.mxu0 %v226
  %250 = vmatprep.subr.bf16.mxu0 0
  %251 = vmatpush1.bf16.msra.mxu0 %v227
  %252 = vmatprep.subr.bf16.mxu0 0
  %253 = vmatpush1.bf16.msra.mxu0 0
  %254 = vmatprep.subr.bf16.mxu0 0
  %255 = vmatpush1.bf16.msra.mxu0 0
  %256 = vmatprep.subr.bf16.mxu0 0
  %257 = vmatpush1.bf16.msra.mxu0 0
  %258 = vmatprep.subr.bf16.mxu0 0
  %259 = vmatpush1.bf16.msra.mxu0 0
  %260 = vmatprep.subr.bf16.mxu0 0
  %261 = vmatpush1.bf16.msra.mxu0 0
  %262 = vmatprep.subr.bf16.mxu0 0
  %263 = vmatpush1.bf16.msra.mxu0 0
  %264 = vmatprep.subr.bf16.mxu0 0
  %265 = vmatpush1.bf16.msra.mxu0 0
  %266 = vmatprep.subr.bf16.mxu0 0
  %267 = vmatpush1.bf16.msra.mxu0 0
  %268 = vmatprep.mubr.bf16.mxu0 0
  %269 = vmatmul.mubr.bf16.gmra.mrb[0].mxu0 %v26
  %v270 = vpop.f32.mrb[0].mxu0
  %v271 = vadd.f32 %v158, %v270
  %v272 = vpop.f32.mrb[0].mxu0
  %v273 = vpop.f32.mrb[0].mxu0
  %v274 = vadd.f32 %v161, %v273
  %v275 = vpop.f32.mrb[0].mxu0
  %276 = vmatprep.mubr.bf16.mxu0 0
  %277 = vmatmul.mubr.bf16.gmra.mrb[0].mxu0 %v27
  %v278 = vpop.f32.mrb[0].mxu0
  %v279 = vadd.f32 %v166, %v278
  %v280 = vpop.f32.mrb[0].mxu0
  %v281 = vpop.f32.mrb[0].mxu0
  %v282 = vadd.f32 %v169, %v281
  %v283 = vpop.f32.mrb[0].mxu0
  %284 = vmatprep.mubr.bf16.mxu0 0
  %285 = vmatmul.mubr.bf16.gmra.mrb[0].mxu0 %v28
  %v286 = vpop.f32.mrb[0].mxu0
  %v287 = vadd.f32 %v174, %v286
  %v288 = vpop.f32.mrb[0].mxu0
  %v289 = vpop.f32.mrb[0].mxu0
  %v290 = vadd.f32 %v177, %v289
  %v291 = vpop.f32.mrb[0].mxu0
  %292 = vmatprep.mubr.bf16.mxu0 0
  %293 = vmatmul.mubr.bf16.gmra.mrb[0].mxu0 %v29
  %v294 = vpop.f32.mrb[0].mxu0
  %v295 = vadd.f32 %v182, %v294
  %v296 = vpop.f32.mrb[0].mxu0
  %v297 = vpop.f32.mrb[0].mxu0
  %v298 = vadd.f32 %v185, %v297
  %v299 = vpop.f32.mrb[0].mxu0
  %300 = vdwg.mxu0
  %v301 = vld [vmem:[%s0 + $0x2] sm:$0xff]
  %v302 = vld [vmem:[%s0 + $0x12] sm:$0xff]
  %v303 = vld [vmem:[%s0 + $0x22] sm:$0xff]
  %v304 = vld [vmem:[%s0 + $0x32] sm:$0xff]
  %v305 = vld [vmem:[%s0 + $0x62] sm:$0xff]
  %v306 = vld [vmem:[%s0 + $0x72] sm:$0xff]
  %v307 = vld [vmem:[%s0 + $0x82] sm:$0xff]
  %v308 = vld [vmem:[%s0 + $0x92] sm:$0xff]
  %v309 = vpack.c.bf16 %v302, %v301
  %v310 = vpack.c.bf16 %v304, %v303
  %v311 = vpack.c.bf16 %v306, %v305
  %v312 = vpack.c.bf16 %v308, %v307
  %s313 = scalar_lea.vmem %s1, 128
  %v314 = vld [vmem:[%s313] sm:$0xf]
  %v315 = vld [vmem:[%s313 + $0x4] sm:$0xf]
  %v316 = vld [vmem:[%s313 + $0x8] sm:$0xf]
  %v317 = vld [vmem:[%s313 + $0xc] sm:$0xf]
  %v318 = vld [vmem:[%s313 + $0x10] sm:$0xf]
  %v319 = vld [vmem:[%s313 + $0x14] sm:$0xf]
  %v320 = vld [vmem:[%s313 + $0x18] sm:$0xf]
  %v321 = vld [vmem:[%s313 + $0x1c] sm:$0xf]
  %v322 = vld [vmem:[%s313 + $0x20] sm:$0xf]
  %v323 = vld [vmem:[%s313 + $0x24] sm:$0xf]
  %v324 = vld [vmem:[%s313 + $0x28] sm:$0xf]
  %v325 = vld [vmem:[%s313 + $0x2c] sm:$0xf]
  %v326 = vld [vmem:[%s313 + $0x30] sm:$0xf]
  %v327 = vld [vmem:[%s313 + $0x34] sm:$0xf]
  %v328 = vld [vmem:[%s313 + $0x38] sm:$0xf]
  %v329 = vld [vmem:[%s313 + $0x3c] sm:$0xf]
  %v346 = vunpack.c.l.b16 %v314
  %v347 = vunpack.c.l.b16 %v315
  %v348 = vunpack.c.l.b16 %v316
  %v349 = vunpack.c.l.b16 %v317
  %v350 = vunpack.c.l.b16 %v318
  %v351 = vunpack.c.l.b16 %v319
  %v352 = vunpack.c.l.b16 %v320
  %v353 = vunpack.c.l.b16 %v321
  %v354 = vunpack.c.l.b16 %v322
  %v355 = vunpack.c.l.b16 %v323
  %v356 = vunpack.c.l.b16 %v324
  %v357 = vunpack.c.l.b16 %v325
  %v358 = vunpack.c.l.b16 %v326
  %v359 = vunpack.c.l.b16 %v327
  %v360 = vunpack.c.l.b16 %v328
  %v361 = vunpack.c.l.b16 %v329
  %v362 = vpack.c.b16 %v347, %v346
  %v363 = vpack.c.b16 %v349, %v348
  %v364 = vpack.c.b16 %v351, %v350
  %v365 = vpack.c.b16 %v353, %v352
  %v366 = vpack.c.b16 %v355, %v354
  %v367 = vpack.c.b16 %v357, %v356
  %v368 = vpack.c.b16 %v359, %v358
  %v369 = vpack.c.b16 %v361, %v360
  %378 = vmatprep.subr.bf16.mxu0 0
  %379 = vmatpush1.bf16.msra.mxu0 %v362
  %380 = vmatprep.subr.bf16.mxu0 0
  %381 = vmatpush1.bf16.msra.mxu0 %v363
  %382 = vmatprep.subr.bf16.mxu0 0
  %383 = vmatpush1.bf16.msra.mxu0 %v364
  %384 = vmatprep.subr.bf16.mxu0 0
  %385 = vmatpush1.bf16.msra.mxu0 %v365
  %386 = vmatprep.subr.bf16.mxu0 0
  %387 = vmatpush1.bf16.msra.mxu0 %v366
  %388 = vmatprep.subr.bf16.mxu0 0
  %389 = vmatpush1.bf16.msra.mxu0 %v367
  %390 = vmatprep.subr.bf16.mxu0 0
  %391 = vmatpush1.bf16.msra.mxu0 %v368
  %392 = vmatprep.subr.bf16.mxu0 0
  %393 = vmatpush1.bf16.msra.mxu0 %v369
  %394 = vmatprep.subr.bf16.mxu0 0
  %395 = vmatpush1.bf16.msra.mxu0 0
  %396 = vmatprep.subr.bf16.mxu0 0
  %397 = vmatpush1.bf16.msra.mxu0 0
  %398 = vmatprep.subr.bf16.mxu0 0
  %399 = vmatpush1.bf16.msra.mxu0 0
  %400 = vmatprep.subr.bf16.mxu0 0
  %401 = vmatpush1.bf16.msra.mxu0 0
  %402 = vmatprep.subr.bf16.mxu0 0
  %403 = vmatpush1.bf16.msra.mxu0 0
  %404 = vmatprep.subr.bf16.mxu0 0
  %405 = vmatpush1.bf16.msra.mxu0 0
  %406 = vmatprep.subr.bf16.mxu0 0
  %407 = vmatpush1.bf16.msra.mxu0 0
  %408 = vmatprep.subr.bf16.mxu0 0
  %409 = vmatpush1.bf16.msra.mxu0 0
  %410 = vmatprep.mubr.bf16.mxu0 0
  %411 = vmatmul.mubr.bf16.gmra.mrb[0].mxu0 %v309
  %v412 = vpop.f32.mrb[0].mxu0
  %v413 = vadd.f32 0.0, %v412
  %v414 = vpop.f32.mrb[0].mxu0
  %v415 = vpop.f32.mrb[0].mxu0
  %v416 = vadd.f32 0.0, %v415
  %v417 = vpop.f32.mrb[0].mxu0
  %418 = vmatprep.mubr.bf16.mxu0 0
  %419 = vmatmul.mubr.bf16.gmra.mrb[0].mxu0 %v310
  %v420 = vpop.f32.mrb[0].mxu0
  %v421 = vadd.f32 0.0, %v420
  %v422 = vpop.f32.mrb[0].mxu0
  %v423 = vpop.f32.mrb[0].mxu0
  %v424 = vadd.f32 0.0, %v423
  %v425 = vpop.f32.mrb[0].mxu0
  %426 = vmatprep.mubr.bf16.mxu0 0
  %427 = vmatmul.mubr.bf16.gmra.mrb[0].mxu0 %v311
  %v428 = vpop.f32.mrb[0].mxu0
  %v429 = vadd.f32 0.0, %v428
  %v430 = vpop.f32.mrb[0].mxu0
  %v431 = vpop.f32.mrb[0].mxu0
  %v432 = vadd.f32 0.0, %v431
  %v433 = vpop.f32.mrb[0].mxu0
  %434 = vmatprep.mubr.bf16.mxu0 0
  %435 = vmatmul.mubr.bf16.gmra.mrb[0].mxu0 %v312
  %v436 = vpop.f32.mrb[0].mxu0
  %v437 = vadd.f32 0.0, %v436
  %v438 = vpop.f32.mrb[0].mxu0
  %v439 = vpop.f32.mrb[0].mxu0
  %v440 = vadd.f32 0.0, %v439
  %v441 = vpop.f32.mrb[0].mxu0
  %442 = vdwg.mxu0
  %v443 = vadd.f32 %v271, %v413
  %v444 = vadd.f32 %v274, %v416
  %v445 = vadd.f32 %v279, %v421
  %v446 = vadd.f32 %v282, %v424
  %v447 = vadd.f32 %v287, %v429
  %v448 = vadd.f32 %v290, %v432
  %v449 = vadd.f32 %v295, %v437
  %v450 = vadd.f32 %v298, %v440
  %s451 = scalar_lea.vmem %s0, 16
  %v452 = vld [vmem:[%s451] sm:$0xff]
  %v453 = vld [vmem:[%s451 + $0x10] sm:$0xff]
  %v454 = vld [vmem:[%s451 + $0x20] sm:$0xff]
  %v455 = vld [vmem:[%s451 + $0x30] sm:$0xff]
  %v456 = vld [vmem:[%s451 + $0x60] sm:$0xff]
  %v457 = vld [vmem:[%s451 + $0x70] sm:$0xff]
  %v458 = vld [vmem:[%s451 + $0x80] sm:$0xff]
  %v459 = vld [vmem:[%s451 + $0x90] sm:$0xff]
  %v460 = vpack.c.bf16 %v453, %v452
  %v461 = vpack.c.bf16 %v455, %v454
  %v462 = vpack.c.bf16 %v457, %v456
  %v463 = vpack.c.bf16 %v459, %v458
  %s464 = scalar_lea.vmem %s1, 192
  %v465 = vld [vmem:[%s464] sm:$0xf]
  %v466 = vld [vmem:[%s464 + $0x4] sm:$0xf]
  %v467 = vld [vmem:[%s464 + $0x8] sm:$0xf]
  %v468 = vld [vmem:[%s464 + $0xc] sm:$0xf]
  %v469 = vld [vmem:[%s464 + $0x10] sm:$0xf]
  %v470 = vld [vmem:[%s464 + $0x14] sm:$0xf]
  %v471 = vld [vmem:[%s464 + $0x18] sm:$0xf]
  %v472 = vld [vmem:[%s464 + $0x1c] sm:$0xf]
  %v473 = vld [vmem:[%s464 + $0x20] sm:$0xf]
  %v474 = vld [vmem:[%s464 + $0x24] sm:$0xf]
  %v475 = vld [vmem:[%s464 + $0x28] sm:$0xf]
  %v476 = vld [vmem:[%s464 + $0x2c] sm:$0xf]
  %v477 = vld [vmem:[%s464 + $0x30] sm:$0xf]
  %v478 = vld [vmem:[%s464 + $0x34] sm:$0xf]
  %v479 = vld [vmem:[%s464 + $0x38] sm:$0xf]
  %v480 = vld [vmem:[%s464 + $0x3c] sm:$0xf]
  %v497 = vunpack.c.l.b16 %v465
  %v498 = vunpack.c.l.b16 %v466
  %v499 = vunpack.c.l.b16 %v467
  %v500 = vunpack.c.l.b16 %v468
  %v501 = vunpack.c.l.b16 %v469
  %v502 = vunpack.c.l.b16 %v470
  %v503 = vunpack.c.l.b16 %v471
  %v504 = vunpack.c.l.b16 %v472
  %v505 = vunpack.c.l.b16 %v473
  %v506 = vunpack.c.l.b16 %v474
  %v507 = vunpack.c.l.b16 %v475
  %v508 = vunpack.c.l.b16 %v476
  %v509 = vunpack.c.l.b16 %v477
  %v510 = vunpack.c.l.b16 %v478
  %v511 = vunpack.c.l.b16 %v479
  %v512 = vunpack.c.l.b16 %v480
  %v513 = vpack.c.b16 %v498, %v497
  %v514 = vpack.c.b16 %v500, %v499
  %v515 = vpack.c.b16 %v502, %v501
  %v516 = vpack.c.b16 %v504, %v503
  %v517 = vpack.c.b16 %v506, %v505
  %v518 = vpack.c.b16 %v508, %v507
  %v519 = vpack.c.b16 %v510, %v509
  %v520 = vpack.c.b16 %v512, %v511
  %529 = vmatprep.subr.bf16.mxu0 0
  %530 = vmatpush1.bf16.msra.mxu0 %v513
  %531 = vmatprep.subr.bf16.mxu0 0
  %532 = vmatpush1.bf16.msra.mxu0 %v514
  %533 = vmatprep.subr.bf16.mxu0 0
  %534 = vmatpush1.bf16.msra.mxu0 %v515
  %535 = vmatprep.subr.bf16.mxu0 0
  %536 = vmatpush1.bf16.msra.mxu0 %v516
  %537 = vmatprep.subr.bf16.mxu0 0
  %538 = vmatpush1.bf16.msra.mxu0 %v517
  %539 = vmatprep.subr.bf16.mxu0 0
  %540 = vmatpush1.bf16.msra.mxu0 %v518
  %541 = vmatprep.subr.bf16.mxu0 0
  %542 = vmatpush1.bf16.msra.mxu0 %v519
  %543 = vmatprep.subr.bf16.mxu0 0
  %544 = vmatpush1.bf16.msra.mxu0 %v520
  %545 = vmatprep.subr.bf16.mxu0 0
  %546 = vmatpush1.bf16.msra.mxu0 0
  %547 = vmatprep.subr.bf16.mxu0 0
  %548 = vmatpush1.bf16.msra.mxu0 0
  %549 = vmatprep.subr.bf16.mxu0 0
  %550 = vmatpush1.bf16.msra.mxu0 0
  %551 = vmatprep.subr.bf16.mxu0 0
  %552 = vmatpush1.bf16.msra.mxu0 0
  %553 = vmatprep.subr.bf16.mxu0 0
  %554 = vmatpush1.bf16.msra.mxu0 0
  %555 = vmatprep.subr.bf16.mxu0 0
  %556 = vmatpush1.bf16.msra.mxu0 0
  %557 = vmatprep.subr.bf16.mxu0 0
  %558 = vmatpush1.bf16.msra.mxu0 0
  %559 = vmatprep.subr.bf16.mxu0 0
  %560 = vmatpush1.bf16.msra.mxu0 0
  %561 = vmatprep.mubr.bf16.mxu0 0
  %562 = vmatmul.mubr.bf16.gmra.mrb[0].mxu0 %v460
  %v563 = vpop.f32.mrb[0].mxu0
  %v564 = vadd.f32 0.0, %v563
  %v565 = vpop.f32.mrb[0].mxu0
  %v566 = vpop.f32.mrb[0].mxu0
  %v567 = vadd.f32 0.0, %v566
  %v568 = vpop.f32.mrb[0].mxu0
  %569 = vmatprep.mubr.bf16.mxu0 0
  %570 = vmatmul.mubr.bf16.gmra.mrb[0].mxu0 %v461
  %v571 = vpop.f32.mrb[0].mxu0
  %v572 = vadd.f32 0.0, %v571
  %v573 = vpop.f32.mrb[0].mxu0
  %v574 = vpop.f32.mrb[0].mxu0
  %v575 = vadd.f32 0.0, %v574
  %v576 = vpop.f32.mrb[0].mxu0
  %577 = vmatprep.mubr.bf16.mxu0 0
  %578 = vmatmul.mubr.bf16.gmra.mrb[0].mxu0 %v462
  %v579 = vpop.f32.mrb[0].mxu0
  %v580 = vadd.f32 0.0, %v579
  %v581 = vpop.f32.mrb[0].mxu0
  %v582 = vpop.f32.mrb[0].mxu0
  %v583 = vadd.f32 0.0, %v582
  %v584 = vpop.f32.mrb[0].mxu0
  %585 = vmatprep.mubr.bf16.mxu0 0
  %586 = vmatmul.mubr.bf16.gmra.mrb[0].mxu0 %v463
  %v587 = vpop.f32.mrb[0].mxu0
  %v588 = vadd.f32 0.0, %v587
  %v589 = vpop.f32.mrb[0].mxu0
  %v590 = vpop.f32.mrb[0].mxu0
  %v591 = vadd.f32 0.0, %v590
  %v592 = vpop.f32.mrb[0].mxu0
  %593 = vdwg.mxu0
  %v594 = vadd.f32 %v443, %v564
  %v595 = vadd.f32 %v444, %v567
  %v596 = vadd.f32 %v445, %v572
  %v597 = vadd.f32 %v446, %v575
  %v598 = vadd.f32 %v447, %v580
  %v599 = vadd.f32 %v448, %v583
  %v600 = vadd.f32 %v449, %v588
  %v601 = vadd.f32 %v450, %v591
  %v602 = vld [vmem:[%s451 + $0x1] sm:$0xff]
  %v603 = vld [vmem:[%s451 + $0x11] sm:$0xff]
  %v604 = vld [vmem:[%s451 + $0x21] sm:$0xff]
  %v605 = vld [vmem:[%s451 + $0x31] sm:$0xff]
  %v606 = vld [vmem:[%s451 + $0x61] sm:$0xff]
  %v607 = vld [vmem:[%s451 + $0x71] sm:$0xff]
  %v608 = vld [vmem:[%s451 + $0x81] sm:$0xff]
  %v609 = vld [vmem:[%s451 + $0x91] sm:$0xff]
  %v610 = vpack.c.bf16 %v603, %v602
  %v611 = vpack.c.bf16 %v605, %v604
  %v612 = vpack.c.bf16 %v607, %v606
  %v613 = vpack.c.bf16 %v609, %v608
  %s614 = scalar_lea.vmem %s1, 256
  %v615 = vld [vmem:[%s614] sm:$0xf]
  %v616 = vld [vmem:[%s614 + $0x4] sm:$0xf]
  %v617 = vld [vmem:[%s614 + $0x8] sm:$0xf]
  %v618 = vld [vmem:[%s614 + $0xc] sm:$0xf]
  %v619 = vld [vmem:[%s614 + $0x10] sm:$0xf]
  %v620 = vld [vmem:[%s614 + $0x14] sm:$0xf]
  %v621 = vld [vmem:[%s614 + $0x18] sm:$0xf]
  %v622 = vld [vmem:[%s614 + $0x1c] sm:$0xf]
  %v623 = vld [vmem:[%s614 + $0x20] sm:$0xf]
  %v624 = vld [vmem:[%s614 + $0x24] sm:$0xf]
  %v625 = vld [vmem:[%s614 + $0x28] sm:$0xf]
  %v626 = vld [vmem:[%s614 + $0x2c] sm:$0xf]
  %v627 = vld [vmem:[%s614 + $0x30] sm:$0xf]
  %v628 = vld [vmem:[%s614 + $0x34] sm:$0xf]
  %v629 = vld [vmem:[%s614 + $0x38] sm:$0xf]
  %v630 = vld [vmem:[%s614 + $0x3c] sm:$0xf]
  %v647 = vunpack.c.l.b16 %v615
  %v648 = vunpack.c.l.b16 %v616
  %v649 = vunpack.c.l.b16 %v617
  %v650 = vunpack.c.l.b16 %v618
  %v651 = vunpack.c.l.b16 %v619
  %v652 = vunpack.c.l.b16 %v620
  %v653 = vunpack.c.l.b16 %v621
  %v654 = vunpack.c.l.b16 %v622
  %v655 = vunpack.c.l.b16 %v623
  %v656 = vunpack.c.l.b16 %v624
  %v657 = vunpack.c.l.b16 %v625
  %v658 = vunpack.c.l.b16 %v626
  %v659 = vunpack.c.l.b16 %v627
  %v660 = vunpack.c.l.b16 %v628
  %v661 = vunpack.c.l.b16 %v629
  %v662 = vunpack.c.l.b16 %v630
  %v663 = vpack.c.b16 %v648, %v647
  %v664 = vpack.c.b16 %v650, %v649
  %v665 = vpack.c.b16 %v652, %v651
  %v666 = vpack.c.b16 %v654, %v653
  %v667 = vpack.c.b16 %v656, %v655
  %v668 = vpack.c.b16 %v658, %v657
  %v669 = vpack.c.b16 %v660, %v659
  %v670 = vpack.c.b16 %v662, %v661
  %679 = vmatprep.subr.bf16.mxu0 0
  %680 = vmatpush1.bf16.msra.mxu0 %v663
  %681 = vmatprep.subr.bf16.mxu0 0
  %682 = vmatpush1.bf16.msra.mxu0 %v664
  %683 = vmatprep.subr.bf16.mxu0 0
  %684 = vmatpush1.bf16.msra.mxu0 %v665
  %685 = vmatprep.subr.bf16.mxu0 0
  %686 = vmatpush1.bf16.msra.mxu0 %v666
  %687 = vmatprep.subr.bf16.mxu0 0
  %688 = vmatpush1.bf16.msra.mxu0 %v667
  %689 = vmatprep.subr.bf16.mxu0 0
  %690 = vmatpush1.bf16.msra.mxu0 %v668
  %691 = vmatprep.subr.bf16.mxu0 0
  %692 = vmatpush1.bf16.msra.mxu0 %v669
  %693 = vmatprep.subr.bf16.mxu0 0
  %694 = vmatpush1.bf16.msra.mxu0 %v670
  %695 = vmatprep.subr.bf16.mxu0 0
  %696 = vmatpush1.bf16.msra.mxu0 0
  %697 = vmatprep.subr.bf16.mxu0 0
  %698 = vmatpush1.bf16.msra.mxu0 0
  %699 = vmatprep.subr.bf16.mxu0 0
  %700 = vmatpush1.bf16.msra.mxu0 0
  %701 = vmatprep.subr.bf16.mxu0 0
  %702 = vmatpush1.bf16.msra.mxu0 0
  %703 = vmatprep.subr.bf16.mxu0 0
  %704 = vmatpush1.bf16.msra.mxu0 0
  %705 = vmatprep.subr.bf16.mxu0 0
  %706 = vmatpush1.bf16.msra.mxu0 0
  %707 = vmatprep.subr.bf16.mxu0 0
  %708 = vmatpush1.bf16.msra.mxu0 0
  %709 = vmatprep.subr.bf16.mxu0 0
  %710 = vmatpush1.bf16.msra.mxu0 0
  %711 = vmatprep.mubr.bf16.mxu0 0
  %712 = vmatmul.mubr.bf16.gmra.mrb[0].mxu0 %v610
  %v713 = vpop.f32.mrb[0].mxu0
  %v714 = vadd.f32 0.0, %v713
  %v715 = vpop.f32.mrb[0].mxu0
  %v716 = vpop.f32.mrb[0].mxu0
  %v717 = vadd.f32 0.0, %v716
  %v718 = vpop.f32.mrb[0].mxu0
  %719 = vmatprep.mubr.bf16.mxu0 0
  %720 = vmatmul.mubr.bf16.gmra.mrb[0].mxu0 %v611
  %v721 = vpop.f32.mrb[0].mxu0
  %v722 = vadd.f32 0.0, %v721
  %v723 = vpop.f32.mrb[0].mxu0
  %v724 = vpop.f32.mrb[0].mxu0
  %v725 = vadd.f32 0.0, %v724
  %v726 = vpop.f32.mrb[0].mxu0
  %727 = vmatprep.mubr.bf16.mxu0 0
  %728 = vmatmul.mubr.bf16.gmra.mrb[0].mxu0 %v612
  %v729 = vpop.f32.mrb[0].mxu0
  %v730 = vadd.f32 0.0, %v729
  %v731 = vpop.f32.mrb[0].mxu0
  %v732 = vpop.f32.mrb[0].mxu0
  %v733 = vadd.f32 0.0, %v732
  %v734 = vpop.f32.mrb[0].mxu0
  %735 = vmatprep.mubr.bf16.mxu0 0
  %736 = vmatmul.mubr.bf16.gmra.mrb[0].mxu0 %v613
  %v737 = vpop.f32.mrb[0].mxu0
  %v738 = vadd.f32 0.0, %v737
  %v739 = vpop.f32.mrb[0].mxu0
  %v740 = vpop.f32.mrb[0].mxu0
  %v741 = vadd.f32 0.0, %v740
  %v742 = vpop.f32.mrb[0].mxu0
  %743 = vdwg.mxu0
  %v744 = vadd.f32 %v594, %v714
  %v745 = vadd.f32 %v595, %v717
  %v746 = vadd.f32 %v596, %v722
  %v747 = vadd.f32 %v597, %v725
  %v748 = vadd.f32 %v598, %v730
  %v749 = vadd.f32 %v599, %v733
  %v750 = vadd.f32 %v600, %v738
  %v751 = vadd.f32 %v601, %v741
  %v752 = vld [vmem:[%s451 + $0x2] sm:$0xff]
  %v753 = vld [vmem:[%s451 + $0x12] sm:$0xff]
  %v754 = vld [vmem:[%s451 + $0x22] sm:$0xff]
  %v755 = vld [vmem:[%s451 + $0x32] sm:$0xff]
  %v756 = vld [vmem:[%s451 + $0x62] sm:$0xff]
  %v757 = vld [vmem:[%s451 + $0x72] sm:$0xff]
  %v758 = vld [vmem:[%s451 + $0x82] sm:$0xff]
  %v759 = vld [vmem:[%s451 + $0x92] sm:$0xff]
  %v760 = vpack.c.bf16 %v753, %v752
  %v761 = vpack.c.bf16 %v755, %v754
  %v762 = vpack.c.bf16 %v757, %v756
  %v763 = vpack.c.bf16 %v759, %v758
  %s764 = scalar_lea.vmem %s1, 320
  %v765 = vld [vmem:[%s764] sm:$0xf]
  %v766 = vld [vmem:[%s764 + $0x4] sm:$0xf]
  %v767 = vld [vmem:[%s764 + $0x8] sm:$0xf]
  %v768 = vld [vmem:[%s764 + $0xc] sm:$0xf]
  %v769 = vld [vmem:[%s764 + $0x10] sm:$0xf]
  %v770 = vld [vmem:[%s764 + $0x14] sm:$0xf]
  %v771 = vld [vmem:[%s764 + $0x18] sm:$0xf]
  %v772 = vld [vmem:[%s764 + $0x1c] sm:$0xf]
  %v773 = vld [vmem:[%s764 + $0x20] sm:$0xf]
  %v774 = vld [vmem:[%s764 + $0x24] sm:$0xf]
  %v775 = vld [vmem:[%s764 + $0x28] sm:$0xf]
  %v776 = vld [vmem:[%s764 + $0x2c] sm:$0xf]
  %v777 = vld [vmem:[%s764 + $0x30] sm:$0xf]
  %v778 = vld [vmem:[%s764 + $0x34] sm:$0xf]
  %v779 = vld [vmem:[%s764 + $0x38] sm:$0xf]
  %v780 = vld [vmem:[%s764 + $0x3c] sm:$0xf]
  %v797 = vunpack.c.l.b16 %v765
  %v798 = vunpack.c.l.b16 %v766
  %v799 = vunpack.c.l.b16 %v767
  %v800 = vunpack.c.l.b16 %v768
  %v801 = vunpack.c.l.b16 %v769
  %v802 = vunpack.c.l.b16 %v770
  %v803 = vunpack.c.l.b16 %v771
  %v804 = vunpack.c.l.b16 %v772
  %v805 = vunpack.c.l.b16 %v773
  %v806 = vunpack.c.l.b16 %v774
  %v807 = vunpack.c.l.b16 %v775
  %v808 = vunpack.c.l.b16 %v776
  %v809 = vunpack.c.l.b16 %v777
  %v810 = vunpack.c.l.b16 %v778
  %v811 = vunpack.c.l.b16 %v779
  %v812 = vunpack.c.l.b16 %v780
  %v813 = vpack.c.b16 %v798, %v797
  %v814 = vpack.c.b16 %v800, %v799
  %v815 = vpack.c.b16 %v802, %v801
  %v816 = vpack.c.b16 %v804, %v803
  %v817 = vpack.c.b16 %v806, %v805
  %v818 = vpack.c.b16 %v808, %v807
  %v819 = vpack.c.b16 %v810, %v809
  %v820 = vpack.c.b16 %v812, %v811
  %829 = vmatprep.subr.bf16.mxu0 0
  %830 = vmatpush1.bf16.msra.mxu0 %v813
  %831 = vmatprep.subr.bf16.mxu0 0
  %832 = vmatpush1.bf16.msra.mxu0 %v814
  %833 = vmatprep.subr.bf16.mxu0 0
  %834 = vmatpush1.bf16.msra.mxu0 %v815
  %835 = vmatprep.subr.bf16.mxu0 0
  %836 = vmatpush1.bf16.msra.mxu0 %v816
  %837 = vmatprep.subr.bf16.mxu0 0
  %838 = vmatpush1.bf16.msra.mxu0 %v817
  %839 = vmatprep.subr.bf16.mxu0 0
  %840 = vmatpush1.bf16.msra.mxu0 %v818
  %841 = vmatprep.subr.bf16.mxu0 0
  %842 = vmatpush1.bf16.msra.mxu0 %v819
  %843 = vmatprep.subr.bf16.mxu0 0
  %844 = vmatpush1.bf16.msra.mxu0 %v820
  %845 = vmatprep.subr.bf16.mxu0 0
  %846 = vmatpush1.bf16.msra.mxu0 0
  %847 = vmatprep.subr.bf16.mxu0 0
  %848 = vmatpush1.bf16.msra.mxu0 0
  %849 = vmatprep.subr.bf16.mxu0 0
  %850 = vmatpush1.bf16.msra.mxu0 0
  %851 = vmatprep.subr.bf16.mxu0 0
  %852 = vmatpush1.bf16.msra.mxu0 0
  %853 = vmatprep.subr.bf16.mxu0 0
  %854 = vmatpush1.bf16.msra.mxu0 0
  %855 = vmatprep.subr.bf16.mxu0 0
  %856 = vmatpush1.bf16.msra.mxu0 0
  %857 = vmatprep.subr.bf16.mxu0 0
  %858 = vmatpush1.bf16.msra.mxu0 0
  %859 = vmatprep.subr.bf16.mxu0 0
  %860 = vmatpush1.bf16.msra.mxu0 0
  %861 = vmatprep.mubr.bf16.mxu0 0
  %862 = vmatmul.mubr.bf16.gmra.mrb[0].mxu0 %v760
  %v863 = vpop.f32.mrb[0].mxu0
  %v864 = vadd.f32 0.0, %v863
  %v865 = vpop.f32.mrb[0].mxu0
  %v866 = vpop.f32.mrb[0].mxu0
  %v867 = vadd.f32 0.0, %v866
  %v868 = vpop.f32.mrb[0].mxu0
  %869 = vmatprep.mubr.bf16.mxu0 0
  %870 = vmatmul.mubr.bf16.gmra.mrb[0].mxu0 %v761
  %v871 = vpop.f32.mrb[0].mxu0
  %v872 = vadd.f32 0.0, %v871
  %v873 = vpop.f32.mrb[0].mxu0
  %v874 = vpop.f32.mrb[0].mxu0
  %v875 = vadd.f32 0.0, %v874
  %v876 = vpop.f32.mrb[0].mxu0
  %877 = vmatprep.mubr.bf16.mxu0 0
  %878 = vmatmul.mubr.bf16.gmra.mrb[0].mxu0 %v762
  %v879 = vpop.f32.mrb[0].mxu0
  %v880 = vadd.f32 0.0, %v879
  %v881 = vpop.f32.mrb[0].mxu0
  %v882 = vpop.f32.mrb[0].mxu0
  %v883 = vadd.f32 0.0, %v882
  %v884 = vpop.f32.mrb[0].mxu0
  %885 = vmatprep.mubr.bf16.mxu0 0
  %886 = vmatmul.mubr.bf16.gmra.mrb[0].mxu0 %v763
  %v887 = vpop.f32.mrb[0].mxu0
  %v888 = vadd.f32 0.0, %v887
  %v889 = vpop.f32.mrb[0].mxu0
  %v890 = vpop.f32.mrb[0].mxu0
  %v891 = vadd.f32 0.0, %v890
  %v892 = vpop.f32.mrb[0].mxu0
  %893 = vdwg.mxu0
  %v894 = vadd.f32 %v744, %v864
  %v895 = vadd.f32 %v745, %v867
  %v896 = vadd.f32 %v746, %v872
  %v897 = vadd.f32 %v747, %v875
  %v898 = vadd.f32 %v748, %v880
  %v899 = vadd.f32 %v749, %v883
  %v900 = vadd.f32 %v750, %v888
  %v901 = vadd.f32 %v751, %v891
  %s902 = scalar_lea.vmem %s0, 32
  %v903 = vld [vmem:[%s902] sm:$0xff]
  %v904 = vld [vmem:[%s902 + $0x10] sm:$0xff]
  %v905 = vld [vmem:[%s902 + $0x20] sm:$0xff]
  %v906 = vld [vmem:[%s902 + $0x30] sm:$0xff]
  %v907 = vld [vmem:[%s902 + $0x60] sm:$0xff]
  %v908 = vld [vmem:[%s902 + $0x70] sm:$0xff]
  %v909 = vld [vmem:[%s902 + $0x80] sm:$0xff]
  %v910 = vld [vmem:[%s902 + $0x90] sm:$0xff]
  %v911 = vpack.c.bf16 %v904, %v903
  %v912 = vpack.c.bf16 %v906, %v905
  %v913 = vpack.c.bf16 %v908, %v907
  %v914 = vpack.c.bf16 %v910, %v909
  %s915 = scalar_lea.vmem %s1, 384
  %v916 = vld [vmem:[%s915] sm:$0xf]
  %v917 = vld [vmem:[%s915 + $0x4] sm:$0xf]
  %v918 = vld [vmem:[%s915 + $0x8] sm:$0xf]
  %v919 = vld [vmem:[%s915 + $0xc] sm:$0xf]
  %v920 = vld [vmem:[%s915 + $0x10] sm:$0xf]
  %v921 = vld [vmem:[%s915 + $0x14] sm:$0xf]
  %v922 = vld [vmem:[%s915 + $0x18] sm:$0xf]
  %v923 = vld [vmem:[%s915 + $0x1c] sm:$0xf]
  %v924 = vld [vmem:[%s915 + $0x20] sm:$0xf]
  %v925 = vld [vmem:[%s915 + $0x24] sm:$0xf]
  %v926 = vld [vmem:[%s915 + $0x28] sm:$0xf]
  %v927 = vld [vmem:[%s915 + $0x2c] sm:$0xf]
  %v928 = vld [vmem:[%s915 + $0x30] sm:$0xf]
  %v929 = vld [vmem:[%s915 + $0x34] sm:$0xf]
  %v930 = vld [vmem:[%s915 + $0x38] sm:$0xf]
  %v931 = vld [vmem:[%s915 + $0x3c] sm:$0xf]
  %v948 = vunpack.c.l.b16 %v916
  %v949 = vunpack.c.l.b16 %v917
  %v950 = vunpack.c.l.b16 %v918
  %v951 = vunpack.c.l.b16 %v919
  %v952 = vunpack.c.l.b16 %v920
  %v953 = vunpack.c.l.b16 %v921
  %v954 = vunpack.c.l.b16 %v922
  %v955 = vunpack.c.l.b16 %v923
  %v956 = vunpack.c.l.b16 %v924
  %v957 = vunpack.c.l.b16 %v925
  %v958 = vunpack.c.l.b16 %v926
  %v959 = vunpack.c.l.b16 %v927
  %v960 = vunpack.c.l.b16 %v928
  %v961 = vunpack.c.l.b16 %v929
  %v962 = vunpack.c.l.b16 %v930
  %v963 = vunpack.c.l.b16 %v931
  %v964 = vpack.c.b16 %v949, %v948
  %v965 = vpack.c.b16 %v951, %v950
  %v966 = vpack.c.b16 %v953, %v952
  %v967 = vpack.c.b16 %v955, %v954
  %v968 = vpack.c.b16 %v957, %v956
  %v969 = vpack.c.b16 %v959, %v958
  %v970 = vpack.c.b16 %v961, %v960
  %v971 = vpack.c.b16 %v963, %v962
  %980 = vmatprep.subr.bf16.mxu0 0
  %981 = vmatpush1.bf16.msra.mxu0 %v964
  %982 = vmatprep.subr.bf16.mxu0 0
  %983 = vmatpush1.bf16.msra.mxu0 %v965
  %984 = vmatprep.subr.bf16.mxu0 0
  %985 = vmatpush1.bf16.msra.mxu0 %v966
  %986 = vmatprep.subr.bf16.mxu0 0
  %987 = vmatpush1.bf16.msra.mxu0 %v967
  %988 = vmatprep.subr.bf16.mxu0 0
  %989 = vmatpush1.bf16.msra.mxu0 %v968
  %990 = vmatprep.subr.bf16.mxu0 0
  %991 = vmatpush1.bf16.msra.mxu0 %v969
  %992 = vmatprep.subr.bf16.mxu0 0
  %993 = vmatpush1.bf16.msra.mxu0 %v970
  %994 = vmatprep.subr.bf16.mxu0 0
  %995 = vmatpush1.bf16.msra.mxu0 %v971
  %996 = vmatprep.subr.bf16.mxu0 0
  %997 = vmatpush1.bf16.msra.mxu0 0
  %998 = vmatprep.subr.bf16.mxu0 0
  %999 = vmatpush1.bf16.msra.mxu0 0
  %1000 = vmatprep.subr.bf16.mxu0 0
  %1001 = vmatpush1.bf16.msra.mxu0 0
  %1002 = vmatprep.subr.bf16.mxu0 0
  %1003 = vmatpush1.bf16.msra.mxu0 0
  %1004 = vmatprep.subr.bf16.mxu0 0
  %1005 = vmatpush1.bf16.msra.mxu0 0
  %1006 = vmatprep.subr.bf16.mxu0 0
  %1007 = vmatpush1.bf16.msra.mxu0 0
  %1008 = vmatprep.subr.bf16.mxu0 0
  %1009 = vmatpush1.bf16.msra.mxu0 0
  %1010 = vmatprep.subr.bf16.mxu0 0
  %1011 = vmatpush1.bf16.msra.mxu0 0
  %1012 = vmatprep.mubr.bf16.mxu0 0
  %1013 = vmatmul.mubr.bf16.gmra.mrb[0].mxu0 %v911
  %v1014 = vpop.f32.mrb[0].mxu0
  %v1015 = vadd.f32 0.0, %v1014
  %v1016 = vpop.f32.mrb[0].mxu0
  %v1017 = vpop.f32.mrb[0].mxu0
  %v1018 = vadd.f32 0.0, %v1017
  %v1019 = vpop.f32.mrb[0].mxu0
  %1020 = vmatprep.mubr.bf16.mxu0 0
  %1021 = vmatmul.mubr.bf16.gmra.mrb[0].mxu0 %v912
  %v1022 = vpop.f32.mrb[0].mxu0
  %v1023 = vadd.f32 0.0, %v1022
  %v1024 = vpop.f32.mrb[0].mxu0
  %v1025 = vpop.f32.mrb[0].mxu0
  %v1026 = vadd.f32 0.0, %v1025
  %v1027 = vpop.f32.mrb[0].mxu0
  %1028 = vmatprep.mubr.bf16.mxu0 0
  %1029 = vmatmul.mubr.bf16.gmra.mrb[0].mxu0 %v913
  %v1030 = vpop.f32.mrb[0].mxu0
  %v1031 = vadd.f32 0.0, %v1030
  %v1032 = vpop.f32.mrb[0].mxu0
  %v1033 = vpop.f32.mrb[0].mxu0
  %v1034 = vadd.f32 0.0, %v1033
  %v1035 = vpop.f32.mrb[0].mxu0
  %1036 = vmatprep.mubr.bf16.mxu0 0
  %1037 = vmatmul.mubr.bf16.gmra.mrb[0].mxu0 %v914
  %v1038 = vpop.f32.mrb[0].mxu0
  %v1039 = vadd.f32 0.0, %v1038
  %v1040 = vpop.f32.mrb[0].mxu0
  %v1041 = vpop.f32.mrb[0].mxu0
  %v1042 = vadd.f32 0.0, %v1041
  %v1043 = vpop.f32.mrb[0].mxu0
  %1044 = vdwg.mxu0
  %v1045 = vadd.f32 %v894, %v1015
  %v1046 = vadd.f32 %v895, %v1018
  %v1047 = vadd.f32 %v896, %v1023
  %v1048 = vadd.f32 %v897, %v1026
  %v1049 = vadd.f32 %v898, %v1031
  %v1050 = vadd.f32 %v899, %v1034
  %v1051 = vadd.f32 %v900, %v1039
  %v1052 = vadd.f32 %v901, %v1042
  %v1053 = vld [vmem:[%s902 + $0x1] sm:$0xff]
  %v1054 = vld [vmem:[%s902 + $0x11] sm:$0xff]
  %v1055 = vld [vmem:[%s902 + $0x21] sm:$0xff]
  %v1056 = vld [vmem:[%s902 + $0x31] sm:$0xff]
  %v1057 = vld [vmem:[%s902 + $0x61] sm:$0xff]
  %v1058 = vld [vmem:[%s902 + $0x71] sm:$0xff]
  %v1059 = vld [vmem:[%s902 + $0x81] sm:$0xff]
  %v1060 = vld [vmem:[%s902 + $0x91] sm:$0xff]
  %v1061 = vpack.c.bf16 %v1054, %v1053
  %v1062 = vpack.c.bf16 %v1056, %v1055
  %v1063 = vpack.c.bf16 %v1058, %v1057
  %v1064 = vpack.c.bf16 %v1060, %v1059
  %s1065 = scalar_lea.vmem %s1, 448
  %v1066 = vld [vmem:[%s1065] sm:$0xf]
  %v1067 = vld [vmem:[%s1065 + $0x4] sm:$0xf]
  %v1068 = vld [vmem:[%s1065 + $0x8] sm:$0xf]
  %v1069 = vld [vmem:[%s1065 + $0xc] sm:$0xf]
  %v1070 = vld [vmem:[%s1065 + $0x10] sm:$0xf]
  %v1071 = vld [vmem:[%s1065 + $0x14] sm:$0xf]
  %v1072 = vld [vmem:[%s1065 + $0x18] sm:$0xf]
  %v1073 = vld [vmem:[%s1065 + $0x1c] sm:$0xf]
  %v1074 = vld [vmem:[%s1065 + $0x20] sm:$0xf]
  %v1075 = vld [vmem:[%s1065 + $0x24] sm:$0xf]
  %v1076 = vld [vmem:[%s1065 + $0x28] sm:$0xf]
  %v1077 = vld [vmem:[%s1065 + $0x2c] sm:$0xf]
  %v1078 = vld [vmem:[%s1065 + $0x30] sm:$0xf]
  %v1079 = vld [vmem:[%s1065 + $0x34] sm:$0xf]
  %v1080 = vld [vmem:[%s1065 + $0x38] sm:$0xf]
  %v1081 = vld [vmem:[%s1065 + $0x3c] sm:$0xf]
  %v1098 = vunpack.c.l.b16 %v1066
  %v1099 = vunpack.c.l.b16 %v1067
  %v1100 = vunpack.c.l.b16 %v1068
  %v1101 = vunpack.c.l.b16 %v1069
  %v1102 = vunpack.c.l.b16 %v1070
  %v1103 = vunpack.c.l.b16 %v1071
  %v1104 = vunpack.c.l.b16 %v1072
  %v1105 = vunpack.c.l.b16 %v1073
  %v1106 = vunpack.c.l.b16 %v1074
  %v1107 = vunpack.c.l.b16 %v1075
  %v1108 = vunpack.c.l.b16 %v1076
  %v1109 = vunpack.c.l.b16 %v1077
  %v1110 = vunpack.c.l.b16 %v1078
  %v1111 = vunpack.c.l.b16 %v1079
  %v1112 = vunpack.c.l.b16 %v1080
  %v1113 = vunpack.c.l.b16 %v1081
  %v1114 = vpack.c.b16 %v1099, %v1098
  %v1115 = vpack.c.b16 %v1101, %v1100
  %v1116 = vpack.c.b16 %v1103, %v1102
  %v1117 = vpack.c.b16 %v1105, %v1104
  %v1118 = vpack.c.b16 %v1107, %v1106
  %v1119 = vpack.c.b16 %v1109, %v1108
  %v1120 = vpack.c.b16 %v1111, %v1110
  %v1121 = vpack.c.b16 %v1113, %v1112
  %1130 = vmatprep.subr.bf16.mxu0 0
  %1131 = vmatpush1.bf16.msra.mxu0 %v1114
  %1132 = vmatprep.subr.bf16.mxu0 0
  %1133 = vmatpush1.bf16.msra.mxu0 %v1115
  %1134 = vmatprep.subr.bf16.mxu0 0
  %1135 = vmatpush1.bf16.msra.mxu0 %v1116
  %1136 = vmatprep.subr.bf16.mxu0 0
  %1137 = vmatpush1.bf16.msra.mxu0 %v1117
  %1138 = vmatprep.subr.bf16.mxu0 0
  %1139 = vmatpush1.bf16.msra.mxu0 %v1118
  %1140 = vmatprep.subr.bf16.mxu0 0
  %1141 = vmatpush1.bf16.msra.mxu0 %v1119
  %1142 = vmatprep.subr.bf16.mxu0 0
  %1143 = vmatpush1.bf16.msra.mxu0 %v1120
  %1144 = vmatprep.subr.bf16.mxu0 0
  %1145 = vmatpush1.bf16.msra.mxu0 %v1121
  %1146 = vmatprep.subr.bf16.mxu0 0
  %1147 = vmatpush1.bf16.msra.mxu0 0
  %1148 = vmatprep.subr.bf16.mxu0 0
  %1149 = vmatpush1.bf16.msra.mxu0 0
  %1150 = vmatprep.subr.bf16.mxu0 0
  %1151 = vmatpush1.bf16.msra.mxu0 0
  %1152 = vmatprep.subr.bf16.mxu0 0
  %1153 = vmatpush1.bf16.msra.mxu0 0
  %1154 = vmatprep.subr.bf16.mxu0 0
  %1155 = vmatpush1.bf16.msra.mxu0 0
  %1156 = vmatprep.subr.bf16.mxu0 0
  %1157 = vmatpush1.bf16.msra.mxu0 0
  %1158 = vmatprep.subr.bf16.mxu0 0
  %1159 = vmatpush1.bf16.msra.mxu0 0
  %1160 = vmatprep.subr.bf16.mxu0 0
  %1161 = vmatpush1.bf16.msra.mxu0 0
  %1162 = vmatprep.mubr.bf16.mxu0 0
  %1163 = vmatmul.mubr.bf16.gmra.mrb[0].mxu0 %v1061
  %v1164 = vpop.f32.mrb[0].mxu0
  %v1165 = vadd.f32 0.0, %v1164
  %v1166 = vpop.f32.mrb[0].mxu0
  %v1167 = vpop.f32.mrb[0].mxu0
  %v1168 = vadd.f32 0.0, %v1167
  %v1169 = vpop.f32.mrb[0].mxu0
  %1170 = vmatprep.mubr.bf16.mxu0 0
  %1171 = vmatmul.mubr.bf16.gmra.mrb[0].mxu0 %v1062
  %v1172 = vpop.f32.mrb[0].mxu0
  %v1173 = vadd.f32 0.0, %v1172
  %v1174 = vpop.f32.mrb[0].mxu0
  %v1175 = vpop.f32.mrb[0].mxu0
  %v1176 = vadd.f32 0.0, %v1175
  %v1177 = vpop.f32.mrb[0].mxu0
  %1178 = vmatprep.mubr.bf16.mxu0 0
  %1179 = vmatmul.mubr.bf16.gmra.mrb[0].mxu0 %v1063
  %v1180 = vpop.f32.mrb[0].mxu0
  %v1181 = vadd.f32 0.0, %v1180
  %v1182 = vpop.f32.mrb[0].mxu0
  %v1183 = vpop.f32.mrb[0].mxu0
  %v1184 = vadd.f32 0.0, %v1183
  %v1185 = vpop.f32.mrb[0].mxu0
  %1186 = vmatprep.mubr.bf16.mxu0 0
  %1187 = vmatmul.mubr.bf16.gmra.mrb[0].mxu0 %v1064
  %v1188 = vpop.f32.mrb[0].mxu0
  %v1189 = vadd.f32 0.0, %v1188
  %v1190 = vpop.f32.mrb[0].mxu0
  %v1191 = vpop.f32.mrb[0].mxu0
  %v1192 = vadd.f32 0.0, %v1191
  %v1193 = vpop.f32.mrb[0].mxu0
  %1194 = vdwg.mxu0
  %v1195 = vadd.f32 %v1045, %v1165
  %v1196 = vadd.f32 %v1046, %v1168
  %v1197 = vadd.f32 %v1047, %v1173
  %v1198 = vadd.f32 %v1048, %v1176
  %v1199 = vadd.f32 %v1049, %v1181
  %v1200 = vadd.f32 %v1050, %v1184
  %v1201 = vadd.f32 %v1051, %v1189
  %v1202 = vadd.f32 %v1052, %v1192
  %v1203 = vld [vmem:[%s902 + $0x2] sm:$0xff]
  %v1204 = vld [vmem:[%s902 + $0x12] sm:$0xff]
  %v1205 = vld [vmem:[%s902 + $0x22] sm:$0xff]
  %v1206 = vld [vmem:[%s902 + $0x32] sm:$0xff]
  %v1207 = vld [vmem:[%s902 + $0x62] sm:$0xff]
  %v1208 = vld [vmem:[%s902 + $0x72] sm:$0xff]
  %v1209 = vld [vmem:[%s902 + $0x82] sm:$0xff]
  %v1210 = vld [vmem:[%s902 + $0x92] sm:$0xff]
  %v1211 = vpack.c.bf16 %v1204, %v1203
  %v1212 = vpack.c.bf16 %v1206, %v1205
  %v1213 = vpack.c.bf16 %v1208, %v1207
  %v1214 = vpack.c.bf16 %v1210, %v1209
  %s1215 = scalar_lea.vmem %s1, 512
  %v1216 = vld [vmem:[%s1215] sm:$0xf]
  %v1217 = vld [vmem:[%s1215 + $0x4] sm:$0xf]
  %v1218 = vld [vmem:[%s1215 + $0x8] sm:$0xf]
  %v1219 = vld [vmem:[%s1215 + $0xc] sm:$0xf]
  %v1220 = vld [vmem:[%s1215 + $0x10] sm:$0xf]
  %v1221 = vld [vmem:[%s1215 + $0x14] sm:$0xf]
  %v1222 = vld [vmem:[%s1215 + $0x18] sm:$0xf]
  %v1223 = vld [vmem:[%s1215 + $0x1c] sm:$0xf]
  %v1224 = vld [vmem:[%s1215 + $0x20] sm:$0xf]
  %v1225 = vld [vmem:[%s1215 + $0x24] sm:$0xf]
  %v1226 = vld [vmem:[%s1215 + $0x28] sm:$0xf]
  %v1227 = vld [vmem:[%s1215 + $0x2c] sm:$0xf]
  %v1228 = vld [vmem:[%s1215 + $0x30] sm:$0xf]
  %v1229 = vld [vmem:[%s1215 + $0x34] sm:$0xf]
  %v1230 = vld [vmem:[%s1215 + $0x38] sm:$0xf]
  %v1231 = vld [vmem:[%s1215 + $0x3c] sm:$0xf]
  %v1248 = vunpack.c.l.b16 %v1216
  %v1249 = vunpack.c.l.b16 %v1217
  %v1250 = vunpack.c.l.b16 %v1218
  %v1251 = vunpack.c.l.b16 %v1219
  %v1252 = vunpack.c.l.b16 %v1220
  %v1253 = vunpack.c.l.b16 %v1221
  %v1254 = vunpack.c.l.b16 %v1222
  %v1255 = vunpack.c.l.b16 %v1223
  %v1256 = vunpack.c.l.b16 %v1224
  %v1257 = vunpack.c.l.b16 %v1225
  %v1258 = vunpack.c.l.b16 %v1226
  %v1259 = vunpack.c.l.b16 %v1227
  %v1260 = vunpack.c.l.b16 %v1228
  %v1261 = vunpack.c.l.b16 %v1229
  %v1262 = vunpack.c.l.b16 %v1230
  %v1263 = vunpack.c.l.b16 %v1231
  %v1264 = vpack.c.b16 %v1249, %v1248
  %v1265 = vpack.c.b16 %v1251, %v1250
  %v1266 = vpack.c.b16 %v1253, %v1252
  %v1267 = vpack.c.b16 %v1255, %v1254
  %v1268 = vpack.c.b16 %v1257, %v1256
  %v1269 = vpack.c.b16 %v1259, %v1258
  %v1270 = vpack.c.b16 %v1261, %v1260
  %v1271 = vpack.c.b16 %v1263, %v1262
  %1280 = vmatprep.subr.bf16.mxu0 0
  %1281 = vmatpush1.bf16.msra.mxu0 %v1264
  %1282 = vmatprep.subr.bf16.mxu0 0
  %1283 = vmatpush1.bf16.msra.mxu0 %v1265
  %1284 = vmatprep.subr.bf16.mxu0 0
  %1285 = vmatpush1.bf16.msra.mxu0 %v1266
  %1286 = vmatprep.subr.bf16.mxu0 0
  %1287 = vmatpush1.bf16.msra.mxu0 %v1267
  %1288 = vmatprep.subr.bf16.mxu0 0
  %1289 = vmatpush1.bf16.msra.mxu0 %v1268
  %1290 = vmatprep.subr.bf16.mxu0 0
  %1291 = vmatpush1.bf16.msra.mxu0 %v1269
  %1292 = vmatprep.subr.bf16.mxu0 0
  %1293 = vmatpush1.bf16.msra.mxu0 %v1270
  %1294 = vmatprep.subr.bf16.mxu0 0
  %1295 = vmatpush1.bf16.msra.mxu0 %v1271
  %1296 = vmatprep.subr.bf16.mxu0 0
  %1297 = vmatpush1.bf16.msra.mxu0 0
  %1298 = vmatprep.subr.bf16.mxu0 0
  %1299 = vmatpush1.bf16.msra.mxu0 0
  %1300 = vmatprep.subr.bf16.mxu0 0
  %1301 = vmatpush1.bf16.msra.mxu0 0
  %1302 = vmatprep.subr.bf16.mxu0 0
  %1303 = vmatpush1.bf16.msra.mxu0 0
  %1304 = vmatprep.subr.bf16.mxu0 0
  %1305 = vmatpush1.bf16.msra.mxu0 0
  %1306 = vmatprep.subr.bf16.mxu0 0
  %1307 = vmatpush1.bf16.msra.mxu0 0
  %1308 = vmatprep.subr.bf16.mxu0 0
  %1309 = vmatpush1.bf16.msra.mxu0 0
  %1310 = vmatprep.subr.bf16.mxu0 0
  %1311 = vmatpush1.bf16.msra.mxu0 0
  %1312 = vmatprep.mubr.bf16.mxu0 0
  %1313 = vmatmul.mubr.bf16.gmra.mrb[0].mxu0 %v1211
  %v1314 = vpop.f32.mrb[0].mxu0
  %v1315 = vadd.f32 0.0, %v1314
  %v1316 = vpop.f32.mrb[0].mxu0
  %v1317 = vpop.f32.mrb[0].mxu0
  %v1318 = vadd.f32 0.0, %v1317
  %v1319 = vpop.f32.mrb[0].mxu0
  %1320 = vmatprep.mubr.bf16.mxu0 0
  %1321 = vmatmul.mubr.bf16.gmra.mrb[0].mxu0 %v1212
  %v1322 = vpop.f32.mrb[0].mxu0
  %v1323 = vadd.f32 0.0, %v1322
  %v1324 = vpop.f32.mrb[0].mxu0
  %v1325 = vpop.f32.mrb[0].mxu0
  %v1326 = vadd.f32 0.0, %v1325
  %v1327 = vpop.f32.mrb[0].mxu0
  %1328 = vmatprep.mubr.bf16.mxu0 0
  %1329 = vmatmul.mubr.bf16.gmra.mrb[0].mxu0 %v1213
  %v1330 = vpop.f32.mrb[0].mxu0
  %v1331 = vadd.f32 0.0, %v1330
  %v1332 = vpop.f32.mrb[0].mxu0
  %v1333 = vpop.f32.mrb[0].mxu0
  %v1334 = vadd.f32 0.0, %v1333
  %v1335 = vpop.f32.mrb[0].mxu0
  %1336 = vmatprep.mubr.bf16.mxu0 0
  %1337 = vmatmul.mubr.bf16.gmra.mrb[0].mxu0 %v1214
  %v1338 = vpop.f32.mrb[0].mxu0
  %v1339 = vadd.f32 0.0, %v1338
  %v1340 = vpop.f32.mrb[0].mxu0
  %v1341 = vpop.f32.mrb[0].mxu0
  %v1342 = vadd.f32 0.0, %v1341
  %v1343 = vpop.f32.mrb[0].mxu0
  %1344 = vdwg.mxu0
  %v1345 = vadd.f32 %v1195, %v1315
  %v1346 = vadd.f32 %v1196, %v1318
  %v1347 = vadd.f32 %v1197, %v1323
  %v1348 = vadd.f32 %v1198, %v1326
  %v1349 = vadd.f32 %v1199, %v1331
  %v1350 = vadd.f32 %v1200, %v1334
  %v1351 = vadd.f32 %v1201, %v1339
  %v1352 = vadd.f32 %v1202, %v1342
  %p1353 = scmp.eq.s32.totalorder 0, 0
  // Predicated region
  $region18: #{densenet_fpn_forward.15} parent=0 // pred_check
    %p1354 = pneg %p1353
  $region19: #{densenet_fpn_forward.15} parent=0 // pred_check_branch
    %1356 = sbr.rel (%p1354) target = $region21
  $region20: #{densenet_fpn_forward.15} parent=0 // pred_region
    %1357 = vst [vmem:[%s4] sm:$0xff] %v1345
    %1358 = vst [vmem:[%s4 + $0x8] sm:$0xff] %v1346
    %1359 = vst [vmem:[%s4 + $0x10] sm:$0xff] %v1347
    %1360 = vst [vmem:[%s4 + $0x18] sm:$0xff] %v1348
    %1361 = vst [vmem:[%s4 + $0x20] sm:$0xff] %v1349
    %1362 = vst [vmem:[%s4 + $0x28] sm:$0xff] %v1350
    %1363 = vst [vmem:[%s4 + $0x30] sm:$0xff] %v1351
    %1364 = vst [vmem:[%s4 + $0x38] sm:$0xff] %v1352
  $region21: #{densenet_fpn_forward.15} parent=0 // pred_fallthru
    _
  %p1365 = scmp.gt.s32.totalorder 0, 0
  // Predicated region
  $region22: #{densenet_fpn_forward.15} parent=0 // pred_check
    %p1366 = pneg %p1365
  $region23: #{densenet_fpn_forward.15} parent=0 // pred_check_branch
    %1368 = sbr.rel (%p1366) target = $region25
  $region24: #{densenet_fpn_forward.15} parent=0 // pred_region
    %v1369 = vld [vmem:[%s4] sm:$0xff]
    %v1370 = vld [vmem:[%s4 + $0x8] sm:$0xff]
    %v1371 = vld [vmem:[%s4 + $0x10] sm:$0xff]
    %v1372 = vld [vmem:[%s4 + $0x18] sm:$0xff]
    %v1373 = vld [vmem:[%s4 + $0x20] sm:$0xff]
    %v1374 = vld [vmem:[%s4 + $0x28] sm:$0xff]
    %v1375 = vld [vmem:[%s4 + $0x30] sm:$0xff]
    %v1376 = vld [vmem:[%s4 + $0x38] sm:$0xff]
    %v1377 = vadd.f32 %v1369, %v1345
    %v1378 = vadd.f32 %v1370, %v1346
    %v1379 = vadd.f32 %v1371, %v1347
    %v1380 = vadd.f32 %v1372, %v1348
    %v1381 = vadd.f32 %v1373, %v1349
    %v1382 = vadd.f32 %v1374, %v1350
    %v1383 = vadd.f32 %v1375, %v1351
    %v1384 = vadd.f32 %v1376, %v1352
    %1385 = vst [vmem:[%s4] sm:$0xff] %v1377
    %1386 = vst [vmem:[%s4 + $0x8] sm:$0xff] %v1378
    %1387 = vst [vmem:[%s4 + $0x10] sm:$0xff] %v1379
    %1388 = vst [vmem:[%s4 + $0x18] sm:$0xff] %v1380
    %1389 = vst [vmem:[%s4 + $0x20] sm:$0xff] %v1381
    %1390 = vst [vmem:[%s4 + $0x28] sm:$0xff] %v1382
    %1391 = vst [vmem:[%s4 + $0x30] sm:$0xff] %v1383
    %1392 = vst [vmem:[%s4 + $0x38] sm:$0xff] %v1384
  $region25: #{densenet_fpn_forward.15} parent=0 // pred_fallthru
    _
  // Predicated region
  $region26: #{densenet_fpn_forward.15} parent=0 // pred_check
    %p1393 = pneg %p1353
  $region27: #{densenet_fpn_forward.15} parent=0 // pred_check_branch
    %1395 = sbr.rel (%p1393) target = $region29
  $region28: #{densenet_fpn_forward.15} parent=0 // pred_region
    %v1396 = vld [vmem:[%s4] sm:$0xff]
    %v1397 = vld [vmem:[%s4 + $0x8] sm:$0xff]
    %v1398 = vld [vmem:[%s4 + $0x10] sm:$0xff]
    %v1399 = vld [vmem:[%s4 + $0x18] sm:$0xff]
    %v1400 = vld [vmem:[%s4 + $0x20] sm:$0xff]
    %v1401 = vld [vmem:[%s4 + $0x28] sm:$0xff]
    %v1402 = vld [vmem:[%s4 + $0x30] sm:$0xff]
    %v1403 = vld [vmem:[%s4 + $0x38] sm:$0xff]
    %v1404 = vmax.f32 %v1396, 0.0
    %v1405 = vmax.f32 %v1397, 0.0
    %v1406 = vmax.f32 %v1398, 0.0
    %v1407 = vmax.f32 %v1399, 0.0
    %v1408 = vmax.f32 %v1400, 0.0
    %v1409 = vmax.f32 %v1401, 0.0
    %v1410 = vmax.f32 %v1402, 0.0
    %v1411 = vmax.f32 %v1403, 0.0
    %v1412 = vld [vmem:[%s2] sm:$0x1]
    %v1414 = vlaneseq
    %v1415 = vshrl.u32 %v1414, 7
    %v1416 = vsub.s32 0, %v1415
    %v1417 = vrot.slane %v1412, %v1416
    %v1419 = vmul.f32 %v1404, %v1417
    %v1420 = vmul.f32 %v1405, %v1417
    %v1421 = vmul.f32 %v1406, %v1417
    %v1422 = vmul.f32 %v1407, %v1417
    %v1423 = vmul.f32 %v1408, %v1417
    %v1424 = vmul.f32 %v1409, %v1417
    %v1425 = vmul.f32 %v1410, %v1417
    %v1426 = vmul.f32 %v1411, %v1417
    %v1427 = vld [vmem:[%s3] sm:$0x1]
    %v1429 = vlaneseq
    %v1430 = vshrl.u32 %v1429, 7
    %v1431 = vsub.s32 0, %v1430
    %v1432 = vrot.slane %v1427, %v1431
    %v1434 = vadd.f32 %v1419, %v1432
    %v1435 = vadd.f32 %v1420, %v1432
    %v1436 = vadd.f32 %v1421, %v1432
    %v1437 = vadd.f32 %v1422, %v1432
    %v1438 = vadd.f32 %v1423, %v1432
    %v1439 = vadd.f32 %v1424, %v1432
    %v1440 = vadd.f32 %v1425, %v1432
    %v1441 = vadd.f32 %v1426, %v1432
    %1442 = vst [vmem:[%s4] sm:$0xff] %v1434
    %1443 = vst [vmem:[%s4 + $0x8] sm:$0xff] %v1435
    %1444 = vst [vmem:[%s4 + $0x10] sm:$0xff] %v1436
    %1445 = vst [vmem:[%s4 + $0x18] sm:$0xff] %v1437
    %1446 = vst [vmem:[%s4 + $0x20] sm:$0xff] %v1438
    %1447 = vst [vmem:[%s4 + $0x28] sm:$0xff] %v1439
    %1448 = vst [vmem:[%s4 + $0x30] sm:$0xff] %v1440
    %1449 = vst [vmem:[%s4 + $0x38] sm:$0xff] %v1441
  $region29: #{densenet_fpn_forward.15} parent=0 // pred_fallthru
    _
  // Predicated region
  $region30: #{densenet_fpn_forward.15} parent=0 // pred_check
    _
  $region31: #{densenet_fpn_forward.15} parent=0 // pred_check_branch
    %1451 = sbr.rel (0) target = $region33
  $region32: #{densenet_fpn_forward.15} parent=0 // pred_region
    _
  $region33: #{densenet_fpn_forward.15} parent=0 // pred_fallthru
    _
  // Predicated region
  $region34: #{densenet_fpn_forward.15} parent=0 // pred_check
    _
  $region35: #{densenet_fpn_forward.15} parent=0 // pred_check_branch
    %1453 = sbr.rel (0) target = $region37
  $region36: #{densenet_fpn_forward.15} parent=0 // pred_region
    _
  $region37: #{densenet_fpn_forward.15} parent=0 // pred_fallthru
    _

// kernel: densenet_fpn_forward.9
$region0: #{densenet_fpn_forward.9}
  #allocation0 [shape = 'u32[]', space=smem, size = 0x4, offset = 0x4, fixed_abs, tag = 'smem constant byte address 0x4 - core index']
  #allocation1 [shape = 'u32[144,128]{1,0:T(1,128)}', space=vmem, size = 0x12000, scoped, tag = 'internal scratch']
  %s0 = inlined_call_operand.vmem [shape: f32[2,10,10,128], index: 0, kind: input, shape index: {}]
  %s1 = inlined_call_operand.vmem [shape: bf16[3,3,128,128], index: 1, kind: input, shape index: {}]
  %s2 = inlined_call_operand.hbm [shape: f32[128,128], index: 2, kind: output, shape index: {}]
  %s3 = sld [smem:[#allocation0]]
  $region30: #{densenet_fpn_forward.9} parent=0
    _
  %s5 = ssub.s32 1, %s3
  %s6 = scalar_select 0, %s5, %s3
  $region1: #{densenet_fpn_forward.9} parent=0
    #allocation2 [shape = 'u8[65536]{0}', space=vmem, size = 0x10000, scoped, tag = 'output window, operand 0, single buffered']
    #allocation3 [shape = 's32[1]{0}', space=sflag, size = 0x4, scoped, tag = 'scoped memory for densenet_fpn_forward.9']
    %7 = vsyncpa [#allocation3], 0
    // Predicated region
    $region2: #{densenet_fpn_forward.9} parent=1 // pred_check
      _
    $region3: #{densenet_fpn_forward.9} parent=1 // pred_check_branch
      %9 = sbr.rel (0) target = $region5
    $region4: #{densenet_fpn_forward.9} parent=1 // pred_region
      _
    $region5: #{densenet_fpn_forward.9} parent=1 // pred_fallthru
      _
    // Predicated region
    $region6: #{densenet_fpn_forward.9} parent=1 // pred_check
      _
    $region7: #{densenet_fpn_forward.9} parent=1 // pred_check_branch
      %11 = sbr.rel (0) target = $region9
    $region8: #{densenet_fpn_forward.9} parent=1 // pred_region
      _
    $region9: #{densenet_fpn_forward.9} parent=1 // pred_fallthru
      _
    %v13 = vld [vmem:[%s0] sm:$0xff]
    %v14 = vld [vmem:[%s0 + $0x10] sm:$0xff]
    %v15 = vld [vmem:[%s0 + $0x20] sm:$0xff]
    %v16 = vld [vmem:[%s0 + $0x30] sm:$0xff]
    %v17 = vld [vmem:[%s0 + $0x40] sm:$0xff]
    %v18 = vld [vmem:[%s0 + $0x50] sm:$0xff]
    %v19 = vld [vmem:[%s0 + $0x60] sm:$0xff]
    %v20 = vld [vmem:[%s0 + $0x70] sm:$0xff]
    %v21 = vld [vmem:[%s0 + $0xa0] sm:$0xff]
    %v22 = vld [vmem:[%s0 + $0xb0] sm:$0xff]
    %v23 = vld [vmem:[%s0 + $0xc0] sm:$0xff]
    %v24 = vld [vmem:[%s0 + $0xd0] sm:$0xff]
    %v25 = vld [vmem:[%s0 + $0xe0] sm:$0xff]
    %v26 = vld [vmem:[%s0 + $0xf0] sm:$0xff]
    %v27 = vld [vmem:[%s0 + $0x100] sm:$0xff]
    %v28 = vld [vmem:[%s0 + $0x110] sm:$0xff]
    %v29 = vpack.c.bf16 %v14, %v13
    %v30 = vpack.c.bf16 %v16, %v15
    %v31 = vpack.c.bf16 %v18, %v17
    %v32 = vpack.c.bf16 %v20, %v19
    %v33 = vpack.c.bf16 %v22, %v21
    %v34 = vpack.c.bf16 %v24, %v23
    %v35 = vpack.c.bf16 %v26, %v25
    %v36 = vpack.c.bf16 %v28, %v27
    %v37 = vld [vmem:[%s1] sm:$0xf]
    %v38 = vld [vmem:[%s1 + $0x4] sm:$0xf]
    %v39 = vld [vmem:[%s1 + $0x8] sm:$0xf]
    %v40 = vld [vmem:[%s1 + $0xc] sm:$0xf]
    %v41 = vld [vmem:[%s1 + $0x10] sm:$0xf]
    %v42 = vld [vmem:[%s1 + $0x14] sm:$0xf]
    %v43 = vld [vmem:[%s1 + $0x18] sm:$0xf]
    %v44 = vld [vmem:[%s1 + $0x1c] sm:$0xf]
    %v45 = vld [vmem:[%s1 + $0x20] sm:$0xf]
    %v46 = vld [vmem:[%s1 + $0x24] sm:$0xf]
    %v47 = vld [vmem:[%s1 + $0x28] sm:$0xf]
    %v48 = vld [vmem:[%s1 + $0x2c] sm:$0xf]
    %v49 = vld [vmem:[%s1 + $0x30] sm:$0xf]
    %v50 = vld [vmem:[%s1 + $0x34] sm:$0xf]
    %v51 = vld [vmem:[%s1 + $0x38] sm:$0xf]
    %v52 = vld [vmem:[%s1 + $0x3c] sm:$0xf]
    %v53 = vld [vmem:[%s0 + $0x1] sm:$0xff]
    %v54 = vld [vmem:[%s0 + $0x11] sm:$0xff]
    %v55 = vld [vmem:[%s0 + $0x21] sm:$0xff]
    %v56 = vld [vmem:[%s0 + $0x31] sm:$0xff]
    %v57 = vld [vmem:[%s0 + $0x41] sm:$0xff]
    %v58 = vld [vmem:[%s0 + $0x51] sm:$0xff]
    %v59 = vld [vmem:[%s0 + $0x61] sm:$0xff]
    %v60 = vld [vmem:[%s0 + $0x71] sm:$0xff]
    %v61 = vld [vmem:[%s0 + $0xa1] sm:$0xff]
    %v62 = vld [vmem:[%s0 + $0xb1] sm:$0xff]
    %v63 = vld [vmem:[%s0 + $0xc1] sm:$0xff]
    %v64 = vld [vmem:[%s0 + $0xd1] sm:$0xff]
    %v65 = vld [vmem:[%s0 + $0xe1] sm:$0xff]
    %v66 = vld [vmem:[%s0 + $0xf1] sm:$0xff]
    %v67 = vld [vmem:[%s0 + $0x101] sm:$0xff]
    %v68 = vld [vmem:[%s0 + $0x111] sm:$0xff]
    %v69 = vpack.c.bf16 %v54, %v53
    %v70 = vpack.c.bf16 %v56, %v55
    %v71 = vpack.c.bf16 %v58, %v57
    %v72 = vpack.c.bf16 %v60, %v59
    %v73 = vpack.c.bf16 %v62, %v61
    %v74 = vpack.c.bf16 %v64, %v63
    %v75 = vpack.c.bf16 %v66, %v65
    %v76 = vpack.c.bf16 %v68, %v67
    %s77 = scalar_lea.vmem %s1, 64
    %v78 = vld [vmem:[%s77] sm:$0xf]
    %v79 = vld [vmem:[%s77 + $0x4] sm:$0xf]
    %v80 = vld [vmem:[%s77 + $0x8] sm:$0xf]
    %v81 = vld [vmem:[%s77 + $0xc] sm:$0xf]
    %v82 = vld [vmem:[%s77 + $0x10] sm:$0xf]
    %v83 = vld [vmem:[%s77 + $0x14] sm:$0xf]
    %v84 = vld [vmem:[%s77 + $0x18] sm:$0xf]
    %v85 = vld [vmem:[%s77 + $0x1c] sm:$0xf]
    %v86 = vld [vmem:[%s77 + $0x20] sm:$0xf]
    %v87 = vld [vmem:[%s77 + $0x24] sm:$0xf]
    %v88 = vld [vmem:[%s77 + $0x28] sm:$0xf]
    %v89 = vld [vmem:[%s77 + $0x2c] sm:$0xf]
    %v90 = vld [vmem:[%s77 + $0x30] sm:$0xf]
    %v91 = vld [vmem:[%s77 + $0x34] sm:$0xf]
    %v92 = vld [vmem:[%s77 + $0x38] sm:$0xf]
    %v93 = vld [vmem:[%s77 + $0x3c] sm:$0xf]
    %v110 = vunpack.c.l.b16 %v78
    %v111 = vunpack.c.l.b16 %v79
    %v112 = vunpack.c.l.b16 %v80
    %v113 = vunpack.c.l.b16 %v81
    %v114 = vunpack.c.l.b16 %v82
    %v115 = vunpack.c.l.b16 %v83
    %v116 = vunpack.c.l.b16 %v84
    %v117 = vunpack.c.l.b16 %v85
    %v118 = vunpack.c.l.b16 %v86
    %v119 = vunpack.c.l.b16 %v87
    %v120 = vunpack.c.l.b16 %v88
    %v121 = vunpack.c.l.b16 %v89
    %v122 = vunpack.c.l.b16 %v90
    %v123 = vunpack.c.l.b16 %v91
    %v124 = vunpack.c.l.b16 %v92
    %v125 = vunpack.c.l.b16 %v93
    %v126 = vpack.c.b16 %v111, %v110
    %v127 = vpack.c.b16 %v113, %v112
    %v128 = vpack.c.b16 %v115, %v114
    %v129 = vpack.c.b16 %v117, %v116
    %v130 = vpack.c.b16 %v119, %v118
    %v131 = vpack.c.b16 %v121, %v120
    %v132 = vpack.c.b16 %v123, %v122
    %v133 = vpack.c.b16 %v125, %v124
    %142 = vmatprep.subr.bf16.mxu0 0
    %143 = vmatpush1.bf16.msra.mxu0 %v126
    %144 = vmatprep.subr.bf16.mxu0 0
    %145 = vmatpush1.bf16.msra.mxu0 %v127
    %146 = vmatprep.subr.bf16.mxu0 0
    %147 = vmatpush1.bf16.msra.mxu0 %v128
    %148 = vmatprep.subr.bf16.mxu0 0
    %149 = vmatpush1.bf16.msra.mxu0 %v129
    %150 = vmatprep.subr.bf16.mxu0 0
    %151 = vmatpush1.bf16.msra.mxu0 %v130
    %152 = vmatprep.subr.bf16.mxu0 0
    %153 = vmatpush1.bf16.msra.mxu0 %v131
    %154 = vmatprep.subr.bf16.mxu0 0
    %155 = vmatpush1.bf16.msra.mxu0 %v132
    %156 = vmatprep.subr.bf16.mxu0 0
    %157 = vmatpush1.bf16.msra.mxu0 %v133
    %158 = vmatprep.subr.bf16.mxu0 0
    %159 = vmatpush1.bf16.msra.mxu0 0
    %160 = vmatprep.subr.bf16.mxu0 0
    %161 = vmatpush1.bf16.msra.mxu0 0
    %162 = vmatprep.subr.bf16.mxu0 0
    %163 = vmatpush1.bf16.msra.mxu0 0
    %164 = vmatprep.subr.bf16.mxu0 0
    %165 = vmatpush1.bf16.msra.mxu0 0
    %166 = vmatprep.subr.bf16.mxu0 0
    %167 = vmatpush1.bf16.msra.mxu0 0
    %168 = vmatprep.subr.bf16.mxu0 0
    %169 = vmatpush1.bf16.msra.mxu0 0
    %170 = vmatprep.subr.bf16.mxu0 0
    %171 = vmatpush1.bf16.msra.mxu0 0
    %172 = vmatprep.subr.bf16.mxu0 0
    %173 = vmatpush1.bf16.msra.mxu0 0
    %174 = vmatprep.mubr.bf16.mxu0 0
    %175 = vmatmul.mubr.bf16.gmra.mrb[0].mxu0 %v69
    %v176 = vpop.f32.mrb[0].mxu0
    %v177 = vadd.f32 0.0, %v176
    %v178 = vpop.f32.mrb[0].mxu0
    %v179 = vpop.f32.mrb[0].mxu0
    %v180 = vadd.f32 0.0, %v179
    %v181 = vpop.f32.mrb[0].mxu0
    %182 = vmatprep.mubr.bf16.mxu0 0
    %183 = vmatmul.mubr.bf16.gmra.mrb[0].mxu0 %v70
    %v184 = vpop.f32.mrb[0].mxu0
    %v185 = vadd.f32 0.0, %v184
    %v186 = vpop.f32.mrb[0].mxu0
    %v187 = vpop.f32.mrb[0].mxu0
    %v188 = vadd.f32 0.0, %v187
    %v189 = vpop.f32.mrb[0].mxu0
    %190 = vmatprep.mubr.bf16.mxu0 0
    %191 = vmatmul.mubr.bf16.gmra.mrb[0].mxu0 %v71
    %v192 = vpop.f32.mrb[0].mxu0
    %v193 = vadd.f32 0.0, %v192
    %v194 = vpop.f32.mrb[0].mxu0
    %v195 = vpop.f32.mrb[0].mxu0
    %v196 = vadd.f32 0.0, %v195
    %v197 = vpop.f32.mrb[0].mxu0
    %198 = vmatprep.mubr.bf16.mxu0 0
    %199 = vmatmul.mubr.bf16.gmra.mrb[0].mxu0 %v72
    %v200 = vpop.f32.mrb[0].mxu0
    %v201 = vadd.f32 0.0, %v200
    %v202 = vpop.f32.mrb[0].mxu0
    %v203 = vpop.f32.mrb[0].mxu0
    %v204 = vadd.f32 0.0, %v203
    %v205 = vpop.f32.mrb[0].mxu0
    %206 = vmatprep.mubr.bf16.mxu0 0
    %207 = vmatmul.mubr.bf16.gmra.mrb[0].mxu0 %v73
    %v208 = vpop.f32.mrb[0].mxu0
    %v209 = vadd.f32 0.0, %v208
    %v210 = vpop.f32.mrb[0].mxu0
    %v211 = vpop.f32.mrb[0].mxu0
    %v212 = vadd.f32 0.0, %v211
    %v213 = vpop.f32.mrb[0].mxu0
    %214 = vmatprep.mubr.bf16.mxu0 0
    %215 = vmatmul.mubr.bf16.gmra.mrb[0].mxu0 %v74
    %v216 = vpop.f32.mrb[0].mxu0
    %v217 = vadd.f32 0.0, %v216
    %v218 = vpop.f32.mrb[0].mxu0
    %v219 = vpop.f32.mrb[0].mxu0
    %v220 = vadd.f32 0.0, %v219
    %v221 = vpop.f32.mrb[0].mxu0
    %222 = vmatprep.mubr.bf16.mxu0 0
    %223 = vmatmul.mubr.bf16.gmra.mrb[0].mxu0 %v75
    %v224 = vpop.f32.mrb[0].mxu0
    %v225 = vadd.f32 0.0, %v224
    %v226 = vpop.f32.mrb[0].mxu0
    %v227 = vpop.f32.mrb[0].mxu0
    %v228 = vadd.f32 0.0, %v227
    %v229 = vpop.f32.mrb[0].mxu0
    %230 = vmatprep.mubr.bf16.mxu0 0
    %231 = vmatmul.mubr.bf16.gmra.mrb[0].mxu0 %v76
    %v232 = vpop.f32.mrb[0].mxu0
    %v233 = vadd.f32 0.0, %v232
    %v234 = vpop.f32.mrb[0].mxu0
    %v235 = vpop.f32.mrb[0].mxu0
    %v236 = vadd.f32 0.0, %v235
    %v237 = vpop.f32.mrb[0].mxu0
    %238 = vdwg.mxu0
    %v255 = vunpack.c.l.b16 %v37
    %v256 = vunpack.c.l.b16 %v38
    %v257 = vunpack.c.l.b16 %v39
    %v258 = vunpack.c.l.b16 %v40
    %v259 = vunpack.c.l.b16 %v41
    %v260 = vunpack.c.l.b16 %v42
    %v261 = vunpack.c.l.b16 %v43
    %v262 = vunpack.c.l.b16 %v44
    %v263 = vunpack.c.l.b16 %v45
    %v264 = vunpack.c.l.b16 %v46
    %v265 = vunpack.c.l.b16 %v47
    %v266 = vunpack.c.l.b16 %v48
    %v267 = vunpack.c.l.b16 %v49
    %v268 = vunpack.c.l.b16 %v50
    %v269 = vunpack.c.l.b16 %v51
    %v270 = vunpack.c.l.b16 %v52
    %v271 = vpack.c.b16 %v256, %v255
    %v272 = vpack.c.b16 %v258, %v257
    %v273 = vpack.c.b16 %v260, %v259
    %v274 = vpack.c.b16 %v262, %v261
    %v275 = vpack.c.b16 %v264, %v263
    %v276 = vpack.c.b16 %v266, %v265
    %v277 = vpack.c.b16 %v268, %v267
    %v278 = vpack.c.b16 %v270, %v269
    %287 = vmatprep.subr.bf16.mxu0 0
    %288 = vmatpush1.bf16.msra.mxu0 %v271
    %289 = vmatprep.subr.bf16.mxu0 0
    %290 = vmatpush1.bf16.msra.mxu0 %v272
    %291 = vmatprep.subr.bf16.mxu0 0
    %292 = vmatpush1.bf16.msra.mxu0 %v273
    %293 = vmatprep.subr.bf16.mxu0 0
    %294 = vmatpush1.bf16.msra.mxu0 %v274
    %295 = vmatprep.subr.bf16.mxu0 0
    %296 = vmatpush1.bf16.msra.mxu0 %v275
    %297 = vmatprep.subr.bf16.mxu0 0
    %298 = vmatpush1.bf16.msra.mxu0 %v276
    %299 = vmatprep.subr.bf16.mxu0 0
    %300 = vmatpush1.bf16.msra.mxu0 %v277
    %301 = vmatprep.subr.bf16.mxu0 0
    %302 = vmatpush1.bf16.msra.mxu0 %v278
    %303 = vmatprep.subr.bf16.mxu0 0
    %304 = vmatpush1.bf16.msra.mxu0 0
    %305 = vmatprep.subr.bf16.mxu0 0
    %306 = vmatpush1.bf16.msra.mxu0 0
    %307 = vmatprep.subr.bf16.mxu0 0
    %308 = vmatpush1.bf16.msra.mxu0 0
    %309 = vmatprep.subr.bf16.mxu0 0
    %310 = vmatpush1.bf16.msra.mxu0 0
    %311 = vmatprep.subr.bf16.mxu0 0
    %312 = vmatpush1.bf16.msra.mxu0 0
    %313 = vmatprep.subr.bf16.mxu0 0
    %314 = vmatpush1.bf16.msra.mxu0 0
    %315 = vmatprep.subr.bf16.mxu0 0
    %316 = vmatpush1.bf16.msra.mxu0 0
    %317 = vmatprep.subr.bf16.mxu0 0
    %318 = vmatpush1.bf16.msra.mxu0 0
    %319 = vmatprep.mubr.bf16.mxu0 0
    %320 = vmatmul.mubr.bf16.gmra.mrb[0].mxu0 %v29
    %v321 = vpop.f32.mrb[0].mxu0
    %v322 = vadd.f32 %v177, %v321
    %v323 = vpop.f32.mrb[0].mxu0
    %v324 = vpop.f32.mrb[0].mxu0
    %v325 = vadd.f32 %v180, %v324
    %v326 = vpop.f32.mrb[0].mxu0
    %327 = vmatprep.mubr.bf16.mxu0 0
    %328 = vmatmul.mubr.bf16.gmra.mrb[0].mxu0 %v30
    %v329 = vpop.f32.mrb[0].mxu0
    %v330 = vadd.f32 %v185, %v329
    %v331 = vpop.f32.mrb[0].mxu0
    %v332 = vpop.f32.mrb[0].mxu0
    %v333 = vadd.f32 %v188, %v332
    %v334 = vpop.f32.mrb[0].mxu0
    %335 = vmatprep.mubr.bf16.mxu0 0
    %336 = vmatmul.mubr.bf16.gmra.mrb[0].mxu0 %v31
    %v337 = vpop.f32.mrb[0].mxu0
    %v338 = vadd.f32 %v193, %v337
    %v339 = vpop.f32.mrb[0].mxu0
    %v340 = vpop.f32.mrb[0].mxu0
    %v341 = vadd.f32 %v196, %v340
    %v342 = vpop.f32.mrb[0].mxu0
    %343 = vmatprep.mubr.bf16.mxu0 0
    %344 = vmatmul.mubr.bf16.gmra.mrb[0].mxu0 %v32
    %v345 = vpop.f32.mrb[0].mxu0
    %v346 = vadd.f32 %v201, %v345
    %v347 = vpop.f32.mrb[0].mxu0
    %v348 = vpop.f32.mrb[0].mxu0
    %v349 = vadd.f32 %v204, %v348
    %v350 = vpop.f32.mrb[0].mxu0
    %351 = vmatprep.mubr.bf16.mxu0 0
    %352 = vmatmul.mubr.bf16.gmra.mrb[0].mxu0 %v33
    %v353 = vpop.f32.mrb[0].mxu0
    %v354 = vadd.f32 %v209, %v353
    %v355 = vpop.f32.mrb[0].mxu0
    %v356 = vpop.f32.mrb[0].mxu0
    %v357 = vadd.f32 %v212, %v356
    %v358 = vpop.f32.mrb[0].mxu0
    %359 = vmatprep.mubr.bf16.mxu0 0
    %360 = vmatmul.mubr.bf16.gmra.mrb[0].mxu0 %v34
    %v361 = vpop.f32.mrb[0].mxu0
    %v362 = vadd.f32 %v217, %v361
    %v363 = vpop.f32.mrb[0].mxu0
    %v364 = vpop.f32.mrb[0].mxu0
    %v365 = vadd.f32 %v220, %v364
    %v366 = vpop.f32.mrb[0].mxu0
    %367 = vmatprep.mubr.bf16.mxu0 0
    %368 = vmatmul.mubr.bf16.gmra.mrb[0].mxu0 %v35
    %v369 = vpop.f32.mrb[0].mxu0
    %v370 = vadd.f32 %v225, %v369
    %v371 = vpop.f32.mrb[0].mxu0
    %v372 = vpop.f32.mrb[0].mxu0
    %v373 = vadd.f32 %v228, %v372
    %v374 = vpop.f32.mrb[0].mxu0
    %375 = vmatprep.mubr.bf16.mxu0 0
    %376 = vmatmul.mubr.bf16.gmra.mrb[0].mxu0 %v36
    %v377 = vpop.f32.mrb[0].mxu0
    %v378 = vadd.f32 %v233, %v377
    %v379 = vpop.f32.mrb[0].mxu0
    %v380 = vpop.f32.mrb[0].mxu0
    %v381 = vadd.f32 %v236, %v380
    %v382 = vpop.f32.mrb[0].mxu0
    %383 = vdwg.mxu0
    %v384 = vld [vmem:[%s0 + $0x2] sm:$0xff]
    %v385 = vld [vmem:[%s0 + $0x12] sm:$0xff]
    %v386 = vld [vmem:[%s0 + $0x22] sm:$0xff]
    %v387 = vld [vmem:[%s0 + $0x32] sm:$0xff]
    %v388 = vld [vmem:[%s0 + $0x42] sm:$0xff]
    %v389 = vld [vmem:[%s0 + $0x52] sm:$0xff]
    %v390 = vld [vmem:[%s0 + $0x62] sm:$0xff]
    %v391 = vld [vmem:[%s0 + $0x72] sm:$0xff]
    %v392 = vld [vmem:[%s0 + $0xa2] sm:$0xff]
    %v393 = vld [vmem:[%s0 + $0xb2] sm:$0xff]
    %v394 = vld [vmem:[%s0 + $0xc2] sm:$0xff]
    %v395 = vld [vmem:[%s0 + $0xd2] sm:$0xff]
    %v396 = vld [vmem:[%s0 + $0xe2] sm:$0xff]
    %v397 = vld [vmem:[%s0 + $0xf2] sm:$0xff]
    %v398 = vld [vmem:[%s0 + $0x102] sm:$0xff]
    %v399 = vld [vmem:[%s0 + $0x112] sm:$0xff]
    %v400 = vpack.c.bf16 %v385, %v384
    %v401 = vpack.c.bf16 %v387, %v386
    %v402 = vpack.c.bf16 %v389, %v388
    %v403 = vpack.c.bf16 %v391, %v390
    %v404 = vpack.c.bf16 %v393, %v392
    %v405 = vpack.c.bf16 %v395, %v394
    %v406 = vpack.c.bf16 %v397, %v396
    %v407 = vpack.c.bf16 %v399, %v398
    %s408 = scalar_lea.vmem %s1, 128
    %v409 = vld [vmem:[%s408] sm:$0xf]
    %v410 = vld [vmem:[%s408 + $0x4] sm:$0xf]
    %v411 = vld [vmem:[%s408 + $0x8] sm:$0xf]
    %v412 = vld [vmem:[%s408 + $0xc] sm:$0xf]
    %v413 = vld [vmem:[%s408 + $0x10] sm:$0xf]
    %v414 = vld [vmem:[%s408 + $0x14] sm:$0xf]
    %v415 = vld [vmem:[%s408 + $0x18] sm:$0xf]
    %v416 = vld [vmem:[%s408 + $0x1c] sm:$0xf]
    %v417 = vld [vmem:[%s408 + $0x20] sm:$0xf]
    %v418 = vld [vmem:[%s408 + $0x24] sm:$0xf]
    %v419 = vld [vmem:[%s408 + $0x28] sm:$0xf]
    %v420 = vld [vmem:[%s408 + $0x2c] sm:$0xf]
    %v421 = vld [vmem:[%s408 + $0x30] sm:$0xf]
    %v422 = vld [vmem:[%s408 + $0x34] sm:$0xf]
    %v423 = vld [vmem:[%s408 + $0x38] sm:$0xf]
    %v424 = vld [vmem:[%s408 + $0x3c] sm:$0xf]
    %v441 = vunpack.c.l.b16 %v409
    %v442 = vunpack.c.l.b16 %v410
    %v443 = vunpack.c.l.b16 %v411
    %v444 = vunpack.c.l.b16 %v412
    %v445 = vunpack.c.l.b16 %v413
    %v446 = vunpack.c.l.b16 %v414
    %v447 = vunpack.c.l.b16 %v415
    %v448 = vunpack.c.l.b16 %v416
    %v449 = vunpack.c.l.b16 %v417
    %v450 = vunpack.c.l.b16 %v418
    %v451 = vunpack.c.l.b16 %v419
    %v452 = vunpack.c.l.b16 %v420
    %v453 = vunpack.c.l.b16 %v421
    %v454 = vunpack.c.l.b16 %v422
    %v455 = vunpack.c.l.b16 %v423
    %v456 = vunpack.c.l.b16 %v424
    %v457 = vpack.c.b16 %v442, %v441
    %v458 = vpack.c.b16 %v444, %v443
    %v459 = vpack.c.b16 %v446, %v445
    %v460 = vpack.c.b16 %v448, %v447
    %v461 = vpack.c.b16 %v450, %v449
    %v462 = vpack.c.b16 %v452, %v451
    %v463 = vpack.c.b16 %v454, %v453
    %v464 = vpack.c.b16 %v456, %v455
    %473 = vmatprep.subr.bf16.mxu0 0
    %474 = vmatpush1.bf16.msra.mxu0 %v457
    %475 = vmatprep.subr.bf16.mxu0 0
    %476 = vmatpush1.bf16.msra.mxu0 %v458
    %477 = vmatprep.subr.bf16.mxu0 0
    %478 = vmatpush1.bf16.msra.mxu0 %v459
    %479 = vmatprep.subr.bf16.mxu0 0
    %480 = vmatpush1.bf16.msra.mxu0 %v460
    %481 = vmatprep.subr.bf16.mxu0 0
    %482 = vmatpush1.bf16.msra.mxu0 %v461
    %483 = vmatprep.subr.bf16.mxu0 0
    %484 = vmatpush1.bf16.msra.mxu0 %v462
    %485 = vmatprep.subr.bf16.mxu0 0
    %486 = vmatpush1.bf16.msra.mxu0 %v463
    %487 = vmatprep.subr.bf16.mxu0 0
    %488 = vmatpush1.bf16.msra.mxu0 %v464
    %489 = vmatprep.subr.bf16.mxu0 0
    %490 = vmatpush1.bf16.msra.mxu0 0
    %491 = vmatprep.subr.bf16.mxu0 0
    %492 = vmatpush1.bf16.msra.mxu0 0
    %493 = vmatprep.subr.bf16.mxu0 0
    %494 = vmatpush1.bf16.msra.mxu0 0
    %495 = vmatprep.subr.bf16.mxu0 0
    %496 = vmatpush1.bf16.msra.mxu0 0
    %497 = vmatprep.subr.bf16.mxu0 0
    %498 = vmatpush1.bf16.msra.mxu0 0
    %499 = vmatprep.subr.bf16.mxu0 0
    %500 = vmatpush1.bf16.msra.mxu0 0
    %501 = vmatprep.subr.bf16.mxu0 0
    %502 = vmatpush1.bf16.msra.mxu0 0
    %503 = vmatprep.subr.bf16.mxu0 0
    %504 = vmatpush1.bf16.msra.mxu0 0
    %505 = vmatprep.mubr.bf16.mxu0 0
    %506 = vmatmul.mubr.bf16.gmra.mrb[0].mxu0 %v400
    %v507 = vpop.f32.mrb[0].mxu0
    %v508 = vadd.f32 0.0, %v507
    %v509 = vpop.f32.mrb[0].mxu0
    %v510 = vpop.f32.mrb[0].mxu0
    %v511 = vadd.f32 0.0, %v510
    %v512 = vpop.f32.mrb[0].mxu0
    %513 = vmatprep.mubr.bf16.mxu0 0
    %514 = vmatmul.mubr.bf16.gmra.mrb[0].mxu0 %v401
    %v515 = vpop.f32.mrb[0].mxu0
    %v516 = vadd.f32 0.0, %v515
    %v517 = vpop.f32.mrb[0].mxu0
    %v518 = vpop.f32.mrb[0].mxu0
    %v519 = vadd.f32 0.0, %v518
    %v520 = vpop.f32.mrb[0].mxu0
    %521 = vmatprep.mubr.bf16.mxu0 0
    %522 = vmatmul.mubr.bf16.gmra.mrb[0].mxu0 %v402
    %v523 = vpop.f32.mrb[0].mxu0
    %v524 = vadd.f32 0.0, %v523
    %v525 = vpop.f32.mrb[0].mxu0
    %v526 = vpop.f32.mrb[0].mxu0
    %v527 = vadd.f32 0.0, %v526
    %v528 = vpop.f32.mrb[0].mxu0
    %529 = vmatprep.mubr.bf16.mxu0 0
    %530 = vmatmul.mubr.bf16.gmra.mrb[0].mxu0 %v403
    %v531 = vpop.f32.mrb[0].mxu0
    %v532 = vadd.f32 0.0, %v531
    %v533 = vpop.f32.mrb[0].mxu0
    %v534 = vpop.f32.mrb[0].mxu0
    %v535 = vadd.f32 0.0, %v534
    %v536 = vpop.f32.mrb[0].mxu0
    %537 = vmatprep.mubr.bf16.mxu0 0
    %538 = vmatmul.mubr.bf16.gmra.mrb[0].mxu0 %v404
    %v539 = vpop.f32.mrb[0].mxu0
    %v540 = vadd.f32 0.0, %v539
    %v541 = vpop.f32.mrb[0].mxu0
    %v542 = vpop.f32.mrb[0].mxu0
    %v543 = vadd.f32 0.0, %v542
    %v544 = vpop.f32.mrb[0].mxu0
    %545 = vmatprep.mubr.bf16.mxu0 0
    %546 = vmatmul.mubr.bf16.gmra.mrb[0].mxu0 %v405
    %v547 = vpop.f32.mrb[0].mxu0
    %v548 = vadd.f32 0.0, %v547
    %v549 = vpop.f32.mrb[0].mxu0
    %v550 = vpop.f32.mrb[0].mxu0
    %v551 = vadd.f32 0.0, %v550
    %v552 = vpop.f32.mrb[0].mxu0
    %553 = vmatprep.mubr.bf16.mxu0 0
    %554 = vmatmul.mubr.bf16.gmra.mrb[0].mxu0 %v406
    %v555 = vpop.f32.mrb[0].mxu0
    %v556 = vadd.f32 0.0, %v555
    %v557 = vpop.f32.mrb[0].mxu0
    %v558 = vpop.f32.mrb[0].mxu0
    %v559 = vadd.f32 0.0, %v558
    %v560 = vpop.f32.mrb[0].mxu0
    %561 = vmatprep.mubr.bf16.mxu0 0
    %562 = vmatmul.mubr.bf16.gmra.mrb[0].mxu0 %v407
    %v563 = vpop.f32.mrb[0].mxu0
    %v564 = vadd.f32 0.0, %v563
    %v565 = vpop.f32.mrb[0].mxu0
    %v566 = vpop.f32.mrb[0].mxu0
    %v567 = vadd.f32 0.0, %v566
    %v568 = vpop.f32.mrb[0].mxu0
    %569 = vdwg.mxu0
    %v570 = vadd.f32 %v322, %v508
    %v571 = vadd.f32 %v325, %v511
    %v572 = vadd.f32 %v330, %v516
    %v573 = vadd.f32 %v333, %v519
    %v574 = vadd.f32 %v338, %v524
    %v575 = vadd.f32 %v341, %v527
    %v576 = vadd.f32 %v346, %v532
    %v577 = vadd.f32 %v349, %v535
    %v578 = vadd.f32 %v354, %v540
    %v579 = vadd.f32 %v357, %v543
    %v580 = vadd.f32 %v362, %v548
    %v581 = vadd.f32 %v365, %v551
    %v582 = vadd.f32 %v370, %v556
    %v583 = vadd.f32 %v373, %v559
    %v584 = vadd.f32 %v378, %v564
    %v585 = vadd.f32 %v381, %v567
    %s586 = scalar_lea.vmem %s0, 16
    %v587 = vld [vmem:[%s586] sm:$0xff]
    %v588 = vld [vmem:[%s586 + $0x10] sm:$0xff]
    %v589 = vld [vmem:[%s586 + $0x20] sm:$0xff]
    %v590 = vld [vmem:[%s586 + $0x30] sm:$0xff]
    %v591 = vld [vmem:[%s586 + $0x40] sm:$0xff]
    %v592 = vld [vmem:[%s586 + $0x50] sm:$0xff]
    %v593 = vld [vmem:[%s586 + $0x60] sm:$0xff]
    %v594 = vld [vmem:[%s586 + $0x70] sm:$0xff]
    %v595 = vld [vmem:[%s586 + $0xa0] sm:$0xff]
    %v596 = vld [vmem:[%s586 + $0xb0] sm:$0xff]
    %v597 = vld [vmem:[%s586 + $0xc0] sm:$0xff]
    %v598 = vld [vmem:[%s586 + $0xd0] sm:$0xff]
    %v599 = vld [vmem:[%s586 + $0xe0] sm:$0xff]
    %v600 = vld [vmem:[%s586 + $0xf0] sm:$0xff]
    %v601 = vld [vmem:[%s586 + $0x100] sm:$0xff]
    %v602 = vld [vmem:[%s586 + $0x110] sm:$0xff]
    %v603 = vpack.c.bf16 %v588, %v587
    %v604 = vpack.c.bf16 %v590, %v589
    %v605 = vpack.c.bf16 %v592, %v591
    %v606 = vpack.c.bf16 %v594, %v593
    %v607 = vpack.c.bf16 %v596, %v595
    %v608 = vpack.c.bf16 %v598, %v597
    %v609 = vpack.c.bf16 %v600, %v599
    %v610 = vpack.c.bf16 %v602, %v601
    %s611 = scalar_lea.vmem %s1, 192
    %v612 = vld [vmem:[%s611] sm:$0xf]
    %v613 = vld [vmem:[%s611 + $0x4] sm:$0xf]
    %v614 = vld [vmem:[%s611 + $0x8] sm:$0xf]
    %v615 = vld [vmem:[%s611 + $0xc] sm:$0xf]
    %v616 = vld [vmem:[%s611 + $0x10] sm:$0xf]
    %v617 = vld [vmem:[%s611 + $0x14] sm:$0xf]
    %v618 = vld [vmem:[%s611 + $0x18] sm:$0xf]
    %v619 = vld [vmem:[%s611 + $0x1c] sm:$0xf]
    %v620 = vld [vmem:[%s611 + $0x20] sm:$0xf]
    %v621 = vld [vmem:[%s611 + $0x24] sm:$0xf]
    %v622 = vld [vmem:[%s611 + $0x28] sm:$0xf]
    %v623 = vld [vmem:[%s611 + $0x2c] sm:$0xf]
    %v624 = vld [vmem:[%s611 + $0x30] sm:$0xf]
    %v625 = vld [vmem:[%s611 + $0x34] sm:$0xf]
    %v626 = vld [vmem:[%s611 + $0x38] sm:$0xf]
    %v627 = vld [vmem:[%s611 + $0x3c] sm:$0xf]
    %v644 = vunpack.c.l.b16 %v612
    %v645 = vunpack.c.l.b16 %v613
    %v646 = vunpack.c.l.b16 %v614
    %v647 = vunpack.c.l.b16 %v615
    %v648 = vunpack.c.l.b16 %v616
    %v649 = vunpack.c.l.b16 %v617
    %v650 = vunpack.c.l.b16 %v618
    %v651 = vunpack.c.l.b16 %v619
    %v652 = vunpack.c.l.b16 %v620
    %v653 = vunpack.c.l.b16 %v621
    %v654 = vunpack.c.l.b16 %v622
    %v655 = vunpack.c.l.b16 %v623
    %v656 = vunpack.c.l.b16 %v624
    %v657 = vunpack.c.l.b16 %v625
    %v658 = vunpack.c.l.b16 %v626
    %v659 = vunpack.c.l.b16 %v627
    %v660 = vpack.c.b16 %v645, %v644
    %v661 = vpack.c.b16 %v647, %v646
    %v662 = vpack.c.b16 %v649, %v648
    %v663 = vpack.c.b16 %v651, %v650
    %v664 = vpack.c.b16 %v653, %v652
    %v665 = vpack.c.b16 %v655, %v654
    %v666 = vpack.c.b16 %v657, %v656
    %v667 = vpack.c.b16 %v659, %v658
    %676 = vmatprep.subr.bf16.mxu0 0
    %677 = vmatpush1.bf16.msra.mxu0 %v660
    %678 = vmatprep.subr.bf16.mxu0 0
    %679 = vmatpush1.bf16.msra.mxu0 %v661
    %680 = vmatprep.subr.bf16.mxu0 0
    %681 = vmatpush1.bf16.msra.mxu0 %v662
    %682 = vmatprep.subr.bf16.mxu0 0
    %683 = vmatpush1.bf16.msra.mxu0 %v663
    %684 = vmatprep.subr.bf16.mxu0 0
    %685 = vmatpush1.bf16.msra.mxu0 %v664
    %686 = vmatprep.subr.bf16.mxu0 0
    %687 = vmatpush1.bf16.msra.mxu0 %v665
    %688 = vmatprep.subr.bf16.mxu0 0
    %689 = vmatpush1.bf16.msra.mxu0 %v666
    %690 = vmatprep.subr.bf16.mxu0 0
    %691 = vmatpush1.bf16.msra.mxu0 %v667
    %692 = vmatprep.subr.bf16.mxu0 0
    %693 = vmatpush1.bf16.msra.mxu0 0
    %694 = vmatprep.subr.bf16.mxu0 0
    %695 = vmatpush1.bf16.msra.mxu0 0
    %696 = vmatprep.subr.bf16.mxu0 0
    %697 = vmatpush1.bf16.msra.mxu0 0
    %698 = vmatprep.subr.bf16.mxu0 0
    %699 = vmatpush1.bf16.msra.mxu0 0
    %700 = vmatprep.subr.bf16.mxu0 0
    %701 = vmatpush1.bf16.msra.mxu0 0
    %702 = vmatprep.subr.bf16.mxu0 0
    %703 = vmatpush1.bf16.msra.mxu0 0
    %704 = vmatprep.subr.bf16.mxu0 0
    %705 = vmatpush1.bf16.msra.mxu0 0
    %706 = vmatprep.subr.bf16.mxu0 0
    %707 = vmatpush1.bf16.msra.mxu0 0
    %708 = vmatprep.mubr.bf16.mxu0 0
    %709 = vmatmul.mubr.bf16.gmra.mrb[0].mxu0 %v603
    %v710 = vpop.f32.mrb[0].mxu0
    %v711 = vadd.f32 0.0, %v710
    %v712 = vpop.f32.mrb[0].mxu0
    %v713 = vpop.f32.mrb[0].mxu0
    %v714 = vadd.f32 0.0, %v713
    %v715 = vpop.f32.mrb[0].mxu0
    %716 = vmatprep.mubr.bf16.mxu0 0
    %717 = vmatmul.mubr.bf16.gmra.mrb[0].mxu0 %v604
    %v718 = vpop.f32.mrb[0].mxu0
    %v719 = vadd.f32 0.0, %v718
    %v720 = vpop.f32.mrb[0].mxu0
    %v721 = vpop.f32.mrb[0].mxu0
    %v722 = vadd.f32 0.0, %v721
    %v723 = vpop.f32.mrb[0].mxu0
    %724 = vmatprep.mubr.bf16.mxu0 0
    %725 = vmatmul.mubr.bf16.gmra.mrb[0].mxu0 %v605
    %v726 = vpop.f32.mrb[0].mxu0
    %v727 = vadd.f32 0.0, %v726
    %v728 = vpop.f32.mrb[0].mxu0
    %v729 = vpop.f32.mrb[0].mxu0
    %v730 = vadd.f32 0.0, %v729
    %v731 = vpop.f32.mrb[0].mxu0
    %732 = vmatprep.mubr.bf16.mxu0 0
    %733 = vmatmul.mubr.bf16.gmra.mrb[0].mxu0 %v606
    %v734 = vpop.f32.mrb[0].mxu0
    %v735 = vadd.f32 0.0, %v734
    %v736 = vpop.f32.mrb[0].mxu0
    %v737 = vpop.f32.mrb[0].mxu0
    %v738 = vadd.f32 0.0, %v737
    %v739 = vpop.f32.mrb[0].mxu0
    %740 = vmatprep.mubr.bf16.mxu0 0
    %741 = vmatmul.mubr.bf16.gmra.mrb[0].mxu0 %v607
    %v742 = vpop.f32.mrb[0].mxu0
    %v743 = vadd.f32 0.0, %v742
    %v744 = vpop.f32.mrb[0].mxu0
    %v745 = vpop.f32.mrb[0].mxu0
    %v746 = vadd.f32 0.0, %v745
    %v747 = vpop.f32.mrb[0].mxu0
    %748 = vmatprep.mubr.bf16.mxu0 0
    %749 = vmatmul.mubr.bf16.gmra.mrb[0].mxu0 %v608
    %v750 = vpop.f32.mrb[0].mxu0
    %v751 = vadd.f32 0.0, %v750
    %v752 = vpop.f32.mrb[0].mxu0
    %v753 = vpop.f32.mrb[0].mxu0
    %v754 = vadd.f32 0.0, %v753
    %v755 = vpop.f32.mrb[0].mxu0
    %756 = vmatprep.mubr.bf16.mxu0 0
    %757 = vmatmul.mubr.bf16.gmra.mrb[0].mxu0 %v609
    %v758 = vpop.f32.mrb[0].mxu0
    %v759 = vadd.f32 0.0, %v758
    %v760 = vpop.f32.mrb[0].mxu0
    %v761 = vpop.f32.mrb[0].mxu0
    %v762 = vadd.f32 0.0, %v761
    %v763 = vpop.f32.mrb[0].mxu0
    %764 = vmatprep.mubr.bf16.mxu0 0
    %765 = vmatmul.mubr.bf16.gmra.mrb[0].mxu0 %v610
    %v766 = vpop.f32.mrb[0].mxu0
    %v767 = vadd.f32 0.0, %v766
    %v768 = vpop.f32.mrb[0].mxu0
    %v769 = vpop.f32.mrb[0].mxu0
    %v770 = vadd.f32 0.0, %v769
    %v771 = vpop.f32.mrb[0].mxu0
    %772 = vdwg.mxu0
    %v773 = vadd.f32 %v570, %v711
    %v774 = vadd.f32 %v571, %v714
    %v775 = vadd.f32 %v572, %v719
    %v776 = vadd.f32 %v573, %v722
    %v777 = vadd.f32 %v574, %v727
    %v778 = vadd.f32 %v575, %v730
    %v779 = vadd.f32 %v576, %v735
    %v780 = vadd.f32 %v577, %v738
    %v781 = vadd.f32 %v578, %v743
    %v782 = vadd.f32 %v579, %v746
    %v783 = vadd.f32 %v580, %v751
    %v784 = vadd.f32 %v581, %v754
    %v785 = vadd.f32 %v582, %v759
    %v786 = vadd.f32 %v583, %v762
    %v787 = vadd.f32 %v584, %v767
    %v788 = vadd.f32 %v585, %v770
    %v789 = vld [vmem:[%s586 + $0x1] sm:$0xff]
    %v790 = vld [vmem:[%s586 + $0x11] sm:$0xff]
    %v791 = vld [vmem:[%s586 + $0x21] sm:$0xff]
    %v792 = vld [vmem:[%s586 + $0x31] sm:$0xff]
    %v793 = vld [vmem:[%s586 + $0x41] sm:$0xff]
    %v794 = vld [vmem:[%s586 + $0x51] sm:$0xff]
    %v795 = vld [vmem:[%s586 + $0x61] sm:$0xff]
    %v796 = vld [vmem:[%s586 + $0x71] sm:$0xff]
    %v797 = vld [vmem:[%s586 + $0xa1] sm:$0xff]
    %v798 = vld [vmem:[%s586 + $0xb1] sm:$0xff]
    %v799 = vld [vmem:[%s586 + $0xc1] sm:$0xff]
    %v800 = vld [vmem:[%s586 + $0xd1] sm:$0xff]
    %v801 = vld [vmem:[%s586 + $0xe1] sm:$0xff]
    %v802 = vld [vmem:[%s586 + $0xf1] sm:$0xff]
    %v803 = vld [vmem:[%s586 + $0x101] sm:$0xff]
    %v804 = vld [vmem:[%s586 + $0x111] sm:$0xff]
    %v805 = vpack.c.bf16 %v790, %v789
    %v806 = vpack.c.bf16 %v792, %v791
    %v807 = vpack.c.bf16 %v794, %v793
    %v808 = vpack.c.bf16 %v796, %v795
    %v809 = vpack.c.bf16 %v798, %v797
    %v810 = vpack.c.bf16 %v800, %v799
    %v811 = vpack.c.bf16 %v802, %v801
    %v812 = vpack.c.bf16 %v804, %v803
    %s813 = scalar_lea.vmem %s1, 256
    %v814 = vld [vmem:[%s813] sm:$0xf]
    %v815 = vld [vmem:[%s813 + $0x4] sm:$0xf]
    %v816 = vld [vmem:[%s813 + $0x8] sm:$0xf]
    %v817 = vld [vmem:[%s813 + $0xc] sm:$0xf]
    %v818 = vld [vmem:[%s813 + $0x10] sm:$0xf]
    %v819 = vld [vmem:[%s813 + $0x14] sm:$0xf]
    %v820 = vld [vmem:[%s813 + $0x18] sm:$0xf]
    %v821 = vld [vmem:[%s813 + $0x1c] sm:$0xf]
    %v822 = vld [vmem:[%s813 + $0x20] sm:$0xf]
    %v823 = vld [vmem:[%s813 + $0x24] sm:$0xf]
    %v824 = vld [vmem:[%s813 + $0x28] sm:$0xf]
    %v825 = vld [vmem:[%s813 + $0x2c] sm:$0xf]
    %v826 = vld [vmem:[%s813 + $0x30] sm:$0xf]
    %v827 = vld [vmem:[%s813 + $0x34] sm:$0xf]
    %v828 = vld [vmem:[%s813 + $0x38] sm:$0xf]
    %v829 = vld [vmem:[%s813 + $0x3c] sm:$0xf]
    %v846 = vunpack.c.l.b16 %v814
    %v847 = vunpack.c.l.b16 %v815
    %v848 = vunpack.c.l.b16 %v816
    %v849 = vunpack.c.l.b16 %v817
    %v850 = vunpack.c.l.b16 %v818
    %v851 = vunpack.c.l.b16 %v819
    %v852 = vunpack.c.l.b16 %v820
    %v853 = vunpack.c.l.b16 %v821
    %v854 = vunpack.c.l.b16 %v822
    %v855 = vunpack.c.l.b16 %v823
    %v856 = vunpack.c.l.b16 %v824
    %v857 = vunpack.c.l.b16 %v825
    %v858 = vunpack.c.l.b16 %v826
    %v859 = vunpack.c.l.b16 %v827
    %v860 = vunpack.c.l.b16 %v828
    %v861 = vunpack.c.l.b16 %v829
    %v862 = vpack.c.b16 %v847, %v846
    %v863 = vpack.c.b16 %v849, %v848
    %v864 = vpack.c.b16 %v851, %v850
    %v865 = vpack.c.b16 %v853, %v852
    %v866 = vpack.c.b16 %v855, %v854
    %v867 = vpack.c.b16 %v857, %v856
    %v868 = vpack.c.b16 %v859, %v858
    %v869 = vpack.c.b16 %v861, %v860
    %878 = vmatprep.subr.bf16.mxu0 0
    %879 = vmatpush1.bf16.msra.mxu0 %v862
    %880 = vmatprep.subr.bf16.mxu0 0
    %881 = vmatpush1.bf16.msra.mxu0 %v863
    %882 = vmatprep.subr.bf16.mxu0 0
    %883 = vmatpush1.bf16.msra.mxu0 %v864
    %884 = vmatprep.subr.bf16.mxu0 0
    %885 = vmatpush1.bf16.msra.mxu0 %v865
    %886 = vmatprep.subr.bf16.mxu0 0
    %887 = vmatpush1.bf16.msra.mxu0 %v866
    %888 = vmatprep.subr.bf16.mxu0 0
    %889 = vmatpush1.bf16.msra.mxu0 %v867
    %890 = vmatprep.subr.bf16.mxu0 0
    %891 = vmatpush1.bf16.msra.mxu0 %v868
    %892 = vmatprep.subr.bf16.mxu0 0
    %893 = vmatpush1.bf16.msra.mxu0 %v869
    %894 = vmatprep.subr.bf16.mxu0 0
    %895 = vmatpush1.bf16.msra.mxu0 0
    %896 = vmatprep.subr.bf16.mxu0 0
    %897 = vmatpush1.bf16.msra.mxu0 0
    %898 = vmatprep.subr.bf16.mxu0 0
    %899 = vmatpush1.bf16.msra.mxu0 0
    %900 = vmatprep.subr.bf16.mxu0 0
    %901 = vmatpush1.bf16.msra.mxu0 0
    %902 = vmatprep.subr.bf16.mxu0 0
    %903 = vmatpush1.bf16.msra.mxu0 0
    %904 = vmatprep.subr.bf16.mxu0 0
    %905 = vmatpush1.bf16.msra.mxu0 0
    %906 = vmatprep.subr.bf16.mxu0 0
    %907 = vmatpush1.bf16.msra.mxu0 0
    %908 = vmatprep.subr.bf16.mxu0 0
    %909 = vmatpush1.bf16.msra.mxu0 0
    %910 = vmatprep.mubr.bf16.mxu0 0
    %911 = vmatmul.mubr.bf16.gmra.mrb[0].mxu0 %v805
    %v912 = vpop.f32.mrb[0].mxu0
    %v913 = vadd.f32 0.0, %v912
    %v914 = vpop.f32.mrb[0].mxu0
    %v915 = vpop.f32.mrb[0].mxu0
    %v916 = vadd.f32 0.0, %v915
    %v917 = vpop.f32.mrb[0].mxu0
    %918 = vmatprep.mubr.bf16.mxu0 0
    %919 = vmatmul.mubr.bf16.gmra.mrb[0].mxu0 %v806
    %v920 = vpop.f32.mrb[0].mxu0
    %v921 = vadd.f32 0.0, %v920
    %v922 = vpop.f32.mrb[0].mxu0
    %v923 = vpop.f32.mrb[0].mxu0
    %v924 = vadd.f32 0.0, %v923
    %v925 = vpop.f32.mrb[0].mxu0
    %926 = vmatprep.mubr.bf16.mxu0 0
    %927 = vmatmul.mubr.bf16.gmra.mrb[0].mxu0 %v807
    %v928 = vpop.f32.mrb[0].mxu0
    %v929 = vadd.f32 0.0, %v928
    %v930 = vpop.f32.mrb[0].mxu0
    %v931 = vpop.f32.mrb[0].mxu0
    %v932 = vadd.f32 0.0, %v931
    %v933 = vpop.f32.mrb[0].mxu0
    %934 = vmatprep.mubr.bf16.mxu0 0
    %935 = vmatmul.mubr.bf16.gmra.mrb[0].mxu0 %v808
    %v936 = vpop.f32.mrb[0].mxu0
    %v937 = vadd.f32 0.0, %v936
    %v938 = vpop.f32.mrb[0].mxu0
    %v939 = vpop.f32.mrb[0].mxu0
    %v940 = vadd.f32 0.0, %v939
    %v941 = vpop.f32.mrb[0].mxu0
    %942 = vmatprep.mubr.bf16.mxu0 0
    %943 = vmatmul.mubr.bf16.gmra.mrb[0].mxu0 %v809
    %v944 = vpop.f32.mrb[0].mxu0
    %v945 = vadd.f32 0.0, %v944
    %v946 = vpop.f32.mrb[0].mxu0
    %v947 = vpop.f32.mrb[0].mxu0
    %v948 = vadd.f32 0.0, %v947
    %v949 = vpop.f32.mrb[0].mxu0
    %950 = vmatprep.mubr.bf16.mxu0 0
    %951 = vmatmul.mubr.bf16.gmra.mrb[0].mxu0 %v810
    %v952 = vpop.f32.mrb[0].mxu0
    %v953 = vadd.f32 0.0, %v952
    %v954 = vpop.f32.mrb[0].mxu0
    %v955 = vpop.f32.mrb[0].mxu0
    %v956 = vadd.f32 0.0, %v955
    %v957 = vpop.f32.mrb[0].mxu0
    %958 = vmatprep.mubr.bf16.mxu0 0
    %959 = vmatmul.mubr.bf16.gmra.mrb[0].mxu0 %v811
    %v960 = vpop.f32.mrb[0].mxu0
    %v961 = vadd.f32 0.0, %v960
    %v962 = vpop.f32.mrb[0].mxu0
    %v963 = vpop.f32.mrb[0].mxu0
    %v964 = vadd.f32 0.0, %v963
    %v965 = vpop.f32.mrb[0].mxu0
    %966 = vmatprep.mubr.bf16.mxu0 0
    %967 = vmatmul.mubr.bf16.gmra.mrb[0].mxu0 %v812
    %v968 = vpop.f32.mrb[0].mxu0
    %v969 = vadd.f32 0.0, %v968
    %v970 = vpop.f32.mrb[0].mxu0
    %v971 = vpop.f32.mrb[0].mxu0
    %v972 = vadd.f32 0.0, %v971
    %v973 = vpop.f32.mrb[0].mxu0
    %974 = vdwg.mxu0
    %v975 = vadd.f32 %v773, %v913
    %v976 = vadd.f32 %v774, %v916
    %v977 = vadd.f32 %v775, %v921
    %v978 = vadd.f32 %v776, %v924
    %v979 = vadd.f32 %v777, %v929
    %v980 = vadd.f32 %v778, %v932
    %v981 = vadd.f32 %v779, %v937
    %v982 = vadd.f32 %v780, %v940
    %v983 = vadd.f32 %v781, %v945
    %v984 = vadd.f32 %v782, %v948
    %v985 = vadd.f32 %v783, %v953
    %v986 = vadd.f32 %v784, %v956
    %v987 = vadd.f32 %v785, %v961
    %v988 = vadd.f32 %v786, %v964
    %v989 = vadd.f32 %v787, %v969
    %v990 = vadd.f32 %v788, %v972
    %v991 = vld [vmem:[%s586 + $0x2] sm:$0xff]
    %v992 = vld [vmem:[%s586 + $0x12] sm:$0xff]
    %v993 = vld [vmem:[%s586 + $0x22] sm:$0xff]
    %v994 = vld [vmem:[%s586 + $0x32] sm:$0xff]
    %v995 = vld [vmem:[%s586 + $0x42] sm:$0xff]
    %v996 = vld [vmem:[%s586 + $0x52] sm:$0xff]
    %v997 = vld [vmem:[%s586 + $0x62] sm:$0xff]
    %v998 = vld [vmem:[%s586 + $0x72] sm:$0xff]
    %v999 = vld [vmem:[%s586 + $0xa2] sm:$0xff]
    %v1000 = vld [vmem:[%s586 + $0xb2] sm:$0xff]
    %v1001 = vld [vmem:[%s586 + $0xc2] sm:$0xff]
    %v1002 = vld [vmem:[%s586 + $0xd2] sm:$0xff]
    %v1003 = vld [vmem:[%s586 + $0xe2] sm:$0xff]
    %v1004 = vld [vmem:[%s586 + $0xf2] sm:$0xff]
    %v1005 = vld [vmem:[%s586 + $0x102] sm:$0xff]
    %v1006 = vld [vmem:[%s586 + $0x112] sm:$0xff]
    %v1007 = vpack.c.bf16 %v992, %v991
    %v1008 = vpack.c.bf16 %v994, %v993
    %v1009 = vpack.c.bf16 %v996, %v995
    %v1010 = vpack.c.bf16 %v998, %v997
    %v1011 = vpack.c.bf16 %v1000, %v999
    %v1012 = vpack.c.bf16 %v1002, %v1001
    %v1013 = vpack.c.bf16 %v1004, %v1003
    %v1014 = vpack.c.bf16 %v1006, %v1005
    %s1015 = scalar_lea.vmem %s1, 320
    %v1016 = vld [vmem:[%s1015] sm:$0xf]
    %v1017 = vld [vmem:[%s1015 + $0x4] sm:$0xf]
    %v1018 = vld [vmem:[%s1015 + $0x8] sm:$0xf]
    %v1019 = vld [vmem:[%s1015 + $0xc] sm:$0xf]
    %v1020 = vld [vmem:[%s1015 + $0x10] sm:$0xf]
    %v1021 = vld [vmem:[%s1015 + $0x14] sm:$0xf]
    %v1022 = vld [vmem:[%s1015 + $0x18] sm:$0xf]
    %v1023 = vld [vmem:[%s1015 + $0x1c] sm:$0xf]
    %v1024 = vld [vmem:[%s1015 + $0x20] sm:$0xf]
    %v1025 = vld [vmem:[%s1015 + $0x24] sm:$0xf]
    %v1026 = vld [vmem:[%s1015 + $0x28] sm:$0xf]
    %v1027 = vld [vmem:[%s1015 + $0x2c] sm:$0xf]
    %v1028 = vld [vmem:[%s1015 + $0x30] sm:$0xf]
    %v1029 = vld [vmem:[%s1015 + $0x34] sm:$0xf]
    %v1030 = vld [vmem:[%s1015 + $0x38] sm:$0xf]
    %v1031 = vld [vmem:[%s1015 + $0x3c] sm:$0xf]
    %v1048 = vunpack.c.l.b16 %v1016
    %v1049 = vunpack.c.l.b16 %v1017
    %v1050 = vunpack.c.l.b16 %v1018
    %v1051 = vunpack.c.l.b16 %v1019
    %v1052 = vunpack.c.l.b16 %v1020
    %v1053 = vunpack.c.l.b16 %v1021
    %v1054 = vunpack.c.l.b16 %v1022
    %v1055 = vunpack.c.l.b16 %v1023
    %v1056 = vunpack.c.l.b16 %v1024
    %v1057 = vunpack.c.l.b16 %v1025
    %v1058 = vunpack.c.l.b16 %v1026
    %v1059 = vunpack.c.l.b16 %v1027
    %v1060 = vunpack.c.l.b16 %v1028
    %v1061 = vunpack.c.l.b16 %v1029
    %v1062 = vunpack.c.l.b16 %v1030
    %v1063 = vunpack.c.l.b16 %v1031
    %v1064 = vpack.c.b16 %v1049, %v1048
    %v1065 = vpack.c.b16 %v1051, %v1050
    %v1066 = vpack.c.b16 %v1053, %v1052
    %v1067 = vpack.c.b16 %v1055, %v1054
    %v1068 = vpack.c.b16 %v1057, %v1056
    %v1069 = vpack.c.b16 %v1059, %v1058
    %v1070 = vpack.c.b16 %v1061, %v1060
    %v1071 = vpack.c.b16 %v1063, %v1062
    %1080 = vmatprep.subr.bf16.mxu0 0
    %1081 = vmatpush1.bf16.msra.mxu0 %v1064
    %1082 = vmatprep.subr.bf16.mxu0 0
    %1083 = vmatpush1.bf16.msra.mxu0 %v1065
    %1084 = vmatprep.subr.bf16.mxu0 0
    %1085 = vmatpush1.bf16.msra.mxu0 %v1066
    %1086 = vmatprep.subr.bf16.mxu0 0
    %1087 = vmatpush1.bf16.msra.mxu0 %v1067
    %1088 = vmatprep.subr.bf16.mxu0 0
    %1089 = vmatpush1.bf16.msra.mxu0 %v1068
    %1090 = vmatprep.subr.bf16.mxu0 0
    %1091 = vmatpush1.bf16.msra.mxu0 %v1069
    %1092 = vmatprep.subr.bf16.mxu0 0
    %1093 = vmatpush1.bf16.msra.mxu0 %v1070
    %1094 = vmatprep.subr.bf16.mxu0 0
    %1095 = vmatpush1.bf16.msra.mxu0 %v1071
    %1096 = vmatprep.subr.bf16.mxu0 0
    %1097 = vmatpush1.bf16.msra.mxu0 0
    %1098 = vmatprep.subr.bf16.mxu0 0
    %1099 = vmatpush1.bf16.msra.mxu0 0
    %1100 = vmatprep.subr.bf16.mxu0 0
    %1101 = vmatpush1.bf16.msra.mxu0 0
    %1102 = vmatprep.subr.bf16.mxu0 0
    %1103 = vmatpush1.bf16.msra.mxu0 0
    %1104 = vmatprep.subr.bf16.mxu0 0
    %1105 = vmatpush1.bf16.msra.mxu0 0
    %1106 = vmatprep.subr.bf16.mxu0 0
    %1107 = vmatpush1.bf16.msra.mxu0 0
    %1108 = vmatprep.subr.bf16.mxu0 0
    %1109 = vmatpush1.bf16.msra.mxu0 0
    %1110 = vmatprep.subr.bf16.mxu0 0
    %1111 = vmatpush1.bf16.msra.mxu0 0
    %1112 = vmatprep.mubr.bf16.mxu0 0
    %1113 = vmatmul.mubr.bf16.gmra.mrb[0].mxu0 %v1007
    %v1114 = vpop.f32.mrb[0].mxu0
    %v1115 = vadd.f32 0.0, %v1114
    %v1116 = vpop.f32.mrb[0].mxu0
    %v1117 = vpop.f32.mrb[0].mxu0
    %v1118 = vadd.f32 0.0, %v1117
    %v1119 = vpop.f32.mrb[0].mxu0
    %1120 = vmatprep.mubr.bf16.mxu0 0
    %1121 = vmatmul.mubr.bf16.gmra.mrb[0].mxu0 %v1008
    %v1122 = vpop.f32.mrb[0].mxu0
    %v1123 = vadd.f32 0.0, %v1122
    %v1124 = vpop.f32.mrb[0].mxu0
    %v1125 = vpop.f32.mrb[0].mxu0
    %v1126 = vadd.f32 0.0, %v1125
    %v1127 = vpop.f32.mrb[0].mxu0
    %1128 = vmatprep.mubr.bf16.mxu0 0
    %1129 = vmatmul.mubr.bf16.gmra.mrb[0].mxu0 %v1009
    %v1130 = vpop.f32.mrb[0].mxu0
    %v1131 = vadd.f32 0.0, %v1130
    %v1132 = vpop.f32.mrb[0].mxu0
    %v1133 = vpop.f32.mrb[0].mxu0
    %v1134 = vadd.f32 0.0, %v1133
    %v1135 = vpop.f32.mrb[0].mxu0
    %1136 = vmatprep.mubr.bf16.mxu0 0
    %1137 = vmatmul.mubr.bf16.gmra.mrb[0].mxu0 %v1010
    %v1138 = vpop.f32.mrb[0].mxu0
    %v1139 = vadd.f32 0.0, %v1138
    %v1140 = vpop.f32.mrb[0].mxu0
    %v1141 = vpop.f32.mrb[0].mxu0
    %v1142 = vadd.f32 0.0, %v1141
    %v1143 = vpop.f32.mrb[0].mxu0
    %1144 = vmatprep.mubr.bf16.mxu0 0
    %1145 = vmatmul.mubr.bf16.gmra.mrb[0].mxu0 %v1011
    %v1146 = vpop.f32.mrb[0].mxu0
    %v1147 = vadd.f32 0.0, %v1146
    %v1148 = vpop.f32.mrb[0].mxu0
    %v1149 = vpop.f32.mrb[0].mxu0
    %v1150 = vadd.f32 0.0, %v1149
    %v1151 = vpop.f32.mrb[0].mxu0
    %1152 = vmatprep.mubr.bf16.mxu0 0
    %1153 = vmatmul.mubr.bf16.gmra.mrb[0].mxu0 %v1012
    %v1154 = vpop.f32.mrb[0].mxu0
    %v1155 = vadd.f32 0.0, %v1154
    %v1156 = vpop.f32.mrb[0].mxu0
    %v1157 = vpop.f32.mrb[0].mxu0
    %v1158 = vadd.f32 0.0, %v1157
    %v1159 = vpop.f32.mrb[0].mxu0
    %1160 = vmatprep.mubr.bf16.mxu0 0
    %1161 = vmatmul.mubr.bf16.gmra.mrb[0].mxu0 %v1013
    %v1162 = vpop.f32.mrb[0].mxu0
    %v1163 = vadd.f32 0.0, %v1162
    %v1164 = vpop.f32.mrb[0].mxu0
    %v1165 = vpop.f32.mrb[0].mxu0
    %v1166 = vadd.f32 0.0, %v1165
    %v1167 = vpop.f32.mrb[0].mxu0
    %1168 = vmatprep.mubr.bf16.mxu0 0
    %1169 = vmatmul.mubr.bf16.gmra.mrb[0].mxu0 %v1014
    %v1170 = vpop.f32.mrb[0].mxu0
    %v1171 = vadd.f32 0.0, %v1170
    %v1172 = vpop.f32.mrb[0].mxu0
    %v1173 = vpop.f32.mrb[0].mxu0
    %v1174 = vadd.f32 0.0, %v1173
    %v1175 = vpop.f32.mrb[0].mxu0
    %1176 = vdwg.mxu0
    %v1177 = vadd.f32 %v975, %v1115
    %v1178 = vadd.f32 %v976, %v1118
    %v1179 = vadd.f32 %v977, %v1123
    %v1180 = vadd.f32 %v978, %v1126
    %v1181 = vadd.f32 %v979, %v1131
    %v1182 = vadd.f32 %v980, %v1134
    %v1183 = vadd.f32 %v981, %v1139
    %v1184 = vadd.f32 %v982, %v1142
    %v1185 = vadd.f32 %v983, %v1147
    %v1186 = vadd.f32 %v984, %v1150
    %v1187 = vadd.f32 %v985, %v1155
    %v1188 = vadd.f32 %v986, %v1158
    %v1189 = vadd.f32 %v987, %v1163
    %v1190 = vadd.f32 %v988, %v1166
    %v1191 = vadd.f32 %v989, %v1171
    %v1192 = vadd.f32 %v990, %v1174
    %s1193 = scalar_lea.vmem %s0, 32
    %v1194 = vld [vmem:[%s1193] sm:$0xff]
    %v1195 = vld [vmem:[%s1193 + $0x10] sm:$0xff]
    %v1196 = vld [vmem:[%s1193 + $0x20] sm:$0xff]
    %v1197 = vld [vmem:[%s1193 + $0x30] sm:$0xff]
    %v1198 = vld [vmem:[%s1193 + $0x40] sm:$0xff]
    %v1199 = vld [vmem:[%s1193 + $0x50] sm:$0xff]
    %v1200 = vld [vmem:[%s1193 + $0x60] sm:$0xff]
    %v1201 = vld [vmem:[%s1193 + $0x70] sm:$0xff]
    %v1202 = vld [vmem:[%s1193 + $0xa0] sm:$0xff]
    %v1203 = vld [vmem:[%s1193 + $0xb0] sm:$0xff]
    %v1204 = vld [vmem:[%s1193 + $0xc0] sm:$0xff]
    %v1205 = vld [vmem:[%s1193 + $0xd0] sm:$0xff]
    %v1206 = vld [vmem:[%s1193 + $0xe0] sm:$0xff]
    %v1207 = vld [vmem:[%s1193 + $0xf0] sm:$0xff]
    %v1208 = vld [vmem:[%s1193 + $0x100] sm:$0xff]
    %v1209 = vld [vmem:[%s1193 + $0x110] sm:$0xff]
    %v1210 = vpack.c.bf16 %v1195, %v1194
    %v1211 = vpack.c.bf16 %v1197, %v1196
    %v1212 = vpack.c.bf16 %v1199, %v1198
    %v1213 = vpack.c.bf16 %v1201, %v1200
    %v1214 = vpack.c.bf16 %v1203, %v1202
    %v1215 = vpack.c.bf16 %v1205, %v1204
    %v1216 = vpack.c.bf16 %v1207, %v1206
    %v1217 = vpack.c.bf16 %v1209, %v1208
    %s1218 = scalar_lea.vmem %s1, 384
    %v1219 = vld [vmem:[%s1218] sm:$0xf]
    %v1220 = vld [vmem:[%s1218 + $0x4] sm:$0xf]
    %v1221 = vld [vmem:[%s1218 + $0x8] sm:$0xf]
    %v1222 = vld [vmem:[%s1218 + $0xc] sm:$0xf]
    %v1223 = vld [vmem:[%s1218 + $0x10] sm:$0xf]
    %v1224 = vld [vmem:[%s1218 + $0x14] sm:$0xf]
    %v1225 = vld [vmem:[%s1218 + $0x18] sm:$0xf]
    %v1226 = vld [vmem:[%s1218 + $0x1c] sm:$0xf]
    %v1227 = vld [vmem:[%s1218 + $0x20] sm:$0xf]
    %v1228 = vld [vmem:[%s1218 + $0x24] sm:$0xf]
    %v1229 = vld [vmem:[%s1218 + $0x28] sm:$0xf]
    %v1230 = vld [vmem:[%s1218 + $0x2c] sm:$0xf]
    %v1231 = vld [vmem:[%s1218 + $0x30] sm:$0xf]
    %v1232 = vld [vmem:[%s1218 + $0x34] sm:$0xf]
    %v1233 = vld [vmem:[%s1218 + $0x38] sm:$0xf]
    %v1234 = vld [vmem:[%s1218 + $0x3c] sm:$0xf]
    %v1251 = vunpack.c.l.b16 %v1219
    %v1252 = vunpack.c.l.b16 %v1220
    %v1253 = vunpack.c.l.b16 %v1221
    %v1254 = vunpack.c.l.b16 %v1222
    %v1255 = vunpack.c.l.b16 %v1223
    %v1256 = vunpack.c.l.b16 %v1224
    %v1257 = vunpack.c.l.b16 %v1225
    %v1258 = vunpack.c.l.b16 %v1226
    %v1259 = vunpack.c.l.b16 %v1227
    %v1260 = vunpack.c.l.b16 %v1228
    %v1261 = vunpack.c.l.b16 %v1229
    %v1262 = vunpack.c.l.b16 %v1230
    %v1263 = vunpack.c.l.b16 %v1231
    %v1264 = vunpack.c.l.b16 %v1232
    %v1265 = vunpack.c.l.b16 %v1233
    %v1266 = vunpack.c.l.b16 %v1234
    %v1267 = vpack.c.b16 %v1252, %v1251
    %v1268 = vpack.c.b16 %v1254, %v1253
    %v1269 = vpack.c.b16 %v1256, %v1255
    %v1270 = vpack.c.b16 %v1258, %v1257
    %v1271 = vpack.c.b16 %v1260, %v1259
    %v1272 = vpack.c.b16 %v1262, %v1261
    %v1273 = vpack.c.b16 %v1264, %v1263
    %v1274 = vpack.c.b16 %v1266, %v1265
    %1283 = vmatprep.subr.bf16.mxu0 0
    %1284 = vmatpush1.bf16.msra.mxu0 %v1267
    %1285 = vmatprep.subr.bf16.mxu0 0
    %1286 = vmatpush1.bf16.msra.mxu0 %v1268
    %1287 = vmatprep.subr.bf16.mxu0 0
    %1288 = vmatpush1.bf16.msra.mxu0 %v1269
    %1289 = vmatprep.subr.bf16.mxu0 0
    %1290 = vmatpush1.bf16.msra.mxu0 %v1270
    %1291 = vmatprep.subr.bf16.mxu0 0
    %1292 = vmatpush1.bf16.msra.mxu0 %v1271
    %1293 = vmatprep.subr.bf16.mxu0 0
    %1294 = vmatpush1.bf16.msra.mxu0 %v1272
    %1295 = vmatprep.subr.bf16.mxu0 0
    %1296 = vmatpush1.bf16.msra.mxu0 %v1273
    %1297 = vmatprep.subr.bf16.mxu0 0
    %1298 = vmatpush1.bf16.msra.mxu0 %v1274
    %1299 = vmatprep.subr.bf16.mxu0 0
    %1300 = vmatpush1.bf16.msra.mxu0 0
    %1301 = vmatprep.subr.bf16.mxu0 0
    %1302 = vmatpush1.bf16.msra.mxu0 0
    %1303 = vmatprep.subr.bf16.mxu0 0
    %1304 = vmatpush1.bf16.msra.mxu0 0
    %1305 = vmatprep.subr.bf16.mxu0 0
    %1306 = vmatpush1.bf16.msra.mxu0 0
    %1307 = vmatprep.subr.bf16.mxu0 0
    %1308 = vmatpush1.bf16.msra.mxu0 0
    %1309 = vmatprep.subr.bf16.mxu0 0
    %1310 = vmatpush1.bf16.msra.mxu0 0
    %1311 = vmatprep.subr.bf16.mxu0 0
    %1312 = vmatpush1.bf16.msra.mxu0 0
    %1313 = vmatprep.subr.bf16.mxu0 0
    %1314 = vmatpush1.bf16.msra.mxu0 0
    %1315 = vmatprep.mubr.bf16.mxu0 0
    %1316 = vmatmul.mubr.bf16.gmra.mrb[0].mxu0 %v1210
    %v1317 = vpop.f32.mrb[0].mxu0
    %v1318 = vadd.f32 0.0, %v1317
    %v1319 = vpop.f32.mrb[0].mxu0
    %v1320 = vpop.f32.mrb[0].mxu0
    %v1321 = vadd.f32 0.0, %v1320
    %v1322 = vpop.f32.mrb[0].mxu0
    %1323 = vmatprep.mubr.bf16.mxu0 0
    %1324 = vmatmul.mubr.bf16.gmra.mrb[0].mxu0 %v1211
    %v1325 = vpop.f32.mrb[0].mxu0
    %v1326 = vadd.f32 0.0, %v1325
    %v1327 = vpop.f32.mrb[0].mxu0
    %v1328 = vpop.f32.mrb[0].mxu0
    %v1329 = vadd.f32 0.0, %v1328
    %v1330 = vpop.f32.mrb[0].mxu0
    %1331 = vmatprep.mubr.bf16.mxu0 0
    %1332 = vmatmul.mubr.bf16.gmra.mrb[0].mxu0 %v1212
    %v1333 = vpop.f32.mrb[0].mxu0
    %v1334 = vadd.f32 0.0, %v1333
    %v1335 = vpop.f32.mrb[0].mxu0
    %v1336 = vpop.f32.mrb[0].mxu0
    %v1337 = vadd.f32 0.0, %v1336
    %v1338 = vpop.f32.mrb[0].mxu0
    %1339 = vmatprep.mubr.bf16.mxu0 0
    %1340 = vmatmul.mubr.bf16.gmra.mrb[0].mxu0 %v1213
    %v1341 = vpop.f32.mrb[0].mxu0
    %v1342 = vadd.f32 0.0, %v1341
    %v1343 = vpop.f32.mrb[0].mxu0
    %v1344 = vpop.f32.mrb[0].mxu0
    %v1345 = vadd.f32 0.0, %v1344
    %v1346 = vpop.f32.mrb[0].mxu0
    %1347 = vmatprep.mubr.bf16.mxu0 0
    %1348 = vmatmul.mubr.bf16.gmra.mrb[0].mxu0 %v1214
    %v1349 = vpop.f32.mrb[0].mxu0
    %v1350 = vadd.f32 0.0, %v1349
    %v1351 = vpop.f32.mrb[0].mxu0
    %v1352 = vpop.f32.mrb[0].mxu0
    %v1353 = vadd.f32 0.0, %v1352
    %v1354 = vpop.f32.mrb[0].mxu0
    %1355 = vmatprep.mubr.bf16.mxu0 0
    %1356 = vmatmul.mubr.bf16.gmra.mrb[0].mxu0 %v1215
    %v1357 = vpop.f32.mrb[0].mxu0
    %v1358 = vadd.f32 0.0, %v1357
    %v1359 = vpop.f32.mrb[0].mxu0
    %v1360 = vpop.f32.mrb[0].mxu0
    %v1361 = vadd.f32 0.0, %v1360
    %v1362 = vpop.f32.mrb[0].mxu0
    %1363 = vmatprep.mubr.bf16.mxu0 0
    %1364 = vmatmul.mubr.bf16.gmra.mrb[0].mxu0 %v1216
    %v1365 = vpop.f32.mrb[0].mxu0
    %v1366 = vadd.f32 0.0, %v1365
    %v1367 = vpop.f32.mrb[0].mxu0
    %v1368 = vpop.f32.mrb[0].mxu0
    %v1369 = vadd.f32 0.0, %v1368
    %v1370 = vpop.f32.mrb[0].mxu0
    %1371 = vmatprep.mubr.bf16.mxu0 0
    %1372 = vmatmul.mubr.bf16.gmra.mrb[0].mxu0 %v1217
    %v1373 = vpop.f32.mrb[0].mxu0
    %v1374 = vadd.f32 0.0, %v1373
    %v1375 = vpop.f32.mrb[0].mxu0
    %v1376 = vpop.f32.mrb[0].mxu0
    %v1377 = vadd.f32 0.0, %v1376
    %v1378 = vpop.f32.mrb[0].mxu0
    %1379 = vdwg.mxu0
    %v1380 = vadd.f32 %v1177, %v1318
    %v1381 = vadd.f32 %v1178, %v1321
    %v1382 = vadd.f32 %v1179, %v1326
    %v1383 = vadd.f32 %v1180, %v1329
    %v1384 = vadd.f32 %v1181, %v1334
    %v1385 = vadd.f32 %v1182, %v1337
    %v1386 = vadd.f32 %v1183, %v1342
    %v1387 = vadd.f32 %v1184, %v1345
    %v1388 = vadd.f32 %v1185, %v1350
    %v1389 = vadd.f32 %v1186, %v1353
    %v1390 = vadd.f32 %v1187, %v1358
    %v1391 = vadd.f32 %v1188, %v1361
    %v1392 = vadd.f32 %v1189, %v1366
    %v1393 = vadd.f32 %v1190, %v1369
    %v1394 = vadd.f32 %v1191, %v1374
    %v1395 = vadd.f32 %v1192, %v1377
    %v1396 = vld [vmem:[%s1193 + $0x1] sm:$0xff]
    %v1397 = vld [vmem:[%s1193 + $0x11] sm:$0xff]
    %v1398 = vld [vmem:[%s1193 + $0x21] sm:$0xff]
    %v1399 = vld [vmem:[%s1193 + $0x31] sm:$0xff]
    %v1400 = vld [vmem:[%s1193 + $0x41] sm:$0xff]
    %v1401 = vld [vmem:[%s1193 + $0x51] sm:$0xff]
    %v1402 = vld [vmem:[%s1193 + $0x61] sm:$0xff]
    %v1403 = vld [vmem:[%s1193 + $0x71] sm:$0xff]
    %v1404 = vld [vmem:[%s1193 + $0xa1] sm:$0xff]
    %v1405 = vld [vmem:[%s1193 + $0xb1] sm:$0xff]
    %v1406 = vld [vmem:[%s1193 + $0xc1] sm:$0xff]
    %v1407 = vld [vmem:[%s1193 + $0xd1] sm:$0xff]
    %v1408 = vld [vmem:[%s1193 + $0xe1] sm:$0xff]
    %v1409 = vld [vmem:[%s1193 + $0xf1] sm:$0xff]
    %v1410 = vld [vmem:[%s1193 + $0x101] sm:$0xff]
    %v1411 = vld [vmem:[%s1193 + $0x111] sm:$0xff]
    %v1412 = vpack.c.bf16 %v1397, %v1396
    %v1413 = vpack.c.bf16 %v1399, %v1398
    %v1414 = vpack.c.bf16 %v1401, %v1400
    %v1415 = vpack.c.bf16 %v1403, %v1402
    %v1416 = vpack.c.bf16 %v1405, %v1404
    %v1417 = vpack.c.bf16 %v1407, %v1406
    %v1418 = vpack.c.bf16 %v1409, %v1408
    %v1419 = vpack.c.bf16 %v1411, %v1410
    %s1420 = scalar_lea.vmem %s1, 448
    %v1421 = vld [vmem:[%s1420] sm:$0xf]
    %v1422 = vld [vmem:[%s1420 + $0x4] sm:$0xf]
    %v1423 = vld [vmem:[%s1420 + $0x8] sm:$0xf]
    %v1424 = vld [vmem:[%s1420 + $0xc] sm:$0xf]
    %v1425 = vld [vmem:[%s1420 + $0x10] sm:$0xf]
    %v1426 = vld [vmem:[%s1420 + $0x14] sm:$0xf]
    %v1427 = vld [vmem:[%s1420 + $0x18] sm:$0xf]
    %v1428 = vld [vmem:[%s1420 + $0x1c] sm:$0xf]
    %v1429 = vld [vmem:[%s1420 + $0x20] sm:$0xf]
    %v1430 = vld [vmem:[%s1420 + $0x24] sm:$0xf]
    %v1431 = vld [vmem:[%s1420 + $0x28] sm:$0xf]
    %v1432 = vld [vmem:[%s1420 + $0x2c] sm:$0xf]
    %v1433 = vld [vmem:[%s1420 + $0x30] sm:$0xf]
    %v1434 = vld [vmem:[%s1420 + $0x34] sm:$0xf]
    %v1435 = vld [vmem:[%s1420 + $0x38] sm:$0xf]
    %v1436 = vld [vmem:[%s1420 + $0x3c] sm:$0xf]
    %v1453 = vunpack.c.l.b16 %v1421
    %v1454 = vunpack.c.l.b16 %v1422
    %v1455 = vunpack.c.l.b16 %v1423
    %v1456 = vunpack.c.l.b16 %v1424
    %v1457 = vunpack.c.l.b16 %v1425
    %v1458 = vunpack.c.l.b16 %v1426
    %v1459 = vunpack.c.l.b16 %v1427
    %v1460 = vunpack.c.l.b16 %v1428
    %v1461 = vunpack.c.l.b16 %v1429
    %v1462 = vunpack.c.l.b16 %v1430
    %v1463 = vunpack.c.l.b16 %v1431
    %v1464 = vunpack.c.l.b16 %v1432
    %v1465 = vunpack.c.l.b16 %v1433
    %v1466 = vunpack.c.l.b16 %v1434
    %v1467 = vunpack.c.l.b16 %v1435
    %v1468 = vunpack.c.l.b16 %v1436
    %v1469 = vpack.c.b16 %v1454, %v1453
    %v1470 = vpack.c.b16 %v1456, %v1455
    %v1471 = vpack.c.b16 %v1458, %v1457
    %v1472 = vpack.c.b16 %v1460, %v1459
    %v1473 = vpack.c.b16 %v1462, %v1461
    %v1474 = vpack.c.b16 %v1464, %v1463
    %v1475 = vpack.c.b16 %v1466, %v1465
    %v1476 = vpack.c.b16 %v1468, %v1467
    %1485 = vmatprep.subr.bf16.mxu0 0
    %1486 = vmatpush1.bf16.msra.mxu0 %v1469
    %1487 = vmatprep.subr.bf16.mxu0 0
    %1488 = vmatpush1.bf16.msra.mxu0 %v1470
    %1489 = vmatprep.subr.bf16.mxu0 0
    %1490 = vmatpush1.bf16.msra.mxu0 %v1471
    %1491 = vmatprep.subr.bf16.mxu0 0
    %1492 = vmatpush1.bf16.msra.mxu0 %v1472
    %1493 = vmatprep.subr.bf16.mxu0 0
    %1494 = vmatpush1.bf16.msra.mxu0 %v1473
    %1495 = vmatprep.subr.bf16.mxu0 0
    %1496 = vmatpush1.bf16.msra.mxu0 %v1474
    %1497 = vmatprep.subr.bf16.mxu0 0
    %1498 = vmatpush1.bf16.msra.mxu0 %v1475
    %1499 = vmatprep.subr.bf16.mxu0 0
    %1500 = vmatpush1.bf16.msra.mxu0 %v1476
    %1501 = vmatprep.subr.bf16.mxu0 0
    %1502 = vmatpush1.bf16.msra.mxu0 0
    %1503 = vmatprep.subr.bf16.mxu0 0
    %1504 = vmatpush1.bf16.msra.mxu0 0
    %1505 = vmatprep.subr.bf16.mxu0 0
    %1506 = vmatpush1.bf16.msra.mxu0 0
    %1507 = vmatprep.subr.bf16.mxu0 0
    %1508 = vmatpush1.bf16.msra.mxu0 0
    %1509 = vmatprep.subr.bf16.mxu0 0
    %1510 = vmatpush1.bf16.msra.mxu0 0
    %1511 = vmatprep.subr.bf16.mxu0 0
    %1512 = vmatpush1.bf16.msra.mxu0 0
    %1513 = vmatprep.subr.bf16.mxu0 0
    %1514 = vmatpush1.bf16.msra.mxu0 0
    %1515 = vmatprep.subr.bf16.mxu0 0
    %1516 = vmatpush1.bf16.msra.mxu0 0
    %1517 = vmatprep.mubr.bf16.mxu0 0
    %1518 = vmatmul.mubr.bf16.gmra.mrb[0].mxu0 %v1412
    %v1519 = vpop.f32.mrb[0].mxu0
    %v1520 = vadd.f32 0.0, %v1519
    %v1521 = vpop.f32.mrb[0].mxu0
    %v1522 = vpop.f32.mrb[0].mxu0
    %v1523 = vadd.f32 0.0, %v1522
    %v1524 = vpop.f32.mrb[0].mxu0
    %1525 = vmatprep.mubr.bf16.mxu0 0
    %1526 = vmatmul.mubr.bf16.gmra.mrb[0].mxu0 %v1413
    %v1527 = vpop.f32.mrb[0].mxu0
    %v1528 = vadd.f32 0.0, %v1527
    %v1529 = vpop.f32.mrb[0].mxu0
    %v1530 = vpop.f32.mrb[0].mxu0
    %v1531 = vadd.f32 0.0, %v1530
    %v1532 = vpop.f32.mrb[0].mxu0
    %1533 = vmatprep.mubr.bf16.mxu0 0
    %1534 = vmatmul.mubr.bf16.gmra.mrb[0].mxu0 %v1414
    %v1535 = vpop.f32.mrb[0].mxu0
    %v1536 = vadd.f32 0.0, %v1535
    %v1537 = vpop.f32.mrb[0].mxu0
    %v1538 = vpop.f32.mrb[0].mxu0
    %v1539 = vadd.f32 0.0, %v1538
    %v1540 = vpop.f32.mrb[0].mxu0
    %1541 = vmatprep.mubr.bf16.mxu0 0
    %1542 = vmatmul.mubr.bf16.gmra.mrb[0].mxu0 %v1415
    %v1543 = vpop.f32.mrb[0].mxu0
    %v1544 = vadd.f32 0.0, %v1543
    %v1545 = vpop.f32.mrb[0].mxu0
    %v1546 = vpop.f32.mrb[0].mxu0
    %v1547 = vadd.f32 0.0, %v1546
    %v1548 = vpop.f32.mrb[0].mxu0
    %1549 = vmatprep.mubr.bf16.mxu0 0
    %1550 = vmatmul.mubr.bf16.gmra.mrb[0].mxu0 %v1416
    %v1551 = vpop.f32.mrb[0].mxu0
    %v1552 = vadd.f32 0.0, %v1551
    %v1553 = vpop.f32.mrb[0].mxu0
    %v1554 = vpop.f32.mrb[0].mxu0
    %v1555 = vadd.f32 0.0, %v1554
    %v1556 = vpop.f32.mrb[0].mxu0
    %1557 = vmatprep.mubr.bf16.mxu0 0
    %1558 = vmatmul.mubr.bf16.gmra.mrb[0].mxu0 %v1417
    %v1559 = vpop.f32.mrb[0].mxu0
    %v1560 = vadd.f32 0.0, %v1559
    %v1561 = vpop.f32.mrb[0].mxu0
    %v1562 = vpop.f32.mrb[0].mxu0
    %v1563 = vadd.f32 0.0, %v1562
    %v1564 = vpop.f32.mrb[0].mxu0
    %1565 = vmatprep.mubr.bf16.mxu0 0
    %1566 = vmatmul.mubr.bf16.gmra.mrb[0].mxu0 %v1418
    %v1567 = vpop.f32.mrb[0].mxu0
    %v1568 = vadd.f32 0.0, %v1567
    %v1569 = vpop.f32.mrb[0].mxu0
    %v1570 = vpop.f32.mrb[0].mxu0
    %v1571 = vadd.f32 0.0, %v1570
    %v1572 = vpop.f32.mrb[0].mxu0
    %1573 = vmatprep.mubr.bf16.mxu0 0
    %1574 = vmatmul.mubr.bf16.gmra.mrb[0].mxu0 %v1419
    %v1575 = vpop.f32.mrb[0].mxu0
    %v1576 = vadd.f32 0.0, %v1575
    %v1577 = vpop.f32.mrb[0].mxu0
    %v1578 = vpop.f32.mrb[0].mxu0
    %v1579 = vadd.f32 0.0, %v1578
    %v1580 = vpop.f32.mrb[0].mxu0
    %1581 = vdwg.mxu0
    %v1582 = vadd.f32 %v1380, %v1520
    %v1583 = vadd.f32 %v1381, %v1523
    %v1584 = vadd.f32 %v1382, %v1528
    %v1585 = vadd.f32 %v1383, %v1531
    %v1586 = vadd.f32 %v1384, %v1536
    %v1587 = vadd.f32 %v1385, %v1539
    %v1588 = vadd.f32 %v1386, %v1544
    %v1589 = vadd.f32 %v1387, %v1547
    %v1590 = vadd.f32 %v1388, %v1552
    %v1591 = vadd.f32 %v1389, %v1555
    %v1592 = vadd.f32 %v1390, %v1560
    %v1593 = vadd.f32 %v1391, %v1563
    %v1594 = vadd.f32 %v1392, %v1568
    %v1595 = vadd.f32 %v1393, %v1571
    %v1596 = vadd.f32 %v1394, %v1576
    %v1597 = vadd.f32 %v1395, %v1579
    %v1598 = vld [vmem:[%s1193 + $0x2] sm:$0xff]
    %v1599 = vld [vmem:[%s1193 + $0x12] sm:$0xff]
    %v1600 = vld [vmem:[%s1193 + $0x22] sm:$0xff]
    %v1601 = vld [vmem:[%s1193 + $0x32] sm:$0xff]
    %v1602 = vld [vmem:[%s1193 + $0x42] sm:$0xff]
    %v1603 = vld [vmem:[%s1193 + $0x52] sm:$0xff]
    %v1604 = vld [vmem:[%s1193 + $0x62] sm:$0xff]
    %v1605 = vld [vmem:[%s1193 + $0x72] sm:$0xff]
    %v1606 = vld [vmem:[%s1193 + $0xa2] sm:$0xff]
    %v1607 = vld [vmem:[%s1193 + $0xb2] sm:$0xff]
    %v1608 = vld [vmem:[%s1193 + $0xc2] sm:$0xff]
    %v1609 = vld [vmem:[%s1193 + $0xd2] sm:$0xff]
    %v1610 = vld [vmem:[%s1193 + $0xe2] sm:$0xff]
    %v1611 = vld [vmem:[%s1193 + $0xf2] sm:$0xff]
    %v1612 = vld [vmem:[%s1193 + $0x102] sm:$0xff]
    %v1613 = vld [vmem:[%s1193 + $0x112] sm:$0xff]
    %v1614 = vpack.c.bf16 %v1599, %v1598
    %v1615 = vpack.c.bf16 %v1601, %v1600
    %v1616 = vpack.c.bf16 %v1603, %v1602
    %v1617 = vpack.c.bf16 %v1605, %v1604
    %v1618 = vpack.c.bf16 %v1607, %v1606
    %v1619 = vpack.c.bf16 %v1609, %v1608
    %v1620 = vpack.c.bf16 %v1611, %v1610
    %v1621 = vpack.c.bf16 %v1613, %v1612
    %s1622 = scalar_lea.vmem %s1, 512
    %v1623 = vld [vmem:[%s1622] sm:$0xf]
    %v1624 = vld [vmem:[%s1622 + $0x4] sm:$0xf]
    %v1625 = vld [vmem:[%s1622 + $0x8] sm:$0xf]
    %v1626 = vld [vmem:[%s1622 + $0xc] sm:$0xf]
    %v1627 = vld [vmem:[%s1622 + $0x10] sm:$0xf]
    %v1628 = vld [vmem:[%s1622 + $0x14] sm:$0xf]
    %v1629 = vld [vmem:[%s1622 + $0x18] sm:$0xf]
    %v1630 = vld [vmem:[%s1622 + $0x1c] sm:$0xf]
    %v1631 = vld [vmem:[%s1622 + $0x20] sm:$0xf]
    %v1632 = vld [vmem:[%s1622 + $0x24] sm:$0xf]
    %v1633 = vld [vmem:[%s1622 + $0x28] sm:$0xf]
    %v1634 = vld [vmem:[%s1622 + $0x2c] sm:$0xf]
    %v1635 = vld [vmem:[%s1622 + $0x30] sm:$0xf]
    %v1636 = vld [vmem:[%s1622 + $0x34] sm:$0xf]
    %v1637 = vld [vmem:[%s1622 + $0x38] sm:$0xf]
    %v1638 = vld [vmem:[%s1622 + $0x3c] sm:$0xf]
    %v1655 = vunpack.c.l.b16 %v1623
    %v1656 = vunpack.c.l.b16 %v1624
    %v1657 = vunpack.c.l.b16 %v1625
    %v1658 = vunpack.c.l.b16 %v1626
    %v1659 = vunpack.c.l.b16 %v1627
    %v1660 = vunpack.c.l.b16 %v1628
    %v1661 = vunpack.c.l.b16 %v1629
    %v1662 = vunpack.c.l.b16 %v1630
    %v1663 = vunpack.c.l.b16 %v1631
    %v1664 = vunpack.c.l.b16 %v1632
    %v1665 = vunpack.c.l.b16 %v1633
    %v1666 = vunpack.c.l.b16 %v1634
    %v1667 = vunpack.c.l.b16 %v1635
    %v1668 = vunpack.c.l.b16 %v1636
    %v1669 = vunpack.c.l.b16 %v1637
    %v1670 = vunpack.c.l.b16 %v1638
    %v1671 = vpack.c.b16 %v1656, %v1655
    %v1672 = vpack.c.b16 %v1658, %v1657
    %v1673 = vpack.c.b16 %v1660, %v1659
    %v1674 = vpack.c.b16 %v1662, %v1661
    %v1675 = vpack.c.b16 %v1664, %v1663
    %v1676 = vpack.c.b16 %v1666, %v1665
    %v1677 = vpack.c.b16 %v1668, %v1667
    %v1678 = vpack.c.b16 %v1670, %v1669
    %1687 = vmatprep.subr.bf16.mxu0 0
    %1688 = vmatpush1.bf16.msra.mxu0 %v1671
    %1689 = vmatprep.subr.bf16.mxu0 0
    %1690 = vmatpush1.bf16.msra.mxu0 %v1672
    %1691 = vmatprep.subr.bf16.mxu0 0
    %1692 = vmatpush1.bf16.msra.mxu0 %v1673
    %1693 = vmatprep.subr.bf16.mxu0 0
    %1694 = vmatpush1.bf16.msra.mxu0 %v1674
    %1695 = vmatprep.subr.bf16.mxu0 0
    %1696 = vmatpush1.bf16.msra.mxu0 %v1675
    %1697 = vmatprep.subr.bf16.mxu0 0
    %1698 = vmatpush1.bf16.msra.mxu0 %v1676
    %1699 = vmatprep.subr.bf16.mxu0 0
    %1700 = vmatpush1.bf16.msra.mxu0 %v1677
    %1701 = vmatprep.subr.bf16.mxu0 0
    %1702 = vmatpush1.bf16.msra.mxu0 %v1678
    %1703 = vmatprep.subr.bf16.mxu0 0
    %1704 = vmatpush1.bf16.msra.mxu0 0
    %1705 = vmatprep.subr.bf16.mxu0 0
    %1706 = vmatpush1.bf16.msra.mxu0 0
    %1707 = vmatprep.subr.bf16.mxu0 0
    %1708 = vmatpush1.bf16.msra.mxu0 0
    %1709 = vmatprep.subr.bf16.mxu0 0
    %1710 = vmatpush1.bf16.msra.mxu0 0
    %1711 = vmatprep.subr.bf16.mxu0 0
    %1712 = vmatpush1.bf16.msra.mxu0 0
    %1713 = vmatprep.subr.bf16.mxu0 0
    %1714 = vmatpush1.bf16.msra.mxu0 0
    %1715 = vmatprep.subr.bf16.mxu0 0
    %1716 = vmatpush1.bf16.msra.mxu0 0
    %1717 = vmatprep.subr.bf16.mxu0 0
    %1718 = vmatpush1.bf16.msra.mxu0 0
    %1719 = vmatprep.mubr.bf16.mxu0 0
    %1720 = vmatmul.mubr.bf16.gmra.mrb[0].mxu0 %v1614
    %v1721 = vpop.f32.mrb[0].mxu0
    %v1722 = vadd.f32 0.0, %v1721
    %v1723 = vpop.f32.mrb[0].mxu0
    %v1724 = vpop.f32.mrb[0].mxu0
    %v1725 = vadd.f32 0.0, %v1724
    %v1726 = vpop.f32.mrb[0].mxu0
    %1727 = vmatprep.mubr.bf16.mxu0 0
    %1728 = vmatmul.mubr.bf16.gmra.mrb[0].mxu0 %v1615
    %v1729 = vpop.f32.mrb[0].mxu0
    %v1730 = vadd.f32 0.0, %v1729
    %v1731 = vpop.f32.mrb[0].mxu0
    %v1732 = vpop.f32.mrb[0].mxu0
    %v1733 = vadd.f32 0.0, %v1732
    %v1734 = vpop.f32.mrb[0].mxu0
    %1735 = vmatprep.mubr.bf16.mxu0 0
    %1736 = vmatmul.mubr.bf16.gmra.mrb[0].mxu0 %v1616
    %v1737 = vpop.f32.mrb[0].mxu0
    %v1738 = vadd.f32 0.0, %v1737
    %v1739 = vpop.f32.mrb[0].mxu0
    %v1740 = vpop.f32.mrb[0].mxu0
    %v1741 = vadd.f32 0.0, %v1740
    %v1742 = vpop.f32.mrb[0].mxu0
    %1743 = vmatprep.mubr.bf16.mxu0 0
    %1744 = vmatmul.mubr.bf16.gmra.mrb[0].mxu0 %v1617
    %v1745 = vpop.f32.mrb[0].mxu0
    %v1746 = vadd.f32 0.0, %v1745
    %v1747 = vpop.f32.mrb[0].mxu0
    %v1748 = vpop.f32.mrb[0].mxu0
    %v1749 = vadd.f32 0.0, %v1748
    %v1750 = vpop.f32.mrb[0].mxu0
    %1751 = vmatprep.mubr.bf16.mxu0 0
    %1752 = vmatmul.mubr.bf16.gmra.mrb[0].mxu0 %v1618
    %v1753 = vpop.f32.mrb[0].mxu0
    %v1754 = vadd.f32 0.0, %v1753
    %v1755 = vpop.f32.mrb[0].mxu0
    %v1756 = vpop.f32.mrb[0].mxu0
    %v1757 = vadd.f32 0.0, %v1756
    %v1758 = vpop.f32.mrb[0].mxu0
    %1759 = vmatprep.mubr.bf16.mxu0 0
    %1760 = vmatmul.mubr.bf16.gmra.mrb[0].mxu0 %v1619
    %v1761 = vpop.f32.mrb[0].mxu0
    %v1762 = vadd.f32 0.0, %v1761
    %v1763 = vpop.f32.mrb[0].mxu0
    %v1764 = vpop.f32.mrb[0].mxu0
    %v1765 = vadd.f32 0.0, %v1764
    %v1766 = vpop.f32.mrb[0].mxu0
    %1767 = vmatprep.mubr.bf16.mxu0 0
    %1768 = vmatmul.mubr.bf16.gmra.mrb[0].mxu0 %v1620
    %v1769 = vpop.f32.mrb[0].mxu0
    %v1770 = vadd.f32 0.0, %v1769
    %v1771 = vpop.f32.mrb[0].mxu0
    %v1772 = vpop.f32.mrb[0].mxu0
    %v1773 = vadd.f32 0.0, %v1772
    %v1774 = vpop.f32.mrb[0].mxu0
    %1775 = vmatprep.mubr.bf16.mxu0 0
    %1776 = vmatmul.mubr.bf16.gmra.mrb[0].mxu0 %v1621
    %v1777 = vpop.f32.mrb[0].mxu0
    %v1778 = vadd.f32 0.0, %v1777
    %v1779 = vpop.f32.mrb[0].mxu0
    %v1780 = vpop.f32.mrb[0].mxu0
    %v1781 = vadd.f32 0.0, %v1780
    %v1782 = vpop.f32.mrb[0].mxu0
    %1783 = vdwg.mxu0
    %v1784 = vadd.f32 %v1582, %v1722
    %v1785 = vadd.f32 %v1583, %v1725
    %v1786 = vadd.f32 %v1584, %v1730
    %v1787 = vadd.f32 %v1585, %v1733
    %v1788 = vadd.f32 %v1586, %v1738
    %v1789 = vadd.f32 %v1587, %v1741
    %v1790 = vadd.f32 %v1588, %v1746
    %v1791 = vadd.f32 %v1589, %v1749
    %v1792 = vadd.f32 %v1590, %v1754
    %v1793 = vadd.f32 %v1591, %v1757
    %v1794 = vadd.f32 %v1592, %v1762
    %v1795 = vadd.f32 %v1593, %v1765
    %v1796 = vadd.f32 %v1594, %v1770
    %v1797 = vadd.f32 %v1595, %v1773
    %v1798 = vadd.f32 %v1596, %v1778
    %v1799 = vadd.f32 %v1597, %v1781
    %p1800 = scmp.eq.s32.totalorder 0, 0
    // Predicated region
    $region10: #{densenet_fpn_forward.9} parent=1 // pred_check
      %p1801 = pneg %p1800
    $region11: #{densenet_fpn_forward.9} parent=1 // pred_check_branch
      %1803 = sbr.rel (%p1801) target = $region13
    $region12: #{densenet_fpn_forward.9} parent=1 // pred_region
      %1804 = vst [vmem:[#allocation2] sm:$0xff] %v1784
      %1805 = vst [vmem:[#allocation2 + $0x8] sm:$0xff] %v1785
      %1806 = vst [vmem:[#allocation2 + $0x10] sm:$0xff] %v1786
      %1807 = vst [vmem:[#allocation2 + $0x18] sm:$0xff] %v1787
      %1808 = vst [vmem:[#allocation2 + $0x20] sm:$0xff] %v1788
      %1809 = vst [vmem:[#allocation2 + $0x28] sm:$0xff] %v1789
      %1810 = vst [vmem:[#allocation2 + $0x30] sm:$0xff] %v1790
      %1811 = vst [vmem:[#allocation2 + $0x38] sm:$0xff] %v1791
      %1812 = vst [vmem:[#allocation2 + $0x40] sm:$0xff] %v1792
      %1813 = vst [vmem:[#allocation2 + $0x48] sm:$0xff] %v1793
      %1814 = vst [vmem:[#allocation2 + $0x50] sm:$0xff] %v1794
      %1815 = vst [vmem:[#allocation2 + $0x58] sm:$0xff] %v1795
      %1816 = vst [vmem:[#allocation2 + $0x60] sm:$0xff] %v1796
      %1817 = vst [vmem:[#allocation2 + $0x68] sm:$0xff] %v1797
      %1818 = vst [vmem:[#allocation2 + $0x70] sm:$0xff] %v1798
      %1819 = vst [vmem:[#allocation2 + $0x78] sm:$0xff] %v1799
    $region13: #{densenet_fpn_forward.9} parent=1 // pred_fallthru
      _
    %p1820 = scmp.gt.s32.totalorder 0, 0
    // Predicated region
    $region14: #{densenet_fpn_forward.9} parent=1 // pred_check
      %p1821 = pneg %p1820
    $region15: #{densenet_fpn_forward.9} parent=1 // pred_check_branch
      %1823 = sbr.rel (%p1821) target = $region17
    $region16: #{densenet_fpn_forward.9} parent=1 // pred_region
      %v1824 = vld [vmem:[#allocation2] sm:$0xff]
      %v1825 = vld [vmem:[#allocation2 + $0x8] sm:$0xff]
      %v1826 = vld [vmem:[#allocation2 + $0x10] sm:$0xff]
      %v1827 = vld [vmem:[#allocation2 + $0x18] sm:$0xff]
      %v1828 = vld [vmem:[#allocation2 + $0x20] sm:$0xff]
      %v1829 = vld [vmem:[#allocation2 + $0x28] sm:$0xff]
      %v1830 = vld [vmem:[#allocation2 + $0x30] sm:$0xff]
      %v1831 = vld [vmem:[#allocation2 + $0x38] sm:$0xff]
      %v1832 = vld [vmem:[#allocation2 + $0x40] sm:$0xff]
      %v1833 = vld [vmem:[#allocation2 + $0x48] sm:$0xff]
      %v1834 = vld [vmem:[#allocation2 + $0x50] sm:$0xff]
      %v1835 = vld [vmem:[#allocation2 + $0x58] sm:$0xff]
      %v1836 = vld [vmem:[#allocation2 + $0x60] sm:$0xff]
      %v1837 = vld [vmem:[#allocation2 + $0x68] sm:$0xff]
      %v1838 = vld [vmem:[#allocation2 + $0x70] sm:$0xff]
      %v1839 = vld [vmem:[#allocation2 + $0x78] sm:$0xff]
      %v1840 = vadd.f32 %v1824, %v1784
      %v1841 = vadd.f32 %v1825, %v1785
      %v1842 = vadd.f32 %v1826, %v1786
      %v1843 = vadd.f32 %v1827, %v1787
      %v1844 = vadd.f32 %v1828, %v1788
      %v1845 = vadd.f32 %v1829, %v1789
      %v1846 = vadd.f32 %v1830, %v1790
      %v1847 = vadd.f32 %v1831, %v1791
      %v1848 = vadd.f32 %v1832, %v1792
      %v1849 = vadd.f32 %v1833, %v1793
      %v1850 = vadd.f32 %v1834, %v1794
      %v1851 = vadd.f32 %v1835, %v1795
      %v1852 = vadd.f32 %v1836, %v1796
      %v1853 = vadd.f32 %v1837, %v1797
      %v1854 = vadd.f32 %v1838, %v1798
      %v1855 = vadd.f32 %v1839, %v1799
      %1856 = vst [vmem:[#allocation2] sm:$0xff] %v1840
      %1857 = vst [vmem:[#allocation2 + $0x8] sm:$0xff] %v1841
      %1858 = vst [vmem:[#allocation2 + $0x10] sm:$0xff] %v1842
      %1859 = vst [vmem:[#allocation2 + $0x18] sm:$0xff] %v1843
      %1860 = vst [vmem:[#allocation2 + $0x20] sm:$0xff] %v1844
      %1861 = vst [vmem:[#allocation2 + $0x28] sm:$0xff] %v1845
      %1862 = vst [vmem:[#allocation2 + $0x30] sm:$0xff] %v1846
      %1863 = vst [vmem:[#allocation2 + $0x38] sm:$0xff] %v1847
      %1864 = vst [vmem:[#allocation2 + $0x40] sm:$0xff] %v1848
      %1865 = vst [vmem:[#allocation2 + $0x48] sm:$0xff] %v1849
      %1866 = vst [vmem:[#allocation2 + $0x50] sm:$0xff] %v1850
      %1867 = vst [vmem:[#allocation2 + $0x58] sm:$0xff] %v1851
      %1868 = vst [vmem:[#allocation2 + $0x60] sm:$0xff] %v1852
      %1869 = vst [vmem:[#allocation2 + $0x68] sm:$0xff] %v1853
      %1870 = vst [vmem:[#allocation2 + $0x70] sm:$0xff] %v1854
      %1871 = vst [vmem:[#allocation2 + $0x78] sm:$0xff] %v1855
    $region17: #{densenet_fpn_forward.9} parent=1 // pred_fallthru
      _
    // Predicated region
    $region18: #{densenet_fpn_forward.9} parent=1 // pred_check
      %p1872 = pneg %p1800
    $region19: #{densenet_fpn_forward.9} parent=1 // pred_check_branch
      %1874 = sbr.rel (%p1872) target = $region21
    $region20: #{densenet_fpn_forward.9} parent=1 // pred_region
      %v1875 = vld [vmem:[#allocation2] sm:$0xff]
      %v1876 = vld [vmem:[#allocation2 + $0x8] sm:$0xff]
      %v1877 = vld [vmem:[#allocation2 + $0x10] sm:$0xff]
      %v1878 = vld [vmem:[#allocation2 + $0x18] sm:$0xff]
      %v1879 = vld [vmem:[#allocation2 + $0x20] sm:$0xff]
      %v1880 = vld [vmem:[#allocation2 + $0x28] sm:$0xff]
      %v1881 = vld [vmem:[#allocation2 + $0x30] sm:$0xff]
      %v1882 = vld [vmem:[#allocation2 + $0x38] sm:$0xff]
      %v1883 = vld [vmem:[#allocation2 + $0x40] sm:$0xff]
      %v1884 = vld [vmem:[#allocation2 + $0x48] sm:$0xff]
      %v1885 = vld [vmem:[#allocation2 + $0x50] sm:$0xff]
      %v1886 = vld [vmem:[#allocation2 + $0x58] sm:$0xff]
      %v1887 = vld [vmem:[#allocation2 + $0x60] sm:$0xff]
      %v1888 = vld [vmem:[#allocation2 + $0x68] sm:$0xff]
      %v1889 = vld [vmem:[#allocation2 + $0x70] sm:$0xff]
      %v1890 = vld [vmem:[#allocation2 + $0x78] sm:$0xff]
      %1891 = vst [vmem:[#allocation2] sm:$0xff] %v1875
      %1892 = vst [vmem:[#allocation2 + $0x8] sm:$0xff] %v1876
      %1893 = vst [vmem:[#allocation2 + $0x10] sm:$0xff] %v1877
      %1894 = vst [vmem:[#allocation2 + $0x18] sm:$0xff] %v1878
      %1895 = vst [vmem:[#allocation2 + $0x20] sm:$0xff] %v1879
      %1896 = vst [vmem:[#allocation2 + $0x28] sm:$0xff] %v1880
      %1897 = vst [vmem:[#allocation2 + $0x30] sm:$0xff] %v1881
      %1898 = vst [vmem:[#allocation2 + $0x38] sm:$0xff] %v1882
      %1899 = vst [vmem:[#allocation2 + $0x40] sm:$0xff] %v1883
      %1900 = vst [vmem:[#allocation2 + $0x48] sm:$0xff] %v1884
      %1901 = vst [vmem:[#allocation2 + $0x50] sm:$0xff] %v1885
      %1902 = vst [vmem:[#allocation2 + $0x58] sm:$0xff] %v1886
      %1903 = vst [vmem:[#allocation2 + $0x60] sm:$0xff] %v1887
      %1904 = vst [vmem:[#allocation2 + $0x68] sm:$0xff] %v1888
      %1905 = vst [vmem:[#allocation2 + $0x70] sm:$0xff] %v1889
      %1906 = vst [vmem:[#allocation2 + $0x78] sm:$0xff] %v1890
    $region21: #{densenet_fpn_forward.9} parent=1 // pred_fallthru
      _
    // Predicated region
    $region22: #{densenet_fpn_forward.9} parent=1 // pred_check
      _
    $region23: #{densenet_fpn_forward.9} parent=1 // pred_check_branch
      %1908 = sbr.rel (0) target = $region25
    $region24: #{densenet_fpn_forward.9} parent=1 // pred_region
      %s1910 = ssub.s32 2048, 2048
      %1911 = vsyncadd [#allocation3], %s1910
      %s1912 = sshll.u32 [#allocation2], 4
      %s1913 = int_to_ptr.vmem [resolvable:$true] %s1912
      %1918 = dma.vmem_to_hbm [thread:$0]  %s1913, 2048, %s2, [#allocation3], 128, 128, 8
    $region25: #{densenet_fpn_forward.9} parent=1 // pred_fallthru
      _
    // Predicated region
    $region26: #{densenet_fpn_forward.9} parent=1 // pred_check
      _
    $region27: #{densenet_fpn_forward.9} parent=1 // pred_check_branch
      %1920 = sbr.rel (0) target = $region29
    $region28: #{densenet_fpn_forward.9} parent=1 // pred_region
      %1921 = dma.done [#allocation3], 2048
    $region29: #{densenet_fpn_forward.9} parent=1 // pred_fallthru
      _
    %1922 = vsyncpa [#allocation3], 1

// kernel: densenet_fpn_forward.11
$region0: #{densenet_fpn_forward.11}
  #allocation0 [shape = 'u32[]', space=smem, size = 0x4, offset = 0x4, fixed_abs, tag = 'smem constant byte address 0x4 - core index']
  #allocation1 [shape = 'u32[144,128]{1,0:T(1,128)}', space=vmem, size = 0x12000, scoped, tag = 'internal scratch']
  %s0 = inlined_call_operand.vmem [shape: f32[2,10,10,128], index: 0, kind: input, shape index: {}]
  %s1 = inlined_call_operand.vmem [shape: bf16[3,3,128,128], index: 1, kind: input, shape index: {}]
  %s2 = inlined_call_operand.vmem [shape: f32[128,128], index: 2, kind: output, shape index: {}]
  %s3 = sld [smem:[#allocation0]]
  $region30: #{densenet_fpn_forward.11} parent=0
    _
  %s5 = ssub.s32 1, %s3
  %s6 = scalar_select 0, %s5, %s3
  // Predicated region
  $region2: #{densenet_fpn_forward.11} parent=0 // pred_check
    _
  $region3: #{densenet_fpn_forward.11} parent=0 // pred_check_branch
    %8 = sbr.rel (0) target = $region5
  $region4: #{densenet_fpn_forward.11} parent=0 // pred_region
    _
  $region5: #{densenet_fpn_forward.11} parent=0 // pred_fallthru
    _
  // Predicated region
  $region6: #{densenet_fpn_forward.11} parent=0 // pred_check
    _
  $region7: #{densenet_fpn_forward.11} parent=0 // pred_check_branch
    %10 = sbr.rel (0) target = $region9
  $region8: #{densenet_fpn_forward.11} parent=0 // pred_region
    _
  $region9: #{densenet_fpn_forward.11} parent=0 // pred_fallthru
    _
  %v12 = vld [vmem:[%s0] sm:$0xff]
  %v13 = vld [vmem:[%s0 + $0x10] sm:$0xff]
  %v14 = vld [vmem:[%s0 + $0x20] sm:$0xff]
  %v15 = vld [vmem:[%s0 + $0x30] sm:$0xff]
  %v16 = vld [vmem:[%s0 + $0x40] sm:$0xff]
  %v17 = vld [vmem:[%s0 + $0x50] sm:$0xff]
  %v18 = vld [vmem:[%s0 + $0x60] sm:$0xff]
  %v19 = vld [vmem:[%s0 + $0x70] sm:$0xff]
  %v20 = vld [vmem:[%s0 + $0xa0] sm:$0xff]
  %v21 = vld [vmem:[%s0 + $0xb0] sm:$0xff]
  %v22 = vld [vmem:[%s0 + $0xc0] sm:$0xff]
  %v23 = vld [vmem:[%s0 + $0xd0] sm:$0xff]
  %v24 = vld [vmem:[%s0 + $0xe0] sm:$0xff]
  %v25 = vld [vmem:[%s0 + $0xf0] sm:$0xff]
  %v26 = vld [vmem:[%s0 + $0x100] sm:$0xff]
  %v27 = vld [vmem:[%s0 + $0x110] sm:$0xff]
  %v28 = vpack.c.bf16 %v13, %v12
  %v29 = vpack.c.bf16 %v15, %v14
  %v30 = vpack.c.bf16 %v17, %v16
  %v31 = vpack.c.bf16 %v19, %v18
  %v32 = vpack.c.bf16 %v21, %v20
  %v33 = vpack.c.bf16 %v23, %v22
  %v34 = vpack.c.bf16 %v25, %v24
  %v35 = vpack.c.bf16 %v27, %v26
  %v36 = vld [vmem:[%s1] sm:$0xf]
  %v37 = vld [vmem:[%s1 + $0x4] sm:$0xf]
  %v38 = vld [vmem:[%s1 + $0x8] sm:$0xf]
  %v39 = vld [vmem:[%s1 + $0xc] sm:$0xf]
  %v40 = vld [vmem:[%s1 + $0x10] sm:$0xf]
  %v41 = vld [vmem:[%s1 + $0x14] sm:$0xf]
  %v42 = vld [vmem:[%s1 + $0x18] sm:$0xf]
  %v43 = vld [vmem:[%s1 + $0x1c] sm:$0xf]
  %v44 = vld [vmem:[%s1 + $0x20] sm:$0xf]
  %v45 = vld [vmem:[%s1 + $0x24] sm:$0xf]
  %v46 = vld [vmem:[%s1 + $0x28] sm:$0xf]
  %v47 = vld [vmem:[%s1 + $0x2c] sm:$0xf]
  %v48 = vld [vmem:[%s1 + $0x30] sm:$0xf]
  %v49 = vld [vmem:[%s1 + $0x34] sm:$0xf]
  %v50 = vld [vmem:[%s1 + $0x38] sm:$0xf]
  %v51 = vld [vmem:[%s1 + $0x3c] sm:$0xf]
  %v52 = vld [vmem:[%s0 + $0x1] sm:$0xff]
  %v53 = vld [vmem:[%s0 + $0x11] sm:$0xff]
  %v54 = vld [vmem:[%s0 + $0x21] sm:$0xff]
  %v55 = vld [vmem:[%s0 + $0x31] sm:$0xff]
  %v56 = vld [vmem:[%s0 + $0x41] sm:$0xff]
  %v57 = vld [vmem:[%s0 + $0x51] sm:$0xff]
  %v58 = vld [vmem:[%s0 + $0x61] sm:$0xff]
  %v59 = vld [vmem:[%s0 + $0x71] sm:$0xff]
  %v60 = vld [vmem:[%s0 + $0xa1] sm:$0xff]
  %v61 = vld [vmem:[%s0 + $0xb1] sm:$0xff]
  %v62 = vld [vmem:[%s0 + $0xc1] sm:$0xff]
  %v63 = vld [vmem:[%s0 + $0xd1] sm:$0xff]
  %v64 = vld [vmem:[%s0 + $0xe1] sm:$0xff]
  %v65 = vld [vmem:[%s0 + $0xf1] sm:$0xff]
  %v66 = vld [vmem:[%s0 + $0x101] sm:$0xff]
  %v67 = vld [vmem:[%s0 + $0x111] sm:$0xff]
  %v68 = vpack.c.bf16 %v53, %v52
  %v69 = vpack.c.bf16 %v55, %v54
  %v70 = vpack.c.bf16 %v57, %v56
  %v71 = vpack.c.bf16 %v59, %v58
  %v72 = vpack.c.bf16 %v61, %v60
  %v73 = vpack.c.bf16 %v63, %v62
  %v74 = vpack.c.bf16 %v65, %v64
  %v75 = vpack.c.bf16 %v67, %v66
  %s76 = scalar_lea.vmem %s1, 64
  %v77 = vld [vmem:[%s76] sm:$0xf]
  %v78 = vld [vmem:[%s76 + $0x4] sm:$0xf]
  %v79 = vld [vmem:[%s76 + $0x8] sm:$0xf]
  %v80 = vld [vmem:[%s76 + $0xc] sm:$0xf]
  %v81 = vld [vmem:[%s76 + $0x10] sm:$0xf]
  %v82 = vld [vmem:[%s76 + $0x14] sm:$0xf]
  %v83 = vld [vmem:[%s76 + $0x18] sm:$0xf]
  %v84 = vld [vmem:[%s76 + $0x1c] sm:$0xf]
  %v85 = vld [vmem:[%s76 + $0x20] sm:$0xf]
  %v86 = vld [vmem:[%s76 + $0x24] sm:$0xf]
  %v87 = vld [vmem:[%s76 + $0x28] sm:$0xf]
  %v88 = vld [vmem:[%s76 + $0x2c] sm:$0xf]
  %v89 = vld [vmem:[%s76 + $0x30] sm:$0xf]
  %v90 = vld [vmem:[%s76 + $0x34] sm:$0xf]
  %v91 = vld [vmem:[%s76 + $0x38] sm:$0xf]
  %v92 = vld [vmem:[%s76 + $0x3c] sm:$0xf]
  %v109 = vunpack.c.l.b16 %v77
  %v110 = vunpack.c.l.b16 %v78
  %v111 = vunpack.c.l.b16 %v79
  %v112 = vunpack.c.l.b16 %v80
  %v113 = vunpack.c.l.b16 %v81
  %v114 = vunpack.c.l.b16 %v82
  %v115 = vunpack.c.l.b16 %v83
  %v116 = vunpack.c.l.b16 %v84
  %v117 = vunpack.c.l.b16 %v85
  %v118 = vunpack.c.l.b16 %v86
  %v119 = vunpack.c.l.b16 %v87
  %v120 = vunpack.c.l.b16 %v88
  %v121 = vunpack.c.l.b16 %v89
  %v122 = vunpack.c.l.b16 %v90
  %v123 = vunpack.c.l.b16 %v91
  %v124 = vunpack.c.l.b16 %v92
  %v125 = vpack.c.b16 %v110, %v109
  %v126 = vpack.c.b16 %v112, %v111
  %v127 = vpack.c.b16 %v114, %v113
  %v128 = vpack.c.b16 %v116, %v115
  %v129 = vpack.c.b16 %v118, %v117
  %v130 = vpack.c.b16 %v120, %v119
  %v131 = vpack.c.b16 %v122, %v121
  %v132 = vpack.c.b16 %v124, %v123
  %141 = vmatprep.subr.bf16.mxu0 0
  %142 = vmatpush1.bf16.msra.mxu0 %v125
  %143 = vmatprep.subr.bf16.mxu0 0
  %144 = vmatpush1.bf16.msra.mxu0 %v126
  %145 = vmatprep.subr.bf16.mxu0 0
  %146 = vmatpush1.bf16.msra.mxu0 %v127
  %147 = vmatprep.subr.bf16.mxu0 0
  %148 = vmatpush1.bf16.msra.mxu0 %v128
  %149 = vmatprep.subr.bf16.mxu0 0
  %150 = vmatpush1.bf16.msra.mxu0 %v129
  %151 = vmatprep.subr.bf16.mxu0 0
  %152 = vmatpush1.bf16.msra.mxu0 %v130
  %153 = vmatprep.subr.bf16.mxu0 0
  %154 = vmatpush1.bf16.msra.mxu0 %v131
  %155 = vmatprep.subr.bf16.mxu0 0
  %156 = vmatpush1.bf16.msra.mxu0 %v132
  %157 = vmatprep.subr.bf16.mxu0 0
  %158 = vmatpush1.bf16.msra.mxu0 0
  %159 = vmatprep.subr.bf16.mxu0 0
  %160 = vmatpush1.bf16.msra.mxu0 0
  %161 = vmatprep.subr.bf16.mxu0 0
  %162 = vmatpush1.bf16.msra.mxu0 0
  %163 = vmatprep.subr.bf16.mxu0 0
  %164 = vmatpush1.bf16.msra.mxu0 0
  %165 = vmatprep.subr.bf16.mxu0 0
  %166 = vmatpush1.bf16.msra.mxu0 0
  %167 = vmatprep.subr.bf16.mxu0 0
  %168 = vmatpush1.bf16.msra.mxu0 0
  %169 = vmatprep.subr.bf16.mxu0 0
  %170 = vmatpush1.bf16.msra.mxu0 0
  %171 = vmatprep.subr.bf16.mxu0 0
  %172 = vmatpush1.bf16.msra.mxu0 0
  %173 = vmatprep.mubr.bf16.mxu0 0
  %174 = vmatmul.mubr.bf16.gmra.mrb[0].mxu0 %v68
  %v175 = vpop.f32.mrb[0].mxu0
  %v176 = vadd.f32 0.0, %v175
  %v177 = vpop.f32.mrb[0].mxu0
  %v178 = vpop.f32.mrb[0].mxu0
  %v179 = vadd.f32 0.0, %v178
  %v180 = vpop.f32.mrb[0].mxu0
  %181 = vmatprep.mubr.bf16.mxu0 0
  %182 = vmatmul.mubr.bf16.gmra.mrb[0].mxu0 %v69
  %v183 = vpop.f32.mrb[0].mxu0
  %v184 = vadd.f32 0.0, %v183
  %v185 = vpop.f32.mrb[0].mxu0
  %v186 = vpop.f32.mrb[0].mxu0
  %v187 = vadd.f32 0.0, %v186
  %v188 = vpop.f32.mrb[0].mxu0
  %189 = vmatprep.mubr.bf16.mxu0 0
  %190 = vmatmul.mubr.bf16.gmra.mrb[0].mxu0 %v70
  %v191 = vpop.f32.mrb[0].mxu0
  %v192 = vadd.f32 0.0, %v191
  %v193 = vpop.f32.mrb[0].mxu0
  %v194 = vpop.f32.mrb[0].mxu0
  %v195 = vadd.f32 0.0, %v194
  %v196 = vpop.f32.mrb[0].mxu0
  %197 = vmatprep.mubr.bf16.mxu0 0
  %198 = vmatmul.mubr.bf16.gmra.mrb[0].mxu0 %v71
  %v199 = vpop.f32.mrb[0].mxu0
  %v200 = vadd.f32 0.0, %v199
  %v201 = vpop.f32.mrb[0].mxu0
  %v202 = vpop.f32.mrb[0].mxu0
  %v203 = vadd.f32 0.0, %v202
  %v204 = vpop.f32.mrb[0].mxu0
  %205 = vmatprep.mubr.bf16.mxu0 0
  %206 = vmatmul.mubr.bf16.gmra.mrb[0].mxu0 %v72
  %v207 = vpop.f32.mrb[0].mxu0
  %v208 = vadd.f32 0.0, %v207
  %v209 = vpop.f32.mrb[0].mxu0
  %v210 = vpop.f32.mrb[0].mxu0
  %v211 = vadd.f32 0.0, %v210
  %v212 = vpop.f32.mrb[0].mxu0
  %213 = vmatprep.mubr.bf16.mxu0 0
  %214 = vmatmul.mubr.bf16.gmra.mrb[0].mxu0 %v73
  %v215 = vpop.f32.mrb[0].mxu0
  %v216 = vadd.f32 0.0, %v215
  %v217 = vpop.f32.mrb[0].mxu0
  %v218 = vpop.f32.mrb[0].mxu0
  %v219 = vadd.f32 0.0, %v218
  %v220 = vpop.f32.mrb[0].mxu0
  %221 = vmatprep.mubr.bf16.mxu0 0
  %222 = vmatmul.mubr.bf16.gmra.mrb[0].mxu0 %v74
  %v223 = vpop.f32.mrb[0].mxu0
  %v224 = vadd.f32 0.0, %v223
  %v225 = vpop.f32.mrb[0].mxu0
  %v226 = vpop.f32.mrb[0].mxu0
  %v227 = vadd.f32 0.0, %v226
  %v228 = vpop.f32.mrb[0].mxu0
  %229 = vmatprep.mubr.bf16.mxu0 0
  %230 = vmatmul.mubr.bf16.gmra.mrb[0].mxu0 %v75
  %v231 = vpop.f32.mrb[0].mxu0
  %v232 = vadd.f32 0.0, %v231
  %v233 = vpop.f32.mrb[0].mxu0
  %v234 = vpop.f32.mrb[0].mxu0
  %v235 = vadd.f32 0.0, %v234
  %v236 = vpop.f32.mrb[0].mxu0
  %237 = vdwg.mxu0
  %v254 = vunpack.c.l.b16 %v36
  %v255 = vunpack.c.l.b16 %v37
  %v256 = vunpack.c.l.b16 %v38
  %v257 = vunpack.c.l.b16 %v39
  %v258 = vunpack.c.l.b16 %v40
  %v259 = vunpack.c.l.b16 %v41
  %v260 = vunpack.c.l.b16 %v42
  %v261 = vunpack.c.l.b16 %v43
  %v262 = vunpack.c.l.b16 %v44
  %v263 = vunpack.c.l.b16 %v45
  %v264 = vunpack.c.l.b16 %v46
  %v265 = vunpack.c.l.b16 %v47
  %v266 = vunpack.c.l.b16 %v48
  %v267 = vunpack.c.l.b16 %v49
  %v268 = vunpack.c.l.b16 %v50
  %v269 = vunpack.c.l.b16 %v51
  %v270 = vpack.c.b16 %v255, %v254
  %v271 = vpack.c.b16 %v257, %v256
  %v272 = vpack.c.b16 %v259, %v258
  %v273 = vpack.c.b16 %v261, %v260
  %v274 = vpack.c.b16 %v263, %v262
  %v275 = vpack.c.b16 %v265, %v264
  %v276 = vpack.c.b16 %v267, %v266
  %v277 = vpack.c.b16 %v269, %v268
  %286 = vmatprep.subr.bf16.mxu0 0
  %287 = vmatpush1.bf16.msra.mxu0 %v270
  %288 = vmatprep.subr.bf16.mxu0 0
  %289 = vmatpush1.bf16.msra.mxu0 %v271
  %290 = vmatprep.subr.bf16.mxu0 0
  %291 = vmatpush1.bf16.msra.mxu0 %v272
  %292 = vmatprep.subr.bf16.mxu0 0
  %293 = vmatpush1.bf16.msra.mxu0 %v273
  %294 = vmatprep.subr.bf16.mxu0 0
  %295 = vmatpush1.bf16.msra.mxu0 %v274
  %296 = vmatprep.subr.bf16.mxu0 0
  %297 = vmatpush1.bf16.msra.mxu0 %v275
  %298 = vmatprep.subr.bf16.mxu0 0
  %299 = vmatpush1.bf16.msra.mxu0 %v276
  %300 = vmatprep.subr.bf16.mxu0 0
  %301 = vmatpush1.bf16.msra.mxu0 %v277
  %302 = vmatprep.subr.bf16.mxu0 0
  %303 = vmatpush1.bf16.msra.mxu0 0
  %304 = vmatprep.subr.bf16.mxu0 0
  %305 = vmatpush1.bf16.msra.mxu0 0
  %306 = vmatprep.subr.bf16.mxu0 0
  %307 = vmatpush1.bf16.msra.mxu0 0
  %308 = vmatprep.subr.bf16.mxu0 0
  %309 = vmatpush1.bf16.msra.mxu0 0
  %310 = vmatprep.subr.bf16.mxu0 0
  %311 = vmatpush1.bf16.msra.mxu0 0
  %312 = vmatprep.subr.bf16.mxu0 0
  %313 = vmatpush1.bf16.msra.mxu0 0
  %314 = vmatprep.subr.bf16.mxu0 0
  %315 = vmatpush1.bf16.msra.mxu0 0
  %316 = vmatprep.subr.bf16.mxu0 0
  %317 = vmatpush1.bf16.msra.mxu0 0
  %318 = vmatprep.mubr.bf16.mxu0 0
  %319 = vmatmul.mubr.bf16.gmra.mrb[0].mxu0 %v28
  %v320 = vpop.f32.mrb[0].mxu0
  %v321 = vadd.f32 %v176, %v320
  %v322 = vpop.f32.mrb[0].mxu0
  %v323 = vpop.f32.mrb[0].mxu0
  %v324 = vadd.f32 %v179, %v323
  %v325 = vpop.f32.mrb[0].mxu0
  %326 = vmatprep.mubr.bf16.mxu0 0
  %327 = vmatmul.mubr.bf16.gmra.mrb[0].mxu0 %v29
  %v328 = vpop.f32.mrb[0].mxu0
  %v329 = vadd.f32 %v184, %v328
  %v330 = vpop.f32.mrb[0].mxu0
  %v331 = vpop.f32.mrb[0].mxu0
  %v332 = vadd.f32 %v187, %v331
  %v333 = vpop.f32.mrb[0].mxu0
  %334 = vmatprep.mubr.bf16.mxu0 0
  %335 = vmatmul.mubr.bf16.gmra.mrb[0].mxu0 %v30
  %v336 = vpop.f32.mrb[0].mxu0
  %v337 = vadd.f32 %v192, %v336
  %v338 = vpop.f32.mrb[0].mxu0
  %v339 = vpop.f32.mrb[0].mxu0
  %v340 = vadd.f32 %v195, %v339
  %v341 = vpop.f32.mrb[0].mxu0
  %342 = vmatprep.mubr.bf16.mxu0 0
  %343 = vmatmul.mubr.bf16.gmra.mrb[0].mxu0 %v31
  %v344 = vpop.f32.mrb[0].mxu0
  %v345 = vadd.f32 %v200, %v344
  %v346 = vpop.f32.mrb[0].mxu0
  %v347 = vpop.f32.mrb[0].mxu0
  %v348 = vadd.f32 %v203, %v347
  %v349 = vpop.f32.mrb[0].mxu0
  %350 = vmatprep.mubr.bf16.mxu0 0
  %351 = vmatmul.mubr.bf16.gmra.mrb[0].mxu0 %v32
  %v352 = vpop.f32.mrb[0].mxu0
  %v353 = vadd.f32 %v208, %v352
  %v354 = vpop.f32.mrb[0].mxu0
  %v355 = vpop.f32.mrb[0].mxu0
  %v356 = vadd.f32 %v211, %v355
  %v357 = vpop.f32.mrb[0].mxu0
  %358 = vmatprep.mubr.bf16.mxu0 0
  %359 = vmatmul.mubr.bf16.gmra.mrb[0].mxu0 %v33
  %v360 = vpop.f32.mrb[0].mxu0
  %v361 = vadd.f32 %v216, %v360
  %v362 = vpop.f32.mrb[0].mxu0
  %v363 = vpop.f32.mrb[0].mxu0
  %v364 = vadd.f32 %v219, %v363
  %v365 = vpop.f32.mrb[0].mxu0
  %366 = vmatprep.mubr.bf16.mxu0 0
  %367 = vmatmul.mubr.bf16.gmra.mrb[0].mxu0 %v34
  %v368 = vpop.f32.mrb[0].mxu0
  %v369 = vadd.f32 %v224, %v368
  %v370 = vpop.f32.mrb[0].mxu0
  %v371 = vpop.f32.mrb[0].mxu0
  %v372 = vadd.f32 %v227, %v371
  %v373 = vpop.f32.mrb[0].mxu0
  %374 = vmatprep.mubr.bf16.mxu0 0
  %375 = vmatmul.mubr.bf16.gmra.mrb[0].mxu0 %v35
  %v376 = vpop.f32.mrb[0].mxu0
  %v377 = vadd.f32 %v232, %v376
  %v378 = vpop.f32.mrb[0].mxu0
  %v379 = vpop.f32.mrb[0].mxu0
  %v380 = vadd.f32 %v235, %v379
  %v381 = vpop.f32.mrb[0].mxu0
  %382 = vdwg.mxu0
  %v383 = vld [vmem:[%s0 + $0x2] sm:$0xff]
  %v384 = vld [vmem:[%s0 + $0x12] sm:$0xff]
  %v385 = vld [vmem:[%s0 + $0x22] sm:$0xff]
  %v386 = vld [vmem:[%s0 + $0x32] sm:$0xff]
  %v387 = vld [vmem:[%s0 + $0x42] sm:$0xff]
  %v388 = vld [vmem:[%s0 + $0x52] sm:$0xff]
  %v389 = vld [vmem:[%s0 + $0x62] sm:$0xff]
  %v390 = vld [vmem:[%s0 + $0x72] sm:$0xff]
  %v391 = vld [vmem:[%s0 + $0xa2] sm:$0xff]
  %v392 = vld [vmem:[%s0 + $0xb2] sm:$0xff]
  %v393 = vld [vmem:[%s0 + $0xc2] sm:$0xff]
  %v394 = vld [vmem:[%s0 + $0xd2] sm:$0xff]
  %v395 = vld [vmem:[%s0 + $0xe2] sm:$0xff]
  %v396 = vld [vmem:[%s0 + $0xf2] sm:$0xff]
  %v397 = vld [vmem:[%s0 + $0x102] sm:$0xff]
  %v398 = vld [vmem:[%s0 + $0x112] sm:$0xff]
  %v399 = vpack.c.bf16 %v384, %v383
  %v400 = vpack.c.bf16 %v386, %v385
  %v401 = vpack.c.bf16 %v388, %v387
  %v402 = vpack.c.bf16 %v390, %v389
  %v403 = vpack.c.bf16 %v392, %v391
  %v404 = vpack.c.bf16 %v394, %v393
  %v405 = vpack.c.bf16 %v396, %v395
  %v406 = vpack.c.bf16 %v398, %v397
  %s407 = scalar_lea.vmem %s1, 128
  %v408 = vld [vmem:[%s407] sm:$0xf]
  %v409 = vld [vmem:[%s407 + $0x4] sm:$0xf]
  %v410 = vld [vmem:[%s407 + $0x8] sm:$0xf]
  %v411 = vld [vmem:[%s407 + $0xc] sm:$0xf]
  %v412 = vld [vmem:[%s407 + $0x10] sm:$0xf]
  %v413 = vld [vmem:[%s407 + $0x14] sm:$0xf]
  %v414 = vld [vmem:[%s407 + $0x18] sm:$0xf]
  %v415 = vld [vmem:[%s407 + $0x1c] sm:$0xf]
  %v416 = vld [vmem:[%s407 + $0x20] sm:$0xf]
  %v417 = vld [vmem:[%s407 + $0x24] sm:$0xf]
  %v418 = vld [vmem:[%s407 + $0x28] sm:$0xf]
  %v419 = vld [vmem:[%s407 + $0x2c] sm:$0xf]
  %v420 = vld [vmem:[%s407 + $0x30] sm:$0xf]
  %v421 = vld [vmem:[%s407 + $0x34] sm:$0xf]
  %v422 = vld [vmem:[%s407 + $0x38] sm:$0xf]
  %v423 = vld [vmem:[%s407 + $0x3c] sm:$0xf]
  %v440 = vunpack.c.l.b16 %v408
  %v441 = vunpack.c.l.b16 %v409
  %v442 = vunpack.c.l.b16 %v410
  %v443 = vunpack.c.l.b16 %v411
  %v444 = vunpack.c.l.b16 %v412
  %v445 = vunpack.c.l.b16 %v413
  %v446 = vunpack.c.l.b16 %v414
  %v447 = vunpack.c.l.b16 %v415
  %v448 = vunpack.c.l.b16 %v416
  %v449 = vunpack.c.l.b16 %v417
  %v450 = vunpack.c.l.b16 %v418
  %v451 = vunpack.c.l.b16 %v419
  %v452 = vunpack.c.l.b16 %v420
  %v453 = vunpack.c.l.b16 %v421
  %v454 = vunpack.c.l.b16 %v422
  %v455 = vunpack.c.l.b16 %v423
  %v456 = vpack.c.b16 %v441, %v440
  %v457 = vpack.c.b16 %v443, %v442
  %v458 = vpack.c.b16 %v445, %v444
  %v459 = vpack.c.b16 %v447, %v446
  %v460 = vpack.c.b16 %v449, %v448
  %v461 = vpack.c.b16 %v451, %v450
  %v462 = vpack.c.b16 %v453, %v452
  %v463 = vpack.c.b16 %v455, %v454
  %472 = vmatprep.subr.bf16.mxu0 0
  %473 = vmatpush1.bf16.msra.mxu0 %v456
  %474 = vmatprep.subr.bf16.mxu0 0
  %475 = vmatpush1.bf16.msra.mxu0 %v457
  %476 = vmatprep.subr.bf16.mxu0 0
  %477 = vmatpush1.bf16.msra.mxu0 %v458
  %478 = vmatprep.subr.bf16.mxu0 0
  %479 = vmatpush1.bf16.msra.mxu0 %v459
  %480 = vmatprep.subr.bf16.mxu0 0
  %481 = vmatpush1.bf16.msra.mxu0 %v460
  %482 = vmatprep.subr.bf16.mxu0 0
  %483 = vmatpush1.bf16.msra.mxu0 %v461
  %484 = vmatprep.subr.bf16.mxu0 0
  %485 = vmatpush1.bf16.msra.mxu0 %v462
  %486 = vmatprep.subr.bf16.mxu0 0
  %487 = vmatpush1.bf16.msra.mxu0 %v463
  %488 = vmatprep.subr.bf16.mxu0 0
  %489 = vmatpush1.bf16.msra.mxu0 0
  %490 = vmatprep.subr.bf16.mxu0 0
  %491 = vmatpush1.bf16.msra.mxu0 0
  %492 = vmatprep.subr.bf16.mxu0 0
  %493 = vmatpush1.bf16.msra.mxu0 0
  %494 = vmatprep.subr.bf16.mxu0 0
  %495 = vmatpush1.bf16.msra.mxu0 0
  %496 = vmatprep.subr.bf16.mxu0 0
  %497 = vmatpush1.bf16.msra.mxu0 0
  %498 = vmatprep.subr.bf16.mxu0 0
  %499 = vmatpush1.bf16.msra.mxu0 0
  %500 = vmatprep.subr.bf16.mxu0 0
  %501 = vmatpush1.bf16.msra.mxu0 0
  %502 = vmatprep.subr.bf16.mxu0 0
  %503 = vmatpush1.bf16.msra.mxu0 0
  %504 = vmatprep.mubr.bf16.mxu0 0
  %505 = vmatmul.mubr.bf16.gmra.mrb[0].mxu0 %v399
  %v506 = vpop.f32.mrb[0].mxu0
  %v507 = vadd.f32 0.0, %v506
  %v508 = vpop.f32.mrb[0].mxu0
  %v509 = vpop.f32.mrb[0].mxu0
  %v510 = vadd.f32 0.0, %v509
  %v511 = vpop.f32.mrb[0].mxu0
  %512 = vmatprep.mubr.bf16.mxu0 0
  %513 = vmatmul.mubr.bf16.gmra.mrb[0].mxu0 %v400
  %v514 = vpop.f32.mrb[0].mxu0
  %v515 = vadd.f32 0.0, %v514
  %v516 = vpop.f32.mrb[0].mxu0
  %v517 = vpop.f32.mrb[0].mxu0
  %v518 = vadd.f32 0.0, %v517
  %v519 = vpop.f32.mrb[0].mxu0
  %520 = vmatprep.mubr.bf16.mxu0 0
  %521 = vmatmul.mubr.bf16.gmra.mrb[0].mxu0 %v401
  %v522 = vpop.f32.mrb[0].mxu0
  %v523 = vadd.f32 0.0, %v522
  %v524 = vpop.f32.mrb[0].mxu0
  %v525 = vpop.f32.mrb[0].mxu0
  %v526 = vadd.f32 0.0, %v525
  %v527 = vpop.f32.mrb[0].mxu0
  %528 = vmatprep.mubr.bf16.mxu0 0
  %529 = vmatmul.mubr.bf16.gmra.mrb[0].mxu0 %v402
  %v530 = vpop.f32.mrb[0].mxu0
  %v531 = vadd.f32 0.0, %v530
  %v532 = vpop.f32.mrb[0].mxu0
  %v533 = vpop.f32.mrb[0].mxu0
  %v534 = vadd.f32 0.0, %v533
  %v535 = vpop.f32.mrb[0].mxu0
  %536 = vmatprep.mubr.bf16.mxu0 0
  %537 = vmatmul.mubr.bf16.gmra.mrb[0].mxu0 %v403
  %v538 = vpop.f32.mrb[0].mxu0
  %v539 = vadd.f32 0.0, %v538
  %v540 = vpop.f32.mrb[0].mxu0
  %v541 = vpop.f32.mrb[0].mxu0
  %v542 = vadd.f32 0.0, %v541
  %v543 = vpop.f32.mrb[0].mxu0
  %544 = vmatprep.mubr.bf16.mxu0 0
  %545 = vmatmul.mubr.bf16.gmra.mrb[0].mxu0 %v404
  %v546 = vpop.f32.mrb[0].mxu0
  %v547 = vadd.f32 0.0, %v546
  %v548 = vpop.f32.mrb[0].mxu0
  %v549 = vpop.f32.mrb[0].mxu0
  %v550 = vadd.f32 0.0, %v549
  %v551 = vpop.f32.mrb[0].mxu0
  %552 = vmatprep.mubr.bf16.mxu0 0
  %553 = vmatmul.mubr.bf16.gmra.mrb[0].mxu0 %v405
  %v554 = vpop.f32.mrb[0].mxu0
  %v555 = vadd.f32 0.0, %v554
  %v556 = vpop.f32.mrb[0].mxu0
  %v557 = vpop.f32.mrb[0].mxu0
  %v558 = vadd.f32 0.0, %v557
  %v559 = vpop.f32.mrb[0].mxu0
  %560 = vmatprep.mubr.bf16.mxu0 0
  %561 = vmatmul.mubr.bf16.gmra.mrb[0].mxu0 %v406
  %v562 = vpop.f32.mrb[0].mxu0
  %v563 = vadd.f32 0.0, %v562
  %v564 = vpop.f32.mrb[0].mxu0
  %v565 = vpop.f32.mrb[0].mxu0
  %v566 = vadd.f32 0.0, %v565
  %v567 = vpop.f32.mrb[0].mxu0
  %568 = vdwg.mxu0
  %v569 = vadd.f32 %v321, %v507
  %v570 = vadd.f32 %v324, %v510
  %v571 = vadd.f32 %v329, %v515
  %v572 = vadd.f32 %v332, %v518
  %v573 = vadd.f32 %v337, %v523
  %v574 = vadd.f32 %v340, %v526
  %v575 = vadd.f32 %v345, %v531
  %v576 = vadd.f32 %v348, %v534
  %v577 = vadd.f32 %v353, %v539
  %v578 = vadd.f32 %v356, %v542
  %v579 = vadd.f32 %v361, %v547
  %v580 = vadd.f32 %v364, %v550
  %v581 = vadd.f32 %v369, %v555
  %v582 = vadd.f32 %v372, %v558
  %v583 = vadd.f32 %v377, %v563
  %v584 = vadd.f32 %v380, %v566
  %s585 = scalar_lea.vmem %s0, 16
  %v586 = vld [vmem:[%s585] sm:$0xff]
  %v587 = vld [vmem:[%s585 + $0x10] sm:$0xff]
  %v588 = vld [vmem:[%s585 + $0x20] sm:$0xff]
  %v589 = vld [vmem:[%s585 + $0x30] sm:$0xff]
  %v590 = vld [vmem:[%s585 + $0x40] sm:$0xff]
  %v591 = vld [vmem:[%s585 + $0x50] sm:$0xff]
  %v592 = vld [vmem:[%s585 + $0x60] sm:$0xff]
  %v593 = vld [vmem:[%s585 + $0x70] sm:$0xff]
  %v594 = vld [vmem:[%s585 + $0xa0] sm:$0xff]
  %v595 = vld [vmem:[%s585 + $0xb0] sm:$0xff]
  %v596 = vld [vmem:[%s585 + $0xc0] sm:$0xff]
  %v597 = vld [vmem:[%s585 + $0xd0] sm:$0xff]
  %v598 = vld [vmem:[%s585 + $0xe0] sm:$0xff]
  %v599 = vld [vmem:[%s585 + $0xf0] sm:$0xff]
  %v600 = vld [vmem:[%s585 + $0x100] sm:$0xff]
  %v601 = vld [vmem:[%s585 + $0x110] sm:$0xff]
  %v602 = vpack.c.bf16 %v587, %v586
  %v603 = vpack.c.bf16 %v589, %v588
  %v604 = vpack.c.bf16 %v591, %v590
  %v605 = vpack.c.bf16 %v593, %v592
  %v606 = vpack.c.bf16 %v595, %v594
  %v607 = vpack.c.bf16 %v597, %v596
  %v608 = vpack.c.bf16 %v599, %v598
  %v609 = vpack.c.bf16 %v601, %v600
  %s610 = scalar_lea.vmem %s1, 192
  %v611 = vld [vmem:[%s610] sm:$0xf]
  %v612 = vld [vmem:[%s610 + $0x4] sm:$0xf]
  %v613 = vld [vmem:[%s610 + $0x8] sm:$0xf]
  %v614 = vld [vmem:[%s610 + $0xc] sm:$0xf]
  %v615 = vld [vmem:[%s610 + $0x10] sm:$0xf]
  %v616 = vld [vmem:[%s610 + $0x14] sm:$0xf]
  %v617 = vld [vmem:[%s610 + $0x18] sm:$0xf]
  %v618 = vld [vmem:[%s610 + $0x1c] sm:$0xf]
  %v619 = vld [vmem:[%s610 + $0x20] sm:$0xf]
  %v620 = vld [vmem:[%s610 + $0x24] sm:$0xf]
  %v621 = vld [vmem:[%s610 + $0x28] sm:$0xf]
  %v622 = vld [vmem:[%s610 + $0x2c] sm:$0xf]
  %v623 = vld [vmem:[%s610 + $0x30] sm:$0xf]
  %v624 = vld [vmem:[%s610 + $0x34] sm:$0xf]
  %v625 = vld [vmem:[%s610 + $0x38] sm:$0xf]
  %v626 = vld [vmem:[%s610 + $0x3c] sm:$0xf]
  %v643 = vunpack.c.l.b16 %v611
  %v644 = vunpack.c.l.b16 %v612
  %v645 = vunpack.c.l.b16 %v613
  %v646 = vunpack.c.l.b16 %v614
  %v647 = vunpack.c.l.b16 %v615
  %v648 = vunpack.c.l.b16 %v616
  %v649 = vunpack.c.l.b16 %v617
  %v650 = vunpack.c.l.b16 %v618
  %v651 = vunpack.c.l.b16 %v619
  %v652 = vunpack.c.l.b16 %v620
  %v653 = vunpack.c.l.b16 %v621
  %v654 = vunpack.c.l.b16 %v622
  %v655 = vunpack.c.l.b16 %v623
  %v656 = vunpack.c.l.b16 %v624
  %v657 = vunpack.c.l.b16 %v625
  %v658 = vunpack.c.l.b16 %v626
  %v659 = vpack.c.b16 %v644, %v643
  %v660 = vpack.c.b16 %v646, %v645
  %v661 = vpack.c.b16 %v648, %v647
  %v662 = vpack.c.b16 %v650, %v649
  %v663 = vpack.c.b16 %v652, %v651
  %v664 = vpack.c.b16 %v654, %v653
  %v665 = vpack.c.b16 %v656, %v655
  %v666 = vpack.c.b16 %v658, %v657
  %675 = vmatprep.subr.bf16.mxu0 0
  %676 = vmatpush1.bf16.msra.mxu0 %v659
  %677 = vmatprep.subr.bf16.mxu0 0
  %678 = vmatpush1.bf16.msra.mxu0 %v660
  %679 = vmatprep.subr.bf16.mxu0 0
  %680 = vmatpush1.bf16.msra.mxu0 %v661
  %681 = vmatprep.subr.bf16.mxu0 0
  %682 = vmatpush1.bf16.msra.mxu0 %v662
  %683 = vmatprep.subr.bf16.mxu0 0
  %684 = vmatpush1.bf16.msra.mxu0 %v663
  %685 = vmatprep.subr.bf16.mxu0 0
  %686 = vmatpush1.bf16.msra.mxu0 %v664
  %687 = vmatprep.subr.bf16.mxu0 0
  %688 = vmatpush1.bf16.msra.mxu0 %v665
  %689 = vmatprep.subr.bf16.mxu0 0
  %690 = vmatpush1.bf16.msra.mxu0 %v666
  %691 = vmatprep.subr.bf16.mxu0 0
  %692 = vmatpush1.bf16.msra.mxu0 0
  %693 = vmatprep.subr.bf16.mxu0 0
  %694 = vmatpush1.bf16.msra.mxu0 0
  %695 = vmatprep.subr.bf16.mxu0 0
  %696 = vmatpush1.bf16.msra.mxu0 0
  %697 = vmatprep.subr.bf16.mxu0 0
  %698 = vmatpush1.bf16.msra.mxu0 0
  %699 = vmatprep.subr.bf16.mxu0 0
  %700 = vmatpush1.bf16.msra.mxu0 0
  %701 = vmatprep.subr.bf16.mxu0 0
  %702 = vmatpush1.bf16.msra.mxu0 0
  %703 = vmatprep.subr.bf16.mxu0 0
  %704 = vmatpush1.bf16.msra.mxu0 0
  %705 = vmatprep.subr.bf16.mxu0 0
  %706 = vmatpush1.bf16.msra.mxu0 0
  %707 = vmatprep.mubr.bf16.mxu0 0
  %708 = vmatmul.mubr.bf16.gmra.mrb[0].mxu0 %v602
  %v709 = vpop.f32.mrb[0].mxu0
  %v710 = vadd.f32 0.0, %v709
  %v711 = vpop.f32.mrb[0].mxu0
  %v712 = vpop.f32.mrb[0].mxu0
  %v713 = vadd.f32 0.0, %v712
  %v714 = vpop.f32.mrb[0].mxu0
  %715 = vmatprep.mubr.bf16.mxu0 0
  %716 = vmatmul.mubr.bf16.gmra.mrb[0].mxu0 %v603
  %v717 = vpop.f32.mrb[0].mxu0
  %v718 = vadd.f32 0.0, %v717
  %v719 = vpop.f32.mrb[0].mxu0
  %v720 = vpop.f32.mrb[0].mxu0
  %v721 = vadd.f32 0.0, %v720
  %v722 = vpop.f32.mrb[0].mxu0
  %723 = vmatprep.mubr.bf16.mxu0 0
  %724 = vmatmul.mubr.bf16.gmra.mrb[0].mxu0 %v604
  %v725 = vpop.f32.mrb[0].mxu0
  %v726 = vadd.f32 0.0, %v725
  %v727 = vpop.f32.mrb[0].mxu0
  %v728 = vpop.f32.mrb[0].mxu0
  %v729 = vadd.f32 0.0, %v728
  %v730 = vpop.f32.mrb[0].mxu0
  %731 = vmatprep.mubr.bf16.mxu0 0
  %732 = vmatmul.mubr.bf16.gmra.mrb[0].mxu0 %v605
  %v733 = vpop.f32.mrb[0].mxu0
  %v734 = vadd.f32 0.0, %v733
  %v735 = vpop.f32.mrb[0].mxu0
  %v736 = vpop.f32.mrb[0].mxu0
  %v737 = vadd.f32 0.0, %v736
  %v738 = vpop.f32.mrb[0].mxu0
  %739 = vmatprep.mubr.bf16.mxu0 0
  %740 = vmatmul.mubr.bf16.gmra.mrb[0].mxu0 %v606
  %v741 = vpop.f32.mrb[0].mxu0
  %v742 = vadd.f32 0.0, %v741
  %v743 = vpop.f32.mrb[0].mxu0
  %v744 = vpop.f32.mrb[0].mxu0
  %v745 = vadd.f32 0.0, %v744
  %v746 = vpop.f32.mrb[0].mxu0
  %747 = vmatprep.mubr.bf16.mxu0 0
  %748 = vmatmul.mubr.bf16.gmra.mrb[0].mxu0 %v607
  %v749 = vpop.f32.mrb[0].mxu0
  %v750 = vadd.f32 0.0, %v749
  %v751 = vpop.f32.mrb[0].mxu0
  %v752 = vpop.f32.mrb[0].mxu0
  %v753 = vadd.f32 0.0, %v752
  %v754 = vpop.f32.mrb[0].mxu0
  %755 = vmatprep.mubr.bf16.mxu0 0
  %756 = vmatmul.mubr.bf16.gmra.mrb[0].mxu0 %v608
  %v757 = vpop.f32.mrb[0].mxu0
  %v758 = vadd.f32 0.0, %v757
  %v759 = vpop.f32.mrb[0].mxu0
  %v760 = vpop.f32.mrb[0].mxu0
  %v761 = vadd.f32 0.0, %v760
  %v762 = vpop.f32.mrb[0].mxu0
  %763 = vmatprep.mubr.bf16.mxu0 0
  %764 = vmatmul.mubr.bf16.gmra.mrb[0].mxu0 %v609
  %v765 = vpop.f32.mrb[0].mxu0
  %v766 = vadd.f32 0.0, %v765
  %v767 = vpop.f32.mrb[0].mxu0
  %v768 = vpop.f32.mrb[0].mxu0
  %v769 = vadd.f32 0.0, %v768
  %v770 = vpop.f32.mrb[0].mxu0
  %771 = vdwg.mxu0
  %v772 = vadd.f32 %v569, %v710
  %v773 = vadd.f32 %v570, %v713
  %v774 = vadd.f32 %v571, %v718
  %v775 = vadd.f32 %v572, %v721
  %v776 = vadd.f32 %v573, %v726
  %v777 = vadd.f32 %v574, %v729
  %v778 = vadd.f32 %v575, %v734
  %v779 = vadd.f32 %v576, %v737
  %v780 = vadd.f32 %v577, %v742
  %v781 = vadd.f32 %v578, %v745
  %v782 = vadd.f32 %v579, %v750
  %v783 = vadd.f32 %v580, %v753
  %v784 = vadd.f32 %v581, %v758
  %v785 = vadd.f32 %v582, %v761
  %v786 = vadd.f32 %v583, %v766
  %v787 = vadd.f32 %v584, %v769
  %v788 = vld [vmem:[%s585 + $0x1] sm:$0xff]
  %v789 = vld [vmem:[%s585 + $0x11] sm:$0xff]
  %v790 = vld [vmem:[%s585 + $0x21] sm:$0xff]
  %v791 = vld [vmem:[%s585 + $0x31] sm:$0xff]
  %v792 = vld [vmem:[%s585 + $0x41] sm:$0xff]
  %v793 = vld [vmem:[%s585 + $0x51] sm:$0xff]
  %v794 = vld [vmem:[%s585 + $0x61] sm:$0xff]
  %v795 = vld [vmem:[%s585 + $0x71] sm:$0xff]
  %v796 = vld [vmem:[%s585 + $0xa1] sm:$0xff]
  %v797 = vld [vmem:[%s585 + $0xb1] sm:$0xff]
  %v798 = vld [vmem:[%s585 + $0xc1] sm:$0xff]
  %v799 = vld [vmem:[%s585 + $0xd1] sm:$0xff]
  %v800 = vld [vmem:[%s585 + $0xe1] sm:$0xff]
  %v801 = vld [vmem:[%s585 + $0xf1] sm:$0xff]
  %v802 = vld [vmem:[%s585 + $0x101] sm:$0xff]
  %v803 = vld [vmem:[%s585 + $0x111] sm:$0xff]
  %v804 = vpack.c.bf16 %v789, %v788
  %v805 = vpack.c.bf16 %v791, %v790
  %v806 = vpack.c.bf16 %v793, %v792
  %v807 = vpack.c.bf16 %v795, %v794
  %v808 = vpack.c.bf16 %v797, %v796
  %v809 = vpack.c.bf16 %v799, %v798
  %v810 = vpack.c.bf16 %v801, %v800
  %v811 = vpack.c.bf16 %v803, %v802
  %s812 = scalar_lea.vmem %s1, 256
  %v813 = vld [vmem:[%s812] sm:$0xf]
  %v814 = vld [vmem:[%s812 + $0x4] sm:$0xf]
  %v815 = vld [vmem:[%s812 + $0x8] sm:$0xf]
  %v816 = vld [vmem:[%s812 + $0xc] sm:$0xf]
  %v817 = vld [vmem:[%s812 + $0x10] sm:$0xf]
  %v818 = vld [vmem:[%s812 + $0x14] sm:$0xf]
  %v819 = vld [vmem:[%s812 + $0x18] sm:$0xf]
  %v820 = vld [vmem:[%s812 + $0x1c] sm:$0xf]
  %v821 = vld [vmem:[%s812 + $0x20] sm:$0xf]
  %v822 = vld [vmem:[%s812 + $0x24] sm:$0xf]
  %v823 = vld [vmem:[%s812 + $0x28] sm:$0xf]
  %v824 = vld [vmem:[%s812 + $0x2c] sm:$0xf]
  %v825 = vld [vmem:[%s812 + $0x30] sm:$0xf]
  %v826 = vld [vmem:[%s812 + $0x34] sm:$0xf]
  %v827 = vld [vmem:[%s812 + $0x38] sm:$0xf]
  %v828 = vld [vmem:[%s812 + $0x3c] sm:$0xf]
  %v845 = vunpack.c.l.b16 %v813
  %v846 = vunpack.c.l.b16 %v814
  %v847 = vunpack.c.l.b16 %v815
  %v848 = vunpack.c.l.b16 %v816
  %v849 = vunpack.c.l.b16 %v817
  %v850 = vunpack.c.l.b16 %v818
  %v851 = vunpack.c.l.b16 %v819
  %v852 = vunpack.c.l.b16 %v820
  %v853 = vunpack.c.l.b16 %v821
  %v854 = vunpack.c.l.b16 %v822
  %v855 = vunpack.c.l.b16 %v823
  %v856 = vunpack.c.l.b16 %v824
  %v857 = vunpack.c.l.b16 %v825
  %v858 = vunpack.c.l.b16 %v826
  %v859 = vunpack.c.l.b16 %v827
  %v860 = vunpack.c.l.b16 %v828
  %v861 = vpack.c.b16 %v846, %v845
  %v862 = vpack.c.b16 %v848, %v847
  %v863 = vpack.c.b16 %v850, %v849
  %v864 = vpack.c.b16 %v852, %v851
  %v865 = vpack.c.b16 %v854, %v853
  %v866 = vpack.c.b16 %v856, %v855
  %v867 = vpack.c.b16 %v858, %v857
  %v868 = vpack.c.b16 %v860, %v859
  %877 = vmatprep.subr.bf16.mxu0 0
  %878 = vmatpush1.bf16.msra.mxu0 %v861
  %879 = vmatprep.subr.bf16.mxu0 0
  %880 = vmatpush1.bf16.msra.mxu0 %v862
  %881 = vmatprep.subr.bf16.mxu0 0
  %882 = vmatpush1.bf16.msra.mxu0 %v863
  %883 = vmatprep.subr.bf16.mxu0 0
  %884 = vmatpush1.bf16.msra.mxu0 %v864
  %885 = vmatprep.subr.bf16.mxu0 0
  %886 = vmatpush1.bf16.msra.mxu0 %v865
  %887 = vmatprep.subr.bf16.mxu0 0
  %888 = vmatpush1.bf16.msra.mxu0 %v866
  %889 = vmatprep.subr.bf16.mxu0 0
  %890 = vmatpush1.bf16.msra.mxu0 %v867
  %891 = vmatprep.subr.bf16.mxu0 0
  %892 = vmatpush1.bf16.msra.mxu0 %v868
  %893 = vmatprep.subr.bf16.mxu0 0
  %894 = vmatpush1.bf16.msra.mxu0 0
  %895 = vmatprep.subr.bf16.mxu0 0
  %896 = vmatpush1.bf16.msra.mxu0 0
  %897 = vmatprep.subr.bf16.mxu0 0
  %898 = vmatpush1.bf16.msra.mxu0 0
  %899 = vmatprep.subr.bf16.mxu0 0
  %900 = vmatpush1.bf16.msra.mxu0 0
  %901 = vmatprep.subr.bf16.mxu0 0
  %902 = vmatpush1.bf16.msra.mxu0 0
  %903 = vmatprep.subr.bf16.mxu0 0
  %904 = vmatpush1.bf16.msra.mxu0 0
  %905 = vmatprep.subr.bf16.mxu0 0
  %906 = vmatpush1.bf16.msra.mxu0 0
  %907 = vmatprep.subr.bf16.mxu0 0
  %908 = vmatpush1.bf16.msra.mxu0 0
  %909 = vmatprep.mubr.bf16.mxu0 0
  %910 = vmatmul.mubr.bf16.gmra.mrb[0].mxu0 %v804
  %v911 = vpop.f32.mrb[0].mxu0
  %v912 = vadd.f32 0.0, %v911
  %v913 = vpop.f32.mrb[0].mxu0
  %v914 = vpop.f32.mrb[0].mxu0
  %v915 = vadd.f32 0.0, %v914
  %v916 = vpop.f32.mrb[0].mxu0
  %917 = vmatprep.mubr.bf16.mxu0 0
  %918 = vmatmul.mubr.bf16.gmra.mrb[0].mxu0 %v805
  %v919 = vpop.f32.mrb[0].mxu0
  %v920 = vadd.f32 0.0, %v919
  %v921 = vpop.f32.mrb[0].mxu0
  %v922 = vpop.f32.mrb[0].mxu0
  %v923 = vadd.f32 0.0, %v922
  %v924 = vpop.f32.mrb[0].mxu0
  %925 = vmatprep.mubr.bf16.mxu0 0
  %926 = vmatmul.mubr.bf16.gmra.mrb[0].mxu0 %v806
  %v927 = vpop.f32.mrb[0].mxu0
  %v928 = vadd.f32 0.0, %v927
  %v929 = vpop.f32.mrb[0].mxu0
  %v930 = vpop.f32.mrb[0].mxu0
  %v931 = vadd.f32 0.0, %v930
  %v932 = vpop.f32.mrb[0].mxu0
  %933 = vmatprep.mubr.bf16.mxu0 0
  %934 = vmatmul.mubr.bf16.gmra.mrb[0].mxu0 %v807
  %v935 = vpop.f32.mrb[0].mxu0
  %v936 = vadd.f32 0.0, %v935
  %v937 = vpop.f32.mrb[0].mxu0
  %v938 = vpop.f32.mrb[0].mxu0
  %v939 = vadd.f32 0.0, %v938
  %v940 = vpop.f32.mrb[0].mxu0
  %941 = vmatprep.mubr.bf16.mxu0 0
  %942 = vmatmul.mubr.bf16.gmra.mrb[0].mxu0 %v808
  %v943 = vpop.f32.mrb[0].mxu0
  %v944 = vadd.f32 0.0, %v943
  %v945 = vpop.f32.mrb[0].mxu0
  %v946 = vpop.f32.mrb[0].mxu0
  %v947 = vadd.f32 0.0, %v946
  %v948 = vpop.f32.mrb[0].mxu0
  %949 = vmatprep.mubr.bf16.mxu0 0
  %950 = vmatmul.mubr.bf16.gmra.mrb[0].mxu0 %v809
  %v951 = vpop.f32.mrb[0].mxu0
  %v952 = vadd.f32 0.0, %v951
  %v953 = vpop.f32.mrb[0].mxu0
  %v954 = vpop.f32.mrb[0].mxu0
  %v955 = vadd.f32 0.0, %v954
  %v956 = vpop.f32.mrb[0].mxu0
  %957 = vmatprep.mubr.bf16.mxu0 0
  %958 = vmatmul.mubr.bf16.gmra.mrb[0].mxu0 %v810
  %v959 = vpop.f32.mrb[0].mxu0
  %v960 = vadd.f32 0.0, %v959
  %v961 = vpop.f32.mrb[0].mxu0
  %v962 = vpop.f32.mrb[0].mxu0
  %v963 = vadd.f32 0.0, %v962
  %v964 = vpop.f32.mrb[0].mxu0
  %965 = vmatprep.mubr.bf16.mxu0 0
  %966 = vmatmul.mubr.bf16.gmra.mrb[0].mxu0 %v811
  %v967 = vpop.f32.mrb[0].mxu0
  %v968 = vadd.f32 0.0, %v967
  %v969 = vpop.f32.mrb[0].mxu0
  %v970 = vpop.f32.mrb[0].mxu0
  %v971 = vadd.f32 0.0, %v970
  %v972 = vpop.f32.mrb[0].mxu0
  %973 = vdwg.mxu0
  %v974 = vadd.f32 %v772, %v912
  %v975 = vadd.f32 %v773, %v915
  %v976 = vadd.f32 %v774, %v920
  %v977 = vadd.f32 %v775, %v923
  %v978 = vadd.f32 %v776, %v928
  %v979 = vadd.f32 %v777, %v931
  %v980 = vadd.f32 %v778, %v936
  %v981 = vadd.f32 %v779, %v939
  %v982 = vadd.f32 %v780, %v944
  %v983 = vadd.f32 %v781, %v947
  %v984 = vadd.f32 %v782, %v952
  %v985 = vadd.f32 %v783, %v955
  %v986 = vadd.f32 %v784, %v960
  %v987 = vadd.f32 %v785, %v963
  %v988 = vadd.f32 %v786, %v968
  %v989 = vadd.f32 %v787, %v971
  %v990 = vld [vmem:[%s585 + $0x2] sm:$0xff]
  %v991 = vld [vmem:[%s585 + $0x12] sm:$0xff]
  %v992 = vld [vmem:[%s585 + $0x22] sm:$0xff]
  %v993 = vld [vmem:[%s585 + $0x32] sm:$0xff]
  %v994 = vld [vmem:[%s585 + $0x42] sm:$0xff]
  %v995 = vld [vmem:[%s585 + $0x52] sm:$0xff]
  %v996 = vld [vmem:[%s585 + $0x62] sm:$0xff]
  %v997 = vld [vmem:[%s585 + $0x72] sm:$0xff]
  %v998 = vld [vmem:[%s585 + $0xa2] sm:$0xff]
  %v999 = vld [vmem:[%s585 + $0xb2] sm:$0xff]
  %v1000 = vld [vmem:[%s585 + $0xc2] sm:$0xff]
  %v1001 = vld [vmem:[%s585 + $0xd2] sm:$0xff]
  %v1002 = vld [vmem:[%s585 + $0xe2] sm:$0xff]
  %v1003 = vld [vmem:[%s585 + $0xf2] sm:$0xff]
  %v1004 = vld [vmem:[%s585 + $0x102] sm:$0xff]
  %v1005 = vld [vmem:[%s585 + $0x112] sm:$0xff]
  %v1006 = vpack.c.bf16 %v991, %v990
  %v1007 = vpack.c.bf16 %v993, %v992
  %v1008 = vpack.c.bf16 %v995, %v994
  %v1009 = vpack.c.bf16 %v997, %v996
  %v1010 = vpack.c.bf16 %v999, %v998
  %v1011 = vpack.c.bf16 %v1001, %v1000
  %v1012 = vpack.c.bf16 %v1003, %v1002
  %v1013 = vpack.c.bf16 %v1005, %v1004
  %s1014 = scalar_lea.vmem %s1, 320
  %v1015 = vld [vmem:[%s1014] sm:$0xf]
  %v1016 = vld [vmem:[%s1014 + $0x4] sm:$0xf]
  %v1017 = vld [vmem:[%s1014 + $0x8] sm:$0xf]
  %v1018 = vld [vmem:[%s1014 + $0xc] sm:$0xf]
  %v1019 = vld [vmem:[%s1014 + $0x10] sm:$0xf]
  %v1020 = vld [vmem:[%s1014 + $0x14] sm:$0xf]
  %v1021 = vld [vmem:[%s1014 + $0x18] sm:$0xf]
  %v1022 = vld [vmem:[%s1014 + $0x1c] sm:$0xf]
  %v1023 = vld [vmem:[%s1014 + $0x20] sm:$0xf]
  %v1024 = vld [vmem:[%s1014 + $0x24] sm:$0xf]
  %v1025 = vld [vmem:[%s1014 + $0x28] sm:$0xf]
  %v1026 = vld [vmem:[%s1014 + $0x2c] sm:$0xf]
  %v1027 = vld [vmem:[%s1014 + $0x30] sm:$0xf]
  %v1028 = vld [vmem:[%s1014 + $0x34] sm:$0xf]
  %v1029 = vld [vmem:[%s1014 + $0x38] sm:$0xf]
  %v1030 = vld [vmem:[%s1014 + $0x3c] sm:$0xf]
  %v1047 = vunpack.c.l.b16 %v1015
  %v1048 = vunpack.c.l.b16 %v1016
  %v1049 = vunpack.c.l.b16 %v1017
  %v1050 = vunpack.c.l.b16 %v1018
  %v1051 = vunpack.c.l.b16 %v1019
  %v1052 = vunpack.c.l.b16 %v1020
  %v1053 = vunpack.c.l.b16 %v1021
  %v1054 = vunpack.c.l.b16 %v1022
  %v1055 = vunpack.c.l.b16 %v1023
  %v1056 = vunpack.c.l.b16 %v1024
  %v1057 = vunpack.c.l.b16 %v1025
  %v1058 = vunpack.c.l.b16 %v1026
  %v1059 = vunpack.c.l.b16 %v1027
  %v1060 = vunpack.c.l.b16 %v1028
  %v1061 = vunpack.c.l.b16 %v1029
  %v1062 = vunpack.c.l.b16 %v1030
  %v1063 = vpack.c.b16 %v1048, %v1047
  %v1064 = vpack.c.b16 %v1050, %v1049
  %v1065 = vpack.c.b16 %v1052, %v1051
  %v1066 = vpack.c.b16 %v1054, %v1053
  %v1067 = vpack.c.b16 %v1056, %v1055
  %v1068 = vpack.c.b16 %v1058, %v1057
  %v1069 = vpack.c.b16 %v1060, %v1059
  %v1070 = vpack.c.b16 %v1062, %v1061
  %1079 = vmatprep.subr.bf16.mxu0 0
  %1080 = vmatpush1.bf16.msra.mxu0 %v1063
  %1081 = vmatprep.subr.bf16.mxu0 0
  %1082 = vmatpush1.bf16.msra.mxu0 %v1064
  %1083 = vmatprep.subr.bf16.mxu0 0
  %1084 = vmatpush1.bf16.msra.mxu0 %v1065
  %1085 = vmatprep.subr.bf16.mxu0 0
  %1086 = vmatpush1.bf16.msra.mxu0 %v1066
  %1087 = vmatprep.subr.bf16.mxu0 0
  %1088 = vmatpush1.bf16.msra.mxu0 %v1067
  %1089 = vmatprep.subr.bf16.mxu0 0
  %1090 = vmatpush1.bf16.msra.mxu0 %v1068
  %1091 = vmatprep.subr.bf16.mxu0 0
  %1092 = vmatpush1.bf16.msra.mxu0 %v1069
  %1093 = vmatprep.subr.bf16.mxu0 0
  %1094 = vmatpush1.bf16.msra.mxu0 %v1070
  %1095 = vmatprep.subr.bf16.mxu0 0
  %1096 = vmatpush1.bf16.msra.mxu0 0
  %1097 = vmatprep.subr.bf16.mxu0 0
  %1098 = vmatpush1.bf16.msra.mxu0 0
  %1099 = vmatprep.subr.bf16.mxu0 0
  %1100 = vmatpush1.bf16.msra.mxu0 0
  %1101 = vmatprep.subr.bf16.mxu0 0
  %1102 = vmatpush1.bf16.msra.mxu0 0
  %1103 = vmatprep.subr.bf16.mxu0 0
  %1104 = vmatpush1.bf16.msra.mxu0 0
  %1105 = vmatprep.subr.bf16.mxu0 0
  %1106 = vmatpush1.bf16.msra.mxu0 0
  %1107 = vmatprep.subr.bf16.mxu0 0
  %1108 = vmatpush1.bf16.msra.mxu0 0
  %1109 = vmatprep.subr.bf16.mxu0 0
  %1110 = vmatpush1.bf16.msra.mxu0 0
  %1111 = vmatprep.mubr.bf16.mxu0 0
  %1112 = vmatmul.mubr.bf16.gmra.mrb[0].mxu0 %v1006
  %v1113 = vpop.f32.mrb[0].mxu0
  %v1114 = vadd.f32 0.0, %v1113
  %v1115 = vpop.f32.mrb[0].mxu0
  %v1116 = vpop.f32.mrb[0].mxu0
  %v1117 = vadd.f32 0.0, %v1116
  %v1118 = vpop.f32.mrb[0].mxu0
  %1119 = vmatprep.mubr.bf16.mxu0 0
  %1120 = vmatmul.mubr.bf16.gmra.mrb[0].mxu0 %v1007
  %v1121 = vpop.f32.mrb[0].mxu0
  %v1122 = vadd.f32 0.0, %v1121
  %v1123 = vpop.f32.mrb[0].mxu0
  %v1124 = vpop.f32.mrb[0].mxu0
  %v1125 = vadd.f32 0.0, %v1124
  %v1126 = vpop.f32.mrb[0].mxu0
  %1127 = vmatprep.mubr.bf16.mxu0 0
  %1128 = vmatmul.mubr.bf16.gmra.mrb[0].mxu0 %v1008
  %v1129 = vpop.f32.mrb[0].mxu0
  %v1130 = vadd.f32 0.0, %v1129
  %v1131 = vpop.f32.mrb[0].mxu0
  %v1132 = vpop.f32.mrb[0].mxu0
  %v1133 = vadd.f32 0.0, %v1132
  %v1134 = vpop.f32.mrb[0].mxu0
  %1135 = vmatprep.mubr.bf16.mxu0 0
  %1136 = vmatmul.mubr.bf16.gmra.mrb[0].mxu0 %v1009
  %v1137 = vpop.f32.mrb[0].mxu0
  %v1138 = vadd.f32 0.0, %v1137
  %v1139 = vpop.f32.mrb[0].mxu0
  %v1140 = vpop.f32.mrb[0].mxu0
  %v1141 = vadd.f32 0.0, %v1140
  %v1142 = vpop.f32.mrb[0].mxu0
  %1143 = vmatprep.mubr.bf16.mxu0 0
  %1144 = vmatmul.mubr.bf16.gmra.mrb[0].mxu0 %v1010
  %v1145 = vpop.f32.mrb[0].mxu0
  %v1146 = vadd.f32 0.0, %v1145
  %v1147 = vpop.f32.mrb[0].mxu0
  %v1148 = vpop.f32.mrb[0].mxu0
  %v1149 = vadd.f32 0.0, %v1148
  %v1150 = vpop.f32.mrb[0].mxu0
  %1151 = vmatprep.mubr.bf16.mxu0 0
  %1152 = vmatmul.mubr.bf16.gmra.mrb[0].mxu0 %v1011
  %v1153 = vpop.f32.mrb[0].mxu0
  %v1154 = vadd.f32 0.0, %v1153
  %v1155 = vpop.f32.mrb[0].mxu0
  %v1156 = vpop.f32.mrb[0].mxu0
  %v1157 = vadd.f32 0.0, %v1156
  %v1158 = vpop.f32.mrb[0].mxu0
  %1159 = vmatprep.mubr.bf16.mxu0 0
  %1160 = vmatmul.mubr.bf16.gmra.mrb[0].mxu0 %v1012
  %v1161 = vpop.f32.mrb[0].mxu0
  %v1162 = vadd.f32 0.0, %v1161
  %v1163 = vpop.f32.mrb[0].mxu0
  %v1164 = vpop.f32.mrb[0].mxu0
  %v1165 = vadd.f32 0.0, %v1164
  %v1166 = vpop.f32.mrb[0].mxu0
  %1167 = vmatprep.mubr.bf16.mxu0 0
  %1168 = vmatmul.mubr.bf16.gmra.mrb[0].mxu0 %v1013
  %v1169 = vpop.f32.mrb[0].mxu0
  %v1170 = vadd.f32 0.0, %v1169
  %v1171 = vpop.f32.mrb[0].mxu0
  %v1172 = vpop.f32.mrb[0].mxu0
  %v1173 = vadd.f32 0.0, %v1172
  %v1174 = vpop.f32.mrb[0].mxu0
  %1175 = vdwg.mxu0
  %v1176 = vadd.f32 %v974, %v1114
  %v1177 = vadd.f32 %v975, %v1117
  %v1178 = vadd.f32 %v976, %v1122
  %v1179 = vadd.f32 %v977, %v1125
  %v1180 = vadd.f32 %v978, %v1130
  %v1181 = vadd.f32 %v979, %v1133
  %v1182 = vadd.f32 %v980, %v1138
  %v1183 = vadd.f32 %v981, %v1141
  %v1184 = vadd.f32 %v982, %v1146
  %v1185 = vadd.f32 %v983, %v1149
  %v1186 = vadd.f32 %v984, %v1154
  %v1187 = vadd.f32 %v985, %v1157
  %v1188 = vadd.f32 %v986, %v1162
  %v1189 = vadd.f32 %v987, %v1165
  %v1190 = vadd.f32 %v988, %v1170
  %v1191 = vadd.f32 %v989, %v1173
  %s1192 = scalar_lea.vmem %s0, 32
  %v1193 = vld [vmem:[%s1192] sm:$0xff]
  %v1194 = vld [vmem:[%s1192 + $0x10] sm:$0xff]
  %v1195 = vld [vmem:[%s1192 + $0x20] sm:$0xff]
  %v1196 = vld [vmem:[%s1192 + $0x30] sm:$0xff]
  %v1197 = vld [vmem:[%s1192 + $0x40] sm:$0xff]
  %v1198 = vld [vmem:[%s1192 + $0x50] sm:$0xff]
  %v1199 = vld [vmem:[%s1192 + $0x60] sm:$0xff]
  %v1200 = vld [vmem:[%s1192 + $0x70] sm:$0xff]
  %v1201 = vld [vmem:[%s1192 + $0xa0] sm:$0xff]
  %v1202 = vld [vmem:[%s1192 + $0xb0] sm:$0xff]
  %v1203 = vld [vmem:[%s1192 + $0xc0] sm:$0xff]
  %v1204 = vld [vmem:[%s1192 + $0xd0] sm:$0xff]
  %v1205 = vld [vmem:[%s1192 + $0xe0] sm:$0xff]
  %v1206 = vld [vmem:[%s1192 + $0xf0] sm:$0xff]
  %v1207 = vld [vmem:[%s1192 + $0x100] sm:$0xff]
  %v1208 = vld [vmem:[%s1192 + $0x110] sm:$0xff]
  %v1209 = vpack.c.bf16 %v1194, %v1193
  %v1210 = vpack.c.bf16 %v1196, %v1195
  %v1211 = vpack.c.bf16 %v1198, %v1197
  %v1212 = vpack.c.bf16 %v1200, %v1199
  %v1213 = vpack.c.bf16 %v1202, %v1201
  %v1214 = vpack.c.bf16 %v1204, %v1203
  %v1215 = vpack.c.bf16 %v1206, %v1205
  %v1216 = vpack.c.bf16 %v1208, %v1207
  %s1217 = scalar_lea.vmem %s1, 384
  %v1218 = vld [vmem:[%s1217] sm:$0xf]
  %v1219 = vld [vmem:[%s1217 + $0x4] sm:$0xf]
  %v1220 = vld [vmem:[%s1217 + $0x8] sm:$0xf]
  %v1221 = vld [vmem:[%s1217 + $0xc] sm:$0xf]
  %v1222 = vld [vmem:[%s1217 + $0x10] sm:$0xf]
  %v1223 = vld [vmem:[%s1217 + $0x14] sm:$0xf]
  %v1224 = vld [vmem:[%s1217 + $0x18] sm:$0xf]
  %v1225 = vld [vmem:[%s1217 + $0x1c] sm:$0xf]
  %v1226 = vld [vmem:[%s1217 + $0x20] sm:$0xf]
  %v1227 = vld [vmem:[%s1217 + $0x24] sm:$0xf]
  %v1228 = vld [vmem:[%s1217 + $0x28] sm:$0xf]
  %v1229 = vld [vmem:[%s1217 + $0x2c] sm:$0xf]
  %v1230 = vld [vmem:[%s1217 + $0x30] sm:$0xf]
  %v1231 = vld [vmem:[%s1217 + $0x34] sm:$0xf]
  %v1232 = vld [vmem:[%s1217 + $0x38] sm:$0xf]
  %v1233 = vld [vmem:[%s1217 + $0x3c] sm:$0xf]
  %v1250 = vunpack.c.l.b16 %v1218
  %v1251 = vunpack.c.l.b16 %v1219
  %v1252 = vunpack.c.l.b16 %v1220
  %v1253 = vunpack.c.l.b16 %v1221
  %v1254 = vunpack.c.l.b16 %v1222
  %v1255 = vunpack.c.l.b16 %v1223
  %v1256 = vunpack.c.l.b16 %v1224
  %v1257 = vunpack.c.l.b16 %v1225
  %v1258 = vunpack.c.l.b16 %v1226
  %v1259 = vunpack.c.l.b16 %v1227
  %v1260 = vunpack.c.l.b16 %v1228
  %v1261 = vunpack.c.l.b16 %v1229
  %v1262 = vunpack.c.l.b16 %v1230
  %v1263 = vunpack.c.l.b16 %v1231
  %v1264 = vunpack.c.l.b16 %v1232
  %v1265 = vunpack.c.l.b16 %v1233
  %v1266 = vpack.c.b16 %v1251, %v1250
  %v1267 = vpack.c.b16 %v1253, %v1252
  %v1268 = vpack.c.b16 %v1255, %v1254
  %v1269 = vpack.c.b16 %v1257, %v1256
  %v1270 = vpack.c.b16 %v1259, %v1258
  %v1271 = vpack.c.b16 %v1261, %v1260
  %v1272 = vpack.c.b16 %v1263, %v1262
  %v1273 = vpack.c.b16 %v1265, %v1264
  %1282 = vmatprep.subr.bf16.mxu0 0
  %1283 = vmatpush1.bf16.msra.mxu0 %v1266
  %1284 = vmatprep.subr.bf16.mxu0 0
  %1285 = vmatpush1.bf16.msra.mxu0 %v1267
  %1286 = vmatprep.subr.bf16.mxu0 0
  %1287 = vmatpush1.bf16.msra.mxu0 %v1268
  %1288 = vmatprep.subr.bf16.mxu0 0
  %1289 = vmatpush1.bf16.msra.mxu0 %v1269
  %1290 = vmatprep.subr.bf16.mxu0 0
  %1291 = vmatpush1.bf16.msra.mxu0 %v1270
  %1292 = vmatprep.subr.bf16.mxu0 0
  %1293 = vmatpush1.bf16.msra.mxu0 %v1271
  %1294 = vmatprep.subr.bf16.mxu0 0
  %1295 = vmatpush1.bf16.msra.mxu0 %v1272
  %1296 = vmatprep.subr.bf16.mxu0 0
  %1297 = vmatpush1.bf16.msra.mxu0 %v1273
  %1298 = vmatprep.subr.bf16.mxu0 0
  %1299 = vmatpush1.bf16.msra.mxu0 0
  %1300 = vmatprep.subr.bf16.mxu0 0
  %1301 = vmatpush1.bf16.msra.mxu0 0
  %1302 = vmatprep.subr.bf16.mxu0 0
  %1303 = vmatpush1.bf16.msra.mxu0 0
  %1304 = vmatprep.subr.bf16.mxu0 0
  %1305 = vmatpush1.bf16.msra.mxu0 0
  %1306 = vmatprep.subr.bf16.mxu0 0
  %1307 = vmatpush1.bf16.msra.mxu0 0
  %1308 = vmatprep.subr.bf16.mxu0 0
  %1309 = vmatpush1.bf16.msra.mxu0 0
  %1310 = vmatprep.subr.bf16.mxu0 0
  %1311 = vmatpush1.bf16.msra.mxu0 0
  %1312 = vmatprep.subr.bf16.mxu0 0
  %1313 = vmatpush1.bf16.msra.mxu0 0
  %1314 = vmatprep.mubr.bf16.mxu0 0
  %1315 = vmatmul.mubr.bf16.gmra.mrb[0].mxu0 %v1209
  %v1316 = vpop.f32.mrb[0].mxu0
  %v1317 = vadd.f32 0.0, %v1316
  %v1318 = vpop.f32.mrb[0].mxu0
  %v1319 = vpop.f32.mrb[0].mxu0
  %v1320 = vadd.f32 0.0, %v1319
  %v1321 = vpop.f32.mrb[0].mxu0
  %1322 = vmatprep.mubr.bf16.mxu0 0
  %1323 = vmatmul.mubr.bf16.gmra.mrb[0].mxu0 %v1210
  %v1324 = vpop.f32.mrb[0].mxu0
  %v1325 = vadd.f32 0.0, %v1324
  %v1326 = vpop.f32.mrb[0].mxu0
  %v1327 = vpop.f32.mrb[0].mxu0
  %v1328 = vadd.f32 0.0, %v1327
  %v1329 = vpop.f32.mrb[0].mxu0
  %1330 = vmatprep.mubr.bf16.mxu0 0
  %1331 = vmatmul.mubr.bf16.gmra.mrb[0].mxu0 %v1211
  %v1332 = vpop.f32.mrb[0].mxu0
  %v1333 = vadd.f32 0.0, %v1332
  %v1334 = vpop.f32.mrb[0].mxu0
  %v1335 = vpop.f32.mrb[0].mxu0
  %v1336 = vadd.f32 0.0, %v1335
  %v1337 = vpop.f32.mrb[0].mxu0
  %1338 = vmatprep.mubr.bf16.mxu0 0
  %1339 = vmatmul.mubr.bf16.gmra.mrb[0].mxu0 %v1212
  %v1340 = vpop.f32.mrb[0].mxu0
  %v1341 = vadd.f32 0.0, %v1340
  %v1342 = vpop.f32.mrb[0].mxu0
  %v1343 = vpop.f32.mrb[0].mxu0
  %v1344 = vadd.f32 0.0, %v1343
  %v1345 = vpop.f32.mrb[0].mxu0
  %1346 = vmatprep.mubr.bf16.mxu0 0
  %1347 = vmatmul.mubr.bf16.gmra.mrb[0].mxu0 %v1213
  %v1348 = vpop.f32.mrb[0].mxu0
  %v1349 = vadd.f32 0.0, %v1348
  %v1350 = vpop.f32.mrb[0].mxu0
  %v1351 = vpop.f32.mrb[0].mxu0
  %v1352 = vadd.f32 0.0, %v1351
  %v1353 = vpop.f32.mrb[0].mxu0
  %1354 = vmatprep.mubr.bf16.mxu0 0
  %1355 = vmatmul.mubr.bf16.gmra.mrb[0].mxu0 %v1214
  %v1356 = vpop.f32.mrb[0].mxu0
  %v1357 = vadd.f32 0.0, %v1356
  %v1358 = vpop.f32.mrb[0].mxu0
  %v1359 = vpop.f32.mrb[0].mxu0
  %v1360 = vadd.f32 0.0, %v1359
  %v1361 = vpop.f32.mrb[0].mxu0
  %1362 = vmatprep.mubr.bf16.mxu0 0
  %1363 = vmatmul.mubr.bf16.gmra.mrb[0].mxu0 %v1215
  %v1364 = vpop.f32.mrb[0].mxu0
  %v1365 = vadd.f32 0.0, %v1364
  %v1366 = vpop.f32.mrb[0].mxu0
  %v1367 = vpop.f32.mrb[0].mxu0
  %v1368 = vadd.f32 0.0, %v1367
  %v1369 = vpop.f32.mrb[0].mxu0
  %1370 = vmatprep.mubr.bf16.mxu0 0
  %1371 = vmatmul.mubr.bf16.gmra.mrb[0].mxu0 %v1216
  %v1372 = vpop.f32.mrb[0].mxu0
  %v1373 = vadd.f32 0.0, %v1372
  %v1374 = vpop.f32.mrb[0].mxu0
  %v1375 = vpop.f32.mrb[0].mxu0
  %v1376 = vadd.f32 0.0, %v1375
  %v1377 = vpop.f32.mrb[0].mxu0
  %1378 = vdwg.mxu0
  %v1379 = vadd.f32 %v1176, %v1317
  %v1380 = vadd.f32 %v1177, %v1320
  %v1381 = vadd.f32 %v1178, %v1325
  %v1382 = vadd.f32 %v1179, %v1328
  %v1383 = vadd.f32 %v1180, %v1333
  %v1384 = vadd.f32 %v1181, %v1336
  %v1385 = vadd.f32 %v1182, %v1341
  %v1386 = vadd.f32 %v1183, %v1344
  %v1387 = vadd.f32 %v1184, %v1349
  %v1388 = vadd.f32 %v1185, %v1352
  %v1389 = vadd.f32 %v1186, %v1357
  %v1390 = vadd.f32 %v1187, %v1360
  %v1391 = vadd.f32 %v1188, %v1365
  %v1392 = vadd.f32 %v1189, %v1368
  %v1393 = vadd.f32 %v1190, %v1373
  %v1394 = vadd.f32 %v1191, %v1376
  %v1395 = vld [vmem:[%s1192 + $0x1] sm:$0xff]
  %v1396 = vld [vmem:[%s1192 + $0x11] sm:$0xff]
  %v1397 = vld [vmem:[%s1192 + $0x21] sm:$0xff]
  %v1398 = vld [vmem:[%s1192 + $0x31] sm:$0xff]
  %v1399 = vld [vmem:[%s1192 + $0x41] sm:$0xff]
  %v1400 = vld [vmem:[%s1192 + $0x51] sm:$0xff]
  %v1401 = vld [vmem:[%s1192 + $0x61] sm:$0xff]
  %v1402 = vld [vmem:[%s1192 + $0x71] sm:$0xff]
  %v1403 = vld [vmem:[%s1192 + $0xa1] sm:$0xff]
  %v1404 = vld [vmem:[%s1192 + $0xb1] sm:$0xff]
  %v1405 = vld [vmem:[%s1192 + $0xc1] sm:$0xff]
  %v1406 = vld [vmem:[%s1192 + $0xd1] sm:$0xff]
  %v1407 = vld [vmem:[%s1192 + $0xe1] sm:$0xff]
  %v1408 = vld [vmem:[%s1192 + $0xf1] sm:$0xff]
  %v1409 = vld [vmem:[%s1192 + $0x101] sm:$0xff]
  %v1410 = vld [vmem:[%s1192 + $0x111] sm:$0xff]
  %v1411 = vpack.c.bf16 %v1396, %v1395
  %v1412 = vpack.c.bf16 %v1398, %v1397
  %v1413 = vpack.c.bf16 %v1400, %v1399
  %v1414 = vpack.c.bf16 %v1402, %v1401
  %v1415 = vpack.c.bf16 %v1404, %v1403
  %v1416 = vpack.c.bf16 %v1406, %v1405
  %v1417 = vpack.c.bf16 %v1408, %v1407
  %v1418 = vpack.c.bf16 %v1410, %v1409
  %s1419 = scalar_lea.vmem %s1, 448
  %v1420 = vld [vmem:[%s1419] sm:$0xf]
  %v1421 = vld [vmem:[%s1419 + $0x4] sm:$0xf]
  %v1422 = vld [vmem:[%s1419 + $0x8] sm:$0xf]
  %v1423 = vld [vmem:[%s1419 + $0xc] sm:$0xf]
  %v1424 = vld [vmem:[%s1419 + $0x10] sm:$0xf]
  %v1425 = vld [vmem:[%s1419 + $0x14] sm:$0xf]
  %v1426 = vld [vmem:[%s1419 + $0x18] sm:$0xf]
  %v1427 = vld [vmem:[%s1419 + $0x1c] sm:$0xf]
  %v1428 = vld [vmem:[%s1419 + $0x20] sm:$0xf]
  %v1429 = vld [vmem:[%s1419 + $0x24] sm:$0xf]
  %v1430 = vld [vmem:[%s1419 + $0x28] sm:$0xf]
  %v1431 = vld [vmem:[%s1419 + $0x2c] sm:$0xf]
  %v1432 = vld [vmem:[%s1419 + $0x30] sm:$0xf]
  %v1433 = vld [vmem:[%s1419 + $0x34] sm:$0xf]
  %v1434 = vld [vmem:[%s1419 + $0x38] sm:$0xf]
  %v1435 = vld [vmem:[%s1419 + $0x3c] sm:$0xf]
  %v1452 = vunpack.c.l.b16 %v1420
  %v1453 = vunpack.c.l.b16 %v1421
  %v1454 = vunpack.c.l.b16 %v1422
  %v1455 = vunpack.c.l.b16 %v1423
  %v1456 = vunpack.c.l.b16 %v1424
  %v1457 = vunpack.c.l.b16 %v1425
  %v1458 = vunpack.c.l.b16 %v1426
  %v1459 = vunpack.c.l.b16 %v1427
  %v1460 = vunpack.c.l.b16 %v1428
  %v1461 = vunpack.c.l.b16 %v1429
  %v1462 = vunpack.c.l.b16 %v1430
  %v1463 = vunpack.c.l.b16 %v1431
  %v1464 = vunpack.c.l.b16 %v1432
  %v1465 = vunpack.c.l.b16 %v1433
  %v1466 = vunpack.c.l.b16 %v1434
  %v1467 = vunpack.c.l.b16 %v1435
  %v1468 = vpack.c.b16 %v1453, %v1452
  %v1469 = vpack.c.b16 %v1455, %v1454
  %v1470 = vpack.c.b16 %v1457, %v1456
  %v1471 = vpack.c.b16 %v1459, %v1458
  %v1472 = vpack.c.b16 %v1461, %v1460
  %v1473 = vpack.c.b16 %v1463, %v1462
  %v1474 = vpack.c.b16 %v1465, %v1464
  %v1475 = vpack.c.b16 %v1467, %v1466
  %1484 = vmatprep.subr.bf16.mxu0 0
  %1485 = vmatpush1.bf16.msra.mxu0 %v1468
  %1486 = vmatprep.subr.bf16.mxu0 0
  %1487 = vmatpush1.bf16.msra.mxu0 %v1469
  %1488 = vmatprep.subr.bf16.mxu0 0
  %1489 = vmatpush1.bf16.msra.mxu0 %v1470
  %1490 = vmatprep.subr.bf16.mxu0 0
  %1491 = vmatpush1.bf16.msra.mxu0 %v1471
  %1492 = vmatprep.subr.bf16.mxu0 0
  %1493 = vmatpush1.bf16.msra.mxu0 %v1472
  %1494 = vmatprep.subr.bf16.mxu0 0
  %1495 = vmatpush1.bf16.msra.mxu0 %v1473
  %1496 = vmatprep.subr.bf16.mxu0 0
  %1497 = vmatpush1.bf16.msra.mxu0 %v1474
  %1498 = vmatprep.subr.bf16.mxu0 0
  %1499 = vmatpush1.bf16.msra.mxu0 %v1475
  %1500 = vmatprep.subr.bf16.mxu0 0
  %1501 = vmatpush1.bf16.msra.mxu0 0
  %1502 = vmatprep.subr.bf16.mxu0 0
  %1503 = vmatpush1.bf16.msra.mxu0 0
  %1504 = vmatprep.subr.bf16.mxu0 0
  %1505 = vmatpush1.bf16.msra.mxu0 0
  %1506 = vmatprep.subr.bf16.mxu0 0
  %1507 = vmatpush1.bf16.msra.mxu0 0
  %1508 = vmatprep.subr.bf16.mxu0 0
  %1509 = vmatpush1.bf16.msra.mxu0 0
  %1510 = vmatprep.subr.bf16.mxu0 0
  %1511 = vmatpush1.bf16.msra.mxu0 0
  %1512 = vmatprep.subr.bf16.mxu0 0
  %1513 = vmatpush1.bf16.msra.mxu0 0
  %1514 = vmatprep.subr.bf16.mxu0 0
  %1515 = vmatpush1.bf16.msra.mxu0 0
  %1516 = vmatprep.mubr.bf16.mxu0 0
  %1517 = vmatmul.mubr.bf16.gmra.mrb[0].mxu0 %v1411
  %v1518 = vpop.f32.mrb[0].mxu0
  %v1519 = vadd.f32 0.0, %v1518
  %v1520 = vpop.f32.mrb[0].mxu0
  %v1521 = vpop.f32.mrb[0].mxu0
  %v1522 = vadd.f32 0.0, %v1521
  %v1523 = vpop.f32.mrb[0].mxu0
  %1524 = vmatprep.mubr.bf16.mxu0 0
  %1525 = vmatmul.mubr.bf16.gmra.mrb[0].mxu0 %v1412
  %v1526 = vpop.f32.mrb[0].mxu0
  %v1527 = vadd.f32 0.0, %v1526
  %v1528 = vpop.f32.mrb[0].mxu0
  %v1529 = vpop.f32.mrb[0].mxu0
  %v1530 = vadd.f32 0.0, %v1529
  %v1531 = vpop.f32.mrb[0].mxu0
  %1532 = vmatprep.mubr.bf16.mxu0 0
  %1533 = vmatmul.mubr.bf16.gmra.mrb[0].mxu0 %v1413
  %v1534 = vpop.f32.mrb[0].mxu0
  %v1535 = vadd.f32 0.0, %v1534
  %v1536 = vpop.f32.mrb[0].mxu0
  %v1537 = vpop.f32.mrb[0].mxu0
  %v1538 = vadd.f32 0.0, %v1537
  %v1539 = vpop.f32.mrb[0].mxu0
  %1540 = vmatprep.mubr.bf16.mxu0 0
  %1541 = vmatmul.mubr.bf16.gmra.mrb[0].mxu0 %v1414
  %v1542 = vpop.f32.mrb[0].mxu0
  %v1543 = vadd.f32 0.0, %v1542
  %v1544 = vpop.f32.mrb[0].mxu0
  %v1545 = vpop.f32.mrb[0].mxu0
  %v1546 = vadd.f32 0.0, %v1545
  %v1547 = vpop.f32.mrb[0].mxu0
  %1548 = vmatprep.mubr.bf16.mxu0 0
  %1549 = vmatmul.mubr.bf16.gmra.mrb[0].mxu0 %v1415
  %v1550 = vpop.f32.mrb[0].mxu0
  %v1551 = vadd.f32 0.0, %v1550
  %v1552 = vpop.f32.mrb[0].mxu0
  %v1553 = vpop.f32.mrb[0].mxu0
  %v1554 = vadd.f32 0.0, %v1553
  %v1555 = vpop.f32.mrb[0].mxu0
  %1556 = vmatprep.mubr.bf16.mxu0 0
  %1557 = vmatmul.mubr.bf16.gmra.mrb[0].mxu0 %v1416
  %v1558 = vpop.f32.mrb[0].mxu0
  %v1559 = vadd.f32 0.0, %v1558
  %v1560 = vpop.f32.mrb[0].mxu0
  %v1561 = vpop.f32.mrb[0].mxu0
  %v1562 = vadd.f32 0.0, %v1561
  %v1563 = vpop.f32.mrb[0].mxu0
  %1564 = vmatprep.mubr.bf16.mxu0 0
  %1565 = vmatmul.mubr.bf16.gmra.mrb[0].mxu0 %v1417
  %v1566 = vpop.f32.mrb[0].mxu0
  %v1567 = vadd.f32 0.0, %v1566
  %v1568 = vpop.f32.mrb[0].mxu0
  %v1569 = vpop.f32.mrb[0].mxu0
  %v1570 = vadd.f32 0.0, %v1569
  %v1571 = vpop.f32.mrb[0].mxu0
  %1572 = vmatprep.mubr.bf16.mxu0 0
  %1573 = vmatmul.mubr.bf16.gmra.mrb[0].mxu0 %v1418
  %v1574 = vpop.f32.mrb[0].mxu0
  %v1575 = vadd.f32 0.0, %v1574
  %v1576 = vpop.f32.mrb[0].mxu0
  %v1577 = vpop.f32.mrb[0].mxu0
  %v1578 = vadd.f32 0.0, %v1577
  %v1579 = vpop.f32.mrb[0].mxu0
  %1580 = vdwg.mxu0
  %v1581 = vadd.f32 %v1379, %v1519
  %v1582 = vadd.f32 %v1380, %v1522
  %v1583 = vadd.f32 %v1381, %v1527
  %v1584 = vadd.f32 %v1382, %v1530
  %v1585 = vadd.f32 %v1383, %v1535
  %v1586 = vadd.f32 %v1384, %v1538
  %v1587 = vadd.f32 %v1385, %v1543
  %v1588 = vadd.f32 %v1386, %v1546
  %v1589 = vadd.f32 %v1387, %v1551
  %v1590 = vadd.f32 %v1388, %v1554
  %v1591 = vadd.f32 %v1389, %v1559
  %v1592 = vadd.f32 %v1390, %v1562
  %v1593 = vadd.f32 %v1391, %v1567
  %v1594 = vadd.f32 %v1392, %v1570
  %v1595 = vadd.f32 %v1393, %v1575
  %v1596 = vadd.f32 %v1394, %v1578
  %v1597 = vld [vmem:[%s1192 + $0x2] sm:$0xff]
  %v1598 = vld [vmem:[%s1192 + $0x12] sm:$0xff]
  %v1599 = vld [vmem:[%s1192 + $0x22] sm:$0xff]
  %v1600 = vld [vmem:[%s1192 + $0x32] sm:$0xff]
  %v1601 = vld [vmem:[%s1192 + $0x42] sm:$0xff]
  %v1602 = vld [vmem:[%s1192 + $0x52] sm:$0xff]
  %v1603 = vld [vmem:[%s1192 + $0x62] sm:$0xff]
  %v1604 = vld [vmem:[%s1192 + $0x72] sm:$0xff]
  %v1605 = vld [vmem:[%s1192 + $0xa2] sm:$0xff]
  %v1606 = vld [vmem:[%s1192 + $0xb2] sm:$0xff]
  %v1607 = vld [vmem:[%s1192 + $0xc2] sm:$0xff]
  %v1608 = vld [vmem:[%s1192 + $0xd2] sm:$0xff]
  %v1609 = vld [vmem:[%s1192 + $0xe2] sm:$0xff]
  %v1610 = vld [vmem:[%s1192 + $0xf2] sm:$0xff]
  %v1611 = vld [vmem:[%s1192 + $0x102] sm:$0xff]
  %v1612 = vld [vmem:[%s1192 + $0x112] sm:$0xff]
  %v1613 = vpack.c.bf16 %v1598, %v1597
  %v1614 = vpack.c.bf16 %v1600, %v1599
  %v1615 = vpack.c.bf16 %v1602, %v1601
  %v1616 = vpack.c.bf16 %v1604, %v1603
  %v1617 = vpack.c.bf16 %v1606, %v1605
  %v1618 = vpack.c.bf16 %v1608, %v1607
  %v1619 = vpack.c.bf16 %v1610, %v1609
  %v1620 = vpack.c.bf16 %v1612, %v1611
  %s1621 = scalar_lea.vmem %s1, 512
  %v1622 = vld [vmem:[%s1621] sm:$0xf]
  %v1623 = vld [vmem:[%s1621 + $0x4] sm:$0xf]
  %v1624 = vld [vmem:[%s1621 + $0x8] sm:$0xf]
  %v1625 = vld [vmem:[%s1621 + $0xc] sm:$0xf]
  %v1626 = vld [vmem:[%s1621 + $0x10] sm:$0xf]
  %v1627 = vld [vmem:[%s1621 + $0x14] sm:$0xf]
  %v1628 = vld [vmem:[%s1621 + $0x18] sm:$0xf]
  %v1629 = vld [vmem:[%s1621 + $0x1c] sm:$0xf]
  %v1630 = vld [vmem:[%s1621 + $0x20] sm:$0xf]
  %v1631 = vld [vmem:[%s1621 + $0x24] sm:$0xf]
  %v1632 = vld [vmem:[%s1621 + $0x28] sm:$0xf]
  %v1633 = vld [vmem:[%s1621 + $0x2c] sm:$0xf]
  %v1634 = vld [vmem:[%s1621 + $0x30] sm:$0xf]
  %v1635 = vld [vmem:[%s1621 + $0x34] sm:$0xf]
  %v1636 = vld [vmem:[%s1621 + $0x38] sm:$0xf]
  %v1637 = vld [vmem:[%s1621 + $0x3c] sm:$0xf]
  %v1654 = vunpack.c.l.b16 %v1622
  %v1655 = vunpack.c.l.b16 %v1623
  %v1656 = vunpack.c.l.b16 %v1624
  %v1657 = vunpack.c.l.b16 %v1625
  %v1658 = vunpack.c.l.b16 %v1626
  %v1659 = vunpack.c.l.b16 %v1627
  %v1660 = vunpack.c.l.b16 %v1628
  %v1661 = vunpack.c.l.b16 %v1629
  %v1662 = vunpack.c.l.b16 %v1630
  %v1663 = vunpack.c.l.b16 %v1631
  %v1664 = vunpack.c.l.b16 %v1632
  %v1665 = vunpack.c.l.b16 %v1633
  %v1666 = vunpack.c.l.b16 %v1634
  %v1667 = vunpack.c.l.b16 %v1635
  %v1668 = vunpack.c.l.b16 %v1636
  %v1669 = vunpack.c.l.b16 %v1637
  %v1670 = vpack.c.b16 %v1655, %v1654
  %v1671 = vpack.c.b16 %v1657, %v1656
  %v1672 = vpack.c.b16 %v1659, %v1658
  %v1673 = vpack.c.b16 %v1661, %v1660
  %v1674 = vpack.c.b16 %v1663, %v1662
  %v1675 = vpack.c.b16 %v1665, %v1664
  %v1676 = vpack.c.b16 %v1667, %v1666
  %v1677 = vpack.c.b16 %v1669, %v1668
  %1686 = vmatprep.subr.bf16.mxu0 0
  %1687 = vmatpush1.bf16.msra.mxu0 %v1670
  %1688 = vmatprep.subr.bf16.mxu0 0
  %1689 = vmatpush1.bf16.msra.mxu0 %v1671
  %1690 = vmatprep.subr.bf16.mxu0 0
  %1691 = vmatpush1.bf16.msra.mxu0 %v1672
  %1692 = vmatprep.subr.bf16.mxu0 0
  %1693 = vmatpush1.bf16.msra.mxu0 %v1673
  %1694 = vmatprep.subr.bf16.mxu0 0
  %1695 = vmatpush1.bf16.msra.mxu0 %v1674
  %1696 = vmatprep.subr.bf16.mxu0 0
  %1697 = vmatpush1.bf16.msra.mxu0 %v1675
  %1698 = vmatprep.subr.bf16.mxu0 0
  %1699 = vmatpush1.bf16.msra.mxu0 %v1676
  %1700 = vmatprep.subr.bf16.mxu0 0
  %1701 = vmatpush1.bf16.msra.mxu0 %v1677
  %1702 = vmatprep.subr.bf16.mxu0 0
  %1703 = vmatpush1.bf16.msra.mxu0 0
  %1704 = vmatprep.subr.bf16.mxu0 0
  %1705 = vmatpush1.bf16.msra.mxu0 0
  %1706 = vmatprep.subr.bf16.mxu0 0
  %1707 = vmatpush1.bf16.msra.mxu0 0
  %1708 = vmatprep.subr.bf16.mxu0 0
  %1709 = vmatpush1.bf16.msra.mxu0 0
  %1710 = vmatprep.subr.bf16.mxu0 0
  %1711 = vmatpush1.bf16.msra.mxu0 0
  %1712 = vmatprep.subr.bf16.mxu0 0
  %1713 = vmatpush1.bf16.msra.mxu0 0
  %1714 = vmatprep.subr.bf16.mxu0 0
  %1715 = vmatpush1.bf16.msra.mxu0 0
  %1716 = vmatprep.subr.bf16.mxu0 0
  %1717 = vmatpush1.bf16.msra.mxu0 0
  %1718 = vmatprep.mubr.bf16.mxu0 0
  %1719 = vmatmul.mubr.bf16.gmra.mrb[0].mxu0 %v1613
  %v1720 = vpop.f32.mrb[0].mxu0
  %v1721 = vadd.f32 0.0, %v1720
  %v1722 = vpop.f32.mrb[0].mxu0
  %v1723 = vpop.f32.mrb[0].mxu0
  %v1724 = vadd.f32 0.0, %v1723
  %v1725 = vpop.f32.mrb[0].mxu0
  %1726 = vmatprep.mubr.bf16.mxu0 0
  %1727 = vmatmul.mubr.bf16.gmra.mrb[0].mxu0 %v1614
  %v1728 = vpop.f32.mrb[0].mxu0
  %v1729 = vadd.f32 0.0, %v1728
  %v1730 = vpop.f32.mrb[0].mxu0
  %v1731 = vpop.f32.mrb[0].mxu0
  %v1732 = vadd.f32 0.0, %v1731
  %v1733 = vpop.f32.mrb[0].mxu0
  %1734 = vmatprep.mubr.bf16.mxu0 0
  %1735 = vmatmul.mubr.bf16.gmra.mrb[0].mxu0 %v1615
  %v1736 = vpop.f32.mrb[0].mxu0
  %v1737 = vadd.f32 0.0, %v1736
  %v1738 = vpop.f32.mrb[0].mxu0
  %v1739 = vpop.f32.mrb[0].mxu0
  %v1740 = vadd.f32 0.0, %v1739
  %v1741 = vpop.f32.mrb[0].mxu0
  %1742 = vmatprep.mubr.bf16.mxu0 0
  %1743 = vmatmul.mubr.bf16.gmra.mrb[0].mxu0 %v1616
  %v1744 = vpop.f32.mrb[0].mxu0
  %v1745 = vadd.f32 0.0, %v1744
  %v1746 = vpop.f32.mrb[0].mxu0
  %v1747 = vpop.f32.mrb[0].mxu0
  %v1748 = vadd.f32 0.0, %v1747
  %v1749 = vpop.f32.mrb[0].mxu0
  %1750 = vmatprep.mubr.bf16.mxu0 0
  %1751 = vmatmul.mubr.bf16.gmra.mrb[0].mxu0 %v1617
  %v1752 = vpop.f32.mrb[0].mxu0
  %v1753 = vadd.f32 0.0, %v1752
  %v1754 = vpop.f32.mrb[0].mxu0
  %v1755 = vpop.f32.mrb[0].mxu0
  %v1756 = vadd.f32 0.0, %v1755
  %v1757 = vpop.f32.mrb[0].mxu0
  %1758 = vmatprep.mubr.bf16.mxu0 0
  %1759 = vmatmul.mubr.bf16.gmra.mrb[0].mxu0 %v1618
  %v1760 = vpop.f32.mrb[0].mxu0
  %v1761 = vadd.f32 0.0, %v1760
  %v1762 = vpop.f32.mrb[0].mxu0
  %v1763 = vpop.f32.mrb[0].mxu0
  %v1764 = vadd.f32 0.0, %v1763
  %v1765 = vpop.f32.mrb[0].mxu0
  %1766 = vmatprep.mubr.bf16.mxu0 0
  %1767 = vmatmul.mubr.bf16.gmra.mrb[0].mxu0 %v1619
  %v1768 = vpop.f32.mrb[0].mxu0
  %v1769 = vadd.f32 0.0, %v1768
  %v1770 = vpop.f32.mrb[0].mxu0
  %v1771 = vpop.f32.mrb[0].mxu0
  %v1772 = vadd.f32 0.0, %v1771
  %v1773 = vpop.f32.mrb[0].mxu0
  %1774 = vmatprep.mubr.bf16.mxu0 0
  %1775 = vmatmul.mubr.bf16.gmra.mrb[0].mxu0 %v1620
  %v1776 = vpop.f32.mrb[0].mxu0
  %v1777 = vadd.f32 0.0, %v1776
  %v1778 = vpop.f32.mrb[0].mxu0
  %v1779 = vpop.f32.mrb[0].mxu0
  %v1780 = vadd.f32 0.0, %v1779
  %v1781 = vpop.f32.mrb[0].mxu0
  %1782 = vdwg.mxu0
  %v1783 = vadd.f32 %v1581, %v1721
  %v1784 = vadd.f32 %v1582, %v1724
  %v1785 = vadd.f32 %v1583, %v1729
  %v1786 = vadd.f32 %v1584, %v1732
  %v1787 = vadd.f32 %v1585, %v1737
  %v1788 = vadd.f32 %v1586, %v1740
  %v1789 = vadd.f32 %v1587, %v1745
  %v1790 = vadd.f32 %v1588, %v1748
  %v1791 = vadd.f32 %v1589, %v1753
  %v1792 = vadd.f32 %v1590, %v1756
  %v1793 = vadd.f32 %v1591, %v1761
  %v1794 = vadd.f32 %v1592, %v1764
  %v1795 = vadd.f32 %v1593, %v1769
  %v1796 = vadd.f32 %v1594, %v1772
  %v1797 = vadd.f32 %v1595, %v1777
  %v1798 = vadd.f32 %v1596, %v1780
  %p1799 = scmp.eq.s32.totalorder 0, 0
  // Predicated region
  $region10: #{densenet_fpn_forward.11} parent=0 // pred_check
    %p1800 = pneg %p1799
  $region11: #{densenet_fpn_forward.11} parent=0 // pred_check_branch
    %1802 = sbr.rel (%p1800) target = $region13
  $region12: #{densenet_fpn_forward.11} parent=0 // pred_region
    %1803 = vst [vmem:[%s2] sm:$0xff] %v1783
    %1804 = vst [vmem:[%s2 + $0x8] sm:$0xff] %v1784
    %1805 = vst [vmem:[%s2 + $0x10] sm:$0xff] %v1785
    %1806 = vst [vmem:[%s2 + $0x18] sm:$0xff] %v1786
    %1807 = vst [vmem:[%s2 + $0x20] sm:$0xff] %v1787
    %1808 = vst [vmem:[%s2 + $0x28] sm:$0xff] %v1788
    %1809 = vst [vmem:[%s2 + $0x30] sm:$0xff] %v1789
    %1810 = vst [vmem:[%s2 + $0x38] sm:$0xff] %v1790
    %1811 = vst [vmem:[%s2 + $0x40] sm:$0xff] %v1791
    %1812 = vst [vmem:[%s2 + $0x48] sm:$0xff] %v1792
    %1813 = vst [vmem:[%s2 + $0x50] sm:$0xff] %v1793
    %1814 = vst [vmem:[%s2 + $0x58] sm:$0xff] %v1794
    %1815 = vst [vmem:[%s2 + $0x60] sm:$0xff] %v1795
    %1816 = vst [vmem:[%s2 + $0x68] sm:$0xff] %v1796
    %1817 = vst [vmem:[%s2 + $0x70] sm:$0xff] %v1797
    %1818 = vst [vmem:[%s2 + $0x78] sm:$0xff] %v1798
  $region13: #{densenet_fpn_forward.11} parent=0 // pred_fallthru
    _
  %p1819 = scmp.gt.s32.totalorder 0, 0
  // Predicated region
  $region14: #{densenet_fpn_forward.11} parent=0 // pred_check
    %p1820 = pneg %p1819
  $region15: #{densenet_fpn_forward.11} parent=0 // pred_check_branch
    %1822 = sbr.rel (%p1820) target = $region17
  $region16: #{densenet_fpn_forward.11} parent=0 // pred_region
    %v1823 = vld [vmem:[%s2] sm:$0xff]
    %v1824 = vld [vmem:[%s2 + $0x8] sm:$0xff]
    %v1825 = vld [vmem:[%s2 + $0x10] sm:$0xff]
    %v1826 = vld [vmem:[%s2 + $0x18] sm:$0xff]
    %v1827 = vld [vmem:[%s2 + $0x20] sm:$0xff]
    %v1828 = vld [vmem:[%s2 + $0x28] sm:$0xff]
    %v1829 = vld [vmem:[%s2 + $0x30] sm:$0xff]
    %v1830 = vld [vmem:[%s2 + $0x38] sm:$0xff]
    %v1831 = vld [vmem:[%s2 + $0x40] sm:$0xff]
    %v1832 = vld [vmem:[%s2 + $0x48] sm:$0xff]
    %v1833 = vld [vmem:[%s2 + $0x50] sm:$0xff]
    %v1834 = vld [vmem:[%s2 + $0x58] sm:$0xff]
    %v1835 = vld [vmem:[%s2 + $0x60] sm:$0xff]
    %v1836 = vld [vmem:[%s2 + $0x68] sm:$0xff]
    %v1837 = vld [vmem:[%s2 + $0x70] sm:$0xff]
    %v1838 = vld [vmem:[%s2 + $0x78] sm:$0xff]
    %v1839 = vadd.f32 %v1823, %v1783
    %v1840 = vadd.f32 %v1824, %v1784
    %v1841 = vadd.f32 %v1825, %v1785
    %v1842 = vadd.f32 %v1826, %v1786
    %v1843 = vadd.f32 %v1827, %v1787
    %v1844 = vadd.f32 %v1828, %v1788
    %v1845 = vadd.f32 %v1829, %v1789
    %v1846 = vadd.f32 %v1830, %v1790
    %v1847 = vadd.f32 %v1831, %v1791
    %v1848 = vadd.f32 %v1832, %v1792
    %v1849 = vadd.f32 %v1833, %v1793
    %v1850 = vadd.f32 %v1834, %v1794
    %v1851 = vadd.f32 %v1835, %v1795
    %v1852 = vadd.f32 %v1836, %v1796
    %v1853 = vadd.f32 %v1837, %v1797
    %v1854 = vadd.f32 %v1838, %v1798
    %1855 = vst [vmem:[%s2] sm:$0xff] %v1839
    %1856 = vst [vmem:[%s2 + $0x8] sm:$0xff] %v1840
    %1857 = vst [vmem:[%s2 + $0x10] sm:$0xff] %v1841
    %1858 = vst [vmem:[%s2 + $0x18] sm:$0xff] %v1842
    %1859 = vst [vmem:[%s2 + $0x20] sm:$0xff] %v1843
    %1860 = vst [vmem:[%s2 + $0x28] sm:$0xff] %v1844
    %1861 = vst [vmem:[%s2 + $0x30] sm:$0xff] %v1845
    %1862 = vst [vmem:[%s2 + $0x38] sm:$0xff] %v1846
    %1863 = vst [vmem:[%s2 + $0x40] sm:$0xff] %v1847
    %1864 = vst [vmem:[%s2 + $0x48] sm:$0xff] %v1848
    %1865 = vst [vmem:[%s2 + $0x50] sm:$0xff] %v1849
    %1866 = vst [vmem:[%s2 + $0x58] sm:$0xff] %v1850
    %1867 = vst [vmem:[%s2 + $0x60] sm:$0xff] %v1851
    %1868 = vst [vmem:[%s2 + $0x68] sm:$0xff] %v1852
    %1869 = vst [vmem:[%s2 + $0x70] sm:$0xff] %v1853
    %1870 = vst [vmem:[%s2 + $0x78] sm:$0xff] %v1854
  $region17: #{densenet_fpn_forward.11} parent=0 // pred_fallthru
    _
  // Predicated region
  $region18: #{densenet_fpn_forward.11} parent=0 // pred_check
    %p1871 = pneg %p1799
  $region19: #{densenet_fpn_forward.11} parent=0 // pred_check_branch
    %1873 = sbr.rel (%p1871) target = $region21
  $region20: #{densenet_fpn_forward.11} parent=0 // pred_region
    %v1874 = vld [vmem:[%s2] sm:$0xff]
    %v1875 = vld [vmem:[%s2 + $0x8] sm:$0xff]
    %v1876 = vld [vmem:[%s2 + $0x10] sm:$0xff]
    %v1877 = vld [vmem:[%s2 + $0x18] sm:$0xff]
    %v1878 = vld [vmem:[%s2 + $0x20] sm:$0xff]
    %v1879 = vld [vmem:[%s2 + $0x28] sm:$0xff]
    %v1880 = vld [vmem:[%s2 + $0x30] sm:$0xff]
    %v1881 = vld [vmem:[%s2 + $0x38] sm:$0xff]
    %v1882 = vld [vmem:[%s2 + $0x40] sm:$0xff]
    %v1883 = vld [vmem:[%s2 + $0x48] sm:$0xff]
    %v1884 = vld [vmem:[%s2 + $0x50] sm:$0xff]
    %v1885 = vld [vmem:[%s2 + $0x58] sm:$0xff]
    %v1886 = vld [vmem:[%s2 + $0x60] sm:$0xff]
    %v1887 = vld [vmem:[%s2 + $0x68] sm:$0xff]
    %v1888 = vld [vmem:[%s2 + $0x70] sm:$0xff]
    %v1889 = vld [vmem:[%s2 + $0x78] sm:$0xff]
    %1890 = vst [vmem:[%s2] sm:$0xff] %v1874
    %1891 = vst [vmem:[%s2 + $0x8] sm:$0xff] %v1875
    %1892 = vst [vmem:[%s2 + $0x10] sm:$0xff] %v1876
    %1893 = vst [vmem:[%s2 + $0x18] sm:$0xff] %v1877
    %1894 = vst [vmem:[%s2 + $0x20] sm:$0xff] %v1878
    %1895 = vst [vmem:[%s2 + $0x28] sm:$0xff] %v1879
    %1896 = vst [vmem:[%s2 + $0x30] sm:$0xff] %v1880
    %1897 = vst [vmem:[%s2 + $0x38] sm:$0xff] %v1881
    %1898 = vst [vmem:[%s2 + $0x40] sm:$0xff] %v1882
    %1899 = vst [vmem:[%s2 + $0x48] sm:$0xff] %v1883
    %1900 = vst [vmem:[%s2 + $0x50] sm:$0xff] %v1884
    %1901 = vst [vmem:[%s2 + $0x58] sm:$0xff] %v1885
    %1902 = vst [vmem:[%s2 + $0x60] sm:$0xff] %v1886
    %1903 = vst [vmem:[%s2 + $0x68] sm:$0xff] %v1887
    %1904 = vst [vmem:[%s2 + $0x70] sm:$0xff] %v1888
    %1905 = vst [vmem:[%s2 + $0x78] sm:$0xff] %v1889
  $region21: #{densenet_fpn_forward.11} parent=0 // pred_fallthru
    _
  // Predicated region
  $region22: #{densenet_fpn_forward.11} parent=0 // pred_check
    _
  $region23: #{densenet_fpn_forward.11} parent=0 // pred_check_branch
    %1907 = sbr.rel (0) target = $region25
  $region24: #{densenet_fpn_forward.11} parent=0 // pred_region
    _
  $region25: #{densenet_fpn_forward.11} parent=0 // pred_fallthru
    _
  // Predicated region
  $region26: #{densenet_fpn_forward.11} parent=0 // pred_check
    _
  $region27: #{densenet_fpn_forward.11} parent=0 // pred_check_branch
    %1909 = sbr.rel (0) target = $region29
  $region28: #{densenet_fpn_forward.11} parent=0 // pred_region
    _
  $region29: #{densenet_fpn_forward.11} parent=0 // pred_fallthru
    _

</llo_original>
